<compile_context>
chip_gen: v5e
topology: v5e:2x2
jax: 0.10.0
libtpu: 0.0.40
codegen_flags: <defaults>
</compile_context>

<pallas_src>
import functools
import math

import jax
import jax.numpy as jnp
from jax.experimental import pallas as pl
from jax.experimental.pallas import tpu as pltpu

HIDDEN = 1536          # self.swin.config.hidden_size = 1536 (forced in the module)
INTER = 1024           # classifier intermediate width
PATCH = 4              # swin patch size (patch4)
LN_EPS = 1e-5          # nn.LayerNorm default eps
LANE = 128
TOKENS_PER_STEP = 1024  # target bb * tile_p per grid step


def _round_up(x, m):
    return ((x + m - 1) // m) * m


def _vmem_limit_bytes(bb, tile_p, k, npad):
    """Scoped-VMEM request from the actual tile working set, ~30% headroom."""
    tokens = bb * tile_p
    need = (
        2 * tokens * k * 2           # patches block, double-buffered, bf16
        + 2 * k * HIDDEN * 2         # patch-embed weight, bf16
        + 2 * HIDDEN * INTER * 2     # head w1, bf16
        + 2 * INTER * npad * 2       # head w2, bf16
        + 3 * tokens * HIDDEN * 4    # f32 LayerNorm temporaries
        + bb * HIDDEN * 4            # pooled accumulator scratch
        + 2 * bb * npad * 4          # logits output block
        + 8 * HIDDEN * 4             # gammas / betas / biases
        + (2 << 20)                  # misc / internal headroom
    )
    need = int(need * 1.3)
    return max(24 << 20, min(need, 56 << 20))


def _swin_fused_kernel(patches_ref, wp_ref, bp_ref, g_emb_ref, b_emb_ref,
                       g_cls_ref, b_cls_ref, w1_ref, b1_ref, w2_ref, b2_ref,
                       out_ref, acc_ref, *, bb, tile_p, n_patches, mask_pad):
    t = pl.program_id(1)
    rows = bb * tile_p

    # 1) Patch embedding: Conv2d(C, HIDDEN, k=4, s=4) == one MXU matmul over
    #    unfolded 4x4 patch rows (bf16 operands, f32 accumulation).
    x = patches_ref[...]                                    # (bb, tile_p, K) bf16
    x2 = x.reshape(rows, x.shape[-1])
    emb = jnp.dot(x2, wp_ref[...],
                  preferred_element_type=jnp.float32) + bp_ref[...]

    # 2) Patch-embedding LayerNorm, stats in f32 (two-pass variance).
    #    gamma/beta are hoisted out of the token loop (applied in finalize).
    mu = jnp.mean(emb, axis=-1, keepdims=True)
    d = emb - mu
    var = jnp.mean(d * d, axis=-1, keepdims=True)
    z = d * jax.lax.rsqrt(var + LN_EPS)                     # normalized, no affine

    if mask_pad:
        # Zero-padded tokens pick up the conv bias; mask them out of the sum.
        tok = t * tile_p + jax.lax.broadcasted_iota(jnp.int32, (rows, 1), 0)
        z = jnp.where(tok < n_patches, z, 0.0)

    # TODO(synk): pretrained Swin transformer stages (windowed attention blocks,
    # patch merging, final encoder LayerNorm) require the checkpoint; identity here.

    # 3) Pooler: streamed mean over the token axis — accumulate the per-image
    #    token sums into a VMEM f32 scratch, scale once in the finalize.
    partial = jnp.sum(z.reshape(bb, tile_p, HIDDEN), axis=1)  # (bb, HIDDEN)

    @pl.when(t == 0)
    def _init():
        acc_ref[...] = jnp.zeros_like(acc_ref)

    acc_ref[...] += partial

    # 4) Finalize: apply hoisted LN affine + 1/P scale, then the classifier
    #    head (LayerNorm -> Dropout(id) -> Linear -> GELU -> Dropout(id) -> Linear).
    @pl.when(t == pl.num_programs(1) - 1)
    def _finalize():
        inv_p = 1.0 / n_patches
        pooled = acc_ref[...] * (g_emb_ref[...] * inv_p) + b_emb_ref[...]

        mu_h = jnp.mean(pooled, axis=-1, keepdims=True)
        dh = pooled - mu_h
        var_h = jnp.mean(dh * dh, axis=-1, keepdims=True)
        h = dh * jax.lax.rsqrt(var_h + LN_EPS) * g_cls_ref[...] + b_cls_ref[...]

        h = jnp.dot(h.astype(jnp.bfloat16), w1_ref[...],
                    preferred_element_type=jnp.float32) + b1_ref[...]
        # Exact (erf-based) GELU, like nn.GELU().
        h = 0.5 * h * (1.0 + jax.lax.erf(h * (1.0 / math.sqrt(2.0))))
        logits = jnp.dot(h.astype(jnp.bfloat16), w2_ref[...],
                         preferred_element_type=jnp.float32) + b2_ref[...]
        out_ref[...] = logits.reshape(out_ref.shape).astype(out_ref.dtype)


def swin_classifier_forward(x, params, *, tokens_per_step=TOKENS_PER_STEP):
    """x: [B, C, H, W] float32 (NCHW, like the PyTorch module)."""
    B, C, H, W = x.shape
    gh, gw = H // PATCH, W // PATCH
    P = gh * gw
    K = C * PATCH * PATCH
    num_classes = params["w2"].shape[1]
    NPAD = _round_up(max(num_classes, LANE), LANE)

    # ---- token / batch tiling ----
    if P <= tokens_per_step:
        tile_p = P
        P_pad = P
        bb = 1
        for d_ in range(B, 0, -1):          # block several images per step
            if B % d_ == 0 and d_ * P <= tokens_per_step:
                bb = d_
                break
    else:
        bb = 1
        tile_p = tokens_per_step
        P_pad = _round_up(P, tile_p)        # pad tokens; masked in-kernel
    n_tiles = P_pad // tile_p
    mask_pad = P_pad != P

    # im2col for non-overlapping 4x4 patches (layout glue, no compute).
    # Flatten order (C, ph, pw) must match how a Conv2d weight [HIDDEN, C, 4, 4]
    # is flattened into params["wp"] if checkpoint weights are ever loaded.
    patches = x.reshape(B, C, gh, PATCH, gw, PATCH)
    patches = patches.transpose(0, 2, 4, 1, 3, 5).reshape(B, P, K)
    if mask_pad:
        patches = jnp.pad(patches, ((0, 0), (0, P_pad - P), (0, 0)))
    patches = patches.astype(jnp.bfloat16)   # K stays 48 lanes: no 128-pad in HBM

    wp = params["wp"].astype(jnp.bfloat16)
    w1 = params["w1"].astype(jnp.bfloat16)
    w2 = jnp.pad(params["w2"], ((0, 0), (0, NPAD - num_classes))).astype(jnp.bfloat16)
    b2 = jnp.pad(params["b2"], ((0, 0), (0, NPAD - num_classes)))

    vmem_limit = _vmem_limit_bytes(bb, tile_p, K, NPAD)

    cost = pl.CostEstimate(
        flops=(2 * B * P_pad * K * HIDDEN + 10 * B * P_pad * HIDDEN
               + 2 * B * HIDDEN * INTER + 2 * B * INTER * NPAD),
        transcendentals=int(B * (P_pad + INTER + 2)),
        bytes_accessed=int(patches.size * 2 + wp.size * 2 + w1.size * 2
                           + w2.size * 2 + 8 * HIDDEN * 4 + B * NPAD * 4),
    )

    kernel = functools.partial(_swin_fused_kernel, bb=bb, tile_p=tile_p,
                               n_patches=P, mask_pad=mask_pad)

    # NOTE(v7x): for B == 1 the "parallel" batch axis gives megacore nothing;
    # a per-core split of the token reduction could be added on top of this.
    logits = pl.pallas_call(
        kernel,
        out_shape=jax.ShapeDtypeStruct((B, 1, NPAD), jnp.float32),
        grid=(B // bb, n_tiles),
        in_specs=[
            pl.BlockSpec((bb, tile_p, K), lambda b, t: (b, t, 0)),   # patches
            pl.BlockSpec((K, HIDDEN), lambda b, t: (0, 0)),          # wp
            pl.BlockSpec((1, HIDDEN), lambda b, t: (0, 0)),          # bp
            pl.BlockSpec((1, HIDDEN), lambda b, t: (0, 0)),          # g_emb
            pl.BlockSpec((1, HIDDEN), lambda b, t: (0, 0)),          # b_emb
            pl.BlockSpec((1, HIDDEN), lambda b, t: (0, 0)),          # g_cls
            pl.BlockSpec((1, HIDDEN), lambda b, t: (0, 0)),          # b_cls
            pl.BlockSpec((HIDDEN, INTER), lambda b, t: (0, 0)),      # w1
            pl.BlockSpec((1, INTER), lambda b, t: (0, 0)),           # b1
            pl.BlockSpec((INTER, NPAD), lambda b, t: (0, 0)),        # w2
            pl.BlockSpec((1, NPAD), lambda b, t: (0, 0)),            # b2
        ],
        out_specs=pl.BlockSpec((bb, 1, NPAD), lambda b, t: (b, 0, 0)),
        scratch_shapes=[pltpu.VMEM((bb, HIDDEN), jnp.float32)],
        compiler_params=pltpu.CompilerParams(
            dimension_semantics=("parallel", "arbitrary"),
            vmem_limit_bytes=vmem_limit,
        ),
        cost_estimate=cost,
    )(patches, wp, params["bp"], params["g_emb"], params["b_emb"],
      params["g_cls"], params["b_cls"], w1, params["b1"], w2, b2)

    return logits.reshape(B, NPAD)[:, :num_classes]


def init_params(key, in_channels, num_classes):
    ks = jax.random.split(key, 6)
    cpatch = in_channels * PATCH * PATCH
    return {
        "wp": jax.random.normal(ks[0], (cpatch, HIDDEN), jnp.float32) * 0.02,
        "bp": jnp.zeros((1, HIDDEN), jnp.float32),
        "g_emb": jnp.ones((1, HIDDEN), jnp.float32),
        "b_emb": jnp.zeros((1, HIDDEN), jnp.float32),
        "g_cls": jnp.ones((1, HIDDEN), jnp.float32),
        "b_cls": jnp.zeros((1, HIDDEN), jnp.float32),
        "w1": jax.random.normal(ks[1], (HIDDEN, INTER), jnp.float32) * (1.0 / math.sqrt(HIDDEN)),
        "b1": jax.random.normal(ks[2], (1, INTER), jnp.float32) * 0.01,
        "w2": jax.random.normal(ks[3], (INTER, num_classes), jnp.float32) * (1.0 / math.sqrt(INTER)),
        "b2": jax.random.normal(ks[4], (1, num_classes), jnp.float32) * 0.01,
    }


if __name__ == "__main__":
    key = jax.random.PRNGKey(0)
    k_x, k_p = jax.random.split(key)

    B, C, H, W = 2, 3, 16, 16          # small RGB images, patch4 -> 16 tokens/img
    NUM_CLASSES = 10

    x = jax.random.normal(k_x, (B, C, H, W), jnp.float32)
    params = init_params(k_p, C, NUM_CLASSES)

    logits = swin_classifier_forward(x, params)
    logits = jax.block_until_ready(logits)

    assert logits.shape == (B, NUM_CLASSES), logits.shape
    assert jnp.all(jnp.isfinite(logits))
    print("KERNEL_OK")
</pallas_src>

<mosaic_0001>
module attributes {stable_mosaic.version = 11 : i64} {
  func.func @_swin_fused_kernel(%arg0: i32, %arg1: i32, %arg2: memref<2x16x48xbf16, #tpu.memory_space<vmem>>, %arg3: memref<48x1536xbf16, #tpu.memory_space<vmem>>, %arg4: memref<1x1536xf32, #tpu.memory_space<vmem>>, %arg5: memref<1x1536xf32, #tpu.memory_space<vmem>>, %arg6: memref<1x1536xf32, #tpu.memory_space<vmem>>, %arg7: memref<1x1536xf32, #tpu.memory_space<vmem>>, %arg8: memref<1x1536xf32, #tpu.memory_space<vmem>>, %arg9: memref<1536x1024xbf16, #tpu.memory_space<vmem>>, %arg10: memref<1x1024xf32, #tpu.memory_space<vmem>>, %arg11: memref<1024x128xbf16, #tpu.memory_space<vmem>>, %arg12: memref<1x128xf32, #tpu.memory_space<vmem>>, %arg13: memref<2x1x128xf32, #tpu.memory_space<vmem>>, %arg14: memref<2x1536xf32, #tpu.memory_space<vmem>>) attributes {dimension_semantics = [#tpu.dimension_semantics<parallel>, #tpu.dimension_semantics<arbitrary>], iteration_bounds = array<i64: 1, 1>, scalar_prefetch = 0 : i64, scratch_operands = 1 : i64, tpu.core_type = #tpu.core_type<tc>, window_params = [{transform_indices = @transform_0, window_bounds = array<i64: 2, 16, 48>}, {pipeline_mode = #tpu.pipeline_mode<synchronous>, transform_indices = @transform_1, window_bounds = array<i64: 48, 1536>}, {pipeline_mode = #tpu.pipeline_mode<synchronous>, transform_indices = @transform_2, window_bounds = array<i64: 1, 1536>}, {pipeline_mode = #tpu.pipeline_mode<synchronous>, transform_indices = @transform_3, window_bounds = array<i64: 1, 1536>}, {pipeline_mode = #tpu.pipeline_mode<synchronous>, transform_indices = @transform_4, window_bounds = array<i64: 1, 1536>}, {pipeline_mode = #tpu.pipeline_mode<synchronous>, transform_indices = @transform_5, window_bounds = array<i64: 1, 1536>}, {pipeline_mode = #tpu.pipeline_mode<synchronous>, transform_indices = @transform_6, window_bounds = array<i64: 1, 1536>}, {pipeline_mode = #tpu.pipeline_mode<synchronous>, transform_indices = @transform_7, window_bounds = array<i64: 1536, 1024>}, {pipeline_mode = #tpu.pipeline_mode<synchronous>, transform_indices = @transform_8, window_bounds = array<i64: 1, 1024>}, {pipeline_mode = #tpu.pipeline_mode<synchronous>, transform_indices = @transform_9, window_bounds = array<i64: 1024, 128>}, {pipeline_mode = #tpu.pipeline_mode<synchronous>, transform_indices = @transform_10, window_bounds = array<i64: 1, 128>}, {transform_indices = @transform_11, window_bounds = array<i64: 2, 1, 128>}]} {
    %c0 = arith.constant 0 : index
    %c0_0 = arith.constant 0 : index
    %c0_1 = arith.constant 0 : index
    %0 = vector.load %arg2[%c0, %c0_0, %c0_1] : memref<2x16x48xbf16, #tpu.memory_space<vmem>>, vector<2x16x48xbf16>
    %1 = vector.shape_cast %0 : vector<2x16x48xbf16> to vector<32x48xbf16>
    %c0_2 = arith.constant 0 : index
    %c0_3 = arith.constant 0 : index
    %2 = vector.load %arg3[%c0_2, %c0_3] : memref<48x1536xbf16, #tpu.memory_space<vmem>>, vector<48x1536xbf16>
    %cst = arith.constant dense<0.000000e+00> : vector<32x1536xf32>
    %3 = tpu.matmul %1, %2, %cst {dimension_numbers = #tpu.dot_dimension_numbers<[1], [0], [0], [1], [0, 0, 1, 1], [], []>} : vector<32x48xbf16>, vector<48x1536xbf16>, vector<32x1536xf32> -> vector<32x1536xf32>
    %c0_4 = arith.constant 0 : index
    %c0_5 = arith.constant 0 : index
    %4 = vector.load %arg4[%c0_4, %c0_5] : memref<1x1536xf32, #tpu.memory_space<vmem>>, vector<1x1536xf32>
    %5 = vector.broadcast %4 : vector<1x1536xf32> to vector<32x1536xf32>
    %6 = arith.addf %3, %5 : vector<32x1536xf32>
    %cst_6 = arith.constant dense<0.000000e+00> : vector<32xf32>
    %7 = vector.multi_reduction <add>, %6, %cst_6 [1] : vector<32x1536xf32> to vector<32xf32>
    %8 = vector.shape_cast %7 : vector<32xf32> to vector<32x1xf32>
    %cst_7 = arith.constant 1.536000e+03 : f32
    %9 = vector.broadcast %cst_7 : f32 to vector<32x1xf32>
    %10 = arith.divf %8, %9 : vector<32x1xf32>
    %11 = vector.broadcast %10 : vector<32x1xf32> to vector<32x1536xf32>
    %12 = arith.subf %6, %11 : vector<32x1536xf32>
    %13 = arith.mulf %12, %12 : vector<32x1536xf32>
    %cst_8 = arith.constant dense<0.000000e+00> : vector<32xf32>
    %14 = vector.multi_reduction <add>, %13, %cst_8 [1] : vector<32x1536xf32> to vector<32xf32>
    %15 = vector.shape_cast %14 : vector<32xf32> to vector<32x1xf32>
    %cst_9 = arith.constant 1.536000e+03 : f32
    %16 = vector.broadcast %cst_9 : f32 to vector<32x1xf32>
    %17 = arith.divf %15, %16 : vector<32x1xf32>
    %cst_10 = arith.constant 9.99999974E-6 : f32
    %18 = vector.broadcast %cst_10 : f32 to vector<32x1xf32>
    %19 = arith.addf %17, %18 : vector<32x1xf32>
    %20 = math.rsqrt %19 : vector<32x1xf32>
    %21 = vector.broadcast %20 : vector<32x1xf32> to vector<32x1536xf32>
    %22 = arith.mulf %12, %21 : vector<32x1536xf32>
    %23 = vector.shape_cast %22 : vector<32x1536xf32> to vector<2x16x1536xf32>
    %cst_11 = arith.constant dense<0.000000e+00> : vector<2x1536xf32>
    %24 = vector.multi_reduction <add>, %23, %cst_11 [1] : vector<2x16x1536xf32> to vector<2x1536xf32>
    %c0_i32 = arith.constant 0 : i32
    %25 = arith.cmpi eq, %arg1, %c0_i32 : i32
    %26 = arith.extui %25 : i1 to i32
    %c0_i32_12 = arith.constant 0 : i32
    %27 = arith.cmpi ne, %26, %c0_i32_12 : i32
    scf.if %27 {
      %cst_19 = arith.constant 0.000000e+00 : f32
      %34 = vector.broadcast %cst_19 : f32 to vector<2x1536xf32>
      %c0_20 = arith.constant 0 : index
      %c0_21 = arith.constant 0 : index
      %35 = vector.load %arg14[%c0_20, %c0_21] : memref<2x1536xf32, #tpu.memory_space<vmem>>, vector<2x1536xf32>
      tpu.vector_store %arg14[%c0_20, %c0_21], %34 {strides = array<i32>} : memref<2x1536xf32, #tpu.memory_space<vmem>>, vector<2x1536xf32>,
    } else {
    }
    %c0_13 = arith.constant 0 : index
    %c0_14 = arith.constant 0 : index
    %28 = vector.load %arg14[%c0_13, %c0_14] : memref<2x1536xf32, #tpu.memory_space<vmem>>, vector<2x1536xf32>
    %29 = arith.addf %28, %24 : vector<2x1536xf32>
    %c0_15 = arith.constant 0 : index
    %c0_16 = arith.constant 0 : index
    %30 = vector.load %arg14[%c0_15, %c0_16] : memref<2x1536xf32, #tpu.memory_space<vmem>>, vector<2x1536xf32>
    tpu.vector_store %arg14[%c0_15, %c0_16], %29 {strides = array<i32>} : memref<2x1536xf32, #tpu.memory_space<vmem>>, vector<2x1536xf32>,
    %c0_i32_17 = arith.constant 0 : i32
    %31 = arith.cmpi eq, %arg1, %c0_i32_17 : i32
    %32 = arith.extui %31 : i1 to i32
    %c0_i32_18 = arith.constant 0 : i32
    %33 = arith.cmpi ne, %32, %c0_i32_18 : i32
    scf.if %33 {
      %c0_19 = arith.constant 0 : index
      %c0_20 = arith.constant 0 : index
      %34 = vector.load %arg14[%c0_19, %c0_20] : memref<2x1536xf32, #tpu.memory_space<vmem>>, vector<2x1536xf32>
      %c0_21 = arith.constant 0 : index
      %c0_22 = arith.constant 0 : index
      %35 = vector.load %arg5[%c0_21, %c0_22] : memref<1x1536xf32, #tpu.memory_space<vmem>>, vector<1x1536xf32>
      %cst_23 = arith.constant 6.250000e-02 : f32
      %36 = vector.broadcast %cst_23 : f32 to vector<1x1536xf32>
      %37 = arith.mulf %35, %36 : vector<1x1536xf32>
      %38 = vector.broadcast %37 : vector<1x1536xf32> to vector<2x1536xf32>
      %39 = arith.mulf %34, %38 : vector<2x1536xf32>
      %c0_24 = arith.constant 0 : index
      %c0_25 = arith.constant 0 : index
      %40 = vector.load %arg6[%c0_24, %c0_25] : memref<1x1536xf32, #tpu.memory_space<vmem>>, vector<1x1536xf32>
      %41 = vector.broadcast %40 : vector<1x1536xf32> to vector<2x1536xf32>
      %42 = arith.addf %39, %41 : vector<2x1536xf32>
      %cst_26 = arith.constant dense<0.000000e+00> : vector<2xf32>
      %43 = vector.multi_reduction <add>, %42, %cst_26 [1] : vector<2x1536xf32> to vector<2xf32>
      %44 = vector.shape_cast %43 : vector<2xf32> to vector<2x1xf32>
      %cst_27 = arith.constant 1.536000e+03 : f32
      %45 = vector.broadcast %cst_27 : f32 to vector<2x1xf32>
      %46 = arith.divf %44, %45 : vector<2x1xf32>
      %47 = vector.broadcast %46 : vector<2x1xf32> to vector<2x1536xf32>
      %48 = arith.subf %42, %47 : vector<2x1536xf32>
      %49 = arith.mulf %48, %48 : vector<2x1536xf32>
      %cst_28 = arith.constant dense<0.000000e+00> : vector<2xf32>
      %50 = vector.multi_reduction <add>, %49, %cst_28 [1] : vector<2x1536xf32> to vector<2xf32>
      %51 = vector.shape_cast %50 : vector<2xf32> to vector<2x1xf32>
      %cst_29 = arith.constant 1.536000e+03 : f32
      %52 = vector.broadcast %cst_29 : f32 to vector<2x1xf32>
      %53 = arith.divf %51, %52 : vector<2x1xf32>
      %cst_30 = arith.constant 9.99999974E-6 : f32
      %54 = vector.broadcast %cst_30 : f32 to vector<2x1xf32>
      %55 = arith.addf %53, %54 : vector<2x1xf32>
      %56 = math.rsqrt %55 : vector<2x1xf32>
      %57 = vector.broadcast %56 : vector<2x1xf32> to vector<2x1536xf32>
      %58 = arith.mulf %48, %57 : vector<2x1536xf32>
      %c0_31 = arith.constant 0 : index
      %c0_32 = arith.constant 0 : index
      %59 = vector.load %arg7[%c0_31, %c0_32] : memref<1x1536xf32, #tpu.memory_space<vmem>>, vector<1x1536xf32>
      %60 = vector.broadcast %59 : vector<1x1536xf32> to vector<2x1536xf32>
      %61 = arith.mulf %58, %60 : vector<2x1536xf32>
      %c0_33 = arith.constant 0 : index
      %c0_34 = arith.constant 0 : index
      %62 = vector.load %arg8[%c0_33, %c0_34] : memref<1x1536xf32, #tpu.memory_space<vmem>>, vector<1x1536xf32>
      %63 = vector.broadcast %62 : vector<1x1536xf32> to vector<2x1536xf32>
      %64 = arith.addf %61, %63 : vector<2x1536xf32>
      %65 = arith.truncf %64 : vector<2x1536xf32> to vector<2x1536xbf16>
      %c0_35 = arith.constant 0 : index
      %c0_36 = arith.constant 0 : index
      %66 = vector.load %arg9[%c0_35, %c0_36] : memref<1536x1024xbf16, #tpu.memory_space<vmem>>, vector<1536x1024xbf16>
      %cst_37 = arith.constant dense<0.000000e+00> : vector<2x1024xf32>
      %67 = tpu.matmul %65, %66, %cst_37 {dimension_numbers = #tpu.dot_dimension_numbers<[1], [0], [0], [1], [0, 0, 1, 1], [], []>} : vector<2x1536xbf16>, vector<1536x1024xbf16>, vector<2x1024xf32> -> vector<2x1024xf32>
      %c0_38 = arith.constant 0 : index
      %c0_39 = arith.constant 0 : index
      %68 = vector.load %arg10[%c0_38, %c0_39] : memref<1x1024xf32, #tpu.memory_space<vmem>>, vector<1x1024xf32>
      %69 = vector.broadcast %68 : vector<1x1024xf32> to vector<2x1024xf32>
      %70 = arith.addf %67, %69 : vector<2x1024xf32>
      %cst_40 = arith.constant 5.000000e-01 : f32
      %71 = vector.broadcast %cst_40 : f32 to vector<2x1024xf32>
      %72 = arith.mulf %71, %70 : vector<2x1024xf32>
      %cst_41 = arith.constant 0.707106769 : f32
      %73 = vector.broadcast %cst_41 : f32 to vector<2x1024xf32>
      %74 = arith.mulf %70, %73 : vector<2x1024xf32>
      %75 = math.erf %74 : vector<2x1024xf32>
      %cst_42 = arith.constant 1.000000e+00 : f32
      %76 = vector.broadcast %cst_42 : f32 to vector<2x1024xf32>
      %77 = arith.addf %76, %75 : vector<2x1024xf32>
      %78 = arith.mulf %72, %77 : vector<2x1024xf32>
      %79 = arith.truncf %78 : vector<2x1024xf32> to vector<2x1024xbf16>
      %c0_43 = arith.constant 0 : index
      %c0_44 = arith.constant 0 : index
      %80 = vector.load %arg11[%c0_43, %c0_44] : memref<1024x128xbf16, #tpu.memory_space<vmem>>, vector<1024x128xbf16>
      %cst_45 = arith.constant dense<0.000000e+00> : vector<2x128xf32>
      %81 = tpu.matmul %79, %80, %cst_45 {dimension_numbers = #tpu.dot_dimension_numbers<[1], [0], [0], [1], [0, 0, 1, 1], [], []>} : vector<2x1024xbf16>, vector<1024x128xbf16>, vector<2x128xf32> -> vector<2x128xf32>
      %c0_46 = arith.constant 0 : index
      %c0_47 = arith.constant 0 : index
      %82 = vector.load %arg12[%c0_46, %c0_47] : memref<1x128xf32, #tpu.memory_space<vmem>>, vector<1x128xf32>
      %83 = vector.broadcast %82 : vector<1x128xf32> to vector<2x128xf32>
      %84 = arith.addf %81, %83 : vector<2x128xf32>
      %85 = vector.shape_cast %84 : vector<2x128xf32> to vector<2x1x128xf32>
      %c0_48 = arith.constant 0 : index
      %c0_49 = arith.constant 0 : index
      %c0_50 = arith.constant 0 : index
      %86 = vector.load %arg13[%c0_48, %c0_49, %c0_50] : memref<2x1x128xf32, #tpu.memory_space<vmem>>, vector<2x1x128xf32>
      tpu.vector_store %arg13[%c0_48, %c0_49, %c0_50], %85 {strides = array<i32>} : memref<2x1x128xf32, #tpu.memory_space<vmem>>, vector<2x1x128xf32>,
    } else {
    }
    return
  }
  func.func @transform_0(%arg0: i32, %arg1: i32) -> (i32, i32, i32) {
    %c0_i32 = arith.constant 0 : i32
    %c0_i32_0 = arith.constant 0 : i32
    return %arg0, %arg1, %c0_i32 : i32, i32, i32
  }
  func.func @transform_1(%arg0: i32, %arg1: i32) -> (i32, i32) {
    %c0_i32 = arith.constant 0 : i32
    %c0_i32_0 = arith.constant 0 : i32
    %c0_i32_1 = arith.constant 0 : i32
    return %c0_i32, %c0_i32_0 : i32, i32
  }
  func.func @transform_2(%arg0: i32, %arg1: i32) -> (i32, i32) {
    %c0_i32 = arith.constant 0 : i32
    %c0_i32_0 = arith.constant 0 : i32
    %c0_i32_1 = arith.constant 0 : i32
    return %c0_i32, %c0_i32_0 : i32, i32
  }
  func.func @transform_3(%arg0: i32, %arg1: i32) -> (i32, i32) {
    %c0_i32 = arith.constant 0 : i32
    %c0_i32_0 = arith.constant 0 : i32
    %c0_i32_1 = arith.constant 0 : i32
    return %c0_i32, %c0_i32_0 : i32, i32
  }
  func.func @transform_4(%arg0: i32, %arg1: i32) -> (i32, i32) {
    %c0_i32 = arith.constant 0 : i32
    %c0_i32_0 = arith.constant 0 : i32
    %c0_i32_1 = arith.constant 0 : i32
    return %c0_i32, %c0_i32_0 : i32, i32
  }
  func.func @transform_5(%arg0: i32, %arg1: i32) -> (i32, i32) {
    %c0_i32 = arith.constant 0 : i32
    %c0_i32_0 = arith.constant 0 : i32
    %c0_i32_1 = arith.constant 0 : i32
    return %c0_i32, %c0_i32_0 : i32, i32
  }
  func.func @transform_6(%arg0: i32, %arg1: i32) -> (i32, i32) {
    %c0_i32 = arith.constant 0 : i32
    %c0_i32_0 = arith.constant 0 : i32
    %c0_i32_1 = arith.constant 0 : i32
    return %c0_i32, %c0_i32_0 : i32, i32
  }
  func.func @transform_7(%arg0: i32, %arg1: i32) -> (i32, i32) {
    %c0_i32 = arith.constant 0 : i32
    %c0_i32_0 = arith.constant 0 : i32
    %c0_i32_1 = arith.constant 0 : i32
    return %c0_i32, %c0_i32_0 : i32, i32
  }
  func.func @transform_8(%arg0: i32, %arg1: i32) -> (i32, i32) {
    %c0_i32 = arith.constant 0 : i32
    %c0_i32_0 = arith.constant 0 : i32
    %c0_i32_1 = arith.constant 0 : i32
    return %c0_i32, %c0_i32_0 : i32, i32
  }
  func.func @transform_9(%arg0: i32, %arg1: i32) -> (i32, i32) {
    %c0_i32 = arith.constant 0 : i32
    %c0_i32_0 = arith.constant 0 : i32
    %c0_i32_1 = arith.constant 0 : i32
    return %c0_i32, %c0_i32_0 : i32, i32
  }
  func.func @transform_10(%arg0: i32, %arg1: i32) -> (i32, i32) {
    %c0_i32 = arith.constant 0 : i32
    %c0_i32_0 = arith.constant 0 : i32
    %c0_i32_1 = arith.constant 0 : i32
    return %c0_i32, %c0_i32_0 : i32, i32
  }
  func.func @transform_11(%arg0: i32, %arg1: i32) -> (i32, i32, i32) {
    %c0_i32 = arith.constant 0 : i32
    %c0_i32_0 = arith.constant 0 : i32
    %c0_i32_1 = arith.constant 0 : i32
    return %arg0, %c0_i32, %c0_i32_0 : i32, i32, i32
  }
}

</mosaic_0001>

<llo_original>
// kernel: tpu_custom_call.1
$region0: #{tpu_custom_call.1}
  #allocation0 [shape = 'u32[]', space=smem, size = 0x4, offset = 0x4, fixed_abs, tag = 'smem constant byte address 0x4 - core index']
  #allocation1 [shape = 'u32[72,128]{1,0:T(1,128)}', space=vmem, size = 0x9000, scoped, tag = 'internal scratch']
  #allocation2 [shape = 'f32[2,1536]{1,0:T(2,128)}', space=vmem, size = 0x3000, scoped, tag = 'scratch operand']
  %s0 = inlined_call_operand.hbm [shape: bf16[2,16,48], index: 0, kind: input, shape index: {}]
  %s1 = inlined_call_operand.hbm [shape: bf16[48,1536], index: 1, kind: input, shape index: {}]
  %s2 = inlined_call_operand.hbm [shape: f32[1,1536], index: 2, kind: input, shape index: {}]
  %s3 = inlined_call_operand.hbm [shape: f32[1,1536], index: 3, kind: input, shape index: {}]
  %s4 = inlined_call_operand.hbm [shape: f32[1,1536], index: 4, kind: input, shape index: {}]
  %s5 = inlined_call_operand.hbm [shape: f32[1,1536], index: 5, kind: input, shape index: {}]
  %s6 = inlined_call_operand.hbm [shape: f32[1,1536], index: 6, kind: input, shape index: {}]
  %s7 = inlined_call_operand.hbm [shape: bf16[1536,1024], index: 7, kind: input, shape index: {}]
  %s8 = inlined_call_operand.hbm [shape: f32[1,1024], index: 8, kind: input, shape index: {}]
  %s9 = inlined_call_operand.hbm [shape: bf16[1024,128], index: 9, kind: input, shape index: {}]
  %s10 = inlined_call_operand.hbm [shape: f32[1,128], index: 10, kind: input, shape index: {}]
  %s11 = inlined_call_operand.hbm [shape: f32[2,1,128], index: 11, kind: output, shape index: {}]
  %s12 = sld [smem:[#allocation0]]
  $region106: #{tpu_custom_call.1} parent=0
    _
  %s14 = ssub.s32 1, %s12
  %s15 = scalar_select 0, %s14, %s12
  $region1: #{tpu_custom_call.1} parent=0
    #allocation3 [shape = 'u8[8192]{0}', space=vmem, size = 0x2000, scoped, tag = 'input window, operand 0, single buffered']
    #allocation4 [shape = 's32[1]{0}', space=sflag, size = 0x4, scoped, tag = 'scoped memory for tpu_custom_call.1']
    #allocation5 [shape = 's32[1]{0}', space=sflag, size = 0x4, scoped, tag = 'scoped memory for tpu_custom_call.1']
    #allocation6 [shape = 'u8[147456]{0}', space=vmem, size = 0x24000, scoped, tag = 'input window, operand 1, single buffered']
    #allocation7 [shape = 's32[1]{0}', space=sflag, size = 0x4, scoped, tag = 'scoped memory for tpu_custom_call.1']
    #allocation8 [shape = 'u8[6144]{0}', space=vmem, size = 0x1800, scoped, tag = 'input window, operand 2, single buffered']
    #allocation9 [shape = 'u8[6144]{0}', space=vmem, size = 0x1800, scoped, tag = 'input window, operand 3, single buffered']
    #allocation10 [shape = 's32[1]{0}', space=sflag, size = 0x4, scoped, tag = 'scoped memory for tpu_custom_call.1']
    #allocation11 [shape = 'u8[6144]{0}', space=vmem, size = 0x1800, scoped, tag = 'input window, operand 4, single buffered']
    #allocation12 [shape = 'u8[6144]{0}', space=vmem, size = 0x1800, scoped, tag = 'input window, operand 5, single buffered']
    #allocation13 [shape = 's32[1]{0}', space=sflag, size = 0x4, scoped, tag = 'scoped memory for tpu_custom_call.1']
    #allocation14 [shape = 'u8[6144]{0}', space=vmem, size = 0x1800, scoped, tag = 'input window, operand 6, single buffered']
    #allocation15 [shape = 'u8[3145728]{0}', space=vmem, size = 0x300000, scoped, tag = 'input window, operand 7, single buffered']
    #allocation16 [shape = 's32[1]{0}', space=sflag, size = 0x4, scoped, tag = 'scoped memory for tpu_custom_call.1']
    #allocation17 [shape = 'u8[4096]{0}', space=vmem, size = 0x1000, scoped, tag = 'input window, operand 8, single buffered']
    #allocation18 [shape = 'u8[262144]{0}', space=vmem, size = 0x40000, scoped, tag = 'input window, operand 9, single buffered']
    #allocation19 [shape = 's32[1]{0}', space=sflag, size = 0x4, scoped, tag = 'scoped memory for tpu_custom_call.1']
    #allocation20 [shape = 'u8[512]{0}', space=vmem, size = 0x400, scoped, tag = 'input window, operand 10, single buffered']
    #allocation21 [shape = 'u8[1024]{0}', space=vmem, size = 0x400, scoped, tag = 'output window, operand 0, single buffered']
    %16 = vsyncpa [#allocation4], 0
    %17 = vsyncpa [#allocation7], 0
    %18 = vsyncpa [#allocation10], 0
    %19 = vsyncpa [#allocation13], 0
    %20 = vsyncpa [#allocation16], 0
    %21 = vsyncpa [#allocation19], 0
    %22 = vsyncpa [#allocation5], 0
    // Predicated region
    $region2: #{tpu_custom_call.1} parent=1 // pred_check
      _
    $region3: #{tpu_custom_call.1} parent=1 // pred_check_branch
      %24 = sbr.rel (0) target = $region5
    $region4: #{tpu_custom_call.1} parent=1 // pred_region
      %26 = vsyncadd [#allocation4], 0
      %s27 = sshll.u32 %s0, 4
      %s28 = int_to_ptr.hbm [resolvable:$true] %s27
      %s29 = sshll.u32 [#allocation3], 4
      %s30 = int_to_ptr.vmem [resolvable:$true] %s29
      %35 = dma.hbm_to_vmem [thread:$0]  %s28, 256, %s30, [#allocation4], 64, 64, 4
    $region5: #{tpu_custom_call.1} parent=1 // pred_fallthru
      _
    // Predicated region
    $region6: #{tpu_custom_call.1} parent=1 // pred_check
      _
    $region7: #{tpu_custom_call.1} parent=1 // pred_check_branch
      %37 = sbr.rel (0) target = $region9
    $region8: #{tpu_custom_call.1} parent=1 // pred_region
      %39 = vsyncadd [#allocation7], 0
      %s40 = sshll.u32 %s1, 4
      %s41 = int_to_ptr.hbm [resolvable:$true] %s40
      %s42 = sshll.u32 [#allocation6], 4
      %s43 = int_to_ptr.vmem [resolvable:$true] %s42
      %48 = dma.hbm_to_vmem [thread:$0]  %s41, 4608, %s43, [#allocation7], 768, 768, 48
    $region9: #{tpu_custom_call.1} parent=1 // pred_fallthru
      _
    // Predicated region
    $region10: #{tpu_custom_call.1} parent=1 // pred_check
      _
    $region11: #{tpu_custom_call.1} parent=1 // pred_check_branch
      %50 = sbr.rel (0) target = $region13
    $region12: #{tpu_custom_call.1} parent=1 // pred_region
      %52 = vsyncadd [#allocation7], 0
      %s54 = sshll.u32 %s2, 4
      %s55 = int_to_ptr.hbm [resolvable:$true] %s54
      %s56 = sshll.u32 [#allocation8], 4
      %s57 = int_to_ptr.vmem [resolvable:$true] %s56
      %59 = dma.hbm_to_vmem [thread:$0]  %s55, 192, %s57, [#allocation7]
    $region13: #{tpu_custom_call.1} parent=1 // pred_fallthru
      _
    // Predicated region
    $region14: #{tpu_custom_call.1} parent=1 // pred_check
      _
    $region15: #{tpu_custom_call.1} parent=1 // pred_check_branch
      %61 = sbr.rel (0) target = $region17
    $region16: #{tpu_custom_call.1} parent=1 // pred_region
      %63 = vsyncadd [#allocation10], 0
      %s65 = sshll.u32 %s3, 4
      %s66 = int_to_ptr.hbm [resolvable:$true] %s65
      %s67 = sshll.u32 [#allocation9], 4
      %s68 = int_to_ptr.vmem [resolvable:$true] %s67
      %70 = dma.hbm_to_vmem [thread:$0]  %s66, 192, %s68, [#allocation10]
    $region17: #{tpu_custom_call.1} parent=1 // pred_fallthru
      _
    // Predicated region
    $region18: #{tpu_custom_call.1} parent=1 // pred_check
      _
    $region19: #{tpu_custom_call.1} parent=1 // pred_check_branch
      %72 = sbr.rel (0) target = $region21
    $region20: #{tpu_custom_call.1} parent=1 // pred_region
      %74 = vsyncadd [#allocation10], 0
      %s76 = sshll.u32 %s4, 4
      %s77 = int_to_ptr.hbm [resolvable:$true] %s76
      %s78 = sshll.u32 [#allocation11], 4
      %s79 = int_to_ptr.vmem [resolvable:$true] %s78
      %81 = dma.hbm_to_vmem [thread:$0]  %s77, 192, %s79, [#allocation10]
    $region21: #{tpu_custom_call.1} parent=1 // pred_fallthru
      _
    // Predicated region
    $region22: #{tpu_custom_call.1} parent=1 // pred_check
      _
    $region23: #{tpu_custom_call.1} parent=1 // pred_check_branch
      %83 = sbr.rel (0) target = $region25
    $region24: #{tpu_custom_call.1} parent=1 // pred_region
      %85 = vsyncadd [#allocation13], 0
      %s87 = sshll.u32 %s5, 4
      %s88 = int_to_ptr.hbm [resolvable:$true] %s87
      %s89 = sshll.u32 [#allocation12], 4
      %s90 = int_to_ptr.vmem [resolvable:$true] %s89
      %92 = dma.hbm_to_vmem [thread:$0]  %s88, 192, %s90, [#allocation13]
    $region25: #{tpu_custom_call.1} parent=1 // pred_fallthru
      _
    // Predicated region
    $region26: #{tpu_custom_call.1} parent=1 // pred_check
      _
    $region27: #{tpu_custom_call.1} parent=1 // pred_check_branch
      %94 = sbr.rel (0) target = $region29
    $region28: #{tpu_custom_call.1} parent=1 // pred_region
      %96 = vsyncadd [#allocation13], 0
      %s98 = sshll.u32 %s6, 4
      %s99 = int_to_ptr.hbm [resolvable:$true] %s98
      %s100 = sshll.u32 [#allocation14], 4
      %s101 = int_to_ptr.vmem [resolvable:$true] %s100
      %103 = dma.hbm_to_vmem [thread:$0]  %s99, 192, %s101, [#allocation13]
    $region29: #{tpu_custom_call.1} parent=1 // pred_fallthru
      _
    // Predicated region
    $region30: #{tpu_custom_call.1} parent=1 // pred_check
      _
    $region31: #{tpu_custom_call.1} parent=1 // pred_check_branch
      %105 = sbr.rel (0) target = $region33
    $region32: #{tpu_custom_call.1} parent=1 // pred_region
      %107 = vsyncadd [#allocation16], 0
      %s108 = sshll.u32 %s7, 4
      %s109 = int_to_ptr.hbm [resolvable:$true] %s108
      %s110 = sshll.u32 [#allocation15], 4
      %s111 = int_to_ptr.vmem [resolvable:$true] %s110
      %116 = dma.hbm_to_vmem [thread:$0]  %s109, 98304, %s111, [#allocation16], 512, 512, 32
    $region33: #{tpu_custom_call.1} parent=1 // pred_fallthru
      _
    // Predicated region
    $region34: #{tpu_custom_call.1} parent=1 // pred_check
      _
    $region35: #{tpu_custom_call.1} parent=1 // pred_check_branch
      %118 = sbr.rel (0) target = $region37
    $region36: #{tpu_custom_call.1} parent=1 // pred_region
      %120 = vsyncadd [#allocation16], 0
      %s122 = sshll.u32 %s8, 4
      %s123 = int_to_ptr.hbm [resolvable:$true] %s122
      %s124 = sshll.u32 [#allocation17], 4
      %s125 = int_to_ptr.vmem [resolvable:$true] %s124
      %127 = dma.hbm_to_vmem [thread:$0]  %s123, 128, %s125, [#allocation16]
    $region37: #{tpu_custom_call.1} parent=1 // pred_fallthru
      _
    // Predicated region
    $region38: #{tpu_custom_call.1} parent=1 // pred_check
      _
    $region39: #{tpu_custom_call.1} parent=1 // pred_check_branch
      %129 = sbr.rel (0) target = $region41
    $region40: #{tpu_custom_call.1} parent=1 // pred_region
      %131 = vsyncadd [#allocation19], 0
      %s132 = sshll.u32 %s9, 4
      %s133 = int_to_ptr.hbm [resolvable:$true] %s132
      %s134 = sshll.u32 [#allocation18], 4
      %s135 = int_to_ptr.vmem [resolvable:$true] %s134
      %140 = dma.hbm_to_vmem [thread:$0]  %s133, 8192, %s135, [#allocation19], 64, 64, 4
    $region41: #{tpu_custom_call.1} parent=1 // pred_fallthru
      _
    // Predicated region
    $region42: #{tpu_custom_call.1} parent=1 // pred_check
      _
    $region43: #{tpu_custom_call.1} parent=1 // pred_check_branch
      %142 = sbr.rel (0) target = $region45
    $region44: #{tpu_custom_call.1} parent=1 // pred_region
      %144 = vsyncadd [#allocation19], 0
      %s146 = sshll.u32 %s10, 4
      %s147 = int_to_ptr.hbm [resolvable:$true] %s146
      %s148 = sshll.u32 [#allocation20], 4
      %s149 = int_to_ptr.vmem [resolvable:$true] %s148
      %151 = dma.hbm_to_vmem [thread:$0]  %s147, 16, %s149, [#allocation19]
    $region45: #{tpu_custom_call.1} parent=1 // pred_fallthru
      _
    // Predicated region
    $region46: #{tpu_custom_call.1} parent=1 // pred_check
      _
    $region47: #{tpu_custom_call.1} parent=1 // pred_check_branch
      %153 = sbr.rel (0) target = $region49
    $region48: #{tpu_custom_call.1} parent=1 // pred_region
      %155 = dma.done [#allocation4], 256
    $region49: #{tpu_custom_call.1} parent=1 // pred_fallthru
      _
    // Predicated region
    $region50: #{tpu_custom_call.1} parent=1 // pred_check
      _
    $region51: #{tpu_custom_call.1} parent=1 // pred_check_branch
      %157 = sbr.rel (0) target = $region53
    $region52: #{tpu_custom_call.1} parent=1 // pred_region
      %159 = dma.done [#allocation7], 4608
    $region53: #{tpu_custom_call.1} parent=1 // pred_fallthru
      _
    // Predicated region
    $region54: #{tpu_custom_call.1} parent=1 // pred_check
      _
    $region55: #{tpu_custom_call.1} parent=1 // pred_check_branch
      %161 = sbr.rel (0) target = $region57
    $region56: #{tpu_custom_call.1} parent=1 // pred_region
      %163 = dma.done [#allocation7], 192
    $region57: #{tpu_custom_call.1} parent=1 // pred_fallthru
      _
    // Predicated region
    $region58: #{tpu_custom_call.1} parent=1 // pred_check
      _
    $region59: #{tpu_custom_call.1} parent=1 // pred_check_branch
      %165 = sbr.rel (0) target = $region61
    $region60: #{tpu_custom_call.1} parent=1 // pred_region
      %167 = dma.done [#allocation10], 192
    $region61: #{tpu_custom_call.1} parent=1 // pred_fallthru
      _
    // Predicated region
    $region62: #{tpu_custom_call.1} parent=1 // pred_check
      _
    $region63: #{tpu_custom_call.1} parent=1 // pred_check_branch
      %169 = sbr.rel (0) target = $region65
    $region64: #{tpu_custom_call.1} parent=1 // pred_region
      %171 = dma.done [#allocation10], 192
    $region65: #{tpu_custom_call.1} parent=1 // pred_fallthru
      _
    // Predicated region
    $region66: #{tpu_custom_call.1} parent=1 // pred_check
      _
    $region67: #{tpu_custom_call.1} parent=1 // pred_check_branch
      %173 = sbr.rel (0) target = $region69
    $region68: #{tpu_custom_call.1} parent=1 // pred_region
      %175 = dma.done [#allocation13], 192
    $region69: #{tpu_custom_call.1} parent=1 // pred_fallthru
      _
    // Predicated region
    $region70: #{tpu_custom_call.1} parent=1 // pred_check
      _
    $region71: #{tpu_custom_call.1} parent=1 // pred_check_branch
      %177 = sbr.rel (0) target = $region73
    $region72: #{tpu_custom_call.1} parent=1 // pred_region
      %179 = dma.done [#allocation13], 192
    $region73: #{tpu_custom_call.1} parent=1 // pred_fallthru
      _
    // Predicated region
    $region74: #{tpu_custom_call.1} parent=1 // pred_check
      _
    $region75: #{tpu_custom_call.1} parent=1 // pred_check_branch
      %181 = sbr.rel (0) target = $region77
    $region76: #{tpu_custom_call.1} parent=1 // pred_region
      %183 = dma.done [#allocation16], 98304
    $region77: #{tpu_custom_call.1} parent=1 // pred_fallthru
      _
    // Predicated region
    $region78: #{tpu_custom_call.1} parent=1 // pred_check
      _
    $region79: #{tpu_custom_call.1} parent=1 // pred_check_branch
      %185 = sbr.rel (0) target = $region81
    $region80: #{tpu_custom_call.1} parent=1 // pred_region
      %187 = dma.done [#allocation16], 128
    $region81: #{tpu_custom_call.1} parent=1 // pred_fallthru
      _
    // Predicated region
    $region82: #{tpu_custom_call.1} parent=1 // pred_check
      _
    $region83: #{tpu_custom_call.1} parent=1 // pred_check_branch
      %189 = sbr.rel (0) target = $region85
    $region84: #{tpu_custom_call.1} parent=1 // pred_region
      %191 = dma.done [#allocation19], 8192
    $region85: #{tpu_custom_call.1} parent=1 // pred_fallthru
      _
    // Predicated region
    $region86: #{tpu_custom_call.1} parent=1 // pred_check
      _
    $region87: #{tpu_custom_call.1} parent=1 // pred_check_branch
      %193 = sbr.rel (0) target = $region89
    $region88: #{tpu_custom_call.1} parent=1 // pred_region
      %195 = dma.done [#allocation19], 16
    $region89: #{tpu_custom_call.1} parent=1 // pred_fallthru
      _
    %v197 = vld [vmem:[#allocation3] sm:$0xf]
    %v198 = vld [vmem:[#allocation3 + $0x4] sm:$0xf]
    %v199 = vld [vmem:[#allocation3 + $0x8] sm:$0xf]
    %v200 = vld [vmem:[#allocation3 + $0xc] sm:$0xf]
    %v201 = vld [vmem:[#allocation6] sm:$0xff]
    %v202 = vld [vmem:[#allocation6 + $0x8] sm:$0xff]
    %v203 = vld [vmem:[#allocation6 + $0x10] sm:$0xff]
    %v204 = vld [vmem:[#allocation6 + $0x18] sm:$0xff]
    %v205 = vld [vmem:[#allocation6 + $0x20] sm:$0xff]
    %v206 = vld [vmem:[#allocation6 + $0x28] sm:$0xff]
    %v207 = vld [vmem:[#allocation6 + $0x30] sm:$0xff]
    %v208 = vld [vmem:[#allocation6 + $0x38] sm:$0xff]
    %v209 = vld [vmem:[#allocation6 + $0x40] sm:$0xff]
    %v210 = vld [vmem:[#allocation6 + $0x48] sm:$0xff]
    %v211 = vld [vmem:[#allocation6 + $0x50] sm:$0xff]
    %v212 = vld [vmem:[#allocation6 + $0x58] sm:$0xff]
    %v213 = vld [vmem:[#allocation6 + $0x60] sm:$0xff]
    %v214 = vld [vmem:[#allocation6 + $0x68] sm:$0xff]
    %v215 = vld [vmem:[#allocation6 + $0x70] sm:$0xff]
    %v216 = vld [vmem:[#allocation6 + $0x78] sm:$0xff]
    %v217 = vld [vmem:[#allocation6 + $0x80] sm:$0xff]
    %v218 = vld [vmem:[#allocation6 + $0x88] sm:$0xff]
    %v219 = vld [vmem:[#allocation6 + $0x90] sm:$0xff]
    %v220 = vld [vmem:[#allocation6 + $0x98] sm:$0xff]
    %v221 = vld [vmem:[#allocation6 + $0xa0] sm:$0xff]
    %v222 = vld [vmem:[#allocation6 + $0xa8] sm:$0xff]
    %v223 = vld [vmem:[#allocation6 + $0xb0] sm:$0xff]
    %v224 = vld [vmem:[#allocation6 + $0xb8] sm:$0xff]
    %v225 = vld [vmem:[#allocation6 + $0xc0] sm:$0xff]
    %v226 = vld [vmem:[#allocation6 + $0xc8] sm:$0xff]
    %v227 = vld [vmem:[#allocation6 + $0xd0] sm:$0xff]
    %v228 = vld [vmem:[#allocation6 + $0xd8] sm:$0xff]
    %v229 = vld [vmem:[#allocation6 + $0xe0] sm:$0xff]
    %v230 = vld [vmem:[#allocation6 + $0xe8] sm:$0xff]
    %v231 = vld [vmem:[#allocation6 + $0xf0] sm:$0xff]
    %v232 = vld [vmem:[#allocation6 + $0xf8] sm:$0xff]
    %v233 = vld [vmem:[#allocation6 + $0x100] sm:$0xff]
    %v234 = vld [vmem:[#allocation6 + $0x108] sm:$0xff]
    %v235 = vld [vmem:[#allocation6 + $0x110] sm:$0xff]
    %v236 = vld [vmem:[#allocation6 + $0x118] sm:$0xff]
    %v237 = vld [vmem:[#allocation8] sm:$0xff]
    %v238 = vld [vmem:[#allocation8 + $0x8] sm:$0xf]
    %v241 = vperm.slane %v237, 0
    %v242 = vperm.slane %v237, 1
    %v243 = vperm.slane %v237, 2
    %v244 = vperm.slane %v237, 3
    %v245 = vperm.slane %v237, 4
    %v246 = vperm.slane %v237, 5
    %v247 = vperm.slane %v237, 6
    %v248 = vperm.slane %v237, 7
    %v249 = vperm.slane %v238, 0
    %v250 = vperm.slane %v238, 1
    %v251 = vperm.slane %v238, 2
    %v252 = vperm.slane %v238, 3
    %v269 = vunpack.c.l.b16 %v197
    %v270 = vunpack.c.l.b16 %v198
    %v271 = vunpack.c.l.b16 %v199
    %v272 = vunpack.c.l.b16 %v200
    %v273 = vpack.c.b16 %v270, %v269
    %v274 = vpack.c.b16 %v272, %v271
    %v311 = vunpack.c.l.b16 %v201
    %v312 = vunpack.c.h.b16 %v201
    %v313 = vunpack.c.l.b16 %v202
    %v314 = vunpack.c.h.b16 %v202
    %v315 = vunpack.c.l.b16 %v203
    %v316 = vunpack.c.h.b16 %v203
    %v317 = vunpack.c.l.b16 %v204
    %v318 = vunpack.c.h.b16 %v204
    %v319 = vunpack.c.l.b16 %v205
    %v320 = vunpack.c.h.b16 %v205
    %v321 = vunpack.c.l.b16 %v206
    %v322 = vunpack.c.h.b16 %v206
    %v323 = vunpack.c.l.b16 %v207
    %v324 = vunpack.c.h.b16 %v207
    %v325 = vunpack.c.l.b16 %v208
    %v326 = vunpack.c.h.b16 %v208
    %v327 = vunpack.c.l.b16 %v209
    %v328 = vunpack.c.h.b16 %v209
    %v329 = vunpack.c.l.b16 %v210
    %v330 = vunpack.c.h.b16 %v210
    %v331 = vunpack.c.l.b16 %v211
    %v332 = vunpack.c.h.b16 %v211
    %v333 = vunpack.c.l.b16 %v212
    %v334 = vunpack.c.h.b16 %v212
    %v335 = vunpack.c.l.b16 %v213
    %v336 = vunpack.c.h.b16 %v213
    %v337 = vunpack.c.l.b16 %v214
    %v338 = vunpack.c.h.b16 %v214
    %v339 = vunpack.c.l.b16 %v215
    %v340 = vunpack.c.h.b16 %v215
    %v341 = vunpack.c.l.b16 %v216
    %v342 = vunpack.c.h.b16 %v216
    %v343 = vunpack.c.l.b16 %v217
    %v344 = vunpack.c.h.b16 %v217
    %v345 = vunpack.c.l.b16 %v218
    %v346 = vunpack.c.h.b16 %v218
    %v347 = vunpack.c.l.b16 %v219
    %v348 = vunpack.c.h.b16 %v219
    %v349 = vunpack.c.l.b16 %v220
    %v350 = vunpack.c.h.b16 %v220
    %v351 = vunpack.c.l.b16 %v221
    %v352 = vunpack.c.h.b16 %v221
    %v353 = vunpack.c.l.b16 %v222
    %v354 = vunpack.c.h.b16 %v222
    %v355 = vunpack.c.l.b16 %v223
    %v356 = vunpack.c.h.b16 %v223
    %v357 = vunpack.c.l.b16 %v224
    %v358 = vunpack.c.h.b16 %v224
    %v359 = vunpack.c.l.b16 %v225
    %v360 = vunpack.c.h.b16 %v225
    %v361 = vunpack.c.l.b16 %v226
    %v362 = vunpack.c.h.b16 %v226
    %v363 = vunpack.c.l.b16 %v227
    %v364 = vunpack.c.h.b16 %v227
    %v365 = vunpack.c.l.b16 %v228
    %v366 = vunpack.c.h.b16 %v228
    %v367 = vunpack.c.l.b16 %v229
    %v368 = vunpack.c.h.b16 %v229
    %v369 = vunpack.c.l.b16 %v230
    %v370 = vunpack.c.h.b16 %v230
    %v371 = vunpack.c.l.b16 %v231
    %v372 = vunpack.c.h.b16 %v231
    %v373 = vunpack.c.l.b16 %v232
    %v374 = vunpack.c.h.b16 %v232
    %v375 = vunpack.c.l.b16 %v233
    %v376 = vunpack.c.h.b16 %v233
    %v377 = vunpack.c.l.b16 %v234
    %v378 = vunpack.c.h.b16 %v234
    %v379 = vunpack.c.l.b16 %v235
    %v380 = vunpack.c.h.b16 %v235
    %v381 = vunpack.c.l.b16 %v236
    %v382 = vunpack.c.h.b16 %v236
    %v383 = vpack.c.b16 %v323, %v311
    %v384 = vpack.c.b16 %v324, %v312
    %v385 = vpack.c.b16 %v325, %v313
    %v386 = vpack.c.b16 %v326, %v314
    %v387 = vpack.c.b16 %v327, %v315
    %v388 = vpack.c.b16 %v328, %v316
    %v389 = vpack.c.b16 %v329, %v317
    %v390 = vpack.c.b16 %v330, %v318
    %v391 = vpack.c.b16 %v331, %v319
    %v392 = vpack.c.b16 %v332, %v320
    %v393 = vpack.c.b16 %v333, %v321
    %v394 = vpack.c.b16 %v334, %v322
    %v395 = vpack.c.b16 %v347, %v335
    %v396 = vpack.c.b16 %v348, %v336
    %v397 = vpack.c.b16 %v349, %v337
    %v398 = vpack.c.b16 %v350, %v338
    %v399 = vpack.c.b16 %v351, %v339
    %v400 = vpack.c.b16 %v352, %v340
    %v401 = vpack.c.b16 %v353, %v341
    %v402 = vpack.c.b16 %v354, %v342
    %v403 = vpack.c.b16 %v355, %v343
    %v404 = vpack.c.b16 %v356, %v344
    %v405 = vpack.c.b16 %v357, %v345
    %v406 = vpack.c.b16 %v358, %v346
    %v407 = vpack.c.b16 %v371, %v359
    %v408 = vpack.c.b16 %v372, %v360
    %v409 = vpack.c.b16 %v373, %v361
    %v410 = vpack.c.b16 %v374, %v362
    %v411 = vpack.c.b16 %v375, %v363
    %v412 = vpack.c.b16 %v376, %v364
    %v413 = vpack.c.b16 %v377, %v365
    %v414 = vpack.c.b16 %v378, %v366
    %v415 = vpack.c.b16 %v379, %v367
    %v416 = vpack.c.b16 %v380, %v368
    %v417 = vpack.c.b16 %v381, %v369
    %v418 = vpack.c.b16 %v382, %v370
    %vm455 = vcmask 392192
    %v457 = vsel %vm455, %v273, 0
    %v460 = vsel %vm455, %v274, 0
    %462 = vmatpush.bf16.msra.mxu0 0
    %463 = vmatpush.bf16.msra.mxu0 0
    %464 = vmatpush.bf16.msra.mxu0 0
    %465 = vmatpush.bf16.msra.mxu0 0
    %466 = vmatpush.bf16.msra.mxu0 0
    %467 = vmatpush.bf16.msra.mxu0 %v407
    %468 = vmatpush.bf16.msra.mxu0 %v395
    %469 = vmatpush.bf16.msra.mxu0 %v383
    %470 = vmatmul.bf16.gmra.mxu0 %v457
    %v471 = vpop.f32.mrf.mxu0
    %v472 = vadd.f32 %v241, %v471
    %v473 = vpop.f32.mrf.mxu0
    %v474 = vadd.f32 %v241, %v473
    %475 = vmatmul.bf16.gmra.mxu0 %v460
    %v476 = vpop.f32.mrf.mxu0
    %v477 = vadd.f32 %v241, %v476
    %v478 = vpop.f32.mrf.mxu0
    %v479 = vadd.f32 %v241, %v478
    %480 = vdwg.mxu0
    %481 = vmatpush.bf16.msra.mxu0 0
    %482 = vmatpush.bf16.msra.mxu0 0
    %483 = vmatpush.bf16.msra.mxu0 0
    %484 = vmatpush.bf16.msra.mxu0 0
    %485 = vmatpush.bf16.msra.mxu0 0
    %486 = vmatpush.bf16.msra.mxu0 %v408
    %487 = vmatpush.bf16.msra.mxu0 %v396
    %488 = vmatpush.bf16.msra.mxu0 %v384
    %489 = vmatmul.bf16.gmra.mxu0 %v457
    %v490 = vpop.f32.mrf.mxu0
    %v491 = vadd.f32 %v242, %v490
    %v492 = vpop.f32.mrf.mxu0
    %v493 = vadd.f32 %v242, %v492
    %494 = vmatmul.bf16.gmra.mxu0 %v460
    %v495 = vpop.f32.mrf.mxu0
    %v496 = vadd.f32 %v242, %v495
    %v497 = vpop.f32.mrf.mxu0
    %v498 = vadd.f32 %v242, %v497
    %499 = vdwg.mxu0
    %500 = vmatpush.bf16.msra.mxu0 0
    %501 = vmatpush.bf16.msra.mxu0 0
    %502 = vmatpush.bf16.msra.mxu0 0
    %503 = vmatpush.bf16.msra.mxu0 0
    %504 = vmatpush.bf16.msra.mxu0 0
    %505 = vmatpush.bf16.msra.mxu0 %v409
    %506 = vmatpush.bf16.msra.mxu0 %v397
    %507 = vmatpush.bf16.msra.mxu0 %v385
    %508 = vmatmul.bf16.gmra.mxu0 %v457
    %v509 = vpop.f32.mrf.mxu0
    %v510 = vadd.f32 %v243, %v509
    %v511 = vpop.f32.mrf.mxu0
    %v512 = vadd.f32 %v243, %v511
    %513 = vmatmul.bf16.gmra.mxu0 %v460
    %v514 = vpop.f32.mrf.mxu0
    %v515 = vadd.f32 %v243, %v514
    %v516 = vpop.f32.mrf.mxu0
    %v517 = vadd.f32 %v243, %v516
    %518 = vdwg.mxu0
    %519 = vmatpush.bf16.msra.mxu0 0
    %520 = vmatpush.bf16.msra.mxu0 0
    %521 = vmatpush.bf16.msra.mxu0 0
    %522 = vmatpush.bf16.msra.mxu0 0
    %523 = vmatpush.bf16.msra.mxu0 0
    %524 = vmatpush.bf16.msra.mxu0 %v410
    %525 = vmatpush.bf16.msra.mxu0 %v398
    %526 = vmatpush.bf16.msra.mxu0 %v386
    %527 = vmatmul.bf16.gmra.mxu0 %v457
    %v528 = vpop.f32.mrf.mxu0
    %v529 = vadd.f32 %v244, %v528
    %v530 = vpop.f32.mrf.mxu0
    %v531 = vadd.f32 %v244, %v530
    %532 = vmatmul.bf16.gmra.mxu0 %v460
    %v533 = vpop.f32.mrf.mxu0
    %v534 = vadd.f32 %v244, %v533
    %v535 = vpop.f32.mrf.mxu0
    %v536 = vadd.f32 %v244, %v535
    %537 = vdwg.mxu0
    %538 = vmatpush.bf16.msra.mxu0 0
    %539 = vmatpush.bf16.msra.mxu0 0
    %540 = vmatpush.bf16.msra.mxu0 0
    %541 = vmatpush.bf16.msra.mxu0 0
    %542 = vmatpush.bf16.msra.mxu0 0
    %543 = vmatpush.bf16.msra.mxu0 %v411
    %544 = vmatpush.bf16.msra.mxu0 %v399
    %545 = vmatpush.bf16.msra.mxu0 %v387
    %546 = vmatmul.bf16.gmra.mxu0 %v457
    %v547 = vpop.f32.mrf.mxu0
    %v548 = vadd.f32 %v245, %v547
    %v549 = vpop.f32.mrf.mxu0
    %v550 = vadd.f32 %v245, %v549
    %551 = vmatmul.bf16.gmra.mxu0 %v460
    %v552 = vpop.f32.mrf.mxu0
    %v553 = vadd.f32 %v245, %v552
    %v554 = vpop.f32.mrf.mxu0
    %v555 = vadd.f32 %v245, %v554
    %556 = vdwg.mxu0
    %557 = vmatpush.bf16.msra.mxu0 0
    %558 = vmatpush.bf16.msra.mxu0 0
    %559 = vmatpush.bf16.msra.mxu0 0
    %560 = vmatpush.bf16.msra.mxu0 0
    %561 = vmatpush.bf16.msra.mxu0 0
    %562 = vmatpush.bf16.msra.mxu0 %v412
    %563 = vmatpush.bf16.msra.mxu0 %v400
    %564 = vmatpush.bf16.msra.mxu0 %v388
    %565 = vmatmul.bf16.gmra.mxu0 %v457
    %v566 = vpop.f32.mrf.mxu0
    %v567 = vadd.f32 %v246, %v566
    %v568 = vpop.f32.mrf.mxu0
    %v569 = vadd.f32 %v246, %v568
    %570 = vmatmul.bf16.gmra.mxu0 %v460
    %v571 = vpop.f32.mrf.mxu0
    %v572 = vadd.f32 %v246, %v571
    %v573 = vpop.f32.mrf.mxu0
    %v574 = vadd.f32 %v246, %v573
    %575 = vdwg.mxu0
    %576 = vmatpush.bf16.msra.mxu0 0
    %577 = vmatpush.bf16.msra.mxu0 0
    %578 = vmatpush.bf16.msra.mxu0 0
    %579 = vmatpush.bf16.msra.mxu0 0
    %580 = vmatpush.bf16.msra.mxu0 0
    %581 = vmatpush.bf16.msra.mxu0 %v413
    %582 = vmatpush.bf16.msra.mxu0 %v401
    %583 = vmatpush.bf16.msra.mxu0 %v389
    %584 = vmatmul.bf16.gmra.mxu0 %v457
    %v585 = vpop.f32.mrf.mxu0
    %v586 = vadd.f32 %v247, %v585
    %v587 = vpop.f32.mrf.mxu0
    %v588 = vadd.f32 %v247, %v587
    %589 = vmatmul.bf16.gmra.mxu0 %v460
    %v590 = vpop.f32.mrf.mxu0
    %v591 = vadd.f32 %v247, %v590
    %v592 = vpop.f32.mrf.mxu0
    %v593 = vadd.f32 %v247, %v592
    %594 = vdwg.mxu0
    %595 = vmatpush.bf16.msra.mxu0 0
    %596 = vmatpush.bf16.msra.mxu0 0
    %597 = vmatpush.bf16.msra.mxu0 0
    %598 = vmatpush.bf16.msra.mxu0 0
    %599 = vmatpush.bf16.msra.mxu0 0
    %600 = vmatpush.bf16.msra.mxu0 %v414
    %601 = vmatpush.bf16.msra.mxu0 %v402
    %602 = vmatpush.bf16.msra.mxu0 %v390
    %603 = vmatmul.bf16.gmra.mxu0 %v457
    %v604 = vpop.f32.mrf.mxu0
    %v605 = vadd.f32 %v248, %v604
    %v606 = vpop.f32.mrf.mxu0
    %v607 = vadd.f32 %v248, %v606
    %608 = vmatmul.bf16.gmra.mxu0 %v460
    %v609 = vpop.f32.mrf.mxu0
    %v610 = vadd.f32 %v248, %v609
    %v611 = vpop.f32.mrf.mxu0
    %v612 = vadd.f32 %v248, %v611
    %613 = vdwg.mxu0
    %614 = vmatpush.bf16.msra.mxu0 0
    %615 = vmatpush.bf16.msra.mxu0 0
    %616 = vmatpush.bf16.msra.mxu0 0
    %617 = vmatpush.bf16.msra.mxu0 0
    %618 = vmatpush.bf16.msra.mxu0 0
    %619 = vmatpush.bf16.msra.mxu0 %v415
    %620 = vmatpush.bf16.msra.mxu0 %v403
    %621 = vmatpush.bf16.msra.mxu0 %v391
    %622 = vmatmul.bf16.gmra.mxu0 %v457
    %v623 = vpop.f32.mrf.mxu0
    %v624 = vadd.f32 %v249, %v623
    %v625 = vpop.f32.mrf.mxu0
    %v626 = vadd.f32 %v249, %v625
    %627 = vmatmul.bf16.gmra.mxu0 %v460
    %v628 = vpop.f32.mrf.mxu0
    %v629 = vadd.f32 %v249, %v628
    %v630 = vpop.f32.mrf.mxu0
    %v631 = vadd.f32 %v249, %v630
    %632 = vdwg.mxu0
    %633 = vmatpush.bf16.msra.mxu0 0
    %634 = vmatpush.bf16.msra.mxu0 0
    %635 = vmatpush.bf16.msra.mxu0 0
    %636 = vmatpush.bf16.msra.mxu0 0
    %637 = vmatpush.bf16.msra.mxu0 0
    %638 = vmatpush.bf16.msra.mxu0 %v416
    %639 = vmatpush.bf16.msra.mxu0 %v404
    %640 = vmatpush.bf16.msra.mxu0 %v392
    %641 = vmatmul.bf16.gmra.mxu0 %v457
    %v642 = vpop.f32.mrf.mxu0
    %v643 = vadd.f32 %v250, %v642
    %v644 = vpop.f32.mrf.mxu0
    %v645 = vadd.f32 %v250, %v644
    %646 = vmatmul.bf16.gmra.mxu0 %v460
    %v647 = vpop.f32.mrf.mxu0
    %v648 = vadd.f32 %v250, %v647
    %v649 = vpop.f32.mrf.mxu0
    %v650 = vadd.f32 %v250, %v649
    %651 = vdwg.mxu0
    %652 = vmatpush.bf16.msra.mxu0 0
    %653 = vmatpush.bf16.msra.mxu0 0
    %654 = vmatpush.bf16.msra.mxu0 0
    %655 = vmatpush.bf16.msra.mxu0 0
    %656 = vmatpush.bf16.msra.mxu0 0
    %657 = vmatpush.bf16.msra.mxu0 %v417
    %658 = vmatpush.bf16.msra.mxu0 %v405
    %659 = vmatpush.bf16.msra.mxu0 %v393
    %660 = vmatmul.bf16.gmra.mxu0 %v457
    %v661 = vpop.f32.mrf.mxu0
    %v662 = vadd.f32 %v251, %v661
    %v663 = vpop.f32.mrf.mxu0
    %v664 = vadd.f32 %v251, %v663
    %665 = vmatmul.bf16.gmra.mxu0 %v460
    %v666 = vpop.f32.mrf.mxu0
    %v667 = vadd.f32 %v251, %v666
    %v668 = vpop.f32.mrf.mxu0
    %v669 = vadd.f32 %v251, %v668
    %670 = vdwg.mxu0
    %671 = vmatpush.bf16.msra.mxu0 0
    %672 = vmatpush.bf16.msra.mxu0 0
    %673 = vmatpush.bf16.msra.mxu0 0
    %674 = vmatpush.bf16.msra.mxu0 0
    %675 = vmatpush.bf16.msra.mxu0 0
    %676 = vmatpush.bf16.msra.mxu0 %v418
    %677 = vmatpush.bf16.msra.mxu0 %v406
    %678 = vmatpush.bf16.msra.mxu0 %v394
    %679 = vmatmul.bf16.gmra.mxu0 %v457
    %v680 = vpop.f32.mrf.mxu0
    %v681 = vadd.f32 %v252, %v680
    %v682 = vpop.f32.mrf.mxu0
    %v683 = vadd.f32 %v252, %v682
    %684 = vmatmul.bf16.gmra.mxu0 %v460
    %v685 = vpop.f32.mrf.mxu0
    %v686 = vadd.f32 %v252, %v685
    %v687 = vpop.f32.mrf.mxu0
    %v688 = vadd.f32 %v252, %v687
    %689 = vdwg.mxu0
    %v690 = vadd.f32 %v472, %v491
    %v691 = vadd.f32 %v690, %v510
    %v692 = vadd.f32 %v691, %v529
    %v693 = vadd.f32 %v692, %v548
    %v694 = vadd.f32 %v693, %v567
    %v695 = vadd.f32 %v694, %v586
    %v696 = vadd.f32 %v695, %v605
    %v697 = vadd.f32 %v696, %v624
    %v698 = vadd.f32 %v697, %v643
    %v699 = vadd.f32 %v698, %v662
    %v700 = vadd.f32 %v699, %v681
    %701 = vadd.xlane.f32.xlu0 %v700
    %v702 = vpop.xlane.xlu0 %701
    %v703 = vadd.f32 %v474, %v493
    %v704 = vadd.f32 %v703, %v512
    %v705 = vadd.f32 %v704, %v531
    %v706 = vadd.f32 %v705, %v550
    %v707 = vadd.f32 %v706, %v569
    %v708 = vadd.f32 %v707, %v588
    %v709 = vadd.f32 %v708, %v607
    %v710 = vadd.f32 %v709, %v626
    %v711 = vadd.f32 %v710, %v645
    %v712 = vadd.f32 %v711, %v664
    %v713 = vadd.f32 %v712, %v683
    %714 = vadd.xlane.f32.xlu0 %v713
    %v715 = vpop.xlane.xlu0 %714
    %v716 = vadd.f32 %v477, %v496
    %v717 = vadd.f32 %v716, %v515
    %v718 = vadd.f32 %v717, %v534
    %v719 = vadd.f32 %v718, %v553
    %v720 = vadd.f32 %v719, %v572
    %v721 = vadd.f32 %v720, %v591
    %v722 = vadd.f32 %v721, %v610
    %v723 = vadd.f32 %v722, %v629
    %v724 = vadd.f32 %v723, %v648
    %v725 = vadd.f32 %v724, %v667
    %v726 = vadd.f32 %v725, %v686
    %727 = vadd.xlane.f32.xlu0 %v726
    %v728 = vpop.xlane.xlu0 %727
    %v729 = vadd.f32 %v479, %v498
    %v730 = vadd.f32 %v729, %v517
    %v731 = vadd.f32 %v730, %v536
    %v732 = vadd.f32 %v731, %v555
    %v733 = vadd.f32 %v732, %v574
    %v734 = vadd.f32 %v733, %v593
    %v735 = vadd.f32 %v734, %v612
    %v736 = vadd.f32 %v735, %v631
    %v737 = vadd.f32 %v736, %v650
    %v738 = vadd.f32 %v737, %v669
    %v739 = vadd.f32 %v738, %v688
    %740 = vadd.xlane.f32.xlu0 %v739
    %v741 = vpop.xlane.xlu0 %740
    %v742 = vrcp.pop 1536.0
    %v743 = vmul.f32 1536.0, %v742
    %v744 = vsub.f32 1.0, %v743
    %v745 = vmul.f32 %v742, %v744
    %v746 = vadd.f32 %v742, %v745
    %vm747 = vweird.f32 %v742
    %v748 = vsel %vm747, %v742, %v746
    %v749 = vmul.f32 %v702, %v748
    %v750 = vmul.f32 %v715, %v748
    %v751 = vmul.f32 %v728, %v748
    %v752 = vmul.f32 %v741, %v748
    %v753 = vsub.f32 %v472, %v749
    %v754 = vsub.f32 %v491, %v749
    %v755 = vsub.f32 %v510, %v749
    %v756 = vsub.f32 %v529, %v749
    %v757 = vsub.f32 %v548, %v749
    %v758 = vsub.f32 %v567, %v749
    %v759 = vsub.f32 %v586, %v749
    %v760 = vsub.f32 %v605, %v749
    %v761 = vsub.f32 %v624, %v749
    %v762 = vsub.f32 %v643, %v749
    %v763 = vsub.f32 %v662, %v749
    %v764 = vsub.f32 %v681, %v749
    %v765 = vsub.f32 %v474, %v750
    %v766 = vsub.f32 %v493, %v750
    %v767 = vsub.f32 %v512, %v750
    %v768 = vsub.f32 %v531, %v750
    %v769 = vsub.f32 %v550, %v750
    %v770 = vsub.f32 %v569, %v750
    %v771 = vsub.f32 %v588, %v750
    %v772 = vsub.f32 %v607, %v750
    %v773 = vsub.f32 %v626, %v750
    %v774 = vsub.f32 %v645, %v750
    %v775 = vsub.f32 %v664, %v750
    %v776 = vsub.f32 %v683, %v750
    %v777 = vsub.f32 %v477, %v751
    %v778 = vsub.f32 %v496, %v751
    %v779 = vsub.f32 %v515, %v751
    %v780 = vsub.f32 %v534, %v751
    %v781 = vsub.f32 %v553, %v751
    %v782 = vsub.f32 %v572, %v751
    %v783 = vsub.f32 %v591, %v751
    %v784 = vsub.f32 %v610, %v751
    %v785 = vsub.f32 %v629, %v751
    %v786 = vsub.f32 %v648, %v751
    %v787 = vsub.f32 %v667, %v751
    %v788 = vsub.f32 %v686, %v751
    %v789 = vsub.f32 %v479, %v752
    %v790 = vsub.f32 %v498, %v752
    %v791 = vsub.f32 %v517, %v752
    %v792 = vsub.f32 %v536, %v752
    %v793 = vsub.f32 %v555, %v752
    %v794 = vsub.f32 %v574, %v752
    %v795 = vsub.f32 %v593, %v752
    %v796 = vsub.f32 %v612, %v752
    %v797 = vsub.f32 %v631, %v752
    %v798 = vsub.f32 %v650, %v752
    %v799 = vsub.f32 %v669, %v752
    %v800 = vsub.f32 %v688, %v752
    %v801 = vmul.f32 %v753, %v753
    %v802 = vmul.f32 %v754, %v754
    %v803 = vmul.f32 %v755, %v755
    %v804 = vmul.f32 %v756, %v756
    %v805 = vmul.f32 %v757, %v757
    %v806 = vmul.f32 %v758, %v758
    %v807 = vmul.f32 %v759, %v759
    %v808 = vmul.f32 %v760, %v760
    %v809 = vmul.f32 %v761, %v761
    %v810 = vmul.f32 %v762, %v762
    %v811 = vmul.f32 %v763, %v763
    %v812 = vmul.f32 %v764, %v764
    %v813 = vmul.f32 %v765, %v765
    %v814 = vmul.f32 %v766, %v766
    %v815 = vmul.f32 %v767, %v767
    %v816 = vmul.f32 %v768, %v768
    %v817 = vmul.f32 %v769, %v769
    %v818 = vmul.f32 %v770, %v770
    %v819 = vmul.f32 %v771, %v771
    %v820 = vmul.f32 %v772, %v772
    %v821 = vmul.f32 %v773, %v773
    %v822 = vmul.f32 %v774, %v774
    %v823 = vmul.f32 %v775, %v775
    %v824 = vmul.f32 %v776, %v776
    %v825 = vmul.f32 %v777, %v777
    %v826 = vmul.f32 %v778, %v778
    %v827 = vmul.f32 %v779, %v779
    %v828 = vmul.f32 %v780, %v780
    %v829 = vmul.f32 %v781, %v781
    %v830 = vmul.f32 %v782, %v782
    %v831 = vmul.f32 %v783, %v783
    %v832 = vmul.f32 %v784, %v784
    %v833 = vmul.f32 %v785, %v785
    %v834 = vmul.f32 %v786, %v786
    %v835 = vmul.f32 %v787, %v787
    %v836 = vmul.f32 %v788, %v788
    %v837 = vmul.f32 %v789, %v789
    %v838 = vmul.f32 %v790, %v790
    %v839 = vmul.f32 %v791, %v791
    %v840 = vmul.f32 %v792, %v792
    %v841 = vmul.f32 %v793, %v793
    %v842 = vmul.f32 %v794, %v794
    %v843 = vmul.f32 %v795, %v795
    %v844 = vmul.f32 %v796, %v796
    %v845 = vmul.f32 %v797, %v797
    %v846 = vmul.f32 %v798, %v798
    %v847 = vmul.f32 %v799, %v799
    %v848 = vmul.f32 %v800, %v800
    %v849 = vadd.f32 %v801, %v802
    %v850 = vadd.f32 %v849, %v803
    %v851 = vadd.f32 %v850, %v804
    %v852 = vadd.f32 %v851, %v805
    %v853 = vadd.f32 %v852, %v806
    %v854 = vadd.f32 %v853, %v807
    %v855 = vadd.f32 %v854, %v808
    %v856 = vadd.f32 %v855, %v809
    %v857 = vadd.f32 %v856, %v810
    %v858 = vadd.f32 %v857, %v811
    %v859 = vadd.f32 %v858, %v812
    %860 = vadd.xlane.f32.xlu0 %v859
    %v861 = vpop.xlane.xlu0 %860
    %v862 = vadd.f32 %v813, %v814
    %v863 = vadd.f32 %v862, %v815
    %v864 = vadd.f32 %v863, %v816
    %v865 = vadd.f32 %v864, %v817
    %v866 = vadd.f32 %v865, %v818
    %v867 = vadd.f32 %v866, %v819
    %v868 = vadd.f32 %v867, %v820
    %v869 = vadd.f32 %v868, %v821
    %v870 = vadd.f32 %v869, %v822
    %v871 = vadd.f32 %v870, %v823
    %v872 = vadd.f32 %v871, %v824
    %873 = vadd.xlane.f32.xlu0 %v872
    %v874 = vpop.xlane.xlu0 %873
    %v875 = vadd.f32 %v825, %v826
    %v876 = vadd.f32 %v875, %v827
    %v877 = vadd.f32 %v876, %v828
    %v878 = vadd.f32 %v877, %v829
    %v879 = vadd.f32 %v878, %v830
    %v880 = vadd.f32 %v879, %v831
    %v881 = vadd.f32 %v880, %v832
    %v882 = vadd.f32 %v881, %v833
    %v883 = vadd.f32 %v882, %v834
    %v884 = vadd.f32 %v883, %v835
    %v885 = vadd.f32 %v884, %v836
    %886 = vadd.xlane.f32.xlu0 %v885
    %v887 = vpop.xlane.xlu0 %886
    %v888 = vadd.f32 %v837, %v838
    %v889 = vadd.f32 %v888, %v839
    %v890 = vadd.f32 %v889, %v840
    %v891 = vadd.f32 %v890, %v841
    %v892 = vadd.f32 %v891, %v842
    %v893 = vadd.f32 %v892, %v843
    %v894 = vadd.f32 %v893, %v844
    %v895 = vadd.f32 %v894, %v845
    %v896 = vadd.f32 %v895, %v846
    %v897 = vadd.f32 %v896, %v847
    %v898 = vadd.f32 %v897, %v848
    %899 = vadd.xlane.f32.xlu0 %v898
    %v900 = vpop.xlane.xlu0 %899
    %v901 = vmul.f32 %v861, %v748
    %v902 = vmul.f32 %v874, %v748
    %v903 = vmul.f32 %v887, %v748
    %v904 = vmul.f32 %v900, %v748
    %v905 = vadd.f32 %v901, 1e-05
    %v906 = vadd.f32 %v902, 1e-05
    %v907 = vadd.f32 %v903, 1e-05
    %v908 = vadd.f32 %v904, 1e-05
    %v909 = vrsqrt.pop %v905
    %v910 = vmul.f32 %v909, %v905
    %v911 = vmul.f32 %v910, %v909
    %v912 = vmul.f32 0.5, %v911
    %v913 = vsub.f32 1.5, %v912
    %v914 = vmul.f32 %v909, %v913
    %vm915 = vweird.f32 %v905
    %vm916 = vweird.f32 %v909
    %vm917 = vmor %vm915, %vm916
    %v918 = vsel %vm917, %v909, %v914
    %v919 = vrsqrt.pop %v906
    %v920 = vmul.f32 %v919, %v906
    %v921 = vmul.f32 %v920, %v919
    %v922 = vmul.f32 0.5, %v921
    %v923 = vsub.f32 1.5, %v922
    %v924 = vmul.f32 %v919, %v923
    %vm925 = vweird.f32 %v906
    %vm926 = vweird.f32 %v919
    %vm927 = vmor %vm925, %vm926
    %v928 = vsel %vm927, %v919, %v924
    %v929 = vrsqrt.pop %v907
    %v930 = vmul.f32 %v929, %v907
    %v931 = vmul.f32 %v930, %v929
    %v932 = vmul.f32 0.5, %v931
    %v933 = vsub.f32 1.5, %v932
    %v934 = vmul.f32 %v929, %v933
    %vm935 = vweird.f32 %v907
    %vm936 = vweird.f32 %v929
    %vm937 = vmor %vm935, %vm936
    %v938 = vsel %vm937, %v929, %v934
    %v939 = vrsqrt.pop %v908
    %v940 = vmul.f32 %v939, %v908
    %v941 = vmul.f32 %v940, %v939
    %v942 = vmul.f32 0.5, %v941
    %v943 = vsub.f32 1.5, %v942
    %v944 = vmul.f32 %v939, %v943
    %vm945 = vweird.f32 %v908
    %vm946 = vweird.f32 %v939
    %vm947 = vmor %vm945, %vm946
    %v948 = vsel %vm947, %v939, %v944
    %v949 = vmul.f32 %v753, %v918
    %v950 = vmul.f32 %v754, %v918
    %v951 = vmul.f32 %v755, %v918
    %v952 = vmul.f32 %v756, %v918
    %v953 = vmul.f32 %v757, %v918
    %v954 = vmul.f32 %v758, %v918
    %v955 = vmul.f32 %v759, %v918
    %v956 = vmul.f32 %v760, %v918
    %v957 = vmul.f32 %v761, %v918
    %v958 = vmul.f32 %v762, %v918
    %v959 = vmul.f32 %v763, %v918
    %v960 = vmul.f32 %v764, %v918
    %v961 = vmul.f32 %v765, %v928
    %v962 = vmul.f32 %v766, %v928
    %v963 = vmul.f32 %v767, %v928
    %v964 = vmul.f32 %v768, %v928
    %v965 = vmul.f32 %v769, %v928
    %v966 = vmul.f32 %v770, %v928
    %v967 = vmul.f32 %v771, %v928
    %v968 = vmul.f32 %v772, %v928
    %v969 = vmul.f32 %v773, %v928
    %v970 = vmul.f32 %v774, %v928
    %v971 = vmul.f32 %v775, %v928
    %v972 = vmul.f32 %v776, %v928
    %v973 = vmul.f32 %v777, %v938
    %v974 = vmul.f32 %v778, %v938
    %v975 = vmul.f32 %v779, %v938
    %v976 = vmul.f32 %v780, %v938
    %v977 = vmul.f32 %v781, %v938
    %v978 = vmul.f32 %v782, %v938
    %v979 = vmul.f32 %v783, %v938
    %v980 = vmul.f32 %v784, %v938
    %v981 = vmul.f32 %v785, %v938
    %v982 = vmul.f32 %v786, %v938
    %v983 = vmul.f32 %v787, %v938
    %v984 = vmul.f32 %v788, %v938
    %v985 = vmul.f32 %v789, %v948
    %v986 = vmul.f32 %v790, %v948
    %v987 = vmul.f32 %v791, %v948
    %v988 = vmul.f32 %v792, %v948
    %v989 = vmul.f32 %v793, %v948
    %v990 = vmul.f32 %v794, %v948
    %v991 = vmul.f32 %v795, %v948
    %v992 = vmul.f32 %v796, %v948
    %v993 = vmul.f32 %v797, %v948
    %v994 = vmul.f32 %v798, %v948
    %v995 = vmul.f32 %v799, %v948
    %v996 = vmul.f32 %v800, %v948
    %v997 = vadd.f32 %v949, %v961
    %v998 = vrot.slane %v997, 4
    %v999 = vadd.f32 %v997, %v998
    %v1000 = vrot.slane %v999, 2
    %v1001 = vadd.f32 %v999, %v1000
    %v1002 = vrot.slane %v1001, 1
    %v1003 = vadd.f32 %v1001, %v1002
    %v1004 = vadd.f32 %v950, %v962
    %v1005 = vrot.slane %v1004, 4
    %v1006 = vadd.f32 %v1004, %v1005
    %v1007 = vrot.slane %v1006, 2
    %v1008 = vadd.f32 %v1006, %v1007
    %v1009 = vrot.slane %v1008, 1
    %v1010 = vadd.f32 %v1008, %v1009
    %v1011 = vadd.f32 %v951, %v963
    %v1012 = vrot.slane %v1011, 4
    %v1013 = vadd.f32 %v1011, %v1012
    %v1014 = vrot.slane %v1013, 2
    %v1015 = vadd.f32 %v1013, %v1014
    %v1016 = vrot.slane %v1015, 1
    %v1017 = vadd.f32 %v1015, %v1016
    %v1018 = vadd.f32 %v952, %v964
    %v1019 = vrot.slane %v1018, 4
    %v1020 = vadd.f32 %v1018, %v1019
    %v1021 = vrot.slane %v1020, 2
    %v1022 = vadd.f32 %v1020, %v1021
    %v1023 = vrot.slane %v1022, 1
    %v1024 = vadd.f32 %v1022, %v1023
    %v1025 = vadd.f32 %v953, %v965
    %v1026 = vrot.slane %v1025, 4
    %v1027 = vadd.f32 %v1025, %v1026
    %v1028 = vrot.slane %v1027, 2
    %v1029 = vadd.f32 %v1027, %v1028
    %v1030 = vrot.slane %v1029, 1
    %v1031 = vadd.f32 %v1029, %v1030
    %v1032 = vadd.f32 %v954, %v966
    %v1033 = vrot.slane %v1032, 4
    %v1034 = vadd.f32 %v1032, %v1033
    %v1035 = vrot.slane %v1034, 2
    %v1036 = vadd.f32 %v1034, %v1035
    %v1037 = vrot.slane %v1036, 1
    %v1038 = vadd.f32 %v1036, %v1037
    %v1039 = vadd.f32 %v955, %v967
    %v1040 = vrot.slane %v1039, 4
    %v1041 = vadd.f32 %v1039, %v1040
    %v1042 = vrot.slane %v1041, 2
    %v1043 = vadd.f32 %v1041, %v1042
    %v1044 = vrot.slane %v1043, 1
    %v1045 = vadd.f32 %v1043, %v1044
    %v1046 = vadd.f32 %v956, %v968
    %v1047 = vrot.slane %v1046, 4
    %v1048 = vadd.f32 %v1046, %v1047
    %v1049 = vrot.slane %v1048, 2
    %v1050 = vadd.f32 %v1048, %v1049
    %v1051 = vrot.slane %v1050, 1
    %v1052 = vadd.f32 %v1050, %v1051
    %v1053 = vadd.f32 %v957, %v969
    %v1054 = vrot.slane %v1053, 4
    %v1055 = vadd.f32 %v1053, %v1054
    %v1056 = vrot.slane %v1055, 2
    %v1057 = vadd.f32 %v1055, %v1056
    %v1058 = vrot.slane %v1057, 1
    %v1059 = vadd.f32 %v1057, %v1058
    %v1060 = vadd.f32 %v958, %v970
    %v1061 = vrot.slane %v1060, 4
    %v1062 = vadd.f32 %v1060, %v1061
    %v1063 = vrot.slane %v1062, 2
    %v1064 = vadd.f32 %v1062, %v1063
    %v1065 = vrot.slane %v1064, 1
    %v1066 = vadd.f32 %v1064, %v1065
    %v1067 = vadd.f32 %v959, %v971
    %v1068 = vrot.slane %v1067, 4
    %v1069 = vadd.f32 %v1067, %v1068
    %v1070 = vrot.slane %v1069, 2
    %v1071 = vadd.f32 %v1069, %v1070
    %v1072 = vrot.slane %v1071, 1
    %v1073 = vadd.f32 %v1071, %v1072
    %v1074 = vadd.f32 %v960, %v972
    %v1075 = vrot.slane %v1074, 4
    %v1076 = vadd.f32 %v1074, %v1075
    %v1077 = vrot.slane %v1076, 2
    %v1078 = vadd.f32 %v1076, %v1077
    %v1079 = vrot.slane %v1078, 1
    %v1080 = vadd.f32 %v1078, %v1079
    %v1081 = vadd.f32 %v973, %v985
    %v1082 = vrot.slane %v1081, 4
    %v1083 = vadd.f32 %v1081, %v1082
    %v1084 = vrot.slane %v1083, 2
    %v1085 = vadd.f32 %v1083, %v1084
    %v1086 = vrot.slane %v1085, 1
    %v1087 = vadd.f32 %v1085, %v1086
    %v1088 = vadd.f32 %v974, %v986
    %v1089 = vrot.slane %v1088, 4
    %v1090 = vadd.f32 %v1088, %v1089
    %v1091 = vrot.slane %v1090, 2
    %v1092 = vadd.f32 %v1090, %v1091
    %v1093 = vrot.slane %v1092, 1
    %v1094 = vadd.f32 %v1092, %v1093
    %v1095 = vadd.f32 %v975, %v987
    %v1096 = vrot.slane %v1095, 4
    %v1097 = vadd.f32 %v1095, %v1096
    %v1098 = vrot.slane %v1097, 2
    %v1099 = vadd.f32 %v1097, %v1098
    %v1100 = vrot.slane %v1099, 1
    %v1101 = vadd.f32 %v1099, %v1100
    %v1102 = vadd.f32 %v976, %v988
    %v1103 = vrot.slane %v1102, 4
    %v1104 = vadd.f32 %v1102, %v1103
    %v1105 = vrot.slane %v1104, 2
    %v1106 = vadd.f32 %v1104, %v1105
    %v1107 = vrot.slane %v1106, 1
    %v1108 = vadd.f32 %v1106, %v1107
    %v1109 = vadd.f32 %v977, %v989
    %v1110 = vrot.slane %v1109, 4
    %v1111 = vadd.f32 %v1109, %v1110
    %v1112 = vrot.slane %v1111, 2
    %v1113 = vadd.f32 %v1111, %v1112
    %v1114 = vrot.slane %v1113, 1
    %v1115 = vadd.f32 %v1113, %v1114
    %v1116 = vadd.f32 %v978, %v990
    %v1117 = vrot.slane %v1116, 4
    %v1118 = vadd.f32 %v1116, %v1117
    %v1119 = vrot.slane %v1118, 2
    %v1120 = vadd.f32 %v1118, %v1119
    %v1121 = vrot.slane %v1120, 1
    %v1122 = vadd.f32 %v1120, %v1121
    %v1123 = vadd.f32 %v979, %v991
    %v1124 = vrot.slane %v1123, 4
    %v1125 = vadd.f32 %v1123, %v1124
    %v1126 = vrot.slane %v1125, 2
    %v1127 = vadd.f32 %v1125, %v1126
    %v1128 = vrot.slane %v1127, 1
    %v1129 = vadd.f32 %v1127, %v1128
    %v1130 = vadd.f32 %v980, %v992
    %v1131 = vrot.slane %v1130, 4
    %v1132 = vadd.f32 %v1130, %v1131
    %v1133 = vrot.slane %v1132, 2
    %v1134 = vadd.f32 %v1132, %v1133
    %v1135 = vrot.slane %v1134, 1
    %v1136 = vadd.f32 %v1134, %v1135
    %v1137 = vadd.f32 %v981, %v993
    %v1138 = vrot.slane %v1137, 4
    %v1139 = vadd.f32 %v1137, %v1138
    %v1140 = vrot.slane %v1139, 2
    %v1141 = vadd.f32 %v1139, %v1140
    %v1142 = vrot.slane %v1141, 1
    %v1143 = vadd.f32 %v1141, %v1142
    %v1144 = vadd.f32 %v982, %v994
    %v1145 = vrot.slane %v1144, 4
    %v1146 = vadd.f32 %v1144, %v1145
    %v1147 = vrot.slane %v1146, 2
    %v1148 = vadd.f32 %v1146, %v1147
    %v1149 = vrot.slane %v1148, 1
    %v1150 = vadd.f32 %v1148, %v1149
    %v1151 = vadd.f32 %v983, %v995
    %v1152 = vrot.slane %v1151, 4
    %v1153 = vadd.f32 %v1151, %v1152
    %v1154 = vrot.slane %v1153, 2
    %v1155 = vadd.f32 %v1153, %v1154
    %v1156 = vrot.slane %v1155, 1
    %v1157 = vadd.f32 %v1155, %v1156
    %v1158 = vadd.f32 %v984, %v996
    %v1159 = vrot.slane %v1158, 4
    %v1160 = vadd.f32 %v1158, %v1159
    %v1161 = vrot.slane %v1160, 2
    %v1162 = vadd.f32 %v1160, %v1161
    %v1163 = vrot.slane %v1162, 1
    %v1164 = vadd.f32 %v1162, %v1163
    %p1165 = scmp.eq.s32.totalorder 0, 0
    // Predicated region
    $region90: #{tpu_custom_call.1} parent=1 // pred_check
      %p1166 = pneg %p1165
    $region91: #{tpu_custom_call.1} parent=1 // pred_check_branch
      %1168 = sbr.rel (%p1166) target = $region93
    $region92: #{tpu_custom_call.1} parent=1 // pred_region
      %1169 = vst [vmem:[#allocation2] sm:$0xff] 0.0
      %1170 = vst [vmem:[#allocation2 + $0x8] sm:$0xff] 0.0
      %1171 = vst [vmem:[#allocation2 + $0x10] sm:$0xff] 0.0
    $region93: #{tpu_custom_call.1} parent=1 // pred_fallthru
      _
    %v1172 = vld [vmem:[#allocation2] sm:$0xff]
    %v1173 = vld [vmem:[#allocation2 + $0x8] sm:$0xff]
    %v1174 = vld [vmem:[#allocation2 + $0x10] sm:$0xff]
    %v1199 = vrot.slane %v1010, 6
    %v1200 = vrot.slane %v1017, 4
    %v1201 = vrot.slane %v1024, 2
    %v1202 = vrot.slane %v1038, 6
    %v1203 = vrot.slane %v1045, 4
    %v1204 = vrot.slane %v1052, 2
    %v1205 = vrot.slane %v1066, 6
    %v1206 = vrot.slane %v1073, 4
    %v1207 = vrot.slane %v1080, 2
    %v1208 = vrot.slane %v1094, 6
    %v1209 = vrot.slane %v1101, 4
    %v1210 = vrot.slane %v1108, 2
    %v1211 = vrot.slane %v1122, 6
    %v1212 = vrot.slane %v1129, 4
    %v1213 = vrot.slane %v1136, 2
    %v1214 = vrot.slane %v1150, 6
    %v1215 = vrot.slane %v1157, 4
    %v1216 = vrot.slane %v1164, 2
    %vm1217 = vcmask 1041408
    %v1218 = vsel %vm1217, %v1003, %v1199
    %vm1219 = vcmask 1045508
    %v1220 = vsel %vm1219, %v1200, %v1201
    %vm1221 = vcmask 1043456
    %v1222 = vsel %vm1221, %v1218, %v1220
    %v1223 = vsel %vm1217, %v1031, %v1202
    %v1224 = vsel %vm1219, %v1203, %v1204
    %v1225 = vsel %vm1221, %v1223, %v1224
    %v1226 = vsel %vm1217, %v1059, %v1205
    %v1227 = vsel %vm1219, %v1206, %v1207
    %v1228 = vsel %vm1221, %v1226, %v1227
    %v1229 = vsel %vm1217, %v1087, %v1208
    %v1230 = vsel %vm1219, %v1209, %v1210
    %v1231 = vsel %vm1221, %v1229, %v1230
    %v1232 = vsel %vm1217, %v1115, %v1211
    %v1233 = vsel %vm1219, %v1212, %v1213
    %v1234 = vsel %vm1221, %v1232, %v1233
    %v1235 = vsel %vm1217, %v1143, %v1214
    %v1236 = vsel %vm1219, %v1215, %v1216
    %v1237 = vsel %vm1221, %v1235, %v1236
    %vm1238 = vcmask 1044484
    %v1239 = vsel %vm1238, %v1222, %v1222
    %vm1240 = vcmask 1046534
    %v1241 = vsel %vm1240, %v1222, %v1239
    %v1242 = vrot.slane %v1231, 7
    %vm1243 = vcmask 1041409
    %v1244 = vsel %vm1243, %v1242, %v1241
    %vm1245 = vcmask 1043459
    %v1246 = vsel %vm1245, %v1242, %v1244
    %vm1247 = vcmask 1045509
    %v1248 = vsel %vm1247, %v1242, %v1246
    %vm1249 = vcmask 1047559
    %v1250 = vsel %vm1249, %v1242, %v1248
    %v1251 = vsel %vm1238, %v1225, %v1225
    %v1252 = vsel %vm1240, %v1225, %v1251
    %v1253 = vrot.slane %v1234, 7
    %v1254 = vsel %vm1243, %v1253, %v1252
    %v1255 = vsel %vm1245, %v1253, %v1254
    %v1256 = vsel %vm1247, %v1253, %v1255
    %v1257 = vsel %vm1249, %v1253, %v1256
    %v1258 = vsel %vm1238, %v1228, %v1228
    %v1259 = vsel %vm1240, %v1228, %v1258
    %v1260 = vrot.slane %v1237, 7
    %v1261 = vsel %vm1243, %v1260, %v1259
    %v1262 = vsel %vm1245, %v1260, %v1261
    %v1263 = vsel %vm1247, %v1260, %v1262
    %v1264 = vsel %vm1249, %v1260, %v1263
    %v1268 = vadd.f32 %v1172, %v1250
    %v1269 = vadd.f32 %v1173, %v1257
    %v1270 = vadd.f32 %v1174, %v1264
    %1271 = vst [vmem:[#allocation2] sm:$0xff] %v1268
    %1272 = vst [vmem:[#allocation2 + $0x8] sm:$0xff] %v1269
    %1273 = vst [vmem:[#allocation2 + $0x10] sm:$0xff] %v1270
    // Predicated region
    $region94: #{tpu_custom_call.1} parent=1 // pred_check
      %p1274 = pneg %p1165
    $region95: #{tpu_custom_call.1} parent=1 // pred_check_branch
      %1276 = sbr.rel (%p1274) target = $region97
    $region96: #{tpu_custom_call.1} parent=1 // pred_region
      %v1277 = vld [vmem:[#allocation2] sm:$0xff]
      %v1278 = vld [vmem:[#allocation2 + $0x8] sm:$0xff]
      %v1279 = vld [vmem:[#allocation2 + $0x10] sm:$0xff]
      %v1280 = vld [vmem:[#allocation9] sm:$0xff]
      %v1281 = vld [vmem:[#allocation9 + $0x8] sm:$0xf]
      %v1282 = vmul.f32 %v1280, 0.0625
      %v1283 = vmul.f32 %v1281, 0.0625
      %v1286 = vperm.slane %v1282, 0
      %v1287 = vperm.slane %v1282, 1
      %v1288 = vperm.slane %v1282, 2
      %v1289 = vperm.slane %v1282, 3
      %v1290 = vperm.slane %v1282, 4
      %v1291 = vperm.slane %v1282, 5
      %v1292 = vperm.slane %v1282, 6
      %v1293 = vperm.slane %v1282, 7
      %v1294 = vperm.slane %v1283, 0
      %v1295 = vperm.slane %v1283, 1
      %v1296 = vperm.slane %v1283, 2
      %v1297 = vperm.slane %v1283, 3
      %v1298 = vrot.slane %v1287, 6
      %v1299 = vrot.slane %v1288, 4
      %v1300 = vrot.slane %v1289, 2
      %v1301 = vrot.slane %v1291, 6
      %v1302 = vrot.slane %v1292, 4
      %v1303 = vrot.slane %v1293, 2
      %v1304 = vrot.slane %v1295, 6
      %v1305 = vrot.slane %v1296, 4
      %v1306 = vrot.slane %v1297, 2
      %v1307 = vsel %vm1217, %v1286, %v1298
      %v1308 = vsel %vm1219, %v1299, %v1300
      %v1309 = vsel %vm1221, %v1307, %v1308
      %v1310 = vsel %vm1217, %v1290, %v1301
      %v1311 = vsel %vm1219, %v1302, %v1303
      %v1312 = vsel %vm1221, %v1310, %v1311
      %v1313 = vsel %vm1217, %v1294, %v1304
      %v1314 = vsel %vm1219, %v1305, %v1306
      %v1315 = vsel %vm1221, %v1313, %v1314
      %v1319 = vmul.f32 %v1277, %v1309
      %v1320 = vmul.f32 %v1278, %v1312
      %v1321 = vmul.f32 %v1279, %v1315
      %v1322 = vld [vmem:[#allocation11] sm:$0xff]
      %v1323 = vld [vmem:[#allocation11 + $0x8] sm:$0xf]
      %v1326 = vperm.slane %v1322, 0
      %v1327 = vperm.slane %v1322, 1
      %v1328 = vperm.slane %v1322, 2
      %v1329 = vperm.slane %v1322, 3
      %v1330 = vperm.slane %v1322, 4
      %v1331 = vperm.slane %v1322, 5
      %v1332 = vperm.slane %v1322, 6
      %v1333 = vperm.slane %v1322, 7
      %v1334 = vperm.slane %v1323, 0
      %v1335 = vperm.slane %v1323, 1
      %v1336 = vperm.slane %v1323, 2
      %v1337 = vperm.slane %v1323, 3
      %v1338 = vrot.slane %v1327, 6
      %v1339 = vrot.slane %v1328, 4
      %v1340 = vrot.slane %v1329, 2
      %v1341 = vrot.slane %v1331, 6
      %v1342 = vrot.slane %v1332, 4
      %v1343 = vrot.slane %v1333, 2
      %v1344 = vrot.slane %v1335, 6
      %v1345 = vrot.slane %v1336, 4
      %v1346 = vrot.slane %v1337, 2
      %v1347 = vsel %vm1217, %v1326, %v1338
      %v1348 = vsel %vm1219, %v1339, %v1340
      %v1349 = vsel %vm1221, %v1347, %v1348
      %v1350 = vsel %vm1217, %v1330, %v1341
      %v1351 = vsel %vm1219, %v1342, %v1343
      %v1352 = vsel %vm1221, %v1350, %v1351
      %v1353 = vsel %vm1217, %v1334, %v1344
      %v1354 = vsel %vm1219, %v1345, %v1346
      %v1355 = vsel %vm1221, %v1353, %v1354
      %v1359 = vadd.f32 %v1319, %v1349
      %v1360 = vadd.f32 %v1320, %v1352
      %v1361 = vadd.f32 %v1321, %v1355
      %1365 = vst [vmem:[#allocation1] ss:$4 sm:$0xff] %v1359
      %s1366 = scalar_lea.vmem [#allocation1], 32
      %1367 = vst [vmem:[%s1366] ss:$4 sm:$0xff] %v1360
      %v1368 = vld.sshfl [vmem:[#allocation1] sm:$0xff pattern:$0x73625140]
      %v1369 = vld.sshfl [vmem:[#allocation1 + $0x8] sm:$0xff pattern:$0x73625140]
      %v1370 = vld.sshfl [vmem:[#allocation1 + $0x10] sm:$0xff pattern:$0x73625140]
      %v1371 = vld.sshfl [vmem:[#allocation1 + $0x18] sm:$0xff pattern:$0x73625140]
      %v1372 = vld.sshfl [vmem:[#allocation1 + $0x20] sm:$0xff pattern:$0x73625140]
      %v1373 = vld.sshfl [vmem:[#allocation1 + $0x28] sm:$0xff pattern:$0x73625140]
      %v1374 = vld.sshfl [vmem:[#allocation1 + $0x30] sm:$0xff pattern:$0x73625140]
      %v1375 = vld.sshfl [vmem:[#allocation1 + $0x38] sm:$0xff pattern:$0x73625140]
      %1376 = vst [vmem:[#allocation1] ss:$4 sm:$0xff] %v1361
      %v1377 = vld.sshfl [vmem:[#allocation1] sm:$0xff pattern:$0x73625140]
      %v1378 = vld.sshfl [vmem:[#allocation1 + $0x8] sm:$0xff pattern:$0x73625140]
      %v1379 = vld.sshfl [vmem:[#allocation1 + $0x10] sm:$0xff pattern:$0x73625140]
      %v1380 = vld.sshfl [vmem:[#allocation1 + $0x18] sm:$0xff pattern:$0x73625140]
      %v1393 = vsel %vm1217, %v1368, 0.0
      %v1394 = vsel %vm1217, %v1369, 0.0
      %v1395 = vadd.f32 %v1393, %v1394
      %v1396 = vsel %vm1217, %v1370, 0.0
      %v1397 = vadd.f32 %v1395, %v1396
      %v1398 = vsel %vm1217, %v1371, 0.0
      %v1399 = vadd.f32 %v1397, %v1398
      %v1400 = vsel %vm1217, %v1372, 0.0
      %v1401 = vadd.f32 %v1399, %v1400
      %v1402 = vsel %vm1217, %v1373, 0.0
      %v1403 = vadd.f32 %v1401, %v1402
      %v1404 = vsel %vm1217, %v1374, 0.0
      %v1405 = vadd.f32 %v1403, %v1404
      %v1406 = vsel %vm1217, %v1375, 0.0
      %v1407 = vadd.f32 %v1405, %v1406
      %v1408 = vsel %vm1217, %v1377, 0.0
      %v1409 = vadd.f32 %v1407, %v1408
      %v1410 = vsel %vm1217, %v1378, 0.0
      %v1411 = vadd.f32 %v1409, %v1410
      %v1412 = vsel %vm1217, %v1379, 0.0
      %v1413 = vadd.f32 %v1411, %v1412
      %v1414 = vsel %vm1217, %v1380, 0.0
      %v1415 = vadd.f32 %v1413, %v1414
      %1416 = vadd.xlane.f32.xlu0 %v1415
      %v1417 = vpop.xlane.xlu0 %1416
      %v1418 = vmul.f32 %v1417, %v748
      %v1421 = vunpack.c.l.s4 269488144
      %v1422 = vunpack.c.0.s8 %v1421
      %v1423 = vperm.slane %v1418, %v1422
      %v1425 = vsub.f32 %v1359, %v1423
      %v1426 = vsub.f32 %v1360, %v1423
      %v1427 = vsub.f32 %v1361, %v1423
      %v1428 = vmul.f32 %v1425, %v1425
      %v1429 = vmul.f32 %v1426, %v1426
      %v1430 = vmul.f32 %v1427, %v1427
      %1434 = vst [vmem:[#allocation1] ss:$4 sm:$0xff] %v1428
      %s1435 = scalar_lea.vmem [#allocation1], 32
      %1436 = vst [vmem:[%s1435] ss:$4 sm:$0xff] %v1429
      %v1437 = vld.sshfl [vmem:[#allocation1] sm:$0xff pattern:$0x73625140]
      %v1438 = vld.sshfl [vmem:[#allocation1 + $0x8] sm:$0xff pattern:$0x73625140]
      %v1439 = vld.sshfl [vmem:[#allocation1 + $0x10] sm:$0xff pattern:$0x73625140]
      %v1440 = vld.sshfl [vmem:[#allocation1 + $0x18] sm:$0xff pattern:$0x73625140]
      %v1441 = vld.sshfl [vmem:[#allocation1 + $0x20] sm:$0xff pattern:$0x73625140]
      %v1442 = vld.sshfl [vmem:[#allocation1 + $0x28] sm:$0xff pattern:$0x73625140]
      %v1443 = vld.sshfl [vmem:[#allocation1 + $0x30] sm:$0xff pattern:$0x73625140]
      %v1444 = vld.sshfl [vmem:[#allocation1 + $0x38] sm:$0xff pattern:$0x73625140]
      %1445 = vst [vmem:[#allocation1] ss:$4 sm:$0xff] %v1430
      %v1446 = vld.sshfl [vmem:[#allocation1] sm:$0xff pattern:$0x73625140]
      %v1447 = vld.sshfl [vmem:[#allocation1 + $0x8] sm:$0xff pattern:$0x73625140]
      %v1448 = vld.sshfl [vmem:[#allocation1 + $0x10] sm:$0xff pattern:$0x73625140]
      %v1449 = vld.sshfl [vmem:[#allocation1 + $0x18] sm:$0xff pattern:$0x73625140]
      %v1462 = vsel %vm1217, %v1437, 0.0
      %v1463 = vsel %vm1217, %v1438, 0.0
      %v1464 = vadd.f32 %v1462, %v1463
      %v1465 = vsel %vm1217, %v1439, 0.0
      %v1466 = vadd.f32 %v1464, %v1465
      %v1467 = vsel %vm1217, %v1440, 0.0
      %v1468 = vadd.f32 %v1466, %v1467
      %v1469 = vsel %vm1217, %v1441, 0.0
      %v1470 = vadd.f32 %v1468, %v1469
      %v1471 = vsel %vm1217, %v1442, 0.0
      %v1472 = vadd.f32 %v1470, %v1471
      %v1473 = vsel %vm1217, %v1443, 0.0
      %v1474 = vadd.f32 %v1472, %v1473
      %v1475 = vsel %vm1217, %v1444, 0.0
      %v1476 = vadd.f32 %v1474, %v1475
      %v1477 = vsel %vm1217, %v1446, 0.0
      %v1478 = vadd.f32 %v1476, %v1477
      %v1479 = vsel %vm1217, %v1447, 0.0
      %v1480 = vadd.f32 %v1478, %v1479
      %v1481 = vsel %vm1217, %v1448, 0.0
      %v1482 = vadd.f32 %v1480, %v1481
      %v1483 = vsel %vm1217, %v1449, 0.0
      %v1484 = vadd.f32 %v1482, %v1483
      %1485 = vadd.xlane.f32.xlu0 %v1484
      %v1486 = vpop.xlane.xlu0 %1485
      %v1487 = vmul.f32 %v1486, %v748
      %v1488 = vadd.f32 %v1487, 1e-05
      %v1489 = vrsqrt.pop %v1488
      %v1490 = vmul.f32 %v1489, %v1488
      %v1491 = vmul.f32 %v1490, %v1489
      %v1492 = vmul.f32 0.5, %v1491
      %v1493 = vsub.f32 1.5, %v1492
      %v1494 = vmul.f32 %v1489, %v1493
      %vm1495 = vweird.f32 %v1488
      %vm1496 = vweird.f32 %v1489
      %vm1497 = vmor %vm1495, %vm1496
      %v1498 = vsel %vm1497, %v1489, %v1494
      %v1501 = vunpack.c.l.s4 269488144
      %v1502 = vunpack.c.0.s8 %v1501
      %v1503 = vperm.slane %v1498, %v1502
      %v1505 = vmul.f32 %v1425, %v1503
      %v1506 = vmul.f32 %v1426, %v1503
      %v1507 = vmul.f32 %v1427, %v1503
      %v1508 = vld [vmem:[#allocation12] sm:$0xff]
      %v1509 = vld [vmem:[#allocation12 + $0x8] sm:$0xf]
      %v1512 = vperm.slane %v1508, 0
      %v1513 = vperm.slane %v1508, 1
      %v1514 = vperm.slane %v1508, 2
      %v1515 = vperm.slane %v1508, 3
      %v1516 = vperm.slane %v1508, 4
      %v1517 = vperm.slane %v1508, 5
      %v1518 = vperm.slane %v1508, 6
      %v1519 = vperm.slane %v1508, 7
      %v1520 = vperm.slane %v1509, 0
      %v1521 = vperm.slane %v1509, 1
      %v1522 = vperm.slane %v1509, 2
      %v1523 = vperm.slane %v1509, 3
      %v1524 = vrot.slane %v1513, 6
      %v1525 = vrot.slane %v1514, 4
      %v1526 = vrot.slane %v1515, 2
      %v1527 = vrot.slane %v1517, 6
      %v1528 = vrot.slane %v1518, 4
      %v1529 = vrot.slane %v1519, 2
      %v1530 = vrot.slane %v1521, 6
      %v1531 = vrot.slane %v1522, 4
      %v1532 = vrot.slane %v1523, 2
      %v1533 = vsel %vm1217, %v1512, %v1524
      %v1534 = vsel %vm1219, %v1525, %v1526
      %v1535 = vsel %vm1221, %v1533, %v1534
      %v1536 = vsel %vm1217, %v1516, %v1527
      %v1537 = vsel %vm1219, %v1528, %v1529
      %v1538 = vsel %vm1221, %v1536, %v1537
      %v1539 = vsel %vm1217, %v1520, %v1530
      %v1540 = vsel %vm1219, %v1531, %v1532
      %v1541 = vsel %vm1221, %v1539, %v1540
      %v1545 = vmul.f32 %v1505, %v1535
      %v1546 = vmul.f32 %v1506, %v1538
      %v1547 = vmul.f32 %v1507, %v1541
      %v1548 = vld [vmem:[#allocation14] sm:$0xff]
      %v1549 = vld [vmem:[#allocation14 + $0x8] sm:$0xf]
      %v1552 = vperm.slane %v1548, 0
      %v1553 = vperm.slane %v1548, 1
      %v1554 = vperm.slane %v1548, 2
      %v1555 = vperm.slane %v1548, 3
      %v1556 = vperm.slane %v1548, 4
      %v1557 = vperm.slane %v1548, 5
      %v1558 = vperm.slane %v1548, 6
      %v1559 = vperm.slane %v1548, 7
      %v1560 = vperm.slane %v1549, 0
      %v1561 = vperm.slane %v1549, 1
      %v1562 = vperm.slane %v1549, 2
      %v1563 = vperm.slane %v1549, 3
      %v1564 = vrot.slane %v1553, 6
      %v1565 = vrot.slane %v1554, 4
      %v1566 = vrot.slane %v1555, 2
      %v1567 = vrot.slane %v1557, 6
      %v1568 = vrot.slane %v1558, 4
      %v1569 = vrot.slane %v1559, 2
      %v1570 = vrot.slane %v1561, 6
      %v1571 = vrot.slane %v1562, 4
      %v1572 = vrot.slane %v1563, 2
      %v1573 = vsel %vm1217, %v1552, %v1564
      %v1574 = vsel %vm1219, %v1565, %v1566
      %v1575 = vsel %vm1221, %v1573, %v1574
      %v1576 = vsel %vm1217, %v1556, %v1567
      %v1577 = vsel %vm1219, %v1568, %v1569
      %v1578 = vsel %vm1221, %v1576, %v1577
      %v1579 = vsel %vm1217, %v1560, %v1570
      %v1580 = vsel %vm1219, %v1571, %v1572
      %v1581 = vsel %vm1221, %v1579, %v1580
      %v1585 = vadd.f32 %v1545, %v1575
      %v1586 = vadd.f32 %v1546, %v1578
      %v1587 = vadd.f32 %v1547, %v1581
      %1591 = vst [vmem:[#allocation1] ss:$4 sm:$0xff] %v1585
      %s1592 = scalar_lea.vmem [#allocation1], 32
      %1593 = vst [vmem:[%s1592] ss:$4 sm:$0xff] %v1586
      %v1594 = vld.sshfl [vmem:[#allocation1] sm:$0xff pattern:$0x73625140]
      %v1595 = vld.sshfl [vmem:[#allocation1 + $0x8] sm:$0xff pattern:$0x73625140]
      %v1596 = vld.sshfl [vmem:[#allocation1 + $0x10] sm:$0xff pattern:$0x73625140]
      %v1597 = vld.sshfl [vmem:[#allocation1 + $0x18] sm:$0xff pattern:$0x73625140]
      %v1598 = vld.sshfl [vmem:[#allocation1 + $0x20] sm:$0xff pattern:$0x73625140]
      %v1599 = vld.sshfl [vmem:[#allocation1 + $0x28] sm:$0xff pattern:$0x73625140]
      %v1600 = vld.sshfl [vmem:[#allocation1 + $0x30] sm:$0xff pattern:$0x73625140]
      %v1601 = vld.sshfl [vmem:[#allocation1 + $0x38] sm:$0xff pattern:$0x73625140]
      %1602 = vst [vmem:[#allocation1] ss:$4 sm:$0xff] %v1587
      %v1603 = vld.sshfl [vmem:[#allocation1] sm:$0xff pattern:$0x73625140]
      %v1604 = vld.sshfl [vmem:[#allocation1 + $0x8] sm:$0xff pattern:$0x73625140]
      %v1605 = vld.sshfl [vmem:[#allocation1 + $0x10] sm:$0xff pattern:$0x73625140]
      %v1606 = vld.sshfl [vmem:[#allocation1 + $0x18] sm:$0xff pattern:$0x73625140]
      %v1619 = vpack.c.bf16 %v1594, %v1594
      %v1620 = vpack.c.bf16 %v1595, %v1595
      %v1621 = vpack.c.bf16 %v1596, %v1596
      %v1622 = vpack.c.bf16 %v1597, %v1597
      %v1623 = vpack.c.bf16 %v1598, %v1598
      %v1624 = vpack.c.bf16 %v1599, %v1599
      %v1625 = vpack.c.bf16 %v1600, %v1600
      %v1626 = vpack.c.bf16 %v1601, %v1601
      %v1627 = vpack.c.bf16 %v1603, %v1603
      %v1628 = vpack.c.bf16 %v1604, %v1604
      %v1629 = vpack.c.bf16 %v1605, %v1605
      %v1630 = vpack.c.bf16 %v1606, %v1606
      %v1631 = vld [vmem:[#allocation15] sm:$0xff]
      %v1632 = vld [vmem:[#allocation15 + $0x8] sm:$0xff]
      %v1633 = vld [vmem:[#allocation15 + $0x10] sm:$0xff]
      %v1634 = vld [vmem:[#allocation15 + $0x18] sm:$0xff]
      %v1635 = vld [vmem:[#allocation15 + $0x20] sm:$0xff]
      %v1636 = vld [vmem:[#allocation15 + $0x28] sm:$0xff]
      %v1637 = vld [vmem:[#allocation15 + $0x30] sm:$0xff]
      %v1638 = vld [vmem:[#allocation15 + $0x38] sm:$0xff]
      %v1639 = vld [vmem:[#allocation15 + $0x40] sm:$0xff]
      %v1640 = vld [vmem:[#allocation15 + $0x48] sm:$0xff]
      %v1641 = vld [vmem:[#allocation15 + $0x50] sm:$0xff]
      %v1642 = vld [vmem:[#allocation15 + $0x58] sm:$0xff]
      %v1643 = vld [vmem:[#allocation15 + $0x60] sm:$0xff]
      %v1644 = vld [vmem:[#allocation15 + $0x68] sm:$0xff]
      %v1645 = vld [vmem:[#allocation15 + $0x70] sm:$0xff]
      %v1646 = vld [vmem:[#allocation15 + $0x78] sm:$0xff]
      %v1647 = vld [vmem:[#allocation15 + $0x80] sm:$0xff]
      %v1648 = vld [vmem:[#allocation15 + $0x88] sm:$0xff]
      %v1649 = vld [vmem:[#allocation15 + $0x90] sm:$0xff]
      %v1650 = vld [vmem:[#allocation15 + $0x98] sm:$0xff]
      %v1651 = vld [vmem:[#allocation15 + $0xa0] sm:$0xff]
      %v1652 = vld [vmem:[#allocation15 + $0xa8] sm:$0xff]
      %v1653 = vld [vmem:[#allocation15 + $0xb0] sm:$0xff]
      %v1654 = vld [vmem:[#allocation15 + $0xb8] sm:$0xff]
      %v1655 = vld [vmem:[#allocation15 + $0xc0] sm:$0xff]
      %v1656 = vld [vmem:[#allocation15 + $0xc8] sm:$0xff]
      %v1657 = vld [vmem:[#allocation15 + $0xd0] sm:$0xff]
      %v1658 = vld [vmem:[#allocation15 + $0xd8] sm:$0xff]
      %v1659 = vld [vmem:[#allocation15 + $0xe0] sm:$0xff]
      %v1660 = vld [vmem:[#allocation15 + $0xe8] sm:$0xff]
      %v1661 = vld [vmem:[#allocation15 + $0xf0] sm:$0xff]
      %v1662 = vld [vmem:[#allocation15 + $0xf8] sm:$0xff]
      %v1663 = vld [vmem:[#allocation15 + $0x100] sm:$0xff]
      %v1664 = vld [vmem:[#allocation15 + $0x108] sm:$0xff]
      %v1665 = vld [vmem:[#allocation15 + $0x110] sm:$0xff]
      %v1666 = vld [vmem:[#allocation15 + $0x118] sm:$0xff]
      %v1667 = vld [vmem:[#allocation15 + $0x120] sm:$0xff]
      %v1668 = vld [vmem:[#allocation15 + $0x128] sm:$0xff]
      %v1669 = vld [vmem:[#allocation15 + $0x130] sm:$0xff]
      %v1670 = vld [vmem:[#allocation15 + $0x138] sm:$0xff]
      %v1671 = vld [vmem:[#allocation15 + $0x140] sm:$0xff]
      %v1672 = vld [vmem:[#allocation15 + $0x148] sm:$0xff]
      %v1673 = vld [vmem:[#allocation15 + $0x150] sm:$0xff]
      %v1674 = vld [vmem:[#allocation15 + $0x158] sm:$0xff]
      %v1675 = vld [vmem:[#allocation15 + $0x160] sm:$0xff]
      %v1676 = vld [vmem:[#allocation15 + $0x168] sm:$0xff]
      %v1677 = vld [vmem:[#allocation15 + $0x170] sm:$0xff]
      %v1678 = vld [vmem:[#allocation15 + $0x178] sm:$0xff]
      %v1679 = vld [vmem:[#allocation15 + $0x180] sm:$0xff]
      %v1680 = vld [vmem:[#allocation15 + $0x188] sm:$0xff]
      %v1681 = vld [vmem:[#allocation15 + $0x190] sm:$0xff]
      %v1682 = vld [vmem:[#allocation15 + $0x198] sm:$0xff]
      %v1683 = vld [vmem:[#allocation15 + $0x1a0] sm:$0xff]
      %v1684 = vld [vmem:[#allocation15 + $0x1a8] sm:$0xff]
      %v1685 = vld [vmem:[#allocation15 + $0x1b0] sm:$0xff]
      %v1686 = vld [vmem:[#allocation15 + $0x1b8] sm:$0xff]
      %v1687 = vld [vmem:[#allocation15 + $0x1c0] sm:$0xff]
      %v1688 = vld [vmem:[#allocation15 + $0x1c8] sm:$0xff]
      %v1689 = vld [vmem:[#allocation15 + $0x1d0] sm:$0xff]
      %v1690 = vld [vmem:[#allocation15 + $0x1d8] sm:$0xff]
      %v1691 = vld [vmem:[#allocation15 + $0x1e0] sm:$0xff]
      %v1692 = vld [vmem:[#allocation15 + $0x1e8] sm:$0xff]
      %v1693 = vld [vmem:[#allocation15 + $0x1f0] sm:$0xff]
      %v1694 = vld [vmem:[#allocation15 + $0x1f8] sm:$0xff]
      %v1695 = vld [vmem:[#allocation15 + $0x200] sm:$0xff]
      %v1696 = vld [vmem:[#allocation15 + $0x208] sm:$0xff]
      %v1697 = vld [vmem:[#allocation15 + $0x210] sm:$0xff]
      %v1698 = vld [vmem:[#allocation15 + $0x218] sm:$0xff]
      %v1699 = vld [vmem:[#allocation15 + $0x220] sm:$0xff]
      %v1700 = vld [vmem:[#allocation15 + $0x228] sm:$0xff]
      %v1701 = vld [vmem:[#allocation15 + $0x230] sm:$0xff]
      %v1702 = vld [vmem:[#allocation15 + $0x238] sm:$0xff]
      %v1703 = vld [vmem:[#allocation15 + $0x240] sm:$0xff]
      %v1704 = vld [vmem:[#allocation15 + $0x248] sm:$0xff]
      %v1705 = vld [vmem:[#allocation15 + $0x250] sm:$0xff]
      %v1706 = vld [vmem:[#allocation15 + $0x258] sm:$0xff]
      %v1707 = vld [vmem:[#allocation15 + $0x260] sm:$0xff]
      %v1708 = vld [vmem:[#allocation15 + $0x268] sm:$0xff]
      %v1709 = vld [vmem:[#allocation15 + $0x270] sm:$0xff]
      %v1710 = vld [vmem:[#allocation15 + $0x278] sm:$0xff]
      %v1711 = vld [vmem:[#allocation15 + $0x280] sm:$0xff]
      %v1712 = vld [vmem:[#allocation15 + $0x288] sm:$0xff]
      %v1713 = vld [vmem:[#allocation15 + $0x290] sm:$0xff]
      %v1714 = vld [vmem:[#allocation15 + $0x298] sm:$0xff]
      %v1715 = vld [vmem:[#allocation15 + $0x2a0] sm:$0xff]
      %v1716 = vld [vmem:[#allocation15 + $0x2a8] sm:$0xff]
      %v1717 = vld [vmem:[#allocation15 + $0x2b0] sm:$0xff]
      %v1718 = vld [vmem:[#allocation15 + $0x2b8] sm:$0xff]
      %v1719 = vld [vmem:[#allocation15 + $0x2c0] sm:$0xff]
      %v1720 = vld [vmem:[#allocation15 + $0x2c8] sm:$0xff]
      %v1721 = vld [vmem:[#allocation15 + $0x2d0] sm:$0xff]
      %v1722 = vld [vmem:[#allocation15 + $0x2d8] sm:$0xff]
      %v1723 = vld [vmem:[#allocation15 + $0x2e0] sm:$0xff]
      %v1724 = vld [vmem:[#allocation15 + $0x2e8] sm:$0xff]
      %v1725 = vld [vmem:[#allocation15 + $0x2f0] sm:$0xff]
      %v1726 = vld [vmem:[#allocation15 + $0x2f8] sm:$0xff]
      %v1727 = vld [vmem:[#allocation15 + $0x300] sm:$0xff]
      %v1728 = vld [vmem:[#allocation15 + $0x308] sm:$0xff]
      %v1729 = vld [vmem:[#allocation15 + $0x310] sm:$0xff]
      %v1730 = vld [vmem:[#allocation15 + $0x318] sm:$0xff]
      %v1731 = vld [vmem:[#allocation15 + $0x320] sm:$0xff]
      %v1732 = vld [vmem:[#allocation15 + $0x328] sm:$0xff]
      %v1733 = vld [vmem:[#allocation15 + $0x330] sm:$0xff]
      %v1734 = vld [vmem:[#allocation15 + $0x338] sm:$0xff]
      %v1735 = vld [vmem:[#allocation15 + $0x340] sm:$0xff]
      %v1736 = vld [vmem:[#allocation15 + $0x348] sm:$0xff]
      %v1737 = vld [vmem:[#allocation15 + $0x350] sm:$0xff]
      %v1738 = vld [vmem:[#allocation15 + $0x358] sm:$0xff]
      %v1739 = vld [vmem:[#allocation15 + $0x360] sm:$0xff]
      %v1740 = vld [vmem:[#allocation15 + $0x368] sm:$0xff]
      %v1741 = vld [vmem:[#allocation15 + $0x370] sm:$0xff]
      %v1742 = vld [vmem:[#allocation15 + $0x378] sm:$0xff]
      %v1743 = vld [vmem:[#allocation15 + $0x380] sm:$0xff]
      %v1744 = vld [vmem:[#allocation15 + $0x388] sm:$0xff]
      %v1745 = vld [vmem:[#allocation15 + $0x390] sm:$0xff]
      %v1746 = vld [vmem:[#allocation15 + $0x398] sm:$0xff]
      %v1747 = vld [vmem:[#allocation15 + $0x3a0] sm:$0xff]
      %v1748 = vld [vmem:[#allocation15 + $0x3a8] sm:$0xff]
      %v1749 = vld [vmem:[#allocation15 + $0x3b0] sm:$0xff]
      %v1750 = vld [vmem:[#allocation15 + $0x3b8] sm:$0xff]
      %v1751 = vld [vmem:[#allocation15 + $0x3c0] sm:$0xff]
      %v1752 = vld [vmem:[#allocation15 + $0x3c8] sm:$0xff]
      %v1753 = vld [vmem:[#allocation15 + $0x3d0] sm:$0xff]
      %v1754 = vld [vmem:[#allocation15 + $0x3d8] sm:$0xff]
      %v1755 = vld [vmem:[#allocation15 + $0x3e0] sm:$0xff]
      %v1756 = vld [vmem:[#allocation15 + $0x3e8] sm:$0xff]
      %v1757 = vld [vmem:[#allocation15 + $0x3f0] sm:$0xff]
      %v1758 = vld [vmem:[#allocation15 + $0x3f8] sm:$0xff]
      %v1759 = vld [vmem:[#allocation15 + $0x400] sm:$0xff]
      %v1760 = vld [vmem:[#allocation15 + $0x408] sm:$0xff]
      %v1761 = vld [vmem:[#allocation15 + $0x410] sm:$0xff]
      %v1762 = vld [vmem:[#allocation15 + $0x418] sm:$0xff]
      %v1763 = vld [vmem:[#allocation15 + $0x420] sm:$0xff]
      %v1764 = vld [vmem:[#allocation15 + $0x428] sm:$0xff]
      %v1765 = vld [vmem:[#allocation15 + $0x430] sm:$0xff]
      %v1766 = vld [vmem:[#allocation15 + $0x438] sm:$0xff]
      %v1767 = vld [vmem:[#allocation15 + $0x440] sm:$0xff]
      %v1768 = vld [vmem:[#allocation15 + $0x448] sm:$0xff]
      %v1769 = vld [vmem:[#allocation15 + $0x450] sm:$0xff]
      %v1770 = vld [vmem:[#allocation15 + $0x458] sm:$0xff]
      %v1771 = vld [vmem:[#allocation15 + $0x460] sm:$0xff]
      %v1772 = vld [vmem:[#allocation15 + $0x468] sm:$0xff]
      %v1773 = vld [vmem:[#allocation15 + $0x470] sm:$0xff]
      %v1774 = vld [vmem:[#allocation15 + $0x478] sm:$0xff]
      %v1775 = vld [vmem:[#allocation15 + $0x480] sm:$0xff]
      %v1776 = vld [vmem:[#allocation15 + $0x488] sm:$0xff]
      %v1777 = vld [vmem:[#allocation15 + $0x490] sm:$0xff]
      %v1778 = vld [vmem:[#allocation15 + $0x498] sm:$0xff]
      %v1779 = vld [vmem:[#allocation15 + $0x4a0] sm:$0xff]
      %v1780 = vld [vmem:[#allocation15 + $0x4a8] sm:$0xff]
      %v1781 = vld [vmem:[#allocation15 + $0x4b0] sm:$0xff]
      %v1782 = vld [vmem:[#allocation15 + $0x4b8] sm:$0xff]
      %v1783 = vld [vmem:[#allocation15 + $0x4c0] sm:$0xff]
      %v1784 = vld [vmem:[#allocation15 + $0x4c8] sm:$0xff]
      %v1785 = vld [vmem:[#allocation15 + $0x4d0] sm:$0xff]
      %v1786 = vld [vmem:[#allocation15 + $0x4d8] sm:$0xff]
      %v1787 = vld [vmem:[#allocation15 + $0x4e0] sm:$0xff]
      %v1788 = vld [vmem:[#allocation15 + $0x4e8] sm:$0xff]
      %v1789 = vld [vmem:[#allocation15 + $0x4f0] sm:$0xff]
      %v1790 = vld [vmem:[#allocation15 + $0x4f8] sm:$0xff]
      %v1791 = vld [vmem:[#allocation15 + $0x500] sm:$0xff]
      %v1792 = vld [vmem:[#allocation15 + $0x508] sm:$0xff]
      %v1793 = vld [vmem:[#allocation15 + $0x510] sm:$0xff]
      %v1794 = vld [vmem:[#allocation15 + $0x518] sm:$0xff]
      %v1795 = vld [vmem:[#allocation15 + $0x520] sm:$0xff]
      %v1796 = vld [vmem:[#allocation15 + $0x528] sm:$0xff]
      %v1797 = vld [vmem:[#allocation15 + $0x530] sm:$0xff]
      %v1798 = vld [vmem:[#allocation15 + $0x538] sm:$0xff]
      %v1799 = vld [vmem:[#allocation15 + $0x540] sm:$0xff]
      %v1800 = vld [vmem:[#allocation15 + $0x548] sm:$0xff]
      %v1801 = vld [vmem:[#allocation15 + $0x550] sm:$0xff]
      %v1802 = vld [vmem:[#allocation15 + $0x558] sm:$0xff]
      %v1803 = vld [vmem:[#allocation15 + $0x560] sm:$0xff]
      %v1804 = vld [vmem:[#allocation15 + $0x568] sm:$0xff]
      %v1805 = vld [vmem:[#allocation15 + $0x570] sm:$0xff]
      %v1806 = vld [vmem:[#allocation15 + $0x578] sm:$0xff]
      %v1807 = vld [vmem:[#allocation15 + $0x580] sm:$0xff]
      %v1808 = vld [vmem:[#allocation15 + $0x588] sm:$0xff]
      %v1809 = vld [vmem:[#allocation15 + $0x590] sm:$0xff]
      %v1810 = vld [vmem:[#allocation15 + $0x598] sm:$0xff]
      %v1811 = vld [vmem:[#allocation15 + $0x5a0] sm:$0xff]
      %v1812 = vld [vmem:[#allocation15 + $0x5a8] sm:$0xff]
      %v1813 = vld [vmem:[#allocation15 + $0x5b0] sm:$0xff]
      %v1814 = vld [vmem:[#allocation15 + $0x5b8] sm:$0xff]
      %v1815 = vld [vmem:[#allocation15 + $0x5c0] sm:$0xff]
      %v1816 = vld [vmem:[#allocation15 + $0x5c8] sm:$0xff]
      %v1817 = vld [vmem:[#allocation15 + $0x5d0] sm:$0xff]
      %v1818 = vld [vmem:[#allocation15 + $0x5d8] sm:$0xff]
      %v1819 = vld [vmem:[#allocation15 + $0x5e0] sm:$0xff]
      %v1820 = vld [vmem:[#allocation15 + $0x5e8] sm:$0xff]
      %v1821 = vld [vmem:[#allocation15 + $0x5f0] sm:$0xff]
      %v1822 = vld [vmem:[#allocation15 + $0x5f8] sm:$0xff]
      %v1823 = vld [vmem:[#allocation15 + $0x600] sm:$0xff]
      %v1824 = vld [vmem:[#allocation15 + $0x608] sm:$0xff]
      %v1825 = vld [vmem:[#allocation15 + $0x610] sm:$0xff]
      %v1826 = vld [vmem:[#allocation15 + $0x618] sm:$0xff]
      %v1827 = vld [vmem:[#allocation15 + $0x620] sm:$0xff]
      %v1828 = vld [vmem:[#allocation15 + $0x628] sm:$0xff]
      %v1829 = vld [vmem:[#allocation15 + $0x630] sm:$0xff]
      %v1830 = vld [vmem:[#allocation15 + $0x638] sm:$0xff]
      %v1831 = vld [vmem:[#allocation15 + $0x640] sm:$0xff]
      %v1832 = vld [vmem:[#allocation15 + $0x648] sm:$0xff]
      %v1833 = vld [vmem:[#allocation15 + $0x650] sm:$0xff]
      %v1834 = vld [vmem:[#allocation15 + $0x658] sm:$0xff]
      %v1835 = vld [vmem:[#allocation15 + $0x660] sm:$0xff]
      %v1836 = vld [vmem:[#allocation15 + $0x668] sm:$0xff]
      %v1837 = vld [vmem:[#allocation15 + $0x670] sm:$0xff]
      %v1838 = vld [vmem:[#allocation15 + $0x678] sm:$0xff]
      %v1839 = vld [vmem:[#allocation15 + $0x680] sm:$0xff]
      %v1840 = vld [vmem:[#allocation15 + $0x688] sm:$0xff]
      %v1841 = vld [vmem:[#allocation15 + $0x690] sm:$0xff]
      %v1842 = vld [vmem:[#allocation15 + $0x698] sm:$0xff]
      %v1843 = vld [vmem:[#allocation15 + $0x6a0] sm:$0xff]
      %v1844 = vld [vmem:[#allocation15 + $0x6a8] sm:$0xff]
      %v1845 = vld [vmem:[#allocation15 + $0x6b0] sm:$0xff]
      %v1846 = vld [vmem:[#allocation15 + $0x6b8] sm:$0xff]
      %v1847 = vld [vmem:[#allocation15 + $0x6c0] sm:$0xff]
      %v1848 = vld [vmem:[#allocation15 + $0x6c8] sm:$0xff]
      %v1849 = vld [vmem:[#allocation15 + $0x6d0] sm:$0xff]
      %v1850 = vld [vmem:[#allocation15 + $0x6d8] sm:$0xff]
      %v1851 = vld [vmem:[#allocation15 + $0x6e0] sm:$0xff]
      %v1852 = vld [vmem:[#allocation15 + $0x6e8] sm:$0xff]
      %v1853 = vld [vmem:[#allocation15 + $0x6f0] sm:$0xff]
      %v1854 = vld [vmem:[#allocation15 + $0x6f8] sm:$0xff]
      %v1855 = vld [vmem:[#allocation15 + $0x700] sm:$0xff]
      %v1856 = vld [vmem:[#allocation15 + $0x708] sm:$0xff]
      %v1857 = vld [vmem:[#allocation15 + $0x710] sm:$0xff]
      %v1858 = vld [vmem:[#allocation15 + $0x718] sm:$0xff]
      %v1859 = vld [vmem:[#allocation15 + $0x720] sm:$0xff]
      %v1860 = vld [vmem:[#allocation15 + $0x728] sm:$0xff]
      %v1861 = vld [vmem:[#allocation15 + $0x730] sm:$0xff]
      %v1862 = vld [vmem:[#allocation15 + $0x738] sm:$0xff]
      %v1863 = vld [vmem:[#allocation15 + $0x740] sm:$0xff]
      %v1864 = vld [vmem:[#allocation15 + $0x748] sm:$0xff]
      %v1865 = vld [vmem:[#allocation15 + $0x750] sm:$0xff]
      %v1866 = vld [vmem:[#allocation15 + $0x758] sm:$0xff]
      %v1867 = vld [vmem:[#allocation15 + $0x760] sm:$0xff]
      %v1868 = vld [vmem:[#allocation15 + $0x768] sm:$0xff]
      %v1869 = vld [vmem:[#allocation15 + $0x770] sm:$0xff]
      %v1870 = vld [vmem:[#allocation15 + $0x778] sm:$0xff]
      %v1871 = vld [vmem:[#allocation15 + $0x780] sm:$0xff]
      %v1872 = vld [vmem:[#allocation15 + $0x788] sm:$0xff]
      %v1873 = vld [vmem:[#allocation15 + $0x790] sm:$0xff]
      %v1874 = vld [vmem:[#allocation15 + $0x798] sm:$0xff]
      %v1875 = vld [vmem:[#allocation15 + $0x7a0] sm:$0xff]
      %v1876 = vld [vmem:[#allocation15 + $0x7a8] sm:$0xff]
      %v1877 = vld [vmem:[#allocation15 + $0x7b0] sm:$0xff]
      %v1878 = vld [vmem:[#allocation15 + $0x7b8] sm:$0xff]
      %v1879 = vld [vmem:[#allocation15 + $0x7c0] sm:$0xff]
      %v1880 = vld [vmem:[#allocation15 + $0x7c8] sm:$0xff]
      %v1881 = vld [vmem:[#allocation15 + $0x7d0] sm:$0xff]
      %v1882 = vld [vmem:[#allocation15 + $0x7d8] sm:$0xff]
      %v1883 = vld [vmem:[#allocation15 + $0x7e0] sm:$0xff]
      %v1884 = vld [vmem:[#allocation15 + $0x7e8] sm:$0xff]
      %v1885 = vld [vmem:[#allocation15 + $0x7f0] sm:$0xff]
      %v1886 = vld [vmem:[#allocation15 + $0x7f8] sm:$0xff]
      %v1887 = vld [vmem:[#allocation15 + $0x800] sm:$0xff]
      %v1888 = vld [vmem:[#allocation15 + $0x808] sm:$0xff]
      %v1889 = vld [vmem:[#allocation15 + $0x810] sm:$0xff]
      %v1890 = vld [vmem:[#allocation15 + $0x818] sm:$0xff]
      %v1891 = vld [vmem:[#allocation15 + $0x820] sm:$0xff]
      %v1892 = vld [vmem:[#allocation15 + $0x828] sm:$0xff]
      %v1893 = vld [vmem:[#allocation15 + $0x830] sm:$0xff]
      %v1894 = vld [vmem:[#allocation15 + $0x838] sm:$0xff]
      %v1895 = vld [vmem:[#allocation15 + $0x840] sm:$0xff]
      %v1896 = vld [vmem:[#allocation15 + $0x848] sm:$0xff]
      %v1897 = vld [vmem:[#allocation15 + $0x850] sm:$0xff]
      %v1898 = vld [vmem:[#allocation15 + $0x858] sm:$0xff]
      %v1899 = vld [vmem:[#allocation15 + $0x860] sm:$0xff]
      %v1900 = vld [vmem:[#allocation15 + $0x868] sm:$0xff]
      %v1901 = vld [vmem:[#allocation15 + $0x870] sm:$0xff]
      %v1902 = vld [vmem:[#allocation15 + $0x878] sm:$0xff]
      %v1903 = vld [vmem:[#allocation15 + $0x880] sm:$0xff]
      %v1904 = vld [vmem:[#allocation15 + $0x888] sm:$0xff]
      %v1905 = vld [vmem:[#allocation15 + $0x890] sm:$0xff]
      %v1906 = vld [vmem:[#allocation15 + $0x898] sm:$0xff]
      %v1907 = vld [vmem:[#allocation15 + $0x8a0] sm:$0xff]
      %v1908 = vld [vmem:[#allocation15 + $0x8a8] sm:$0xff]
      %v1909 = vld [vmem:[#allocation15 + $0x8b0] sm:$0xff]
      %v1910 = vld [vmem:[#allocation15 + $0x8b8] sm:$0xff]
      %v1911 = vld [vmem:[#allocation15 + $0x8c0] sm:$0xff]
      %v1912 = vld [vmem:[#allocation15 + $0x8c8] sm:$0xff]
      %v1913 = vld [vmem:[#allocation15 + $0x8d0] sm:$0xff]
      %v1914 = vld [vmem:[#allocation15 + $0x8d8] sm:$0xff]
      %v1915 = vld [vmem:[#allocation15 + $0x8e0] sm:$0xff]
      %v1916 = vld [vmem:[#allocation15 + $0x8e8] sm:$0xff]
      %v1917 = vld [vmem:[#allocation15 + $0x8f0] sm:$0xff]
      %v1918 = vld [vmem:[#allocation15 + $0x8f8] sm:$0xff]
      %v1919 = vld [vmem:[#allocation15 + $0x900] sm:$0xff]
      %v1920 = vld [vmem:[#allocation15 + $0x908] sm:$0xff]
      %v1921 = vld [vmem:[#allocation15 + $0x910] sm:$0xff]
      %v1922 = vld [vmem:[#allocation15 + $0x918] sm:$0xff]
      %v1923 = vld [vmem:[#allocation15 + $0x920] sm:$0xff]
      %v1924 = vld [vmem:[#allocation15 + $0x928] sm:$0xff]
      %v1925 = vld [vmem:[#allocation15 + $0x930] sm:$0xff]
      %v1926 = vld [vmem:[#allocation15 + $0x938] sm:$0xff]
      %v1927 = vld [vmem:[#allocation15 + $0x940] sm:$0xff]
      %v1928 = vld [vmem:[#allocation15 + $0x948] sm:$0xff]
      %v1929 = vld [vmem:[#allocation15 + $0x950] sm:$0xff]
      %v1930 = vld [vmem:[#allocation15 + $0x958] sm:$0xff]
      %v1931 = vld [vmem:[#allocation15 + $0x960] sm:$0xff]
      %v1932 = vld [vmem:[#allocation15 + $0x968] sm:$0xff]
      %v1933 = vld [vmem:[#allocation15 + $0x970] sm:$0xff]
      %v1934 = vld [vmem:[#allocation15 + $0x978] sm:$0xff]
      %v1935 = vld [vmem:[#allocation15 + $0x980] sm:$0xff]
      %v1936 = vld [vmem:[#allocation15 + $0x988] sm:$0xff]
      %v1937 = vld [vmem:[#allocation15 + $0x990] sm:$0xff]
      %v1938 = vld [vmem:[#allocation15 + $0x998] sm:$0xff]
      %v1939 = vld [vmem:[#allocation15 + $0x9a0] sm:$0xff]
      %v1940 = vld [vmem:[#allocation15 + $0x9a8] sm:$0xff]
      %v1941 = vld [vmem:[#allocation15 + $0x9b0] sm:$0xff]
      %v1942 = vld [vmem:[#allocation15 + $0x9b8] sm:$0xff]
      %v1943 = vld [vmem:[#allocation15 + $0x9c0] sm:$0xff]
      %v1944 = vld [vmem:[#allocation15 + $0x9c8] sm:$0xff]
      %v1945 = vld [vmem:[#allocation15 + $0x9d0] sm:$0xff]
      %v1946 = vld [vmem:[#allocation15 + $0x9d8] sm:$0xff]
      %v1947 = vld [vmem:[#allocation15 + $0x9e0] sm:$0xff]
      %v1948 = vld [vmem:[#allocation15 + $0x9e8] sm:$0xff]
      %v1949 = vld [vmem:[#allocation15 + $0x9f0] sm:$0xff]
      %v1950 = vld [vmem:[#allocation15 + $0x9f8] sm:$0xff]
      %v1951 = vld [vmem:[#allocation15 + $0xa00] sm:$0xff]
      %v1952 = vld [vmem:[#allocation15 + $0xa08] sm:$0xff]
      %v1953 = vld [vmem:[#allocation15 + $0xa10] sm:$0xff]
      %v1954 = vld [vmem:[#allocation15 + $0xa18] sm:$0xff]
      %v1955 = vld [vmem:[#allocation15 + $0xa20] sm:$0xff]
      %v1956 = vld [vmem:[#allocation15 + $0xa28] sm:$0xff]
      %v1957 = vld [vmem:[#allocation15 + $0xa30] sm:$0xff]
      %v1958 = vld [vmem:[#allocation15 + $0xa38] sm:$0xff]
      %v1959 = vld [vmem:[#allocation15 + $0xa40] sm:$0xff]
      %v1960 = vld [vmem:[#allocation15 + $0xa48] sm:$0xff]
      %v1961 = vld [vmem:[#allocation15 + $0xa50] sm:$0xff]
      %v1962 = vld [vmem:[#allocation15 + $0xa58] sm:$0xff]
      %v1963 = vld [vmem:[#allocation15 + $0xa60] sm:$0xff]
      %v1964 = vld [vmem:[#allocation15 + $0xa68] sm:$0xff]
      %v1965 = vld [vmem:[#allocation15 + $0xa70] sm:$0xff]
      %v1966 = vld [vmem:[#allocation15 + $0xa78] sm:$0xff]
      %v1967 = vld [vmem:[#allocation15 + $0xa80] sm:$0xff]
      %v1968 = vld [vmem:[#allocation15 + $0xa88] sm:$0xff]
      %v1969 = vld [vmem:[#allocation15 + $0xa90] sm:$0xff]
      %v1970 = vld [vmem:[#allocation15 + $0xa98] sm:$0xff]
      %v1971 = vld [vmem:[#allocation15 + $0xaa0] sm:$0xff]
      %v1972 = vld [vmem:[#allocation15 + $0xaa8] sm:$0xff]
      %v1973 = vld [vmem:[#allocation15 + $0xab0] sm:$0xff]
      %v1974 = vld [vmem:[#allocation15 + $0xab8] sm:$0xff]
      %v1975 = vld [vmem:[#allocation15 + $0xac0] sm:$0xff]
      %v1976 = vld [vmem:[#allocation15 + $0xac8] sm:$0xff]
      %v1977 = vld [vmem:[#allocation15 + $0xad0] sm:$0xff]
      %v1978 = vld [vmem:[#allocation15 + $0xad8] sm:$0xff]
      %v1979 = vld [vmem:[#allocation15 + $0xae0] sm:$0xff]
      %v1980 = vld [vmem:[#allocation15 + $0xae8] sm:$0xff]
      %v1981 = vld [vmem:[#allocation15 + $0xaf0] sm:$0xff]
      %v1982 = vld [vmem:[#allocation15 + $0xaf8] sm:$0xff]
      %v1983 = vld [vmem:[#allocation15 + $0xb00] sm:$0xff]
      %v1984 = vld [vmem:[#allocation15 + $0xb08] sm:$0xff]
      %v1985 = vld [vmem:[#allocation15 + $0xb10] sm:$0xff]
      %v1986 = vld [vmem:[#allocation15 + $0xb18] sm:$0xff]
      %v1987 = vld [vmem:[#allocation15 + $0xb20] sm:$0xff]
      %v1988 = vld [vmem:[#allocation15 + $0xb28] sm:$0xff]
      %v1989 = vld [vmem:[#allocation15 + $0xb30] sm:$0xff]
      %v1990 = vld [vmem:[#allocation15 + $0xb38] sm:$0xff]
      %v1991 = vld [vmem:[#allocation15 + $0xb40] sm:$0xff]
      %v1992 = vld [vmem:[#allocation15 + $0xb48] sm:$0xff]
      %v1993 = vld [vmem:[#allocation15 + $0xb50] sm:$0xff]
      %v1994 = vld [vmem:[#allocation15 + $0xb58] sm:$0xff]
      %v1995 = vld [vmem:[#allocation15 + $0xb60] sm:$0xff]
      %v1996 = vld [vmem:[#allocation15 + $0xb68] sm:$0xff]
      %v1997 = vld [vmem:[#allocation15 + $0xb70] sm:$0xff]
      %v1998 = vld [vmem:[#allocation15 + $0xb78] sm:$0xff]
      %v1999 = vld [vmem:[#allocation15 + $0xb80] sm:$0xff]
      %v2000 = vld [vmem:[#allocation15 + $0xb88] sm:$0xff]
      %v2001 = vld [vmem:[#allocation15 + $0xb90] sm:$0xff]
      %v2002 = vld [vmem:[#allocation15 + $0xb98] sm:$0xff]
      %v2003 = vld [vmem:[#allocation15 + $0xba0] sm:$0xff]
      %v2004 = vld [vmem:[#allocation15 + $0xba8] sm:$0xff]
      %v2005 = vld [vmem:[#allocation15 + $0xbb0] sm:$0xff]
      %v2006 = vld [vmem:[#allocation15 + $0xbb8] sm:$0xff]
      %v2007 = vld [vmem:[#allocation15 + $0xbc0] sm:$0xff]
      %v2008 = vld [vmem:[#allocation15 + $0xbc8] sm:$0xff]
      %v2009 = vld [vmem:[#allocation15 + $0xbd0] sm:$0xff]
      %v2010 = vld [vmem:[#allocation15 + $0xbd8] sm:$0xff]
      %v2011 = vld [vmem:[#allocation15 + $0xbe0] sm:$0xff]
      %v2012 = vld [vmem:[#allocation15 + $0xbe8] sm:$0xff]
      %v2013 = vld [vmem:[#allocation15 + $0xbf0] sm:$0xff]
      %v2014 = vld [vmem:[#allocation15 + $0xbf8] sm:$0xff]
      %v2015 = vld [vmem:[#allocation15 + $0xc00] sm:$0xff]
      %v2016 = vld [vmem:[#allocation15 + $0xc08] sm:$0xff]
      %v2017 = vld [vmem:[#allocation15 + $0xc10] sm:$0xff]
      %v2018 = vld [vmem:[#allocation15 + $0xc18] sm:$0xff]
      %v2019 = vld [vmem:[#allocation15 + $0xc20] sm:$0xff]
      %v2020 = vld [vmem:[#allocation15 + $0xc28] sm:$0xff]
      %v2021 = vld [vmem:[#allocation15 + $0xc30] sm:$0xff]
      %v2022 = vld [vmem:[#allocation15 + $0xc38] sm:$0xff]
      %v2023 = vld [vmem:[#allocation15 + $0xc40] sm:$0xff]
      %v2024 = vld [vmem:[#allocation15 + $0xc48] sm:$0xff]
      %v2025 = vld [vmem:[#allocation15 + $0xc50] sm:$0xff]
      %v2026 = vld [vmem:[#allocation15 + $0xc58] sm:$0xff]
      %v2027 = vld [vmem:[#allocation15 + $0xc60] sm:$0xff]
      %v2028 = vld [vmem:[#allocation15 + $0xc68] sm:$0xff]
      %v2029 = vld [vmem:[#allocation15 + $0xc70] sm:$0xff]
      %v2030 = vld [vmem:[#allocation15 + $0xc78] sm:$0xff]
      %v2031 = vld [vmem:[#allocation15 + $0xc80] sm:$0xff]
      %v2032 = vld [vmem:[#allocation15 + $0xc88] sm:$0xff]
      %v2033 = vld [vmem:[#allocation15 + $0xc90] sm:$0xff]
      %v2034 = vld [vmem:[#allocation15 + $0xc98] sm:$0xff]
      %v2035 = vld [vmem:[#allocation15 + $0xca0] sm:$0xff]
      %v2036 = vld [vmem:[#allocation15 + $0xca8] sm:$0xff]
      %v2037 = vld [vmem:[#allocation15 + $0xcb0] sm:$0xff]
      %v2038 = vld [vmem:[#allocation15 + $0xcb8] sm:$0xff]
      %v2039 = vld [vmem:[#allocation15 + $0xcc0] sm:$0xff]
      %v2040 = vld [vmem:[#allocation15 + $0xcc8] sm:$0xff]
      %v2041 = vld [vmem:[#allocation15 + $0xcd0] sm:$0xff]
      %v2042 = vld [vmem:[#allocation15 + $0xcd8] sm:$0xff]
      %v2043 = vld [vmem:[#allocation15 + $0xce0] sm:$0xff]
      %v2044 = vld [vmem:[#allocation15 + $0xce8] sm:$0xff]
      %v2045 = vld [vmem:[#allocation15 + $0xcf0] sm:$0xff]
      %v2046 = vld [vmem:[#allocation15 + $0xcf8] sm:$0xff]
      %v2047 = vld [vmem:[#allocation15 + $0xd00] sm:$0xff]
      %v2048 = vld [vmem:[#allocation15 + $0xd08] sm:$0xff]
      %v2049 = vld [vmem:[#allocation15 + $0xd10] sm:$0xff]
      %v2050 = vld [vmem:[#allocation15 + $0xd18] sm:$0xff]
      %v2051 = vld [vmem:[#allocation15 + $0xd20] sm:$0xff]
      %v2052 = vld [vmem:[#allocation15 + $0xd28] sm:$0xff]
      %v2053 = vld [vmem:[#allocation15 + $0xd30] sm:$0xff]
      %v2054 = vld [vmem:[#allocation15 + $0xd38] sm:$0xff]
      %v2055 = vld [vmem:[#allocation15 + $0xd40] sm:$0xff]
      %v2056 = vld [vmem:[#allocation15 + $0xd48] sm:$0xff]
      %v2057 = vld [vmem:[#allocation15 + $0xd50] sm:$0xff]
      %v2058 = vld [vmem:[#allocation15 + $0xd58] sm:$0xff]
      %v2059 = vld [vmem:[#allocation15 + $0xd60] sm:$0xff]
      %v2060 = vld [vmem:[#allocation15 + $0xd68] sm:$0xff]
      %v2061 = vld [vmem:[#allocation15 + $0xd70] sm:$0xff]
      %v2062 = vld [vmem:[#allocation15 + $0xd78] sm:$0xff]
      %v2063 = vld [vmem:[#allocation15 + $0xd80] sm:$0xff]
      %v2064 = vld [vmem:[#allocation15 + $0xd88] sm:$0xff]
      %v2065 = vld [vmem:[#allocation15 + $0xd90] sm:$0xff]
      %v2066 = vld [vmem:[#allocation15 + $0xd98] sm:$0xff]
      %v2067 = vld [vmem:[#allocation15 + $0xda0] sm:$0xff]
      %v2068 = vld [vmem:[#allocation15 + $0xda8] sm:$0xff]
      %v2069 = vld [vmem:[#allocation15 + $0xdb0] sm:$0xff]
      %v2070 = vld [vmem:[#allocation15 + $0xdb8] sm:$0xff]
      %v2071 = vld [vmem:[#allocation15 + $0xdc0] sm:$0xff]
      %v2072 = vld [vmem:[#allocation15 + $0xdc8] sm:$0xff]
      %v2073 = vld [vmem:[#allocation15 + $0xdd0] sm:$0xff]
      %v2074 = vld [vmem:[#allocation15 + $0xdd8] sm:$0xff]
      %v2075 = vld [vmem:[#allocation15 + $0xde0] sm:$0xff]
      %v2076 = vld [vmem:[#allocation15 + $0xde8] sm:$0xff]
      %v2077 = vld [vmem:[#allocation15 + $0xdf0] sm:$0xff]
      %v2078 = vld [vmem:[#allocation15 + $0xdf8] sm:$0xff]
      %v2079 = vld [vmem:[#allocation15 + $0xe00] sm:$0xff]
      %v2080 = vld [vmem:[#allocation15 + $0xe08] sm:$0xff]
      %v2081 = vld [vmem:[#allocation15 + $0xe10] sm:$0xff]
      %v2082 = vld [vmem:[#allocation15 + $0xe18] sm:$0xff]
      %v2083 = vld [vmem:[#allocation15 + $0xe20] sm:$0xff]
      %v2084 = vld [vmem:[#allocation15 + $0xe28] sm:$0xff]
      %v2085 = vld [vmem:[#allocation15 + $0xe30] sm:$0xff]
      %v2086 = vld [vmem:[#allocation15 + $0xe38] sm:$0xff]
      %v2087 = vld [vmem:[#allocation15 + $0xe40] sm:$0xff]
      %v2088 = vld [vmem:[#allocation15 + $0xe48] sm:$0xff]
      %v2089 = vld [vmem:[#allocation15 + $0xe50] sm:$0xff]
      %v2090 = vld [vmem:[#allocation15 + $0xe58] sm:$0xff]
      %v2091 = vld [vmem:[#allocation15 + $0xe60] sm:$0xff]
      %v2092 = vld [vmem:[#allocation15 + $0xe68] sm:$0xff]
      %v2093 = vld [vmem:[#allocation15 + $0xe70] sm:$0xff]
      %v2094 = vld [vmem:[#allocation15 + $0xe78] sm:$0xff]
      %v2095 = vld [vmem:[#allocation15 + $0xe80] sm:$0xff]
      %v2096 = vld [vmem:[#allocation15 + $0xe88] sm:$0xff]
      %v2097 = vld [vmem:[#allocation15 + $0xe90] sm:$0xff]
      %v2098 = vld [vmem:[#allocation15 + $0xe98] sm:$0xff]
      %v2099 = vld [vmem:[#allocation15 + $0xea0] sm:$0xff]
      %v2100 = vld [vmem:[#allocation15 + $0xea8] sm:$0xff]
      %v2101 = vld [vmem:[#allocation15 + $0xeb0] sm:$0xff]
      %v2102 = vld [vmem:[#allocation15 + $0xeb8] sm:$0xff]
      %v2103 = vld [vmem:[#allocation15 + $0xec0] sm:$0xff]
      %v2104 = vld [vmem:[#allocation15 + $0xec8] sm:$0xff]
      %v2105 = vld [vmem:[#allocation15 + $0xed0] sm:$0xff]
      %v2106 = vld [vmem:[#allocation15 + $0xed8] sm:$0xff]
      %v2107 = vld [vmem:[#allocation15 + $0xee0] sm:$0xff]
      %v2108 = vld [vmem:[#allocation15 + $0xee8] sm:$0xff]
      %v2109 = vld [vmem:[#allocation15 + $0xef0] sm:$0xff]
      %v2110 = vld [vmem:[#allocation15 + $0xef8] sm:$0xff]
      %v2111 = vld [vmem:[#allocation15 + $0xf00] sm:$0xff]
      %v2112 = vld [vmem:[#allocation15 + $0xf08] sm:$0xff]
      %v2113 = vld [vmem:[#allocation15 + $0xf10] sm:$0xff]
      %v2114 = vld [vmem:[#allocation15 + $0xf18] sm:$0xff]
      %v2115 = vld [vmem:[#allocation15 + $0xf20] sm:$0xff]
      %v2116 = vld [vmem:[#allocation15 + $0xf28] sm:$0xff]
      %v2117 = vld [vmem:[#allocation15 + $0xf30] sm:$0xff]
      %v2118 = vld [vmem:[#allocation15 + $0xf38] sm:$0xff]
      %v2119 = vld [vmem:[#allocation15 + $0xf40] sm:$0xff]
      %v2120 = vld [vmem:[#allocation15 + $0xf48] sm:$0xff]
      %v2121 = vld [vmem:[#allocation15 + $0xf50] sm:$0xff]
      %v2122 = vld [vmem:[#allocation15 + $0xf58] sm:$0xff]
      %v2123 = vld [vmem:[#allocation15 + $0xf60] sm:$0xff]
      %v2124 = vld [vmem:[#allocation15 + $0xf68] sm:$0xff]
      %v2125 = vld [vmem:[#allocation15 + $0xf70] sm:$0xff]
      %v2126 = vld [vmem:[#allocation15 + $0xf78] sm:$0xff]
      %v2127 = vld [vmem:[#allocation15 + $0xf80] sm:$0xff]
      %v2128 = vld [vmem:[#allocation15 + $0xf88] sm:$0xff]
      %v2129 = vld [vmem:[#allocation15 + $0xf90] sm:$0xff]
      %v2130 = vld [vmem:[#allocation15 + $0xf98] sm:$0xff]
      %v2131 = vld [vmem:[#allocation15 + $0xfa0] sm:$0xff]
      %v2132 = vld [vmem:[#allocation15 + $0xfa8] sm:$0xff]
      %v2133 = vld [vmem:[#allocation15 + $0xfb0] sm:$0xff]
      %v2134 = vld [vmem:[#allocation15 + $0xfb8] sm:$0xff]
      %v2135 = vld [vmem:[#allocation15 + $0xfc0] sm:$0xff]
      %v2136 = vld [vmem:[#allocation15 + $0xfc8] sm:$0xff]
      %v2137 = vld [vmem:[#allocation15 + $0xfd0] sm:$0xff]
      %v2138 = vld [vmem:[#allocation15 + $0xfd8] sm:$0xff]
      %v2139 = vld [vmem:[#allocation15 + $0xfe0] sm:$0xff]
      %v2140 = vld [vmem:[#allocation15 + $0xfe8] sm:$0xff]
      %v2141 = vld [vmem:[#allocation15 + $0xff0] sm:$0xff]
      %v2142 = vld [vmem:[#allocation15 + $0xff8] sm:$0xff]
      %v2143 = vld [vmem:[#allocation15 + $0x1000] sm:$0xff]
      %v2144 = vld [vmem:[#allocation15 + $0x1008] sm:$0xff]
      %v2145 = vld [vmem:[#allocation15 + $0x1010] sm:$0xff]
      %v2146 = vld [vmem:[#allocation15 + $0x1018] sm:$0xff]
      %v2147 = vld [vmem:[#allocation15 + $0x1020] sm:$0xff]
      %v2148 = vld [vmem:[#allocation15 + $0x1028] sm:$0xff]
      %v2149 = vld [vmem:[#allocation15 + $0x1030] sm:$0xff]
      %v2150 = vld [vmem:[#allocation15 + $0x1038] sm:$0xff]
      %v2151 = vld [vmem:[#allocation15 + $0x1040] sm:$0xff]
      %v2152 = vld [vmem:[#allocation15 + $0x1048] sm:$0xff]
      %v2153 = vld [vmem:[#allocation15 + $0x1050] sm:$0xff]
      %v2154 = vld [vmem:[#allocation15 + $0x1058] sm:$0xff]
      %v2155 = vld [vmem:[#allocation15 + $0x1060] sm:$0xff]
      %v2156 = vld [vmem:[#allocation15 + $0x1068] sm:$0xff]
      %v2157 = vld [vmem:[#allocation15 + $0x1070] sm:$0xff]
      %v2158 = vld [vmem:[#allocation15 + $0x1078] sm:$0xff]
      %v2159 = vld [vmem:[#allocation15 + $0x1080] sm:$0xff]
      %v2160 = vld [vmem:[#allocation15 + $0x1088] sm:$0xff]
      %v2161 = vld [vmem:[#allocation15 + $0x1090] sm:$0xff]
      %v2162 = vld [vmem:[#allocation15 + $0x1098] sm:$0xff]
      %v2163 = vld [vmem:[#allocation15 + $0x10a0] sm:$0xff]
      %v2164 = vld [vmem:[#allocation15 + $0x10a8] sm:$0xff]
      %v2165 = vld [vmem:[#allocation15 + $0x10b0] sm:$0xff]
      %v2166 = vld [vmem:[#allocation15 + $0x10b8] sm:$0xff]
      %v2167 = vld [vmem:[#allocation15 + $0x10c0] sm:$0xff]
      %v2168 = vld [vmem:[#allocation15 + $0x10c8] sm:$0xff]
      %v2169 = vld [vmem:[#allocation15 + $0x10d0] sm:$0xff]
      %v2170 = vld [vmem:[#allocation15 + $0x10d8] sm:$0xff]
      %v2171 = vld [vmem:[#allocation15 + $0x10e0] sm:$0xff]
      %v2172 = vld [vmem:[#allocation15 + $0x10e8] sm:$0xff]
      %v2173 = vld [vmem:[#allocation15 + $0x10f0] sm:$0xff]
      %v2174 = vld [vmem:[#allocation15 + $0x10f8] sm:$0xff]
      %v2175 = vld [vmem:[#allocation15 + $0x1100] sm:$0xff]
      %v2176 = vld [vmem:[#allocation15 + $0x1108] sm:$0xff]
      %v2177 = vld [vmem:[#allocation15 + $0x1110] sm:$0xff]
      %v2178 = vld [vmem:[#allocation15 + $0x1118] sm:$0xff]
      %v2179 = vld [vmem:[#allocation15 + $0x1120] sm:$0xff]
      %v2180 = vld [vmem:[#allocation15 + $0x1128] sm:$0xff]
      %v2181 = vld [vmem:[#allocation15 + $0x1130] sm:$0xff]
      %v2182 = vld [vmem:[#allocation15 + $0x1138] sm:$0xff]
      %v2183 = vld [vmem:[#allocation15 + $0x1140] sm:$0xff]
      %v2184 = vld [vmem:[#allocation15 + $0x1148] sm:$0xff]
      %v2185 = vld [vmem:[#allocation15 + $0x1150] sm:$0xff]
      %v2186 = vld [vmem:[#allocation15 + $0x1158] sm:$0xff]
      %v2187 = vld [vmem:[#allocation15 + $0x1160] sm:$0xff]
      %v2188 = vld [vmem:[#allocation15 + $0x1168] sm:$0xff]
      %v2189 = vld [vmem:[#allocation15 + $0x1170] sm:$0xff]
      %v2190 = vld [vmem:[#allocation15 + $0x1178] sm:$0xff]
      %v2191 = vld [vmem:[#allocation15 + $0x1180] sm:$0xff]
      %v2192 = vld [vmem:[#allocation15 + $0x1188] sm:$0xff]
      %v2193 = vld [vmem:[#allocation15 + $0x1190] sm:$0xff]
      %v2194 = vld [vmem:[#allocation15 + $0x1198] sm:$0xff]
      %v2195 = vld [vmem:[#allocation15 + $0x11a0] sm:$0xff]
      %v2196 = vld [vmem:[#allocation15 + $0x11a8] sm:$0xff]
      %v2197 = vld [vmem:[#allocation15 + $0x11b0] sm:$0xff]
      %v2198 = vld [vmem:[#allocation15 + $0x11b8] sm:$0xff]
      %v2199 = vld [vmem:[#allocation15 + $0x11c0] sm:$0xff]
      %v2200 = vld [vmem:[#allocation15 + $0x11c8] sm:$0xff]
      %v2201 = vld [vmem:[#allocation15 + $0x11d0] sm:$0xff]
      %v2202 = vld [vmem:[#allocation15 + $0x11d8] sm:$0xff]
      %v2203 = vld [vmem:[#allocation15 + $0x11e0] sm:$0xff]
      %v2204 = vld [vmem:[#allocation15 + $0x11e8] sm:$0xff]
      %v2205 = vld [vmem:[#allocation15 + $0x11f0] sm:$0xff]
      %v2206 = vld [vmem:[#allocation15 + $0x11f8] sm:$0xff]
      %v2207 = vld [vmem:[#allocation15 + $0x1200] sm:$0xff]
      %v2208 = vld [vmem:[#allocation15 + $0x1208] sm:$0xff]
      %v2209 = vld [vmem:[#allocation15 + $0x1210] sm:$0xff]
      %v2210 = vld [vmem:[#allocation15 + $0x1218] sm:$0xff]
      %v2211 = vld [vmem:[#allocation15 + $0x1220] sm:$0xff]
      %v2212 = vld [vmem:[#allocation15 + $0x1228] sm:$0xff]
      %v2213 = vld [vmem:[#allocation15 + $0x1230] sm:$0xff]
      %v2214 = vld [vmem:[#allocation15 + $0x1238] sm:$0xff]
      %v2215 = vld [vmem:[#allocation15 + $0x1240] sm:$0xff]
      %v2216 = vld [vmem:[#allocation15 + $0x1248] sm:$0xff]
      %v2217 = vld [vmem:[#allocation15 + $0x1250] sm:$0xff]
      %v2218 = vld [vmem:[#allocation15 + $0x1258] sm:$0xff]
      %v2219 = vld [vmem:[#allocation15 + $0x1260] sm:$0xff]
      %v2220 = vld [vmem:[#allocation15 + $0x1268] sm:$0xff]
      %v2221 = vld [vmem:[#allocation15 + $0x1270] sm:$0xff]
      %v2222 = vld [vmem:[#allocation15 + $0x1278] sm:$0xff]
      %v2223 = vld [vmem:[#allocation15 + $0x1280] sm:$0xff]
      %v2224 = vld [vmem:[#allocation15 + $0x1288] sm:$0xff]
      %v2225 = vld [vmem:[#allocation15 + $0x1290] sm:$0xff]
      %v2226 = vld [vmem:[#allocation15 + $0x1298] sm:$0xff]
      %v2227 = vld [vmem:[#allocation15 + $0x12a0] sm:$0xff]
      %v2228 = vld [vmem:[#allocation15 + $0x12a8] sm:$0xff]
      %v2229 = vld [vmem:[#allocation15 + $0x12b0] sm:$0xff]
      %v2230 = vld [vmem:[#allocation15 + $0x12b8] sm:$0xff]
      %v2231 = vld [vmem:[#allocation15 + $0x12c0] sm:$0xff]
      %v2232 = vld [vmem:[#allocation15 + $0x12c8] sm:$0xff]
      %v2233 = vld [vmem:[#allocation15 + $0x12d0] sm:$0xff]
      %v2234 = vld [vmem:[#allocation15 + $0x12d8] sm:$0xff]
      %v2235 = vld [vmem:[#allocation15 + $0x12e0] sm:$0xff]
      %v2236 = vld [vmem:[#allocation15 + $0x12e8] sm:$0xff]
      %v2237 = vld [vmem:[#allocation15 + $0x12f0] sm:$0xff]
      %v2238 = vld [vmem:[#allocation15 + $0x12f8] sm:$0xff]
      %v2239 = vld [vmem:[#allocation15 + $0x1300] sm:$0xff]
      %v2240 = vld [vmem:[#allocation15 + $0x1308] sm:$0xff]
      %v2241 = vld [vmem:[#allocation15 + $0x1310] sm:$0xff]
      %v2242 = vld [vmem:[#allocation15 + $0x1318] sm:$0xff]
      %v2243 = vld [vmem:[#allocation15 + $0x1320] sm:$0xff]
      %v2244 = vld [vmem:[#allocation15 + $0x1328] sm:$0xff]
      %v2245 = vld [vmem:[#allocation15 + $0x1330] sm:$0xff]
      %v2246 = vld [vmem:[#allocation15 + $0x1338] sm:$0xff]
      %v2247 = vld [vmem:[#allocation15 + $0x1340] sm:$0xff]
      %v2248 = vld [vmem:[#allocation15 + $0x1348] sm:$0xff]
      %v2249 = vld [vmem:[#allocation15 + $0x1350] sm:$0xff]
      %v2250 = vld [vmem:[#allocation15 + $0x1358] sm:$0xff]
      %v2251 = vld [vmem:[#allocation15 + $0x1360] sm:$0xff]
      %v2252 = vld [vmem:[#allocation15 + $0x1368] sm:$0xff]
      %v2253 = vld [vmem:[#allocation15 + $0x1370] sm:$0xff]
      %v2254 = vld [vmem:[#allocation15 + $0x1378] sm:$0xff]
      %v2255 = vld [vmem:[#allocation15 + $0x1380] sm:$0xff]
      %v2256 = vld [vmem:[#allocation15 + $0x1388] sm:$0xff]
      %v2257 = vld [vmem:[#allocation15 + $0x1390] sm:$0xff]
      %v2258 = vld [vmem:[#allocation15 + $0x1398] sm:$0xff]
      %v2259 = vld [vmem:[#allocation15 + $0x13a0] sm:$0xff]
      %v2260 = vld [vmem:[#allocation15 + $0x13a8] sm:$0xff]
      %v2261 = vld [vmem:[#allocation15 + $0x13b0] sm:$0xff]
      %v2262 = vld [vmem:[#allocation15 + $0x13b8] sm:$0xff]
      %v2263 = vld [vmem:[#allocation15 + $0x13c0] sm:$0xff]
      %v2264 = vld [vmem:[#allocation15 + $0x13c8] sm:$0xff]
      %v2265 = vld [vmem:[#allocation15 + $0x13d0] sm:$0xff]
      %v2266 = vld [vmem:[#allocation15 + $0x13d8] sm:$0xff]
      %v2267 = vld [vmem:[#allocation15 + $0x13e0] sm:$0xff]
      %v2268 = vld [vmem:[#allocation15 + $0x13e8] sm:$0xff]
      %v2269 = vld [vmem:[#allocation15 + $0x13f0] sm:$0xff]
      %v2270 = vld [vmem:[#allocation15 + $0x13f8] sm:$0xff]
      %v2271 = vld [vmem:[#allocation15 + $0x1400] sm:$0xff]
      %v2272 = vld [vmem:[#allocation15 + $0x1408] sm:$0xff]
      %v2273 = vld [vmem:[#allocation15 + $0x1410] sm:$0xff]
      %v2274 = vld [vmem:[#allocation15 + $0x1418] sm:$0xff]
      %v2275 = vld [vmem:[#allocation15 + $0x1420] sm:$0xff]
      %v2276 = vld [vmem:[#allocation15 + $0x1428] sm:$0xff]
      %v2277 = vld [vmem:[#allocation15 + $0x1430] sm:$0xff]
      %v2278 = vld [vmem:[#allocation15 + $0x1438] sm:$0xff]
      %v2279 = vld [vmem:[#allocation15 + $0x1440] sm:$0xff]
      %v2280 = vld [vmem:[#allocation15 + $0x1448] sm:$0xff]
      %v2281 = vld [vmem:[#allocation15 + $0x1450] sm:$0xff]
      %v2282 = vld [vmem:[#allocation15 + $0x1458] sm:$0xff]
      %v2283 = vld [vmem:[#allocation15 + $0x1460] sm:$0xff]
      %v2284 = vld [vmem:[#allocation15 + $0x1468] sm:$0xff]
      %v2285 = vld [vmem:[#allocation15 + $0x1470] sm:$0xff]
      %v2286 = vld [vmem:[#allocation15 + $0x1478] sm:$0xff]
      %v2287 = vld [vmem:[#allocation15 + $0x1480] sm:$0xff]
      %v2288 = vld [vmem:[#allocation15 + $0x1488] sm:$0xff]
      %v2289 = vld [vmem:[#allocation15 + $0x1490] sm:$0xff]
      %v2290 = vld [vmem:[#allocation15 + $0x1498] sm:$0xff]
      %v2291 = vld [vmem:[#allocation15 + $0x14a0] sm:$0xff]
      %v2292 = vld [vmem:[#allocation15 + $0x14a8] sm:$0xff]
      %v2293 = vld [vmem:[#allocation15 + $0x14b0] sm:$0xff]
      %v2294 = vld [vmem:[#allocation15 + $0x14b8] sm:$0xff]
      %v2295 = vld [vmem:[#allocation15 + $0x14c0] sm:$0xff]
      %v2296 = vld [vmem:[#allocation15 + $0x14c8] sm:$0xff]
      %v2297 = vld [vmem:[#allocation15 + $0x14d0] sm:$0xff]
      %v2298 = vld [vmem:[#allocation15 + $0x14d8] sm:$0xff]
      %v2299 = vld [vmem:[#allocation15 + $0x14e0] sm:$0xff]
      %v2300 = vld [vmem:[#allocation15 + $0x14e8] sm:$0xff]
      %v2301 = vld [vmem:[#allocation15 + $0x14f0] sm:$0xff]
      %v2302 = vld [vmem:[#allocation15 + $0x14f8] sm:$0xff]
      %v2303 = vld [vmem:[#allocation15 + $0x1500] sm:$0xff]
      %v2304 = vld [vmem:[#allocation15 + $0x1508] sm:$0xff]
      %v2305 = vld [vmem:[#allocation15 + $0x1510] sm:$0xff]
      %v2306 = vld [vmem:[#allocation15 + $0x1518] sm:$0xff]
      %v2307 = vld [vmem:[#allocation15 + $0x1520] sm:$0xff]
      %v2308 = vld [vmem:[#allocation15 + $0x1528] sm:$0xff]
      %v2309 = vld [vmem:[#allocation15 + $0x1530] sm:$0xff]
      %v2310 = vld [vmem:[#allocation15 + $0x1538] sm:$0xff]
      %v2311 = vld [vmem:[#allocation15 + $0x1540] sm:$0xff]
      %v2312 = vld [vmem:[#allocation15 + $0x1548] sm:$0xff]
      %v2313 = vld [vmem:[#allocation15 + $0x1550] sm:$0xff]
      %v2314 = vld [vmem:[#allocation15 + $0x1558] sm:$0xff]
      %v2315 = vld [vmem:[#allocation15 + $0x1560] sm:$0xff]
      %v2316 = vld [vmem:[#allocation15 + $0x1568] sm:$0xff]
      %v2317 = vld [vmem:[#allocation15 + $0x1570] sm:$0xff]
      %v2318 = vld [vmem:[#allocation15 + $0x1578] sm:$0xff]
      %v2319 = vld [vmem:[#allocation15 + $0x1580] sm:$0xff]
      %v2320 = vld [vmem:[#allocation15 + $0x1588] sm:$0xff]
      %v2321 = vld [vmem:[#allocation15 + $0x1590] sm:$0xff]
      %v2322 = vld [vmem:[#allocation15 + $0x1598] sm:$0xff]
      %v2323 = vld [vmem:[#allocation15 + $0x15a0] sm:$0xff]
      %v2324 = vld [vmem:[#allocation15 + $0x15a8] sm:$0xff]
      %v2325 = vld [vmem:[#allocation15 + $0x15b0] sm:$0xff]
      %v2326 = vld [vmem:[#allocation15 + $0x15b8] sm:$0xff]
      %v2327 = vld [vmem:[#allocation15 + $0x15c0] sm:$0xff]
      %v2328 = vld [vmem:[#allocation15 + $0x15c8] sm:$0xff]
      %v2329 = vld [vmem:[#allocation15 + $0x15d0] sm:$0xff]
      %v2330 = vld [vmem:[#allocation15 + $0x15d8] sm:$0xff]
      %v2331 = vld [vmem:[#allocation15 + $0x15e0] sm:$0xff]
      %v2332 = vld [vmem:[#allocation15 + $0x15e8] sm:$0xff]
      %v2333 = vld [vmem:[#allocation15 + $0x15f0] sm:$0xff]
      %v2334 = vld [vmem:[#allocation15 + $0x15f8] sm:$0xff]
      %v2335 = vld [vmem:[#allocation15 + $0x1600] sm:$0xff]
      %v2336 = vld [vmem:[#allocation15 + $0x1608] sm:$0xff]
      %v2337 = vld [vmem:[#allocation15 + $0x1610] sm:$0xff]
      %v2338 = vld [vmem:[#allocation15 + $0x1618] sm:$0xff]
      %v2339 = vld [vmem:[#allocation15 + $0x1620] sm:$0xff]
      %v2340 = vld [vmem:[#allocation15 + $0x1628] sm:$0xff]
      %v2341 = vld [vmem:[#allocation15 + $0x1630] sm:$0xff]
      %v2342 = vld [vmem:[#allocation15 + $0x1638] sm:$0xff]
      %v2343 = vld [vmem:[#allocation15 + $0x1640] sm:$0xff]
      %v2344 = vld [vmem:[#allocation15 + $0x1648] sm:$0xff]
      %v2345 = vld [vmem:[#allocation15 + $0x1650] sm:$0xff]
      %v2346 = vld [vmem:[#allocation15 + $0x1658] sm:$0xff]
      %v2347 = vld [vmem:[#allocation15 + $0x1660] sm:$0xff]
      %v2348 = vld [vmem:[#allocation15 + $0x1668] sm:$0xff]
      %v2349 = vld [vmem:[#allocation15 + $0x1670] sm:$0xff]
      %v2350 = vld [vmem:[#allocation15 + $0x1678] sm:$0xff]
      %v2351 = vld [vmem:[#allocation15 + $0x1680] sm:$0xff]
      %v2352 = vld [vmem:[#allocation15 + $0x1688] sm:$0xff]
      %v2353 = vld [vmem:[#allocation15 + $0x1690] sm:$0xff]
      %v2354 = vld [vmem:[#allocation15 + $0x1698] sm:$0xff]
      %v2355 = vld [vmem:[#allocation15 + $0x16a0] sm:$0xff]
      %v2356 = vld [vmem:[#allocation15 + $0x16a8] sm:$0xff]
      %v2357 = vld [vmem:[#allocation15 + $0x16b0] sm:$0xff]
      %v2358 = vld [vmem:[#allocation15 + $0x16b8] sm:$0xff]
      %v2359 = vld [vmem:[#allocation15 + $0x16c0] sm:$0xff]
      %v2360 = vld [vmem:[#allocation15 + $0x16c8] sm:$0xff]
      %v2361 = vld [vmem:[#allocation15 + $0x16d0] sm:$0xff]
      %v2362 = vld [vmem:[#allocation15 + $0x16d8] sm:$0xff]
      %v2363 = vld [vmem:[#allocation15 + $0x16e0] sm:$0xff]
      %v2364 = vld [vmem:[#allocation15 + $0x16e8] sm:$0xff]
      %v2365 = vld [vmem:[#allocation15 + $0x16f0] sm:$0xff]
      %v2366 = vld [vmem:[#allocation15 + $0x16f8] sm:$0xff]
      %v2367 = vld [vmem:[#allocation15 + $0x1700] sm:$0xff]
      %v2368 = vld [vmem:[#allocation15 + $0x1708] sm:$0xff]
      %v2369 = vld [vmem:[#allocation15 + $0x1710] sm:$0xff]
      %v2370 = vld [vmem:[#allocation15 + $0x1718] sm:$0xff]
      %v2371 = vld [vmem:[#allocation15 + $0x1720] sm:$0xff]
      %v2372 = vld [vmem:[#allocation15 + $0x1728] sm:$0xff]
      %v2373 = vld [vmem:[#allocation15 + $0x1730] sm:$0xff]
      %v2374 = vld [vmem:[#allocation15 + $0x1738] sm:$0xff]
      %v2375 = vld [vmem:[#allocation15 + $0x1740] sm:$0xff]
      %v2376 = vld [vmem:[#allocation15 + $0x1748] sm:$0xff]
      %v2377 = vld [vmem:[#allocation15 + $0x1750] sm:$0xff]
      %v2378 = vld [vmem:[#allocation15 + $0x1758] sm:$0xff]
      %v2379 = vld [vmem:[#allocation15 + $0x1760] sm:$0xff]
      %v2380 = vld [vmem:[#allocation15 + $0x1768] sm:$0xff]
      %v2381 = vld [vmem:[#allocation15 + $0x1770] sm:$0xff]
      %v2382 = vld [vmem:[#allocation15 + $0x1778] sm:$0xff]
      %v2383 = vld [vmem:[#allocation15 + $0x1780] sm:$0xff]
      %v2384 = vld [vmem:[#allocation15 + $0x1788] sm:$0xff]
      %v2385 = vld [vmem:[#allocation15 + $0x1790] sm:$0xff]
      %v2386 = vld [vmem:[#allocation15 + $0x1798] sm:$0xff]
      %v2387 = vld [vmem:[#allocation15 + $0x17a0] sm:$0xff]
      %v2388 = vld [vmem:[#allocation15 + $0x17a8] sm:$0xff]
      %v2389 = vld [vmem:[#allocation15 + $0x17b0] sm:$0xff]
      %v2390 = vld [vmem:[#allocation15 + $0x17b8] sm:$0xff]
      %v2391 = vld [vmem:[#allocation15 + $0x17c0] sm:$0xff]
      %v2392 = vld [vmem:[#allocation15 + $0x17c8] sm:$0xff]
      %v2393 = vld [vmem:[#allocation15 + $0x17d0] sm:$0xff]
      %v2394 = vld [vmem:[#allocation15 + $0x17d8] sm:$0xff]
      %v2395 = vld [vmem:[#allocation15 + $0x17e0] sm:$0xff]
      %v2396 = vld [vmem:[#allocation15 + $0x17e8] sm:$0xff]
      %v2397 = vld [vmem:[#allocation15 + $0x17f0] sm:$0xff]
      %v2398 = vld [vmem:[#allocation15 + $0x17f8] sm:$0xff]
      %v2399 = vld [vmem:[#allocation17] sm:$0xff]
      %v2401 = vperm.slane %v2399, 0
      %v2402 = vperm.slane %v2399, 1
      %v2403 = vperm.slane %v2399, 2
      %v2404 = vperm.slane %v2399, 3
      %v2405 = vperm.slane %v2399, 4
      %v2406 = vperm.slane %v2399, 5
      %v2407 = vperm.slane %v2399, 6
      %v2408 = vperm.slane %v2399, 7
      %v3185 = vunpack.c.l.b16 %v1631
      %v3186 = vunpack.c.h.b16 %v1631
      %v3187 = vunpack.c.l.b16 %v1632
      %v3188 = vunpack.c.h.b16 %v1632
      %v3189 = vunpack.c.l.b16 %v1633
      %v3190 = vunpack.c.h.b16 %v1633
      %v3191 = vunpack.c.l.b16 %v1634
      %v3192 = vunpack.c.h.b16 %v1634
      %v3193 = vunpack.c.l.b16 %v1635
      %v3194 = vunpack.c.h.b16 %v1635
      %v3195 = vunpack.c.l.b16 %v1636
      %v3196 = vunpack.c.h.b16 %v1636
      %v3197 = vunpack.c.l.b16 %v1637
      %v3198 = vunpack.c.h.b16 %v1637
      %v3199 = vunpack.c.l.b16 %v1638
      %v3200 = vunpack.c.h.b16 %v1638
      %v3201 = vunpack.c.l.b16 %v1639
      %v3202 = vunpack.c.h.b16 %v1639
      %v3203 = vunpack.c.l.b16 %v1640
      %v3204 = vunpack.c.h.b16 %v1640
      %v3205 = vunpack.c.l.b16 %v1641
      %v3206 = vunpack.c.h.b16 %v1641
      %v3207 = vunpack.c.l.b16 %v1642
      %v3208 = vunpack.c.h.b16 %v1642
      %v3209 = vunpack.c.l.b16 %v1643
      %v3210 = vunpack.c.h.b16 %v1643
      %v3211 = vunpack.c.l.b16 %v1644
      %v3212 = vunpack.c.h.b16 %v1644
      %v3213 = vunpack.c.l.b16 %v1645
      %v3214 = vunpack.c.h.b16 %v1645
      %v3215 = vunpack.c.l.b16 %v1646
      %v3216 = vunpack.c.h.b16 %v1646
      %v3217 = vunpack.c.l.b16 %v1647
      %v3218 = vunpack.c.h.b16 %v1647
      %v3219 = vunpack.c.l.b16 %v1648
      %v3220 = vunpack.c.h.b16 %v1648
      %v3221 = vunpack.c.l.b16 %v1649
      %v3222 = vunpack.c.h.b16 %v1649
      %v3223 = vunpack.c.l.b16 %v1650
      %v3224 = vunpack.c.h.b16 %v1650
      %v3225 = vunpack.c.l.b16 %v1651
      %v3226 = vunpack.c.h.b16 %v1651
      %v3227 = vunpack.c.l.b16 %v1652
      %v3228 = vunpack.c.h.b16 %v1652
      %v3229 = vunpack.c.l.b16 %v1653
      %v3230 = vunpack.c.h.b16 %v1653
      %v3231 = vunpack.c.l.b16 %v1654
      %v3232 = vunpack.c.h.b16 %v1654
      %v3233 = vunpack.c.l.b16 %v1655
      %v3234 = vunpack.c.h.b16 %v1655
      %v3235 = vunpack.c.l.b16 %v1656
      %v3236 = vunpack.c.h.b16 %v1656
      %v3237 = vunpack.c.l.b16 %v1657
      %v3238 = vunpack.c.h.b16 %v1657
      %v3239 = vunpack.c.l.b16 %v1658
      %v3240 = vunpack.c.h.b16 %v1658
      %v3241 = vunpack.c.l.b16 %v1659
      %v3242 = vunpack.c.h.b16 %v1659
      %v3243 = vunpack.c.l.b16 %v1660
      %v3244 = vunpack.c.h.b16 %v1660
      %v3245 = vunpack.c.l.b16 %v1661
      %v3246 = vunpack.c.h.b16 %v1661
      %v3247 = vunpack.c.l.b16 %v1662
      %v3248 = vunpack.c.h.b16 %v1662
      %v3249 = vunpack.c.l.b16 %v1663
      %v3250 = vunpack.c.h.b16 %v1663
      %v3251 = vunpack.c.l.b16 %v1664
      %v3252 = vunpack.c.h.b16 %v1664
      %v3253 = vunpack.c.l.b16 %v1665
      %v3254 = vunpack.c.h.b16 %v1665
      %v3255 = vunpack.c.l.b16 %v1666
      %v3256 = vunpack.c.h.b16 %v1666
      %v3257 = vunpack.c.l.b16 %v1667
      %v3258 = vunpack.c.h.b16 %v1667
      %v3259 = vunpack.c.l.b16 %v1668
      %v3260 = vunpack.c.h.b16 %v1668
      %v3261 = vunpack.c.l.b16 %v1669
      %v3262 = vunpack.c.h.b16 %v1669
      %v3263 = vunpack.c.l.b16 %v1670
      %v3264 = vunpack.c.h.b16 %v1670
      %v3265 = vunpack.c.l.b16 %v1671
      %v3266 = vunpack.c.h.b16 %v1671
      %v3267 = vunpack.c.l.b16 %v1672
      %v3268 = vunpack.c.h.b16 %v1672
      %v3269 = vunpack.c.l.b16 %v1673
      %v3270 = vunpack.c.h.b16 %v1673
      %v3271 = vunpack.c.l.b16 %v1674
      %v3272 = vunpack.c.h.b16 %v1674
      %v3273 = vunpack.c.l.b16 %v1675
      %v3274 = vunpack.c.h.b16 %v1675
      %v3275 = vunpack.c.l.b16 %v1676
      %v3276 = vunpack.c.h.b16 %v1676
      %v3277 = vunpack.c.l.b16 %v1677
      %v3278 = vunpack.c.h.b16 %v1677
      %v3279 = vunpack.c.l.b16 %v1678
      %v3280 = vunpack.c.h.b16 %v1678
      %v3281 = vunpack.c.l.b16 %v1679
      %v3282 = vunpack.c.h.b16 %v1679
      %v3283 = vunpack.c.l.b16 %v1680
      %v3284 = vunpack.c.h.b16 %v1680
      %v3285 = vunpack.c.l.b16 %v1681
      %v3286 = vunpack.c.h.b16 %v1681
      %v3287 = vunpack.c.l.b16 %v1682
      %v3288 = vunpack.c.h.b16 %v1682
      %v3289 = vunpack.c.l.b16 %v1683
      %v3290 = vunpack.c.h.b16 %v1683
      %v3291 = vunpack.c.l.b16 %v1684
      %v3292 = vunpack.c.h.b16 %v1684
      %v3293 = vunpack.c.l.b16 %v1685
      %v3294 = vunpack.c.h.b16 %v1685
      %v3295 = vunpack.c.l.b16 %v1686
      %v3296 = vunpack.c.h.b16 %v1686
      %v3297 = vunpack.c.l.b16 %v1687
      %v3298 = vunpack.c.h.b16 %v1687
      %v3299 = vunpack.c.l.b16 %v1688
      %v3300 = vunpack.c.h.b16 %v1688
      %v3301 = vunpack.c.l.b16 %v1689
      %v3302 = vunpack.c.h.b16 %v1689
      %v3303 = vunpack.c.l.b16 %v1690
      %v3304 = vunpack.c.h.b16 %v1690
      %v3305 = vunpack.c.l.b16 %v1691
      %v3306 = vunpack.c.h.b16 %v1691
      %v3307 = vunpack.c.l.b16 %v1692
      %v3308 = vunpack.c.h.b16 %v1692
      %v3309 = vunpack.c.l.b16 %v1693
      %v3310 = vunpack.c.h.b16 %v1693
      %v3311 = vunpack.c.l.b16 %v1694
      %v3312 = vunpack.c.h.b16 %v1694
      %v3313 = vunpack.c.l.b16 %v1695
      %v3314 = vunpack.c.h.b16 %v1695
      %v3315 = vunpack.c.l.b16 %v1696
      %v3316 = vunpack.c.h.b16 %v1696
      %v3317 = vunpack.c.l.b16 %v1697
      %v3318 = vunpack.c.h.b16 %v1697
      %v3319 = vunpack.c.l.b16 %v1698
      %v3320 = vunpack.c.h.b16 %v1698
      %v3321 = vunpack.c.l.b16 %v1699
      %v3322 = vunpack.c.h.b16 %v1699
      %v3323 = vunpack.c.l.b16 %v1700
      %v3324 = vunpack.c.h.b16 %v1700
      %v3325 = vunpack.c.l.b16 %v1701
      %v3326 = vunpack.c.h.b16 %v1701
      %v3327 = vunpack.c.l.b16 %v1702
      %v3328 = vunpack.c.h.b16 %v1702
      %v3329 = vunpack.c.l.b16 %v1703
      %v3330 = vunpack.c.h.b16 %v1703
      %v3331 = vunpack.c.l.b16 %v1704
      %v3332 = vunpack.c.h.b16 %v1704
      %v3333 = vunpack.c.l.b16 %v1705
      %v3334 = vunpack.c.h.b16 %v1705
      %v3335 = vunpack.c.l.b16 %v1706
      %v3336 = vunpack.c.h.b16 %v1706
      %v3337 = vunpack.c.l.b16 %v1707
      %v3338 = vunpack.c.h.b16 %v1707
      %v3339 = vunpack.c.l.b16 %v1708
      %v3340 = vunpack.c.h.b16 %v1708
      %v3341 = vunpack.c.l.b16 %v1709
      %v3342 = vunpack.c.h.b16 %v1709
      %v3343 = vunpack.c.l.b16 %v1710
      %v3344 = vunpack.c.h.b16 %v1710
      %v3345 = vunpack.c.l.b16 %v1711
      %v3346 = vunpack.c.h.b16 %v1711
      %v3347 = vunpack.c.l.b16 %v1712
      %v3348 = vunpack.c.h.b16 %v1712
      %v3349 = vunpack.c.l.b16 %v1713
      %v3350 = vunpack.c.h.b16 %v1713
      %v3351 = vunpack.c.l.b16 %v1714
      %v3352 = vunpack.c.h.b16 %v1714
      %v3353 = vunpack.c.l.b16 %v1715
      %v3354 = vunpack.c.h.b16 %v1715
      %v3355 = vunpack.c.l.b16 %v1716
      %v3356 = vunpack.c.h.b16 %v1716
      %v3357 = vunpack.c.l.b16 %v1717
      %v3358 = vunpack.c.h.b16 %v1717
      %v3359 = vunpack.c.l.b16 %v1718
      %v3360 = vunpack.c.h.b16 %v1718
      %v3361 = vunpack.c.l.b16 %v1719
      %v3362 = vunpack.c.h.b16 %v1719
      %v3363 = vunpack.c.l.b16 %v1720
      %v3364 = vunpack.c.h.b16 %v1720
      %v3365 = vunpack.c.l.b16 %v1721
      %v3366 = vunpack.c.h.b16 %v1721
      %v3367 = vunpack.c.l.b16 %v1722
      %v3368 = vunpack.c.h.b16 %v1722
      %v3369 = vunpack.c.l.b16 %v1723
      %v3370 = vunpack.c.h.b16 %v1723
      %v3371 = vunpack.c.l.b16 %v1724
      %v3372 = vunpack.c.h.b16 %v1724
      %v3373 = vunpack.c.l.b16 %v1725
      %v3374 = vunpack.c.h.b16 %v1725
      %v3375 = vunpack.c.l.b16 %v1726
      %v3376 = vunpack.c.h.b16 %v1726
      %v3377 = vunpack.c.l.b16 %v1727
      %v3378 = vunpack.c.h.b16 %v1727
      %v3379 = vunpack.c.l.b16 %v1728
      %v3380 = vunpack.c.h.b16 %v1728
      %v3381 = vunpack.c.l.b16 %v1729
      %v3382 = vunpack.c.h.b16 %v1729
      %v3383 = vunpack.c.l.b16 %v1730
      %v3384 = vunpack.c.h.b16 %v1730
      %v3385 = vunpack.c.l.b16 %v1731
      %v3386 = vunpack.c.h.b16 %v1731
      %v3387 = vunpack.c.l.b16 %v1732
      %v3388 = vunpack.c.h.b16 %v1732
      %v3389 = vunpack.c.l.b16 %v1733
      %v3390 = vunpack.c.h.b16 %v1733
      %v3391 = vunpack.c.l.b16 %v1734
      %v3392 = vunpack.c.h.b16 %v1734
      %v3393 = vunpack.c.l.b16 %v1735
      %v3394 = vunpack.c.h.b16 %v1735
      %v3395 = vunpack.c.l.b16 %v1736
      %v3396 = vunpack.c.h.b16 %v1736
      %v3397 = vunpack.c.l.b16 %v1737
      %v3398 = vunpack.c.h.b16 %v1737
      %v3399 = vunpack.c.l.b16 %v1738
      %v3400 = vunpack.c.h.b16 %v1738
      %v3401 = vunpack.c.l.b16 %v1739
      %v3402 = vunpack.c.h.b16 %v1739
      %v3403 = vunpack.c.l.b16 %v1740
      %v3404 = vunpack.c.h.b16 %v1740
      %v3405 = vunpack.c.l.b16 %v1741
      %v3406 = vunpack.c.h.b16 %v1741
      %v3407 = vunpack.c.l.b16 %v1742
      %v3408 = vunpack.c.h.b16 %v1742
      %v3409 = vunpack.c.l.b16 %v1743
      %v3410 = vunpack.c.h.b16 %v1743
      %v3411 = vunpack.c.l.b16 %v1744
      %v3412 = vunpack.c.h.b16 %v1744
      %v3413 = vunpack.c.l.b16 %v1745
      %v3414 = vunpack.c.h.b16 %v1745
      %v3415 = vunpack.c.l.b16 %v1746
      %v3416 = vunpack.c.h.b16 %v1746
      %v3417 = vunpack.c.l.b16 %v1747
      %v3418 = vunpack.c.h.b16 %v1747
      %v3419 = vunpack.c.l.b16 %v1748
      %v3420 = vunpack.c.h.b16 %v1748
      %v3421 = vunpack.c.l.b16 %v1749
      %v3422 = vunpack.c.h.b16 %v1749
      %v3423 = vunpack.c.l.b16 %v1750
      %v3424 = vunpack.c.h.b16 %v1750
      %v3425 = vunpack.c.l.b16 %v1751
      %v3426 = vunpack.c.h.b16 %v1751
      %v3427 = vunpack.c.l.b16 %v1752
      %v3428 = vunpack.c.h.b16 %v1752
      %v3429 = vunpack.c.l.b16 %v1753
      %v3430 = vunpack.c.h.b16 %v1753
      %v3431 = vunpack.c.l.b16 %v1754
      %v3432 = vunpack.c.h.b16 %v1754
      %v3433 = vunpack.c.l.b16 %v1755
      %v3434 = vunpack.c.h.b16 %v1755
      %v3435 = vunpack.c.l.b16 %v1756
      %v3436 = vunpack.c.h.b16 %v1756
      %v3437 = vunpack.c.l.b16 %v1757
      %v3438 = vunpack.c.h.b16 %v1757
      %v3439 = vunpack.c.l.b16 %v1758
      %v3440 = vunpack.c.h.b16 %v1758
      %v3441 = vunpack.c.l.b16 %v1759
      %v3442 = vunpack.c.h.b16 %v1759
      %v3443 = vunpack.c.l.b16 %v1760
      %v3444 = vunpack.c.h.b16 %v1760
      %v3445 = vunpack.c.l.b16 %v1761
      %v3446 = vunpack.c.h.b16 %v1761
      %v3447 = vunpack.c.l.b16 %v1762
      %v3448 = vunpack.c.h.b16 %v1762
      %v3449 = vunpack.c.l.b16 %v1763
      %v3450 = vunpack.c.h.b16 %v1763
      %v3451 = vunpack.c.l.b16 %v1764
      %v3452 = vunpack.c.h.b16 %v1764
      %v3453 = vunpack.c.l.b16 %v1765
      %v3454 = vunpack.c.h.b16 %v1765
      %v3455 = vunpack.c.l.b16 %v1766
      %v3456 = vunpack.c.h.b16 %v1766
      %v3457 = vunpack.c.l.b16 %v1767
      %v3458 = vunpack.c.h.b16 %v1767
      %v3459 = vunpack.c.l.b16 %v1768
      %v3460 = vunpack.c.h.b16 %v1768
      %v3461 = vunpack.c.l.b16 %v1769
      %v3462 = vunpack.c.h.b16 %v1769
      %v3463 = vunpack.c.l.b16 %v1770
      %v3464 = vunpack.c.h.b16 %v1770
      %v3465 = vunpack.c.l.b16 %v1771
      %v3466 = vunpack.c.h.b16 %v1771
      %v3467 = vunpack.c.l.b16 %v1772
      %v3468 = vunpack.c.h.b16 %v1772
      %v3469 = vunpack.c.l.b16 %v1773
      %v3470 = vunpack.c.h.b16 %v1773
      %v3471 = vunpack.c.l.b16 %v1774
      %v3472 = vunpack.c.h.b16 %v1774
      %v3473 = vunpack.c.l.b16 %v1775
      %v3474 = vunpack.c.h.b16 %v1775
      %v3475 = vunpack.c.l.b16 %v1776
      %v3476 = vunpack.c.h.b16 %v1776
      %v3477 = vunpack.c.l.b16 %v1777
      %v3478 = vunpack.c.h.b16 %v1777
      %v3479 = vunpack.c.l.b16 %v1778
      %v3480 = vunpack.c.h.b16 %v1778
      %v3481 = vunpack.c.l.b16 %v1779
      %v3482 = vunpack.c.h.b16 %v1779
      %v3483 = vunpack.c.l.b16 %v1780
      %v3484 = vunpack.c.h.b16 %v1780
      %v3485 = vunpack.c.l.b16 %v1781
      %v3486 = vunpack.c.h.b16 %v1781
      %v3487 = vunpack.c.l.b16 %v1782
      %v3488 = vunpack.c.h.b16 %v1782
      %v3489 = vunpack.c.l.b16 %v1783
      %v3490 = vunpack.c.h.b16 %v1783
      %v3491 = vunpack.c.l.b16 %v1784
      %v3492 = vunpack.c.h.b16 %v1784
      %v3493 = vunpack.c.l.b16 %v1785
      %v3494 = vunpack.c.h.b16 %v1785
      %v3495 = vunpack.c.l.b16 %v1786
      %v3496 = vunpack.c.h.b16 %v1786
      %v3497 = vunpack.c.l.b16 %v1787
      %v3498 = vunpack.c.h.b16 %v1787
      %v3499 = vunpack.c.l.b16 %v1788
      %v3500 = vunpack.c.h.b16 %v1788
      %v3501 = vunpack.c.l.b16 %v1789
      %v3502 = vunpack.c.h.b16 %v1789
      %v3503 = vunpack.c.l.b16 %v1790
      %v3504 = vunpack.c.h.b16 %v1790
      %v3505 = vunpack.c.l.b16 %v1791
      %v3506 = vunpack.c.h.b16 %v1791
      %v3507 = vunpack.c.l.b16 %v1792
      %v3508 = vunpack.c.h.b16 %v1792
      %v3509 = vunpack.c.l.b16 %v1793
      %v3510 = vunpack.c.h.b16 %v1793
      %v3511 = vunpack.c.l.b16 %v1794
      %v3512 = vunpack.c.h.b16 %v1794
      %v3513 = vunpack.c.l.b16 %v1795
      %v3514 = vunpack.c.h.b16 %v1795
      %v3515 = vunpack.c.l.b16 %v1796
      %v3516 = vunpack.c.h.b16 %v1796
      %v3517 = vunpack.c.l.b16 %v1797
      %v3518 = vunpack.c.h.b16 %v1797
      %v3519 = vunpack.c.l.b16 %v1798
      %v3520 = vunpack.c.h.b16 %v1798
      %v3521 = vunpack.c.l.b16 %v1799
      %v3522 = vunpack.c.h.b16 %v1799
      %v3523 = vunpack.c.l.b16 %v1800
      %v3524 = vunpack.c.h.b16 %v1800
      %v3525 = vunpack.c.l.b16 %v1801
      %v3526 = vunpack.c.h.b16 %v1801
      %v3527 = vunpack.c.l.b16 %v1802
      %v3528 = vunpack.c.h.b16 %v1802
      %v3529 = vunpack.c.l.b16 %v1803
      %v3530 = vunpack.c.h.b16 %v1803
      %v3531 = vunpack.c.l.b16 %v1804
      %v3532 = vunpack.c.h.b16 %v1804
      %v3533 = vunpack.c.l.b16 %v1805
      %v3534 = vunpack.c.h.b16 %v1805
      %v3535 = vunpack.c.l.b16 %v1806
      %v3536 = vunpack.c.h.b16 %v1806
      %v3537 = vunpack.c.l.b16 %v1807
      %v3538 = vunpack.c.h.b16 %v1807
      %v3539 = vunpack.c.l.b16 %v1808
      %v3540 = vunpack.c.h.b16 %v1808
      %v3541 = vunpack.c.l.b16 %v1809
      %v3542 = vunpack.c.h.b16 %v1809
      %v3543 = vunpack.c.l.b16 %v1810
      %v3544 = vunpack.c.h.b16 %v1810
      %v3545 = vunpack.c.l.b16 %v1811
      %v3546 = vunpack.c.h.b16 %v1811
      %v3547 = vunpack.c.l.b16 %v1812
      %v3548 = vunpack.c.h.b16 %v1812
      %v3549 = vunpack.c.l.b16 %v1813
      %v3550 = vunpack.c.h.b16 %v1813
      %v3551 = vunpack.c.l.b16 %v1814
      %v3552 = vunpack.c.h.b16 %v1814
      %v3553 = vunpack.c.l.b16 %v1815
      %v3554 = vunpack.c.h.b16 %v1815
      %v3555 = vunpack.c.l.b16 %v1816
      %v3556 = vunpack.c.h.b16 %v1816
      %v3557 = vunpack.c.l.b16 %v1817
      %v3558 = vunpack.c.h.b16 %v1817
      %v3559 = vunpack.c.l.b16 %v1818
      %v3560 = vunpack.c.h.b16 %v1818
      %v3561 = vunpack.c.l.b16 %v1819
      %v3562 = vunpack.c.h.b16 %v1819
      %v3563 = vunpack.c.l.b16 %v1820
      %v3564 = vunpack.c.h.b16 %v1820
      %v3565 = vunpack.c.l.b16 %v1821
      %v3566 = vunpack.c.h.b16 %v1821
      %v3567 = vunpack.c.l.b16 %v1822
      %v3568 = vunpack.c.h.b16 %v1822
      %v3569 = vunpack.c.l.b16 %v1823
      %v3570 = vunpack.c.h.b16 %v1823
      %v3571 = vunpack.c.l.b16 %v1824
      %v3572 = vunpack.c.h.b16 %v1824
      %v3573 = vunpack.c.l.b16 %v1825
      %v3574 = vunpack.c.h.b16 %v1825
      %v3575 = vunpack.c.l.b16 %v1826
      %v3576 = vunpack.c.h.b16 %v1826
      %v3577 = vunpack.c.l.b16 %v1827
      %v3578 = vunpack.c.h.b16 %v1827
      %v3579 = vunpack.c.l.b16 %v1828
      %v3580 = vunpack.c.h.b16 %v1828
      %v3581 = vunpack.c.l.b16 %v1829
      %v3582 = vunpack.c.h.b16 %v1829
      %v3583 = vunpack.c.l.b16 %v1830
      %v3584 = vunpack.c.h.b16 %v1830
      %v3585 = vunpack.c.l.b16 %v1831
      %v3586 = vunpack.c.h.b16 %v1831
      %v3587 = vunpack.c.l.b16 %v1832
      %v3588 = vunpack.c.h.b16 %v1832
      %v3589 = vunpack.c.l.b16 %v1833
      %v3590 = vunpack.c.h.b16 %v1833
      %v3591 = vunpack.c.l.b16 %v1834
      %v3592 = vunpack.c.h.b16 %v1834
      %v3593 = vunpack.c.l.b16 %v1835
      %v3594 = vunpack.c.h.b16 %v1835
      %v3595 = vunpack.c.l.b16 %v1836
      %v3596 = vunpack.c.h.b16 %v1836
      %v3597 = vunpack.c.l.b16 %v1837
      %v3598 = vunpack.c.h.b16 %v1837
      %v3599 = vunpack.c.l.b16 %v1838
      %v3600 = vunpack.c.h.b16 %v1838
      %v3601 = vunpack.c.l.b16 %v1839
      %v3602 = vunpack.c.h.b16 %v1839
      %v3603 = vunpack.c.l.b16 %v1840
      %v3604 = vunpack.c.h.b16 %v1840
      %v3605 = vunpack.c.l.b16 %v1841
      %v3606 = vunpack.c.h.b16 %v1841
      %v3607 = vunpack.c.l.b16 %v1842
      %v3608 = vunpack.c.h.b16 %v1842
      %v3609 = vunpack.c.l.b16 %v1843
      %v3610 = vunpack.c.h.b16 %v1843
      %v3611 = vunpack.c.l.b16 %v1844
      %v3612 = vunpack.c.h.b16 %v1844
      %v3613 = vunpack.c.l.b16 %v1845
      %v3614 = vunpack.c.h.b16 %v1845
      %v3615 = vunpack.c.l.b16 %v1846
      %v3616 = vunpack.c.h.b16 %v1846
      %v3617 = vunpack.c.l.b16 %v1847
      %v3618 = vunpack.c.h.b16 %v1847
      %v3619 = vunpack.c.l.b16 %v1848
      %v3620 = vunpack.c.h.b16 %v1848
      %v3621 = vunpack.c.l.b16 %v1849
      %v3622 = vunpack.c.h.b16 %v1849
      %v3623 = vunpack.c.l.b16 %v1850
      %v3624 = vunpack.c.h.b16 %v1850
      %v3625 = vunpack.c.l.b16 %v1851
      %v3626 = vunpack.c.h.b16 %v1851
      %v3627 = vunpack.c.l.b16 %v1852
      %v3628 = vunpack.c.h.b16 %v1852
      %v3629 = vunpack.c.l.b16 %v1853
      %v3630 = vunpack.c.h.b16 %v1853
      %v3631 = vunpack.c.l.b16 %v1854
      %v3632 = vunpack.c.h.b16 %v1854
      %v3633 = vunpack.c.l.b16 %v1855
      %v3634 = vunpack.c.h.b16 %v1855
      %v3635 = vunpack.c.l.b16 %v1856
      %v3636 = vunpack.c.h.b16 %v1856
      %v3637 = vunpack.c.l.b16 %v1857
      %v3638 = vunpack.c.h.b16 %v1857
      %v3639 = vunpack.c.l.b16 %v1858
      %v3640 = vunpack.c.h.b16 %v1858
      %v3641 = vunpack.c.l.b16 %v1859
      %v3642 = vunpack.c.h.b16 %v1859
      %v3643 = vunpack.c.l.b16 %v1860
      %v3644 = vunpack.c.h.b16 %v1860
      %v3645 = vunpack.c.l.b16 %v1861
      %v3646 = vunpack.c.h.b16 %v1861
      %v3647 = vunpack.c.l.b16 %v1862
      %v3648 = vunpack.c.h.b16 %v1862
      %v3649 = vunpack.c.l.b16 %v1863
      %v3650 = vunpack.c.h.b16 %v1863
      %v3651 = vunpack.c.l.b16 %v1864
      %v3652 = vunpack.c.h.b16 %v1864
      %v3653 = vunpack.c.l.b16 %v1865
      %v3654 = vunpack.c.h.b16 %v1865
      %v3655 = vunpack.c.l.b16 %v1866
      %v3656 = vunpack.c.h.b16 %v1866
      %v3657 = vunpack.c.l.b16 %v1867
      %v3658 = vunpack.c.h.b16 %v1867
      %v3659 = vunpack.c.l.b16 %v1868
      %v3660 = vunpack.c.h.b16 %v1868
      %v3661 = vunpack.c.l.b16 %v1869
      %v3662 = vunpack.c.h.b16 %v1869
      %v3663 = vunpack.c.l.b16 %v1870
      %v3664 = vunpack.c.h.b16 %v1870
      %v3665 = vunpack.c.l.b16 %v1871
      %v3666 = vunpack.c.h.b16 %v1871
      %v3667 = vunpack.c.l.b16 %v1872
      %v3668 = vunpack.c.h.b16 %v1872
      %v3669 = vunpack.c.l.b16 %v1873
      %v3670 = vunpack.c.h.b16 %v1873
      %v3671 = vunpack.c.l.b16 %v1874
      %v3672 = vunpack.c.h.b16 %v1874
      %v3673 = vunpack.c.l.b16 %v1875
      %v3674 = vunpack.c.h.b16 %v1875
      %v3675 = vunpack.c.l.b16 %v1876
      %v3676 = vunpack.c.h.b16 %v1876
      %v3677 = vunpack.c.l.b16 %v1877
      %v3678 = vunpack.c.h.b16 %v1877
      %v3679 = vunpack.c.l.b16 %v1878
      %v3680 = vunpack.c.h.b16 %v1878
      %v3681 = vunpack.c.l.b16 %v1879
      %v3682 = vunpack.c.h.b16 %v1879
      %v3683 = vunpack.c.l.b16 %v1880
      %v3684 = vunpack.c.h.b16 %v1880
      %v3685 = vunpack.c.l.b16 %v1881
      %v3686 = vunpack.c.h.b16 %v1881
      %v3687 = vunpack.c.l.b16 %v1882
      %v3688 = vunpack.c.h.b16 %v1882
      %v3689 = vunpack.c.l.b16 %v1883
      %v3690 = vunpack.c.h.b16 %v1883
      %v3691 = vunpack.c.l.b16 %v1884
      %v3692 = vunpack.c.h.b16 %v1884
      %v3693 = vunpack.c.l.b16 %v1885
      %v3694 = vunpack.c.h.b16 %v1885
      %v3695 = vunpack.c.l.b16 %v1886
      %v3696 = vunpack.c.h.b16 %v1886
      %v3697 = vunpack.c.l.b16 %v1887
      %v3698 = vunpack.c.h.b16 %v1887
      %v3699 = vunpack.c.l.b16 %v1888
      %v3700 = vunpack.c.h.b16 %v1888
      %v3701 = vunpack.c.l.b16 %v1889
      %v3702 = vunpack.c.h.b16 %v1889
      %v3703 = vunpack.c.l.b16 %v1890
      %v3704 = vunpack.c.h.b16 %v1890
      %v3705 = vunpack.c.l.b16 %v1891
      %v3706 = vunpack.c.h.b16 %v1891
      %v3707 = vunpack.c.l.b16 %v1892
      %v3708 = vunpack.c.h.b16 %v1892
      %v3709 = vunpack.c.l.b16 %v1893
      %v3710 = vunpack.c.h.b16 %v1893
      %v3711 = vunpack.c.l.b16 %v1894
      %v3712 = vunpack.c.h.b16 %v1894
      %v3713 = vunpack.c.l.b16 %v1895
      %v3714 = vunpack.c.h.b16 %v1895
      %v3715 = vunpack.c.l.b16 %v1896
      %v3716 = vunpack.c.h.b16 %v1896
      %v3717 = vunpack.c.l.b16 %v1897
      %v3718 = vunpack.c.h.b16 %v1897
      %v3719 = vunpack.c.l.b16 %v1898
      %v3720 = vunpack.c.h.b16 %v1898
      %v3721 = vunpack.c.l.b16 %v1899
      %v3722 = vunpack.c.h.b16 %v1899
      %v3723 = vunpack.c.l.b16 %v1900
      %v3724 = vunpack.c.h.b16 %v1900
      %v3725 = vunpack.c.l.b16 %v1901
      %v3726 = vunpack.c.h.b16 %v1901
      %v3727 = vunpack.c.l.b16 %v1902
      %v3728 = vunpack.c.h.b16 %v1902
      %v3729 = vunpack.c.l.b16 %v1903
      %v3730 = vunpack.c.h.b16 %v1903
      %v3731 = vunpack.c.l.b16 %v1904
      %v3732 = vunpack.c.h.b16 %v1904
      %v3733 = vunpack.c.l.b16 %v1905
      %v3734 = vunpack.c.h.b16 %v1905
      %v3735 = vunpack.c.l.b16 %v1906
      %v3736 = vunpack.c.h.b16 %v1906
      %v3737 = vunpack.c.l.b16 %v1907
      %v3738 = vunpack.c.h.b16 %v1907
      %v3739 = vunpack.c.l.b16 %v1908
      %v3740 = vunpack.c.h.b16 %v1908
      %v3741 = vunpack.c.l.b16 %v1909
      %v3742 = vunpack.c.h.b16 %v1909
      %v3743 = vunpack.c.l.b16 %v1910
      %v3744 = vunpack.c.h.b16 %v1910
      %v3745 = vunpack.c.l.b16 %v1911
      %v3746 = vunpack.c.h.b16 %v1911
      %v3747 = vunpack.c.l.b16 %v1912
      %v3748 = vunpack.c.h.b16 %v1912
      %v3749 = vunpack.c.l.b16 %v1913
      %v3750 = vunpack.c.h.b16 %v1913
      %v3751 = vunpack.c.l.b16 %v1914
      %v3752 = vunpack.c.h.b16 %v1914
      %v3753 = vunpack.c.l.b16 %v1915
      %v3754 = vunpack.c.h.b16 %v1915
      %v3755 = vunpack.c.l.b16 %v1916
      %v3756 = vunpack.c.h.b16 %v1916
      %v3757 = vunpack.c.l.b16 %v1917
      %v3758 = vunpack.c.h.b16 %v1917
      %v3759 = vunpack.c.l.b16 %v1918
      %v3760 = vunpack.c.h.b16 %v1918
      %v3761 = vunpack.c.l.b16 %v1919
      %v3762 = vunpack.c.h.b16 %v1919
      %v3763 = vunpack.c.l.b16 %v1920
      %v3764 = vunpack.c.h.b16 %v1920
      %v3765 = vunpack.c.l.b16 %v1921
      %v3766 = vunpack.c.h.b16 %v1921
      %v3767 = vunpack.c.l.b16 %v1922
      %v3768 = vunpack.c.h.b16 %v1922
      %v3769 = vunpack.c.l.b16 %v1923
      %v3770 = vunpack.c.h.b16 %v1923
      %v3771 = vunpack.c.l.b16 %v1924
      %v3772 = vunpack.c.h.b16 %v1924
      %v3773 = vunpack.c.l.b16 %v1925
      %v3774 = vunpack.c.h.b16 %v1925
      %v3775 = vunpack.c.l.b16 %v1926
      %v3776 = vunpack.c.h.b16 %v1926
      %v3777 = vunpack.c.l.b16 %v1927
      %v3778 = vunpack.c.h.b16 %v1927
      %v3779 = vunpack.c.l.b16 %v1928
      %v3780 = vunpack.c.h.b16 %v1928
      %v3781 = vunpack.c.l.b16 %v1929
      %v3782 = vunpack.c.h.b16 %v1929
      %v3783 = vunpack.c.l.b16 %v1930
      %v3784 = vunpack.c.h.b16 %v1930
      %v3785 = vunpack.c.l.b16 %v1931
      %v3786 = vunpack.c.h.b16 %v1931
      %v3787 = vunpack.c.l.b16 %v1932
      %v3788 = vunpack.c.h.b16 %v1932
      %v3789 = vunpack.c.l.b16 %v1933
      %v3790 = vunpack.c.h.b16 %v1933
      %v3791 = vunpack.c.l.b16 %v1934
      %v3792 = vunpack.c.h.b16 %v1934
      %v3793 = vunpack.c.l.b16 %v1935
      %v3794 = vunpack.c.h.b16 %v1935
      %v3795 = vunpack.c.l.b16 %v1936
      %v3796 = vunpack.c.h.b16 %v1936
      %v3797 = vunpack.c.l.b16 %v1937
      %v3798 = vunpack.c.h.b16 %v1937
      %v3799 = vunpack.c.l.b16 %v1938
      %v3800 = vunpack.c.h.b16 %v1938
      %v3801 = vunpack.c.l.b16 %v1939
      %v3802 = vunpack.c.h.b16 %v1939
      %v3803 = vunpack.c.l.b16 %v1940
      %v3804 = vunpack.c.h.b16 %v1940
      %v3805 = vunpack.c.l.b16 %v1941
      %v3806 = vunpack.c.h.b16 %v1941
      %v3807 = vunpack.c.l.b16 %v1942
      %v3808 = vunpack.c.h.b16 %v1942
      %v3809 = vunpack.c.l.b16 %v1943
      %v3810 = vunpack.c.h.b16 %v1943
      %v3811 = vunpack.c.l.b16 %v1944
      %v3812 = vunpack.c.h.b16 %v1944
      %v3813 = vunpack.c.l.b16 %v1945
      %v3814 = vunpack.c.h.b16 %v1945
      %v3815 = vunpack.c.l.b16 %v1946
      %v3816 = vunpack.c.h.b16 %v1946
      %v3817 = vunpack.c.l.b16 %v1947
      %v3818 = vunpack.c.h.b16 %v1947
      %v3819 = vunpack.c.l.b16 %v1948
      %v3820 = vunpack.c.h.b16 %v1948
      %v3821 = vunpack.c.l.b16 %v1949
      %v3822 = vunpack.c.h.b16 %v1949
      %v3823 = vunpack.c.l.b16 %v1950
      %v3824 = vunpack.c.h.b16 %v1950
      %v3825 = vunpack.c.l.b16 %v1951
      %v3826 = vunpack.c.h.b16 %v1951
      %v3827 = vunpack.c.l.b16 %v1952
      %v3828 = vunpack.c.h.b16 %v1952
      %v3829 = vunpack.c.l.b16 %v1953
      %v3830 = vunpack.c.h.b16 %v1953
      %v3831 = vunpack.c.l.b16 %v1954
      %v3832 = vunpack.c.h.b16 %v1954
      %v3833 = vunpack.c.l.b16 %v1955
      %v3834 = vunpack.c.h.b16 %v1955
      %v3835 = vunpack.c.l.b16 %v1956
      %v3836 = vunpack.c.h.b16 %v1956
      %v3837 = vunpack.c.l.b16 %v1957
      %v3838 = vunpack.c.h.b16 %v1957
      %v3839 = vunpack.c.l.b16 %v1958
      %v3840 = vunpack.c.h.b16 %v1958
      %v3841 = vunpack.c.l.b16 %v1959
      %v3842 = vunpack.c.h.b16 %v1959
      %v3843 = vunpack.c.l.b16 %v1960
      %v3844 = vunpack.c.h.b16 %v1960
      %v3845 = vunpack.c.l.b16 %v1961
      %v3846 = vunpack.c.h.b16 %v1961
      %v3847 = vunpack.c.l.b16 %v1962
      %v3848 = vunpack.c.h.b16 %v1962
      %v3849 = vunpack.c.l.b16 %v1963
      %v3850 = vunpack.c.h.b16 %v1963
      %v3851 = vunpack.c.l.b16 %v1964
      %v3852 = vunpack.c.h.b16 %v1964
      %v3853 = vunpack.c.l.b16 %v1965
      %v3854 = vunpack.c.h.b16 %v1965
      %v3855 = vunpack.c.l.b16 %v1966
      %v3856 = vunpack.c.h.b16 %v1966
      %v3857 = vunpack.c.l.b16 %v1967
      %v3858 = vunpack.c.h.b16 %v1967
      %v3859 = vunpack.c.l.b16 %v1968
      %v3860 = vunpack.c.h.b16 %v1968
      %v3861 = vunpack.c.l.b16 %v1969
      %v3862 = vunpack.c.h.b16 %v1969
      %v3863 = vunpack.c.l.b16 %v1970
      %v3864 = vunpack.c.h.b16 %v1970
      %v3865 = vunpack.c.l.b16 %v1971
      %v3866 = vunpack.c.h.b16 %v1971
      %v3867 = vunpack.c.l.b16 %v1972
      %v3868 = vunpack.c.h.b16 %v1972
      %v3869 = vunpack.c.l.b16 %v1973
      %v3870 = vunpack.c.h.b16 %v1973
      %v3871 = vunpack.c.l.b16 %v1974
      %v3872 = vunpack.c.h.b16 %v1974
      %v3873 = vunpack.c.l.b16 %v1975
      %v3874 = vunpack.c.h.b16 %v1975
      %v3875 = vunpack.c.l.b16 %v1976
      %v3876 = vunpack.c.h.b16 %v1976
      %v3877 = vunpack.c.l.b16 %v1977
      %v3878 = vunpack.c.h.b16 %v1977
      %v3879 = vunpack.c.l.b16 %v1978
      %v3880 = vunpack.c.h.b16 %v1978
      %v3881 = vunpack.c.l.b16 %v1979
      %v3882 = vunpack.c.h.b16 %v1979
      %v3883 = vunpack.c.l.b16 %v1980
      %v3884 = vunpack.c.h.b16 %v1980
      %v3885 = vunpack.c.l.b16 %v1981
      %v3886 = vunpack.c.h.b16 %v1981
      %v3887 = vunpack.c.l.b16 %v1982
      %v3888 = vunpack.c.h.b16 %v1982
      %v3889 = vunpack.c.l.b16 %v1983
      %v3890 = vunpack.c.h.b16 %v1983
      %v3891 = vunpack.c.l.b16 %v1984
      %v3892 = vunpack.c.h.b16 %v1984
      %v3893 = vunpack.c.l.b16 %v1985
      %v3894 = vunpack.c.h.b16 %v1985
      %v3895 = vunpack.c.l.b16 %v1986
      %v3896 = vunpack.c.h.b16 %v1986
      %v3897 = vunpack.c.l.b16 %v1987
      %v3898 = vunpack.c.h.b16 %v1987
      %v3899 = vunpack.c.l.b16 %v1988
      %v3900 = vunpack.c.h.b16 %v1988
      %v3901 = vunpack.c.l.b16 %v1989
      %v3902 = vunpack.c.h.b16 %v1989
      %v3903 = vunpack.c.l.b16 %v1990
      %v3904 = vunpack.c.h.b16 %v1990
      %v3905 = vunpack.c.l.b16 %v1991
      %v3906 = vunpack.c.h.b16 %v1991
      %v3907 = vunpack.c.l.b16 %v1992
      %v3908 = vunpack.c.h.b16 %v1992
      %v3909 = vunpack.c.l.b16 %v1993
      %v3910 = vunpack.c.h.b16 %v1993
      %v3911 = vunpack.c.l.b16 %v1994
      %v3912 = vunpack.c.h.b16 %v1994
      %v3913 = vunpack.c.l.b16 %v1995
      %v3914 = vunpack.c.h.b16 %v1995
      %v3915 = vunpack.c.l.b16 %v1996
      %v3916 = vunpack.c.h.b16 %v1996
      %v3917 = vunpack.c.l.b16 %v1997
      %v3918 = vunpack.c.h.b16 %v1997
      %v3919 = vunpack.c.l.b16 %v1998
      %v3920 = vunpack.c.h.b16 %v1998
      %v3921 = vunpack.c.l.b16 %v1999
      %v3922 = vunpack.c.h.b16 %v1999
      %v3923 = vunpack.c.l.b16 %v2000
      %v3924 = vunpack.c.h.b16 %v2000
      %v3925 = vunpack.c.l.b16 %v2001
      %v3926 = vunpack.c.h.b16 %v2001
      %v3927 = vunpack.c.l.b16 %v2002
      %v3928 = vunpack.c.h.b16 %v2002
      %v3929 = vunpack.c.l.b16 %v2003
      %v3930 = vunpack.c.h.b16 %v2003
      %v3931 = vunpack.c.l.b16 %v2004
      %v3932 = vunpack.c.h.b16 %v2004
      %v3933 = vunpack.c.l.b16 %v2005
      %v3934 = vunpack.c.h.b16 %v2005
      %v3935 = vunpack.c.l.b16 %v2006
      %v3936 = vunpack.c.h.b16 %v2006
      %v3937 = vunpack.c.l.b16 %v2007
      %v3938 = vunpack.c.h.b16 %v2007
      %v3939 = vunpack.c.l.b16 %v2008
      %v3940 = vunpack.c.h.b16 %v2008
      %v3941 = vunpack.c.l.b16 %v2009
      %v3942 = vunpack.c.h.b16 %v2009
      %v3943 = vunpack.c.l.b16 %v2010
      %v3944 = vunpack.c.h.b16 %v2010
      %v3945 = vunpack.c.l.b16 %v2011
      %v3946 = vunpack.c.h.b16 %v2011
      %v3947 = vunpack.c.l.b16 %v2012
      %v3948 = vunpack.c.h.b16 %v2012
      %v3949 = vunpack.c.l.b16 %v2013
      %v3950 = vunpack.c.h.b16 %v2013
      %v3951 = vunpack.c.l.b16 %v2014
      %v3952 = vunpack.c.h.b16 %v2014
      %v3953 = vunpack.c.l.b16 %v2015
      %v3954 = vunpack.c.h.b16 %v2015
      %v3955 = vunpack.c.l.b16 %v2016
      %v3956 = vunpack.c.h.b16 %v2016
      %v3957 = vunpack.c.l.b16 %v2017
      %v3958 = vunpack.c.h.b16 %v2017
      %v3959 = vunpack.c.l.b16 %v2018
      %v3960 = vunpack.c.h.b16 %v2018
      %v3961 = vunpack.c.l.b16 %v2019
      %v3962 = vunpack.c.h.b16 %v2019
      %v3963 = vunpack.c.l.b16 %v2020
      %v3964 = vunpack.c.h.b16 %v2020
      %v3965 = vunpack.c.l.b16 %v2021
      %v3966 = vunpack.c.h.b16 %v2021
      %v3967 = vunpack.c.l.b16 %v2022
      %v3968 = vunpack.c.h.b16 %v2022
      %v3969 = vunpack.c.l.b16 %v2023
      %v3970 = vunpack.c.h.b16 %v2023
      %v3971 = vunpack.c.l.b16 %v2024
      %v3972 = vunpack.c.h.b16 %v2024
      %v3973 = vunpack.c.l.b16 %v2025
      %v3974 = vunpack.c.h.b16 %v2025
      %v3975 = vunpack.c.l.b16 %v2026
      %v3976 = vunpack.c.h.b16 %v2026
      %v3977 = vunpack.c.l.b16 %v2027
      %v3978 = vunpack.c.h.b16 %v2027
      %v3979 = vunpack.c.l.b16 %v2028
      %v3980 = vunpack.c.h.b16 %v2028
      %v3981 = vunpack.c.l.b16 %v2029
      %v3982 = vunpack.c.h.b16 %v2029
      %v3983 = vunpack.c.l.b16 %v2030
      %v3984 = vunpack.c.h.b16 %v2030
      %v3985 = vunpack.c.l.b16 %v2031
      %v3986 = vunpack.c.h.b16 %v2031
      %v3987 = vunpack.c.l.b16 %v2032
      %v3988 = vunpack.c.h.b16 %v2032
      %v3989 = vunpack.c.l.b16 %v2033
      %v3990 = vunpack.c.h.b16 %v2033
      %v3991 = vunpack.c.l.b16 %v2034
      %v3992 = vunpack.c.h.b16 %v2034
      %v3993 = vunpack.c.l.b16 %v2035
      %v3994 = vunpack.c.h.b16 %v2035
      %v3995 = vunpack.c.l.b16 %v2036
      %v3996 = vunpack.c.h.b16 %v2036
      %v3997 = vunpack.c.l.b16 %v2037
      %v3998 = vunpack.c.h.b16 %v2037
      %v3999 = vunpack.c.l.b16 %v2038
      %v4000 = vunpack.c.h.b16 %v2038
      %v4001 = vunpack.c.l.b16 %v2039
      %v4002 = vunpack.c.h.b16 %v2039
      %v4003 = vunpack.c.l.b16 %v2040
      %v4004 = vunpack.c.h.b16 %v2040
      %v4005 = vunpack.c.l.b16 %v2041
      %v4006 = vunpack.c.h.b16 %v2041
      %v4007 = vunpack.c.l.b16 %v2042
      %v4008 = vunpack.c.h.b16 %v2042
      %v4009 = vunpack.c.l.b16 %v2043
      %v4010 = vunpack.c.h.b16 %v2043
      %v4011 = vunpack.c.l.b16 %v2044
      %v4012 = vunpack.c.h.b16 %v2044
      %v4013 = vunpack.c.l.b16 %v2045
      %v4014 = vunpack.c.h.b16 %v2045
      %v4015 = vunpack.c.l.b16 %v2046
      %v4016 = vunpack.c.h.b16 %v2046
      %v4017 = vunpack.c.l.b16 %v2047
      %v4018 = vunpack.c.h.b16 %v2047
      %v4019 = vunpack.c.l.b16 %v2048
      %v4020 = vunpack.c.h.b16 %v2048
      %v4021 = vunpack.c.l.b16 %v2049
      %v4022 = vunpack.c.h.b16 %v2049
      %v4023 = vunpack.c.l.b16 %v2050
      %v4024 = vunpack.c.h.b16 %v2050
      %v4025 = vunpack.c.l.b16 %v2051
      %v4026 = vunpack.c.h.b16 %v2051
      %v4027 = vunpack.c.l.b16 %v2052
      %v4028 = vunpack.c.h.b16 %v2052
      %v4029 = vunpack.c.l.b16 %v2053
      %v4030 = vunpack.c.h.b16 %v2053
      %v4031 = vunpack.c.l.b16 %v2054
      %v4032 = vunpack.c.h.b16 %v2054
      %v4033 = vunpack.c.l.b16 %v2055
      %v4034 = vunpack.c.h.b16 %v2055
      %v4035 = vunpack.c.l.b16 %v2056
      %v4036 = vunpack.c.h.b16 %v2056
      %v4037 = vunpack.c.l.b16 %v2057
      %v4038 = vunpack.c.h.b16 %v2057
      %v4039 = vunpack.c.l.b16 %v2058
      %v4040 = vunpack.c.h.b16 %v2058
      %v4041 = vunpack.c.l.b16 %v2059
      %v4042 = vunpack.c.h.b16 %v2059
      %v4043 = vunpack.c.l.b16 %v2060
      %v4044 = vunpack.c.h.b16 %v2060
      %v4045 = vunpack.c.l.b16 %v2061
      %v4046 = vunpack.c.h.b16 %v2061
      %v4047 = vunpack.c.l.b16 %v2062
      %v4048 = vunpack.c.h.b16 %v2062
      %v4049 = vunpack.c.l.b16 %v2063
      %v4050 = vunpack.c.h.b16 %v2063
      %v4051 = vunpack.c.l.b16 %v2064
      %v4052 = vunpack.c.h.b16 %v2064
      %v4053 = vunpack.c.l.b16 %v2065
      %v4054 = vunpack.c.h.b16 %v2065
      %v4055 = vunpack.c.l.b16 %v2066
      %v4056 = vunpack.c.h.b16 %v2066
      %v4057 = vunpack.c.l.b16 %v2067
      %v4058 = vunpack.c.h.b16 %v2067
      %v4059 = vunpack.c.l.b16 %v2068
      %v4060 = vunpack.c.h.b16 %v2068
      %v4061 = vunpack.c.l.b16 %v2069
      %v4062 = vunpack.c.h.b16 %v2069
      %v4063 = vunpack.c.l.b16 %v2070
      %v4064 = vunpack.c.h.b16 %v2070
      %v4065 = vunpack.c.l.b16 %v2071
      %v4066 = vunpack.c.h.b16 %v2071
      %v4067 = vunpack.c.l.b16 %v2072
      %v4068 = vunpack.c.h.b16 %v2072
      %v4069 = vunpack.c.l.b16 %v2073
      %v4070 = vunpack.c.h.b16 %v2073
      %v4071 = vunpack.c.l.b16 %v2074
      %v4072 = vunpack.c.h.b16 %v2074
      %v4073 = vunpack.c.l.b16 %v2075
      %v4074 = vunpack.c.h.b16 %v2075
      %v4075 = vunpack.c.l.b16 %v2076
      %v4076 = vunpack.c.h.b16 %v2076
      %v4077 = vunpack.c.l.b16 %v2077
      %v4078 = vunpack.c.h.b16 %v2077
      %v4079 = vunpack.c.l.b16 %v2078
      %v4080 = vunpack.c.h.b16 %v2078
      %v4081 = vunpack.c.l.b16 %v2079
      %v4082 = vunpack.c.h.b16 %v2079
      %v4083 = vunpack.c.l.b16 %v2080
      %v4084 = vunpack.c.h.b16 %v2080
      %v4085 = vunpack.c.l.b16 %v2081
      %v4086 = vunpack.c.h.b16 %v2081
      %v4087 = vunpack.c.l.b16 %v2082
      %v4088 = vunpack.c.h.b16 %v2082
      %v4089 = vunpack.c.l.b16 %v2083
      %v4090 = vunpack.c.h.b16 %v2083
      %v4091 = vunpack.c.l.b16 %v2084
      %v4092 = vunpack.c.h.b16 %v2084
      %v4093 = vunpack.c.l.b16 %v2085
      %v4094 = vunpack.c.h.b16 %v2085
      %v4095 = vunpack.c.l.b16 %v2086
      %v4096 = vunpack.c.h.b16 %v2086
      %v4097 = vunpack.c.l.b16 %v2087
      %v4098 = vunpack.c.h.b16 %v2087
      %v4099 = vunpack.c.l.b16 %v2088
      %v4100 = vunpack.c.h.b16 %v2088
      %v4101 = vunpack.c.l.b16 %v2089
      %v4102 = vunpack.c.h.b16 %v2089
      %v4103 = vunpack.c.l.b16 %v2090
      %v4104 = vunpack.c.h.b16 %v2090
      %v4105 = vunpack.c.l.b16 %v2091
      %v4106 = vunpack.c.h.b16 %v2091
      %v4107 = vunpack.c.l.b16 %v2092
      %v4108 = vunpack.c.h.b16 %v2092
      %v4109 = vunpack.c.l.b16 %v2093
      %v4110 = vunpack.c.h.b16 %v2093
      %v4111 = vunpack.c.l.b16 %v2094
      %v4112 = vunpack.c.h.b16 %v2094
      %v4113 = vunpack.c.l.b16 %v2095
      %v4114 = vunpack.c.h.b16 %v2095
      %v4115 = vunpack.c.l.b16 %v2096
      %v4116 = vunpack.c.h.b16 %v2096
      %v4117 = vunpack.c.l.b16 %v2097
      %v4118 = vunpack.c.h.b16 %v2097
      %v4119 = vunpack.c.l.b16 %v2098
      %v4120 = vunpack.c.h.b16 %v2098
      %v4121 = vunpack.c.l.b16 %v2099
      %v4122 = vunpack.c.h.b16 %v2099
      %v4123 = vunpack.c.l.b16 %v2100
      %v4124 = vunpack.c.h.b16 %v2100
      %v4125 = vunpack.c.l.b16 %v2101
      %v4126 = vunpack.c.h.b16 %v2101
      %v4127 = vunpack.c.l.b16 %v2102
      %v4128 = vunpack.c.h.b16 %v2102
      %v4129 = vunpack.c.l.b16 %v2103
      %v4130 = vunpack.c.h.b16 %v2103
      %v4131 = vunpack.c.l.b16 %v2104
      %v4132 = vunpack.c.h.b16 %v2104
      %v4133 = vunpack.c.l.b16 %v2105
      %v4134 = vunpack.c.h.b16 %v2105
      %v4135 = vunpack.c.l.b16 %v2106
      %v4136 = vunpack.c.h.b16 %v2106
      %v4137 = vunpack.c.l.b16 %v2107
      %v4138 = vunpack.c.h.b16 %v2107
      %v4139 = vunpack.c.l.b16 %v2108
      %v4140 = vunpack.c.h.b16 %v2108
      %v4141 = vunpack.c.l.b16 %v2109
      %v4142 = vunpack.c.h.b16 %v2109
      %v4143 = vunpack.c.l.b16 %v2110
      %v4144 = vunpack.c.h.b16 %v2110
      %v4145 = vunpack.c.l.b16 %v2111
      %v4146 = vunpack.c.h.b16 %v2111
      %v4147 = vunpack.c.l.b16 %v2112
      %v4148 = vunpack.c.h.b16 %v2112
      %v4149 = vunpack.c.l.b16 %v2113
      %v4150 = vunpack.c.h.b16 %v2113
      %v4151 = vunpack.c.l.b16 %v2114
      %v4152 = vunpack.c.h.b16 %v2114
      %v4153 = vunpack.c.l.b16 %v2115
      %v4154 = vunpack.c.h.b16 %v2115
      %v4155 = vunpack.c.l.b16 %v2116
      %v4156 = vunpack.c.h.b16 %v2116
      %v4157 = vunpack.c.l.b16 %v2117
      %v4158 = vunpack.c.h.b16 %v2117
      %v4159 = vunpack.c.l.b16 %v2118
      %v4160 = vunpack.c.h.b16 %v2118
      %v4161 = vunpack.c.l.b16 %v2119
      %v4162 = vunpack.c.h.b16 %v2119
      %v4163 = vunpack.c.l.b16 %v2120
      %v4164 = vunpack.c.h.b16 %v2120
      %v4165 = vunpack.c.l.b16 %v2121
      %v4166 = vunpack.c.h.b16 %v2121
      %v4167 = vunpack.c.l.b16 %v2122
      %v4168 = vunpack.c.h.b16 %v2122
      %v4169 = vunpack.c.l.b16 %v2123
      %v4170 = vunpack.c.h.b16 %v2123
      %v4171 = vunpack.c.l.b16 %v2124
      %v4172 = vunpack.c.h.b16 %v2124
      %v4173 = vunpack.c.l.b16 %v2125
      %v4174 = vunpack.c.h.b16 %v2125
      %v4175 = vunpack.c.l.b16 %v2126
      %v4176 = vunpack.c.h.b16 %v2126
      %v4177 = vunpack.c.l.b16 %v2127
      %v4178 = vunpack.c.h.b16 %v2127
      %v4179 = vunpack.c.l.b16 %v2128
      %v4180 = vunpack.c.h.b16 %v2128
      %v4181 = vunpack.c.l.b16 %v2129
      %v4182 = vunpack.c.h.b16 %v2129
      %v4183 = vunpack.c.l.b16 %v2130
      %v4184 = vunpack.c.h.b16 %v2130
      %v4185 = vunpack.c.l.b16 %v2131
      %v4186 = vunpack.c.h.b16 %v2131
      %v4187 = vunpack.c.l.b16 %v2132
      %v4188 = vunpack.c.h.b16 %v2132
      %v4189 = vunpack.c.l.b16 %v2133
      %v4190 = vunpack.c.h.b16 %v2133
      %v4191 = vunpack.c.l.b16 %v2134
      %v4192 = vunpack.c.h.b16 %v2134
      %v4193 = vunpack.c.l.b16 %v2135
      %v4194 = vunpack.c.h.b16 %v2135
      %v4195 = vunpack.c.l.b16 %v2136
      %v4196 = vunpack.c.h.b16 %v2136
      %v4197 = vunpack.c.l.b16 %v2137
      %v4198 = vunpack.c.h.b16 %v2137
      %v4199 = vunpack.c.l.b16 %v2138
      %v4200 = vunpack.c.h.b16 %v2138
      %v4201 = vunpack.c.l.b16 %v2139
      %v4202 = vunpack.c.h.b16 %v2139
      %v4203 = vunpack.c.l.b16 %v2140
      %v4204 = vunpack.c.h.b16 %v2140
      %v4205 = vunpack.c.l.b16 %v2141
      %v4206 = vunpack.c.h.b16 %v2141
      %v4207 = vunpack.c.l.b16 %v2142
      %v4208 = vunpack.c.h.b16 %v2142
      %v4209 = vunpack.c.l.b16 %v2143
      %v4210 = vunpack.c.h.b16 %v2143
      %v4211 = vunpack.c.l.b16 %v2144
      %v4212 = vunpack.c.h.b16 %v2144
      %v4213 = vunpack.c.l.b16 %v2145
      %v4214 = vunpack.c.h.b16 %v2145
      %v4215 = vunpack.c.l.b16 %v2146
      %v4216 = vunpack.c.h.b16 %v2146
      %v4217 = vunpack.c.l.b16 %v2147
      %v4218 = vunpack.c.h.b16 %v2147
      %v4219 = vunpack.c.l.b16 %v2148
      %v4220 = vunpack.c.h.b16 %v2148
      %v4221 = vunpack.c.l.b16 %v2149
      %v4222 = vunpack.c.h.b16 %v2149
      %v4223 = vunpack.c.l.b16 %v2150
      %v4224 = vunpack.c.h.b16 %v2150
      %v4225 = vunpack.c.l.b16 %v2151
      %v4226 = vunpack.c.h.b16 %v2151
      %v4227 = vunpack.c.l.b16 %v2152
      %v4228 = vunpack.c.h.b16 %v2152
      %v4229 = vunpack.c.l.b16 %v2153
      %v4230 = vunpack.c.h.b16 %v2153
      %v4231 = vunpack.c.l.b16 %v2154
      %v4232 = vunpack.c.h.b16 %v2154
      %v4233 = vunpack.c.l.b16 %v2155
      %v4234 = vunpack.c.h.b16 %v2155
      %v4235 = vunpack.c.l.b16 %v2156
      %v4236 = vunpack.c.h.b16 %v2156
      %v4237 = vunpack.c.l.b16 %v2157
      %v4238 = vunpack.c.h.b16 %v2157
      %v4239 = vunpack.c.l.b16 %v2158
      %v4240 = vunpack.c.h.b16 %v2158
      %v4241 = vunpack.c.l.b16 %v2159
      %v4242 = vunpack.c.h.b16 %v2159
      %v4243 = vunpack.c.l.b16 %v2160
      %v4244 = vunpack.c.h.b16 %v2160
      %v4245 = vunpack.c.l.b16 %v2161
      %v4246 = vunpack.c.h.b16 %v2161
      %v4247 = vunpack.c.l.b16 %v2162
      %v4248 = vunpack.c.h.b16 %v2162
      %v4249 = vunpack.c.l.b16 %v2163
      %v4250 = vunpack.c.h.b16 %v2163
      %v4251 = vunpack.c.l.b16 %v2164
      %v4252 = vunpack.c.h.b16 %v2164
      %v4253 = vunpack.c.l.b16 %v2165
      %v4254 = vunpack.c.h.b16 %v2165
      %v4255 = vunpack.c.l.b16 %v2166
      %v4256 = vunpack.c.h.b16 %v2166
      %v4257 = vunpack.c.l.b16 %v2167
      %v4258 = vunpack.c.h.b16 %v2167
      %v4259 = vunpack.c.l.b16 %v2168
      %v4260 = vunpack.c.h.b16 %v2168
      %v4261 = vunpack.c.l.b16 %v2169
      %v4262 = vunpack.c.h.b16 %v2169
      %v4263 = vunpack.c.l.b16 %v2170
      %v4264 = vunpack.c.h.b16 %v2170
      %v4265 = vunpack.c.l.b16 %v2171
      %v4266 = vunpack.c.h.b16 %v2171
      %v4267 = vunpack.c.l.b16 %v2172
      %v4268 = vunpack.c.h.b16 %v2172
      %v4269 = vunpack.c.l.b16 %v2173
      %v4270 = vunpack.c.h.b16 %v2173
      %v4271 = vunpack.c.l.b16 %v2174
      %v4272 = vunpack.c.h.b16 %v2174
      %v4273 = vunpack.c.l.b16 %v2175
      %v4274 = vunpack.c.h.b16 %v2175
      %v4275 = vunpack.c.l.b16 %v2176
      %v4276 = vunpack.c.h.b16 %v2176
      %v4277 = vunpack.c.l.b16 %v2177
      %v4278 = vunpack.c.h.b16 %v2177
      %v4279 = vunpack.c.l.b16 %v2178
      %v4280 = vunpack.c.h.b16 %v2178
      %v4281 = vunpack.c.l.b16 %v2179
      %v4282 = vunpack.c.h.b16 %v2179
      %v4283 = vunpack.c.l.b16 %v2180
      %v4284 = vunpack.c.h.b16 %v2180
      %v4285 = vunpack.c.l.b16 %v2181
      %v4286 = vunpack.c.h.b16 %v2181
      %v4287 = vunpack.c.l.b16 %v2182
      %v4288 = vunpack.c.h.b16 %v2182
      %v4289 = vunpack.c.l.b16 %v2183
      %v4290 = vunpack.c.h.b16 %v2183
      %v4291 = vunpack.c.l.b16 %v2184
      %v4292 = vunpack.c.h.b16 %v2184
      %v4293 = vunpack.c.l.b16 %v2185
      %v4294 = vunpack.c.h.b16 %v2185
      %v4295 = vunpack.c.l.b16 %v2186
      %v4296 = vunpack.c.h.b16 %v2186
      %v4297 = vunpack.c.l.b16 %v2187
      %v4298 = vunpack.c.h.b16 %v2187
      %v4299 = vunpack.c.l.b16 %v2188
      %v4300 = vunpack.c.h.b16 %v2188
      %v4301 = vunpack.c.l.b16 %v2189
      %v4302 = vunpack.c.h.b16 %v2189
      %v4303 = vunpack.c.l.b16 %v2190
      %v4304 = vunpack.c.h.b16 %v2190
      %v4305 = vunpack.c.l.b16 %v2191
      %v4306 = vunpack.c.h.b16 %v2191
      %v4307 = vunpack.c.l.b16 %v2192
      %v4308 = vunpack.c.h.b16 %v2192
      %v4309 = vunpack.c.l.b16 %v2193
      %v4310 = vunpack.c.h.b16 %v2193
      %v4311 = vunpack.c.l.b16 %v2194
      %v4312 = vunpack.c.h.b16 %v2194
      %v4313 = vunpack.c.l.b16 %v2195
      %v4314 = vunpack.c.h.b16 %v2195
      %v4315 = vunpack.c.l.b16 %v2196
      %v4316 = vunpack.c.h.b16 %v2196
      %v4317 = vunpack.c.l.b16 %v2197
      %v4318 = vunpack.c.h.b16 %v2197
      %v4319 = vunpack.c.l.b16 %v2198
      %v4320 = vunpack.c.h.b16 %v2198
      %v4321 = vunpack.c.l.b16 %v2199
      %v4322 = vunpack.c.h.b16 %v2199
      %v4323 = vunpack.c.l.b16 %v2200
      %v4324 = vunpack.c.h.b16 %v2200
      %v4325 = vunpack.c.l.b16 %v2201
      %v4326 = vunpack.c.h.b16 %v2201
      %v4327 = vunpack.c.l.b16 %v2202
      %v4328 = vunpack.c.h.b16 %v2202
      %v4329 = vunpack.c.l.b16 %v2203
      %v4330 = vunpack.c.h.b16 %v2203
      %v4331 = vunpack.c.l.b16 %v2204
      %v4332 = vunpack.c.h.b16 %v2204
      %v4333 = vunpack.c.l.b16 %v2205
      %v4334 = vunpack.c.h.b16 %v2205
      %v4335 = vunpack.c.l.b16 %v2206
      %v4336 = vunpack.c.h.b16 %v2206
      %v4337 = vunpack.c.l.b16 %v2207
      %v4338 = vunpack.c.h.b16 %v2207
      %v4339 = vunpack.c.l.b16 %v2208
      %v4340 = vunpack.c.h.b16 %v2208
      %v4341 = vunpack.c.l.b16 %v2209
      %v4342 = vunpack.c.h.b16 %v2209
      %v4343 = vunpack.c.l.b16 %v2210
      %v4344 = vunpack.c.h.b16 %v2210
      %v4345 = vunpack.c.l.b16 %v2211
      %v4346 = vunpack.c.h.b16 %v2211
      %v4347 = vunpack.c.l.b16 %v2212
      %v4348 = vunpack.c.h.b16 %v2212
      %v4349 = vunpack.c.l.b16 %v2213
      %v4350 = vunpack.c.h.b16 %v2213
      %v4351 = vunpack.c.l.b16 %v2214
      %v4352 = vunpack.c.h.b16 %v2214
      %v4353 = vunpack.c.l.b16 %v2215
      %v4354 = vunpack.c.h.b16 %v2215
      %v4355 = vunpack.c.l.b16 %v2216
      %v4356 = vunpack.c.h.b16 %v2216
      %v4357 = vunpack.c.l.b16 %v2217
      %v4358 = vunpack.c.h.b16 %v2217
      %v4359 = vunpack.c.l.b16 %v2218
      %v4360 = vunpack.c.h.b16 %v2218
      %v4361 = vunpack.c.l.b16 %v2219
      %v4362 = vunpack.c.h.b16 %v2219
      %v4363 = vunpack.c.l.b16 %v2220
      %v4364 = vunpack.c.h.b16 %v2220
      %v4365 = vunpack.c.l.b16 %v2221
      %v4366 = vunpack.c.h.b16 %v2221
      %v4367 = vunpack.c.l.b16 %v2222
      %v4368 = vunpack.c.h.b16 %v2222
      %v4369 = vunpack.c.l.b16 %v2223
      %v4370 = vunpack.c.h.b16 %v2223
      %v4371 = vunpack.c.l.b16 %v2224
      %v4372 = vunpack.c.h.b16 %v2224
      %v4373 = vunpack.c.l.b16 %v2225
      %v4374 = vunpack.c.h.b16 %v2225
      %v4375 = vunpack.c.l.b16 %v2226
      %v4376 = vunpack.c.h.b16 %v2226
      %v4377 = vunpack.c.l.b16 %v2227
      %v4378 = vunpack.c.h.b16 %v2227
      %v4379 = vunpack.c.l.b16 %v2228
      %v4380 = vunpack.c.h.b16 %v2228
      %v4381 = vunpack.c.l.b16 %v2229
      %v4382 = vunpack.c.h.b16 %v2229
      %v4383 = vunpack.c.l.b16 %v2230
      %v4384 = vunpack.c.h.b16 %v2230
      %v4385 = vunpack.c.l.b16 %v2231
      %v4386 = vunpack.c.h.b16 %v2231
      %v4387 = vunpack.c.l.b16 %v2232
      %v4388 = vunpack.c.h.b16 %v2232
      %v4389 = vunpack.c.l.b16 %v2233
      %v4390 = vunpack.c.h.b16 %v2233
      %v4391 = vunpack.c.l.b16 %v2234
      %v4392 = vunpack.c.h.b16 %v2234
      %v4393 = vunpack.c.l.b16 %v2235
      %v4394 = vunpack.c.h.b16 %v2235
      %v4395 = vunpack.c.l.b16 %v2236
      %v4396 = vunpack.c.h.b16 %v2236
      %v4397 = vunpack.c.l.b16 %v2237
      %v4398 = vunpack.c.h.b16 %v2237
      %v4399 = vunpack.c.l.b16 %v2238
      %v4400 = vunpack.c.h.b16 %v2238
      %v4401 = vunpack.c.l.b16 %v2239
      %v4402 = vunpack.c.h.b16 %v2239
      %v4403 = vunpack.c.l.b16 %v2240
      %v4404 = vunpack.c.h.b16 %v2240
      %v4405 = vunpack.c.l.b16 %v2241
      %v4406 = vunpack.c.h.b16 %v2241
      %v4407 = vunpack.c.l.b16 %v2242
      %v4408 = vunpack.c.h.b16 %v2242
      %v4409 = vunpack.c.l.b16 %v2243
      %v4410 = vunpack.c.h.b16 %v2243
      %v4411 = vunpack.c.l.b16 %v2244
      %v4412 = vunpack.c.h.b16 %v2244
      %v4413 = vunpack.c.l.b16 %v2245
      %v4414 = vunpack.c.h.b16 %v2245
      %v4415 = vunpack.c.l.b16 %v2246
      %v4416 = vunpack.c.h.b16 %v2246
      %v4417 = vunpack.c.l.b16 %v2247
      %v4418 = vunpack.c.h.b16 %v2247
      %v4419 = vunpack.c.l.b16 %v2248
      %v4420 = vunpack.c.h.b16 %v2248
      %v4421 = vunpack.c.l.b16 %v2249
      %v4422 = vunpack.c.h.b16 %v2249
      %v4423 = vunpack.c.l.b16 %v2250
      %v4424 = vunpack.c.h.b16 %v2250
      %v4425 = vunpack.c.l.b16 %v2251
      %v4426 = vunpack.c.h.b16 %v2251
      %v4427 = vunpack.c.l.b16 %v2252
      %v4428 = vunpack.c.h.b16 %v2252
      %v4429 = vunpack.c.l.b16 %v2253
      %v4430 = vunpack.c.h.b16 %v2253
      %v4431 = vunpack.c.l.b16 %v2254
      %v4432 = vunpack.c.h.b16 %v2254
      %v4433 = vunpack.c.l.b16 %v2255
      %v4434 = vunpack.c.h.b16 %v2255
      %v4435 = vunpack.c.l.b16 %v2256
      %v4436 = vunpack.c.h.b16 %v2256
      %v4437 = vunpack.c.l.b16 %v2257
      %v4438 = vunpack.c.h.b16 %v2257
      %v4439 = vunpack.c.l.b16 %v2258
      %v4440 = vunpack.c.h.b16 %v2258
      %v4441 = vunpack.c.l.b16 %v2259
      %v4442 = vunpack.c.h.b16 %v2259
      %v4443 = vunpack.c.l.b16 %v2260
      %v4444 = vunpack.c.h.b16 %v2260
      %v4445 = vunpack.c.l.b16 %v2261
      %v4446 = vunpack.c.h.b16 %v2261
      %v4447 = vunpack.c.l.b16 %v2262
      %v4448 = vunpack.c.h.b16 %v2262
      %v4449 = vunpack.c.l.b16 %v2263
      %v4450 = vunpack.c.h.b16 %v2263
      %v4451 = vunpack.c.l.b16 %v2264
      %v4452 = vunpack.c.h.b16 %v2264
      %v4453 = vunpack.c.l.b16 %v2265
      %v4454 = vunpack.c.h.b16 %v2265
      %v4455 = vunpack.c.l.b16 %v2266
      %v4456 = vunpack.c.h.b16 %v2266
      %v4457 = vunpack.c.l.b16 %v2267
      %v4458 = vunpack.c.h.b16 %v2267
      %v4459 = vunpack.c.l.b16 %v2268
      %v4460 = vunpack.c.h.b16 %v2268
      %v4461 = vunpack.c.l.b16 %v2269
      %v4462 = vunpack.c.h.b16 %v2269
      %v4463 = vunpack.c.l.b16 %v2270
      %v4464 = vunpack.c.h.b16 %v2270
      %v4465 = vunpack.c.l.b16 %v2271
      %v4466 = vunpack.c.h.b16 %v2271
      %v4467 = vunpack.c.l.b16 %v2272
      %v4468 = vunpack.c.h.b16 %v2272
      %v4469 = vunpack.c.l.b16 %v2273
      %v4470 = vunpack.c.h.b16 %v2273
      %v4471 = vunpack.c.l.b16 %v2274
      %v4472 = vunpack.c.h.b16 %v2274
      %v4473 = vunpack.c.l.b16 %v2275
      %v4474 = vunpack.c.h.b16 %v2275
      %v4475 = vunpack.c.l.b16 %v2276
      %v4476 = vunpack.c.h.b16 %v2276
      %v4477 = vunpack.c.l.b16 %v2277
      %v4478 = vunpack.c.h.b16 %v2277
      %v4479 = vunpack.c.l.b16 %v2278
      %v4480 = vunpack.c.h.b16 %v2278
      %v4481 = vunpack.c.l.b16 %v2279
      %v4482 = vunpack.c.h.b16 %v2279
      %v4483 = vunpack.c.l.b16 %v2280
      %v4484 = vunpack.c.h.b16 %v2280
      %v4485 = vunpack.c.l.b16 %v2281
      %v4486 = vunpack.c.h.b16 %v2281
      %v4487 = vunpack.c.l.b16 %v2282
      %v4488 = vunpack.c.h.b16 %v2282
      %v4489 = vunpack.c.l.b16 %v2283
      %v4490 = vunpack.c.h.b16 %v2283
      %v4491 = vunpack.c.l.b16 %v2284
      %v4492 = vunpack.c.h.b16 %v2284
      %v4493 = vunpack.c.l.b16 %v2285
      %v4494 = vunpack.c.h.b16 %v2285
      %v4495 = vunpack.c.l.b16 %v2286
      %v4496 = vunpack.c.h.b16 %v2286
      %v4497 = vunpack.c.l.b16 %v2287
      %v4498 = vunpack.c.h.b16 %v2287
      %v4499 = vunpack.c.l.b16 %v2288
      %v4500 = vunpack.c.h.b16 %v2288
      %v4501 = vunpack.c.l.b16 %v2289
      %v4502 = vunpack.c.h.b16 %v2289
      %v4503 = vunpack.c.l.b16 %v2290
      %v4504 = vunpack.c.h.b16 %v2290
      %v4505 = vunpack.c.l.b16 %v2291
      %v4506 = vunpack.c.h.b16 %v2291
      %v4507 = vunpack.c.l.b16 %v2292
      %v4508 = vunpack.c.h.b16 %v2292
      %v4509 = vunpack.c.l.b16 %v2293
      %v4510 = vunpack.c.h.b16 %v2293
      %v4511 = vunpack.c.l.b16 %v2294
      %v4512 = vunpack.c.h.b16 %v2294
      %v4513 = vunpack.c.l.b16 %v2295
      %v4514 = vunpack.c.h.b16 %v2295
      %v4515 = vunpack.c.l.b16 %v2296
      %v4516 = vunpack.c.h.b16 %v2296
      %v4517 = vunpack.c.l.b16 %v2297
      %v4518 = vunpack.c.h.b16 %v2297
      %v4519 = vunpack.c.l.b16 %v2298
      %v4520 = vunpack.c.h.b16 %v2298
      %v4521 = vunpack.c.l.b16 %v2299
      %v4522 = vunpack.c.h.b16 %v2299
      %v4523 = vunpack.c.l.b16 %v2300
      %v4524 = vunpack.c.h.b16 %v2300
      %v4525 = vunpack.c.l.b16 %v2301
      %v4526 = vunpack.c.h.b16 %v2301
      %v4527 = vunpack.c.l.b16 %v2302
      %v4528 = vunpack.c.h.b16 %v2302
      %v4529 = vunpack.c.l.b16 %v2303
      %v4530 = vunpack.c.h.b16 %v2303
      %v4531 = vunpack.c.l.b16 %v2304
      %v4532 = vunpack.c.h.b16 %v2304
      %v4533 = vunpack.c.l.b16 %v2305
      %v4534 = vunpack.c.h.b16 %v2305
      %v4535 = vunpack.c.l.b16 %v2306
      %v4536 = vunpack.c.h.b16 %v2306
      %v4537 = vunpack.c.l.b16 %v2307
      %v4538 = vunpack.c.h.b16 %v2307
      %v4539 = vunpack.c.l.b16 %v2308
      %v4540 = vunpack.c.h.b16 %v2308
      %v4541 = vunpack.c.l.b16 %v2309
      %v4542 = vunpack.c.h.b16 %v2309
      %v4543 = vunpack.c.l.b16 %v2310
      %v4544 = vunpack.c.h.b16 %v2310
      %v4545 = vunpack.c.l.b16 %v2311
      %v4546 = vunpack.c.h.b16 %v2311
      %v4547 = vunpack.c.l.b16 %v2312
      %v4548 = vunpack.c.h.b16 %v2312
      %v4549 = vunpack.c.l.b16 %v2313
      %v4550 = vunpack.c.h.b16 %v2313
      %v4551 = vunpack.c.l.b16 %v2314
      %v4552 = vunpack.c.h.b16 %v2314
      %v4553 = vunpack.c.l.b16 %v2315
      %v4554 = vunpack.c.h.b16 %v2315
      %v4555 = vunpack.c.l.b16 %v2316
      %v4556 = vunpack.c.h.b16 %v2316
      %v4557 = vunpack.c.l.b16 %v2317
      %v4558 = vunpack.c.h.b16 %v2317
      %v4559 = vunpack.c.l.b16 %v2318
      %v4560 = vunpack.c.h.b16 %v2318
      %v4561 = vunpack.c.l.b16 %v2319
      %v4562 = vunpack.c.h.b16 %v2319
      %v4563 = vunpack.c.l.b16 %v2320
      %v4564 = vunpack.c.h.b16 %v2320
      %v4565 = vunpack.c.l.b16 %v2321
      %v4566 = vunpack.c.h.b16 %v2321
      %v4567 = vunpack.c.l.b16 %v2322
      %v4568 = vunpack.c.h.b16 %v2322
      %v4569 = vunpack.c.l.b16 %v2323
      %v4570 = vunpack.c.h.b16 %v2323
      %v4571 = vunpack.c.l.b16 %v2324
      %v4572 = vunpack.c.h.b16 %v2324
      %v4573 = vunpack.c.l.b16 %v2325
      %v4574 = vunpack.c.h.b16 %v2325
      %v4575 = vunpack.c.l.b16 %v2326
      %v4576 = vunpack.c.h.b16 %v2326
      %v4577 = vunpack.c.l.b16 %v2327
      %v4578 = vunpack.c.h.b16 %v2327
      %v4579 = vunpack.c.l.b16 %v2328
      %v4580 = vunpack.c.h.b16 %v2328
      %v4581 = vunpack.c.l.b16 %v2329
      %v4582 = vunpack.c.h.b16 %v2329
      %v4583 = vunpack.c.l.b16 %v2330
      %v4584 = vunpack.c.h.b16 %v2330
      %v4585 = vunpack.c.l.b16 %v2331
      %v4586 = vunpack.c.h.b16 %v2331
      %v4587 = vunpack.c.l.b16 %v2332
      %v4588 = vunpack.c.h.b16 %v2332
      %v4589 = vunpack.c.l.b16 %v2333
      %v4590 = vunpack.c.h.b16 %v2333
      %v4591 = vunpack.c.l.b16 %v2334
      %v4592 = vunpack.c.h.b16 %v2334
      %v4593 = vunpack.c.l.b16 %v2335
      %v4594 = vunpack.c.h.b16 %v2335
      %v4595 = vunpack.c.l.b16 %v2336
      %v4596 = vunpack.c.h.b16 %v2336
      %v4597 = vunpack.c.l.b16 %v2337
      %v4598 = vunpack.c.h.b16 %v2337
      %v4599 = vunpack.c.l.b16 %v2338
      %v4600 = vunpack.c.h.b16 %v2338
      %v4601 = vunpack.c.l.b16 %v2339
      %v4602 = vunpack.c.h.b16 %v2339
      %v4603 = vunpack.c.l.b16 %v2340
      %v4604 = vunpack.c.h.b16 %v2340
      %v4605 = vunpack.c.l.b16 %v2341
      %v4606 = vunpack.c.h.b16 %v2341
      %v4607 = vunpack.c.l.b16 %v2342
      %v4608 = vunpack.c.h.b16 %v2342
      %v4609 = vunpack.c.l.b16 %v2343
      %v4610 = vunpack.c.h.b16 %v2343
      %v4611 = vunpack.c.l.b16 %v2344
      %v4612 = vunpack.c.h.b16 %v2344
      %v4613 = vunpack.c.l.b16 %v2345
      %v4614 = vunpack.c.h.b16 %v2345
      %v4615 = vunpack.c.l.b16 %v2346
      %v4616 = vunpack.c.h.b16 %v2346
      %v4617 = vunpack.c.l.b16 %v2347
      %v4618 = vunpack.c.h.b16 %v2347
      %v4619 = vunpack.c.l.b16 %v2348
      %v4620 = vunpack.c.h.b16 %v2348
      %v4621 = vunpack.c.l.b16 %v2349
      %v4622 = vunpack.c.h.b16 %v2349
      %v4623 = vunpack.c.l.b16 %v2350
      %v4624 = vunpack.c.h.b16 %v2350
      %v4625 = vunpack.c.l.b16 %v2351
      %v4626 = vunpack.c.h.b16 %v2351
      %v4627 = vunpack.c.l.b16 %v2352
      %v4628 = vunpack.c.h.b16 %v2352
      %v4629 = vunpack.c.l.b16 %v2353
      %v4630 = vunpack.c.h.b16 %v2353
      %v4631 = vunpack.c.l.b16 %v2354
      %v4632 = vunpack.c.h.b16 %v2354
      %v4633 = vunpack.c.l.b16 %v2355
      %v4634 = vunpack.c.h.b16 %v2355
      %v4635 = vunpack.c.l.b16 %v2356
      %v4636 = vunpack.c.h.b16 %v2356
      %v4637 = vunpack.c.l.b16 %v2357
      %v4638 = vunpack.c.h.b16 %v2357
      %v4639 = vunpack.c.l.b16 %v2358
      %v4640 = vunpack.c.h.b16 %v2358
      %v4641 = vunpack.c.l.b16 %v2359
      %v4642 = vunpack.c.h.b16 %v2359
      %v4643 = vunpack.c.l.b16 %v2360
      %v4644 = vunpack.c.h.b16 %v2360
      %v4645 = vunpack.c.l.b16 %v2361
      %v4646 = vunpack.c.h.b16 %v2361
      %v4647 = vunpack.c.l.b16 %v2362
      %v4648 = vunpack.c.h.b16 %v2362
      %v4649 = vunpack.c.l.b16 %v2363
      %v4650 = vunpack.c.h.b16 %v2363
      %v4651 = vunpack.c.l.b16 %v2364
      %v4652 = vunpack.c.h.b16 %v2364
      %v4653 = vunpack.c.l.b16 %v2365
      %v4654 = vunpack.c.h.b16 %v2365
      %v4655 = vunpack.c.l.b16 %v2366
      %v4656 = vunpack.c.h.b16 %v2366
      %v4657 = vunpack.c.l.b16 %v2367
      %v4658 = vunpack.c.h.b16 %v2367
      %v4659 = vunpack.c.l.b16 %v2368
      %v4660 = vunpack.c.h.b16 %v2368
      %v4661 = vunpack.c.l.b16 %v2369
      %v4662 = vunpack.c.h.b16 %v2369
      %v4663 = vunpack.c.l.b16 %v2370
      %v4664 = vunpack.c.h.b16 %v2370
      %v4665 = vunpack.c.l.b16 %v2371
      %v4666 = vunpack.c.h.b16 %v2371
      %v4667 = vunpack.c.l.b16 %v2372
      %v4668 = vunpack.c.h.b16 %v2372
      %v4669 = vunpack.c.l.b16 %v2373
      %v4670 = vunpack.c.h.b16 %v2373
      %v4671 = vunpack.c.l.b16 %v2374
      %v4672 = vunpack.c.h.b16 %v2374
      %v4673 = vunpack.c.l.b16 %v2375
      %v4674 = vunpack.c.h.b16 %v2375
      %v4675 = vunpack.c.l.b16 %v2376
      %v4676 = vunpack.c.h.b16 %v2376
      %v4677 = vunpack.c.l.b16 %v2377
      %v4678 = vunpack.c.h.b16 %v2377
      %v4679 = vunpack.c.l.b16 %v2378
      %v4680 = vunpack.c.h.b16 %v2378
      %v4681 = vunpack.c.l.b16 %v2379
      %v4682 = vunpack.c.h.b16 %v2379
      %v4683 = vunpack.c.l.b16 %v2380
      %v4684 = vunpack.c.h.b16 %v2380
      %v4685 = vunpack.c.l.b16 %v2381
      %v4686 = vunpack.c.h.b16 %v2381
      %v4687 = vunpack.c.l.b16 %v2382
      %v4688 = vunpack.c.h.b16 %v2382
      %v4689 = vunpack.c.l.b16 %v2383
      %v4690 = vunpack.c.h.b16 %v2383
      %v4691 = vunpack.c.l.b16 %v2384
      %v4692 = vunpack.c.h.b16 %v2384
      %v4693 = vunpack.c.l.b16 %v2385
      %v4694 = vunpack.c.h.b16 %v2385
      %v4695 = vunpack.c.l.b16 %v2386
      %v4696 = vunpack.c.h.b16 %v2386
      %v4697 = vunpack.c.l.b16 %v2387
      %v4698 = vunpack.c.h.b16 %v2387
      %v4699 = vunpack.c.l.b16 %v2388
      %v4700 = vunpack.c.h.b16 %v2388
      %v4701 = vunpack.c.l.b16 %v2389
      %v4702 = vunpack.c.h.b16 %v2389
      %v4703 = vunpack.c.l.b16 %v2390
      %v4704 = vunpack.c.h.b16 %v2390
      %v4705 = vunpack.c.l.b16 %v2391
      %v4706 = vunpack.c.h.b16 %v2391
      %v4707 = vunpack.c.l.b16 %v2392
      %v4708 = vunpack.c.h.b16 %v2392
      %v4709 = vunpack.c.l.b16 %v2393
      %v4710 = vunpack.c.h.b16 %v2393
      %v4711 = vunpack.c.l.b16 %v2394
      %v4712 = vunpack.c.h.b16 %v2394
      %v4713 = vunpack.c.l.b16 %v2395
      %v4714 = vunpack.c.h.b16 %v2395
      %v4715 = vunpack.c.l.b16 %v2396
      %v4716 = vunpack.c.h.b16 %v2396
      %v4717 = vunpack.c.l.b16 %v2397
      %v4718 = vunpack.c.h.b16 %v2397
      %v4719 = vunpack.c.l.b16 %v2398
      %v4720 = vunpack.c.h.b16 %v2398
      %v4721 = vpack.c.b16 %v3193, %v3185
      %v4722 = vpack.c.b16 %v3194, %v3186
      %v4723 = vpack.c.b16 %v3195, %v3187
      %v4724 = vpack.c.b16 %v3196, %v3188
      %v4725 = vpack.c.b16 %v3197, %v3189
      %v4726 = vpack.c.b16 %v3198, %v3190
      %v4727 = vpack.c.b16 %v3199, %v3191
      %v4728 = vpack.c.b16 %v3200, %v3192
      %v4729 = vpack.c.b16 %v3209, %v3201
      %v4730 = vpack.c.b16 %v3210, %v3202
      %v4731 = vpack.c.b16 %v3211, %v3203
      %v4732 = vpack.c.b16 %v3212, %v3204
      %v4733 = vpack.c.b16 %v3213, %v3205
      %v4734 = vpack.c.b16 %v3214, %v3206
      %v4735 = vpack.c.b16 %v3215, %v3207
      %v4736 = vpack.c.b16 %v3216, %v3208
      %v4737 = vpack.c.b16 %v3225, %v3217
      %v4738 = vpack.c.b16 %v3226, %v3218
      %v4739 = vpack.c.b16 %v3227, %v3219
      %v4740 = vpack.c.b16 %v3228, %v3220
      %v4741 = vpack.c.b16 %v3229, %v3221
      %v4742 = vpack.c.b16 %v3230, %v3222
      %v4743 = vpack.c.b16 %v3231, %v3223
      %v4744 = vpack.c.b16 %v3232, %v3224
      %v4745 = vpack.c.b16 %v3241, %v3233
      %v4746 = vpack.c.b16 %v3242, %v3234
      %v4747 = vpack.c.b16 %v3243, %v3235
      %v4748 = vpack.c.b16 %v3244, %v3236
      %v4749 = vpack.c.b16 %v3245, %v3237
      %v4750 = vpack.c.b16 %v3246, %v3238
      %v4751 = vpack.c.b16 %v3247, %v3239
      %v4752 = vpack.c.b16 %v3248, %v3240
      %v4753 = vpack.c.b16 %v3257, %v3249
      %v4754 = vpack.c.b16 %v3258, %v3250
      %v4755 = vpack.c.b16 %v3259, %v3251
      %v4756 = vpack.c.b16 %v3260, %v3252
      %v4757 = vpack.c.b16 %v3261, %v3253
      %v4758 = vpack.c.b16 %v3262, %v3254
      %v4759 = vpack.c.b16 %v3263, %v3255
      %v4760 = vpack.c.b16 %v3264, %v3256
      %v4761 = vpack.c.b16 %v3273, %v3265
      %v4762 = vpack.c.b16 %v3274, %v3266
      %v4763 = vpack.c.b16 %v3275, %v3267
      %v4764 = vpack.c.b16 %v3276, %v3268
      %v4765 = vpack.c.b16 %v3277, %v3269
      %v4766 = vpack.c.b16 %v3278, %v3270
      %v4767 = vpack.c.b16 %v3279, %v3271
      %v4768 = vpack.c.b16 %v3280, %v3272
      %v4769 = vpack.c.b16 %v3289, %v3281
      %v4770 = vpack.c.b16 %v3290, %v3282
      %v4771 = vpack.c.b16 %v3291, %v3283
      %v4772 = vpack.c.b16 %v3292, %v3284
      %v4773 = vpack.c.b16 %v3293, %v3285
      %v4774 = vpack.c.b16 %v3294, %v3286
      %v4775 = vpack.c.b16 %v3295, %v3287
      %v4776 = vpack.c.b16 %v3296, %v3288
      %v4777 = vpack.c.b16 %v3305, %v3297
      %v4778 = vpack.c.b16 %v3306, %v3298
      %v4779 = vpack.c.b16 %v3307, %v3299
      %v4780 = vpack.c.b16 %v3308, %v3300
      %v4781 = vpack.c.b16 %v3309, %v3301
      %v4782 = vpack.c.b16 %v3310, %v3302
      %v4783 = vpack.c.b16 %v3311, %v3303
      %v4784 = vpack.c.b16 %v3312, %v3304
      %v4785 = vpack.c.b16 %v3321, %v3313
      %v4786 = vpack.c.b16 %v3322, %v3314
      %v4787 = vpack.c.b16 %v3323, %v3315
      %v4788 = vpack.c.b16 %v3324, %v3316
      %v4789 = vpack.c.b16 %v3325, %v3317
      %v4790 = vpack.c.b16 %v3326, %v3318
      %v4791 = vpack.c.b16 %v3327, %v3319
      %v4792 = vpack.c.b16 %v3328, %v3320
      %v4793 = vpack.c.b16 %v3337, %v3329
      %v4794 = vpack.c.b16 %v3338, %v3330
      %v4795 = vpack.c.b16 %v3339, %v3331
      %v4796 = vpack.c.b16 %v3340, %v3332
      %v4797 = vpack.c.b16 %v3341, %v3333
      %v4798 = vpack.c.b16 %v3342, %v3334
      %v4799 = vpack.c.b16 %v3343, %v3335
      %v4800 = vpack.c.b16 %v3344, %v3336
      %v4801 = vpack.c.b16 %v3353, %v3345
      %v4802 = vpack.c.b16 %v3354, %v3346
      %v4803 = vpack.c.b16 %v3355, %v3347
      %v4804 = vpack.c.b16 %v3356, %v3348
      %v4805 = vpack.c.b16 %v3357, %v3349
      %v4806 = vpack.c.b16 %v3358, %v3350
      %v4807 = vpack.c.b16 %v3359, %v3351
      %v4808 = vpack.c.b16 %v3360, %v3352
      %v4809 = vpack.c.b16 %v3369, %v3361
      %v4810 = vpack.c.b16 %v3370, %v3362
      %v4811 = vpack.c.b16 %v3371, %v3363
      %v4812 = vpack.c.b16 %v3372, %v3364
      %v4813 = vpack.c.b16 %v3373, %v3365
      %v4814 = vpack.c.b16 %v3374, %v3366
      %v4815 = vpack.c.b16 %v3375, %v3367
      %v4816 = vpack.c.b16 %v3376, %v3368
      %v4817 = vpack.c.b16 %v3385, %v3377
      %v4818 = vpack.c.b16 %v3386, %v3378
      %v4819 = vpack.c.b16 %v3387, %v3379
      %v4820 = vpack.c.b16 %v3388, %v3380
      %v4821 = vpack.c.b16 %v3389, %v3381
      %v4822 = vpack.c.b16 %v3390, %v3382
      %v4823 = vpack.c.b16 %v3391, %v3383
      %v4824 = vpack.c.b16 %v3392, %v3384
      %v4825 = vpack.c.b16 %v3401, %v3393
      %v4826 = vpack.c.b16 %v3402, %v3394
      %v4827 = vpack.c.b16 %v3403, %v3395
      %v4828 = vpack.c.b16 %v3404, %v3396
      %v4829 = vpack.c.b16 %v3405, %v3397
      %v4830 = vpack.c.b16 %v3406, %v3398
      %v4831 = vpack.c.b16 %v3407, %v3399
      %v4832 = vpack.c.b16 %v3408, %v3400
      %v4833 = vpack.c.b16 %v3417, %v3409
      %v4834 = vpack.c.b16 %v3418, %v3410
      %v4835 = vpack.c.b16 %v3419, %v3411
      %v4836 = vpack.c.b16 %v3420, %v3412
      %v4837 = vpack.c.b16 %v3421, %v3413
      %v4838 = vpack.c.b16 %v3422, %v3414
      %v4839 = vpack.c.b16 %v3423, %v3415
      %v4840 = vpack.c.b16 %v3424, %v3416
      %v4841 = vpack.c.b16 %v3433, %v3425
      %v4842 = vpack.c.b16 %v3434, %v3426
      %v4843 = vpack.c.b16 %v3435, %v3427
      %v4844 = vpack.c.b16 %v3436, %v3428
      %v4845 = vpack.c.b16 %v3437, %v3429
      %v4846 = vpack.c.b16 %v3438, %v3430
      %v4847 = vpack.c.b16 %v3439, %v3431
      %v4848 = vpack.c.b16 %v3440, %v3432
      %v4849 = vpack.c.b16 %v3449, %v3441
      %v4850 = vpack.c.b16 %v3450, %v3442
      %v4851 = vpack.c.b16 %v3451, %v3443
      %v4852 = vpack.c.b16 %v3452, %v3444
      %v4853 = vpack.c.b16 %v3453, %v3445
      %v4854 = vpack.c.b16 %v3454, %v3446
      %v4855 = vpack.c.b16 %v3455, %v3447
      %v4856 = vpack.c.b16 %v3456, %v3448
      %v4857 = vpack.c.b16 %v3465, %v3457
      %v4858 = vpack.c.b16 %v3466, %v3458
      %v4859 = vpack.c.b16 %v3467, %v3459
      %v4860 = vpack.c.b16 %v3468, %v3460
      %v4861 = vpack.c.b16 %v3469, %v3461
      %v4862 = vpack.c.b16 %v3470, %v3462
      %v4863 = vpack.c.b16 %v3471, %v3463
      %v4864 = vpack.c.b16 %v3472, %v3464
      %v4865 = vpack.c.b16 %v3481, %v3473
      %v4866 = vpack.c.b16 %v3482, %v3474
      %v4867 = vpack.c.b16 %v3483, %v3475
      %v4868 = vpack.c.b16 %v3484, %v3476
      %v4869 = vpack.c.b16 %v3485, %v3477
      %v4870 = vpack.c.b16 %v3486, %v3478
      %v4871 = vpack.c.b16 %v3487, %v3479
      %v4872 = vpack.c.b16 %v3488, %v3480
      %v4873 = vpack.c.b16 %v3497, %v3489
      %v4874 = vpack.c.b16 %v3498, %v3490
      %v4875 = vpack.c.b16 %v3499, %v3491
      %v4876 = vpack.c.b16 %v3500, %v3492
      %v4877 = vpack.c.b16 %v3501, %v3493
      %v4878 = vpack.c.b16 %v3502, %v3494
      %v4879 = vpack.c.b16 %v3503, %v3495
      %v4880 = vpack.c.b16 %v3504, %v3496
      %v4881 = vpack.c.b16 %v3513, %v3505
      %v4882 = vpack.c.b16 %v3514, %v3506
      %v4883 = vpack.c.b16 %v3515, %v3507
      %v4884 = vpack.c.b16 %v3516, %v3508
      %v4885 = vpack.c.b16 %v3517, %v3509
      %v4886 = vpack.c.b16 %v3518, %v3510
      %v4887 = vpack.c.b16 %v3519, %v3511
      %v4888 = vpack.c.b16 %v3520, %v3512
      %v4889 = vpack.c.b16 %v3529, %v3521
      %v4890 = vpack.c.b16 %v3530, %v3522
      %v4891 = vpack.c.b16 %v3531, %v3523
      %v4892 = vpack.c.b16 %v3532, %v3524
      %v4893 = vpack.c.b16 %v3533, %v3525
      %v4894 = vpack.c.b16 %v3534, %v3526
      %v4895 = vpack.c.b16 %v3535, %v3527
      %v4896 = vpack.c.b16 %v3536, %v3528
      %v4897 = vpack.c.b16 %v3545, %v3537
      %v4898 = vpack.c.b16 %v3546, %v3538
      %v4899 = vpack.c.b16 %v3547, %v3539
      %v4900 = vpack.c.b16 %v3548, %v3540
      %v4901 = vpack.c.b16 %v3549, %v3541
      %v4902 = vpack.c.b16 %v3550, %v3542
      %v4903 = vpack.c.b16 %v3551, %v3543
      %v4904 = vpack.c.b16 %v3552, %v3544
      %v4905 = vpack.c.b16 %v3561, %v3553
      %v4906 = vpack.c.b16 %v3562, %v3554
      %v4907 = vpack.c.b16 %v3563, %v3555
      %v4908 = vpack.c.b16 %v3564, %v3556
      %v4909 = vpack.c.b16 %v3565, %v3557
      %v4910 = vpack.c.b16 %v3566, %v3558
      %v4911 = vpack.c.b16 %v3567, %v3559
      %v4912 = vpack.c.b16 %v3568, %v3560
      %v4913 = vpack.c.b16 %v3577, %v3569
      %v4914 = vpack.c.b16 %v3578, %v3570
      %v4915 = vpack.c.b16 %v3579, %v3571
      %v4916 = vpack.c.b16 %v3580, %v3572
      %v4917 = vpack.c.b16 %v3581, %v3573
      %v4918 = vpack.c.b16 %v3582, %v3574
      %v4919 = vpack.c.b16 %v3583, %v3575
      %v4920 = vpack.c.b16 %v3584, %v3576
      %v4921 = vpack.c.b16 %v3593, %v3585
      %v4922 = vpack.c.b16 %v3594, %v3586
      %v4923 = vpack.c.b16 %v3595, %v3587
      %v4924 = vpack.c.b16 %v3596, %v3588
      %v4925 = vpack.c.b16 %v3597, %v3589
      %v4926 = vpack.c.b16 %v3598, %v3590
      %v4927 = vpack.c.b16 %v3599, %v3591
      %v4928 = vpack.c.b16 %v3600, %v3592
      %v4929 = vpack.c.b16 %v3609, %v3601
      %v4930 = vpack.c.b16 %v3610, %v3602
      %v4931 = vpack.c.b16 %v3611, %v3603
      %v4932 = vpack.c.b16 %v3612, %v3604
      %v4933 = vpack.c.b16 %v3613, %v3605
      %v4934 = vpack.c.b16 %v3614, %v3606
      %v4935 = vpack.c.b16 %v3615, %v3607
      %v4936 = vpack.c.b16 %v3616, %v3608
      %v4937 = vpack.c.b16 %v3625, %v3617
      %v4938 = vpack.c.b16 %v3626, %v3618
      %v4939 = vpack.c.b16 %v3627, %v3619
      %v4940 = vpack.c.b16 %v3628, %v3620
      %v4941 = vpack.c.b16 %v3629, %v3621
      %v4942 = vpack.c.b16 %v3630, %v3622
      %v4943 = vpack.c.b16 %v3631, %v3623
      %v4944 = vpack.c.b16 %v3632, %v3624
      %v4945 = vpack.c.b16 %v3641, %v3633
      %v4946 = vpack.c.b16 %v3642, %v3634
      %v4947 = vpack.c.b16 %v3643, %v3635
      %v4948 = vpack.c.b16 %v3644, %v3636
      %v4949 = vpack.c.b16 %v3645, %v3637
      %v4950 = vpack.c.b16 %v3646, %v3638
      %v4951 = vpack.c.b16 %v3647, %v3639
      %v4952 = vpack.c.b16 %v3648, %v3640
      %v4953 = vpack.c.b16 %v3657, %v3649
      %v4954 = vpack.c.b16 %v3658, %v3650
      %v4955 = vpack.c.b16 %v3659, %v3651
      %v4956 = vpack.c.b16 %v3660, %v3652
      %v4957 = vpack.c.b16 %v3661, %v3653
      %v4958 = vpack.c.b16 %v3662, %v3654
      %v4959 = vpack.c.b16 %v3663, %v3655
      %v4960 = vpack.c.b16 %v3664, %v3656
      %v4961 = vpack.c.b16 %v3673, %v3665
      %v4962 = vpack.c.b16 %v3674, %v3666
      %v4963 = vpack.c.b16 %v3675, %v3667
      %v4964 = vpack.c.b16 %v3676, %v3668
      %v4965 = vpack.c.b16 %v3677, %v3669
      %v4966 = vpack.c.b16 %v3678, %v3670
      %v4967 = vpack.c.b16 %v3679, %v3671
      %v4968 = vpack.c.b16 %v3680, %v3672
      %v4969 = vpack.c.b16 %v3689, %v3681
      %v4970 = vpack.c.b16 %v3690, %v3682
      %v4971 = vpack.c.b16 %v3691, %v3683
      %v4972 = vpack.c.b16 %v3692, %v3684
      %v4973 = vpack.c.b16 %v3693, %v3685
      %v4974 = vpack.c.b16 %v3694, %v3686
      %v4975 = vpack.c.b16 %v3695, %v3687
      %v4976 = vpack.c.b16 %v3696, %v3688
      %v4977 = vpack.c.b16 %v3705, %v3697
      %v4978 = vpack.c.b16 %v3706, %v3698
      %v4979 = vpack.c.b16 %v3707, %v3699
      %v4980 = vpack.c.b16 %v3708, %v3700
      %v4981 = vpack.c.b16 %v3709, %v3701
      %v4982 = vpack.c.b16 %v3710, %v3702
      %v4983 = vpack.c.b16 %v3711, %v3703
      %v4984 = vpack.c.b16 %v3712, %v3704
      %v4985 = vpack.c.b16 %v3721, %v3713
      %v4986 = vpack.c.b16 %v3722, %v3714
      %v4987 = vpack.c.b16 %v3723, %v3715
      %v4988 = vpack.c.b16 %v3724, %v3716
      %v4989 = vpack.c.b16 %v3725, %v3717
      %v4990 = vpack.c.b16 %v3726, %v3718
      %v4991 = vpack.c.b16 %v3727, %v3719
      %v4992 = vpack.c.b16 %v3728, %v3720
      %v4993 = vpack.c.b16 %v3737, %v3729
      %v4994 = vpack.c.b16 %v3738, %v3730
      %v4995 = vpack.c.b16 %v3739, %v3731
      %v4996 = vpack.c.b16 %v3740, %v3732
      %v4997 = vpack.c.b16 %v3741, %v3733
      %v4998 = vpack.c.b16 %v3742, %v3734
      %v4999 = vpack.c.b16 %v3743, %v3735
      %v5000 = vpack.c.b16 %v3744, %v3736
      %v5001 = vpack.c.b16 %v3753, %v3745
      %v5002 = vpack.c.b16 %v3754, %v3746
      %v5003 = vpack.c.b16 %v3755, %v3747
      %v5004 = vpack.c.b16 %v3756, %v3748
      %v5005 = vpack.c.b16 %v3757, %v3749
      %v5006 = vpack.c.b16 %v3758, %v3750
      %v5007 = vpack.c.b16 %v3759, %v3751
      %v5008 = vpack.c.b16 %v3760, %v3752
      %v5009 = vpack.c.b16 %v3769, %v3761
      %v5010 = vpack.c.b16 %v3770, %v3762
      %v5011 = vpack.c.b16 %v3771, %v3763
      %v5012 = vpack.c.b16 %v3772, %v3764
      %v5013 = vpack.c.b16 %v3773, %v3765
      %v5014 = vpack.c.b16 %v3774, %v3766
      %v5015 = vpack.c.b16 %v3775, %v3767
      %v5016 = vpack.c.b16 %v3776, %v3768
      %v5017 = vpack.c.b16 %v3785, %v3777
      %v5018 = vpack.c.b16 %v3786, %v3778
      %v5019 = vpack.c.b16 %v3787, %v3779
      %v5020 = vpack.c.b16 %v3788, %v3780
      %v5021 = vpack.c.b16 %v3789, %v3781
      %v5022 = vpack.c.b16 %v3790, %v3782
      %v5023 = vpack.c.b16 %v3791, %v3783
      %v5024 = vpack.c.b16 %v3792, %v3784
      %v5025 = vpack.c.b16 %v3801, %v3793
      %v5026 = vpack.c.b16 %v3802, %v3794
      %v5027 = vpack.c.b16 %v3803, %v3795
      %v5028 = vpack.c.b16 %v3804, %v3796
      %v5029 = vpack.c.b16 %v3805, %v3797
      %v5030 = vpack.c.b16 %v3806, %v3798
      %v5031 = vpack.c.b16 %v3807, %v3799
      %v5032 = vpack.c.b16 %v3808, %v3800
      %v5033 = vpack.c.b16 %v3817, %v3809
      %v5034 = vpack.c.b16 %v3818, %v3810
      %v5035 = vpack.c.b16 %v3819, %v3811
      %v5036 = vpack.c.b16 %v3820, %v3812
      %v5037 = vpack.c.b16 %v3821, %v3813
      %v5038 = vpack.c.b16 %v3822, %v3814
      %v5039 = vpack.c.b16 %v3823, %v3815
      %v5040 = vpack.c.b16 %v3824, %v3816
      %v5041 = vpack.c.b16 %v3833, %v3825
      %v5042 = vpack.c.b16 %v3834, %v3826
      %v5043 = vpack.c.b16 %v3835, %v3827
      %v5044 = vpack.c.b16 %v3836, %v3828
      %v5045 = vpack.c.b16 %v3837, %v3829
      %v5046 = vpack.c.b16 %v3838, %v3830
      %v5047 = vpack.c.b16 %v3839, %v3831
      %v5048 = vpack.c.b16 %v3840, %v3832
      %v5049 = vpack.c.b16 %v3849, %v3841
      %v5050 = vpack.c.b16 %v3850, %v3842
      %v5051 = vpack.c.b16 %v3851, %v3843
      %v5052 = vpack.c.b16 %v3852, %v3844
      %v5053 = vpack.c.b16 %v3853, %v3845
      %v5054 = vpack.c.b16 %v3854, %v3846
      %v5055 = vpack.c.b16 %v3855, %v3847
      %v5056 = vpack.c.b16 %v3856, %v3848
      %v5057 = vpack.c.b16 %v3865, %v3857
      %v5058 = vpack.c.b16 %v3866, %v3858
      %v5059 = vpack.c.b16 %v3867, %v3859
      %v5060 = vpack.c.b16 %v3868, %v3860
      %v5061 = vpack.c.b16 %v3869, %v3861
      %v5062 = vpack.c.b16 %v3870, %v3862
      %v5063 = vpack.c.b16 %v3871, %v3863
      %v5064 = vpack.c.b16 %v3872, %v3864
      %v5065 = vpack.c.b16 %v3881, %v3873
      %v5066 = vpack.c.b16 %v3882, %v3874
      %v5067 = vpack.c.b16 %v3883, %v3875
      %v5068 = vpack.c.b16 %v3884, %v3876
      %v5069 = vpack.c.b16 %v3885, %v3877
      %v5070 = vpack.c.b16 %v3886, %v3878
      %v5071 = vpack.c.b16 %v3887, %v3879
      %v5072 = vpack.c.b16 %v3888, %v3880
      %v5073 = vpack.c.b16 %v3897, %v3889
      %v5074 = vpack.c.b16 %v3898, %v3890
      %v5075 = vpack.c.b16 %v3899, %v3891
      %v5076 = vpack.c.b16 %v3900, %v3892
      %v5077 = vpack.c.b16 %v3901, %v3893
      %v5078 = vpack.c.b16 %v3902, %v3894
      %v5079 = vpack.c.b16 %v3903, %v3895
      %v5080 = vpack.c.b16 %v3904, %v3896
      %v5081 = vpack.c.b16 %v3913, %v3905
      %v5082 = vpack.c.b16 %v3914, %v3906
      %v5083 = vpack.c.b16 %v3915, %v3907
      %v5084 = vpack.c.b16 %v3916, %v3908
      %v5085 = vpack.c.b16 %v3917, %v3909
      %v5086 = vpack.c.b16 %v3918, %v3910
      %v5087 = vpack.c.b16 %v3919, %v3911
      %v5088 = vpack.c.b16 %v3920, %v3912
      %v5089 = vpack.c.b16 %v3929, %v3921
      %v5090 = vpack.c.b16 %v3930, %v3922
      %v5091 = vpack.c.b16 %v3931, %v3923
      %v5092 = vpack.c.b16 %v3932, %v3924
      %v5093 = vpack.c.b16 %v3933, %v3925
      %v5094 = vpack.c.b16 %v3934, %v3926
      %v5095 = vpack.c.b16 %v3935, %v3927
      %v5096 = vpack.c.b16 %v3936, %v3928
      %v5097 = vpack.c.b16 %v3945, %v3937
      %v5098 = vpack.c.b16 %v3946, %v3938
      %v5099 = vpack.c.b16 %v3947, %v3939
      %v5100 = vpack.c.b16 %v3948, %v3940
      %v5101 = vpack.c.b16 %v3949, %v3941
      %v5102 = vpack.c.b16 %v3950, %v3942
      %v5103 = vpack.c.b16 %v3951, %v3943
      %v5104 = vpack.c.b16 %v3952, %v3944
      %v5105 = vpack.c.b16 %v3961, %v3953
      %v5106 = vpack.c.b16 %v3962, %v3954
      %v5107 = vpack.c.b16 %v3963, %v3955
      %v5108 = vpack.c.b16 %v3964, %v3956
      %v5109 = vpack.c.b16 %v3965, %v3957
      %v5110 = vpack.c.b16 %v3966, %v3958
      %v5111 = vpack.c.b16 %v3967, %v3959
      %v5112 = vpack.c.b16 %v3968, %v3960
      %v5113 = vpack.c.b16 %v3977, %v3969
      %v5114 = vpack.c.b16 %v3978, %v3970
      %v5115 = vpack.c.b16 %v3979, %v3971
      %v5116 = vpack.c.b16 %v3980, %v3972
      %v5117 = vpack.c.b16 %v3981, %v3973
      %v5118 = vpack.c.b16 %v3982, %v3974
      %v5119 = vpack.c.b16 %v3983, %v3975
      %v5120 = vpack.c.b16 %v3984, %v3976
      %v5121 = vpack.c.b16 %v3993, %v3985
      %v5122 = vpack.c.b16 %v3994, %v3986
      %v5123 = vpack.c.b16 %v3995, %v3987
      %v5124 = vpack.c.b16 %v3996, %v3988
      %v5125 = vpack.c.b16 %v3997, %v3989
      %v5126 = vpack.c.b16 %v3998, %v3990
      %v5127 = vpack.c.b16 %v3999, %v3991
      %v5128 = vpack.c.b16 %v4000, %v3992
      %v5129 = vpack.c.b16 %v4009, %v4001
      %v5130 = vpack.c.b16 %v4010, %v4002
      %v5131 = vpack.c.b16 %v4011, %v4003
      %v5132 = vpack.c.b16 %v4012, %v4004
      %v5133 = vpack.c.b16 %v4013, %v4005
      %v5134 = vpack.c.b16 %v4014, %v4006
      %v5135 = vpack.c.b16 %v4015, %v4007
      %v5136 = vpack.c.b16 %v4016, %v4008
      %v5137 = vpack.c.b16 %v4025, %v4017
      %v5138 = vpack.c.b16 %v4026, %v4018
      %v5139 = vpack.c.b16 %v4027, %v4019
      %v5140 = vpack.c.b16 %v4028, %v4020
      %v5141 = vpack.c.b16 %v4029, %v4021
      %v5142 = vpack.c.b16 %v4030, %v4022
      %v5143 = vpack.c.b16 %v4031, %v4023
      %v5144 = vpack.c.b16 %v4032, %v4024
      %v5145 = vpack.c.b16 %v4041, %v4033
      %v5146 = vpack.c.b16 %v4042, %v4034
      %v5147 = vpack.c.b16 %v4043, %v4035
      %v5148 = vpack.c.b16 %v4044, %v4036
      %v5149 = vpack.c.b16 %v4045, %v4037
      %v5150 = vpack.c.b16 %v4046, %v4038
      %v5151 = vpack.c.b16 %v4047, %v4039
      %v5152 = vpack.c.b16 %v4048, %v4040
      %v5153 = vpack.c.b16 %v4057, %v4049
      %v5154 = vpack.c.b16 %v4058, %v4050
      %v5155 = vpack.c.b16 %v4059, %v4051
      %v5156 = vpack.c.b16 %v4060, %v4052
      %v5157 = vpack.c.b16 %v4061, %v4053
      %v5158 = vpack.c.b16 %v4062, %v4054
      %v5159 = vpack.c.b16 %v4063, %v4055
      %v5160 = vpack.c.b16 %v4064, %v4056
      %v5161 = vpack.c.b16 %v4073, %v4065
      %v5162 = vpack.c.b16 %v4074, %v4066
      %v5163 = vpack.c.b16 %v4075, %v4067
      %v5164 = vpack.c.b16 %v4076, %v4068
      %v5165 = vpack.c.b16 %v4077, %v4069
      %v5166 = vpack.c.b16 %v4078, %v4070
      %v5167 = vpack.c.b16 %v4079, %v4071
      %v5168 = vpack.c.b16 %v4080, %v4072
      %v5169 = vpack.c.b16 %v4089, %v4081
      %v5170 = vpack.c.b16 %v4090, %v4082
      %v5171 = vpack.c.b16 %v4091, %v4083
      %v5172 = vpack.c.b16 %v4092, %v4084
      %v5173 = vpack.c.b16 %v4093, %v4085
      %v5174 = vpack.c.b16 %v4094, %v4086
      %v5175 = vpack.c.b16 %v4095, %v4087
      %v5176 = vpack.c.b16 %v4096, %v4088
      %v5177 = vpack.c.b16 %v4105, %v4097
      %v5178 = vpack.c.b16 %v4106, %v4098
      %v5179 = vpack.c.b16 %v4107, %v4099
      %v5180 = vpack.c.b16 %v4108, %v4100
      %v5181 = vpack.c.b16 %v4109, %v4101
      %v5182 = vpack.c.b16 %v4110, %v4102
      %v5183 = vpack.c.b16 %v4111, %v4103
      %v5184 = vpack.c.b16 %v4112, %v4104
      %v5185 = vpack.c.b16 %v4121, %v4113
      %v5186 = vpack.c.b16 %v4122, %v4114
      %v5187 = vpack.c.b16 %v4123, %v4115
      %v5188 = vpack.c.b16 %v4124, %v4116
      %v5189 = vpack.c.b16 %v4125, %v4117
      %v5190 = vpack.c.b16 %v4126, %v4118
      %v5191 = vpack.c.b16 %v4127, %v4119
      %v5192 = vpack.c.b16 %v4128, %v4120
      %v5193 = vpack.c.b16 %v4137, %v4129
      %v5194 = vpack.c.b16 %v4138, %v4130
      %v5195 = vpack.c.b16 %v4139, %v4131
      %v5196 = vpack.c.b16 %v4140, %v4132
      %v5197 = vpack.c.b16 %v4141, %v4133
      %v5198 = vpack.c.b16 %v4142, %v4134
      %v5199 = vpack.c.b16 %v4143, %v4135
      %v5200 = vpack.c.b16 %v4144, %v4136
      %v5201 = vpack.c.b16 %v4153, %v4145
      %v5202 = vpack.c.b16 %v4154, %v4146
      %v5203 = vpack.c.b16 %v4155, %v4147
      %v5204 = vpack.c.b16 %v4156, %v4148
      %v5205 = vpack.c.b16 %v4157, %v4149
      %v5206 = vpack.c.b16 %v4158, %v4150
      %v5207 = vpack.c.b16 %v4159, %v4151
      %v5208 = vpack.c.b16 %v4160, %v4152
      %v5209 = vpack.c.b16 %v4169, %v4161
      %v5210 = vpack.c.b16 %v4170, %v4162
      %v5211 = vpack.c.b16 %v4171, %v4163
      %v5212 = vpack.c.b16 %v4172, %v4164
      %v5213 = vpack.c.b16 %v4173, %v4165
      %v5214 = vpack.c.b16 %v4174, %v4166
      %v5215 = vpack.c.b16 %v4175, %v4167
      %v5216 = vpack.c.b16 %v4176, %v4168
      %v5217 = vpack.c.b16 %v4185, %v4177
      %v5218 = vpack.c.b16 %v4186, %v4178
      %v5219 = vpack.c.b16 %v4187, %v4179
      %v5220 = vpack.c.b16 %v4188, %v4180
      %v5221 = vpack.c.b16 %v4189, %v4181
      %v5222 = vpack.c.b16 %v4190, %v4182
      %v5223 = vpack.c.b16 %v4191, %v4183
      %v5224 = vpack.c.b16 %v4192, %v4184
      %v5225 = vpack.c.b16 %v4201, %v4193
      %v5226 = vpack.c.b16 %v4202, %v4194
      %v5227 = vpack.c.b16 %v4203, %v4195
      %v5228 = vpack.c.b16 %v4204, %v4196
      %v5229 = vpack.c.b16 %v4205, %v4197
      %v5230 = vpack.c.b16 %v4206, %v4198
      %v5231 = vpack.c.b16 %v4207, %v4199
      %v5232 = vpack.c.b16 %v4208, %v4200
      %v5233 = vpack.c.b16 %v4217, %v4209
      %v5234 = vpack.c.b16 %v4218, %v4210
      %v5235 = vpack.c.b16 %v4219, %v4211
      %v5236 = vpack.c.b16 %v4220, %v4212
      %v5237 = vpack.c.b16 %v4221, %v4213
      %v5238 = vpack.c.b16 %v4222, %v4214
      %v5239 = vpack.c.b16 %v4223, %v4215
      %v5240 = vpack.c.b16 %v4224, %v4216
      %v5241 = vpack.c.b16 %v4233, %v4225
      %v5242 = vpack.c.b16 %v4234, %v4226
      %v5243 = vpack.c.b16 %v4235, %v4227
      %v5244 = vpack.c.b16 %v4236, %v4228
      %v5245 = vpack.c.b16 %v4237, %v4229
      %v5246 = vpack.c.b16 %v4238, %v4230
      %v5247 = vpack.c.b16 %v4239, %v4231
      %v5248 = vpack.c.b16 %v4240, %v4232
      %v5249 = vpack.c.b16 %v4249, %v4241
      %v5250 = vpack.c.b16 %v4250, %v4242
      %v5251 = vpack.c.b16 %v4251, %v4243
      %v5252 = vpack.c.b16 %v4252, %v4244
      %v5253 = vpack.c.b16 %v4253, %v4245
      %v5254 = vpack.c.b16 %v4254, %v4246
      %v5255 = vpack.c.b16 %v4255, %v4247
      %v5256 = vpack.c.b16 %v4256, %v4248
      %v5257 = vpack.c.b16 %v4265, %v4257
      %v5258 = vpack.c.b16 %v4266, %v4258
      %v5259 = vpack.c.b16 %v4267, %v4259
      %v5260 = vpack.c.b16 %v4268, %v4260
      %v5261 = vpack.c.b16 %v4269, %v4261
      %v5262 = vpack.c.b16 %v4270, %v4262
      %v5263 = vpack.c.b16 %v4271, %v4263
      %v5264 = vpack.c.b16 %v4272, %v4264
      %v5265 = vpack.c.b16 %v4281, %v4273
      %v5266 = vpack.c.b16 %v4282, %v4274
      %v5267 = vpack.c.b16 %v4283, %v4275
      %v5268 = vpack.c.b16 %v4284, %v4276
      %v5269 = vpack.c.b16 %v4285, %v4277
      %v5270 = vpack.c.b16 %v4286, %v4278
      %v5271 = vpack.c.b16 %v4287, %v4279
      %v5272 = vpack.c.b16 %v4288, %v4280
      %v5273 = vpack.c.b16 %v4297, %v4289
      %v5274 = vpack.c.b16 %v4298, %v4290
      %v5275 = vpack.c.b16 %v4299, %v4291
      %v5276 = vpack.c.b16 %v4300, %v4292
      %v5277 = vpack.c.b16 %v4301, %v4293
      %v5278 = vpack.c.b16 %v4302, %v4294
      %v5279 = vpack.c.b16 %v4303, %v4295
      %v5280 = vpack.c.b16 %v4304, %v4296
      %v5281 = vpack.c.b16 %v4313, %v4305
      %v5282 = vpack.c.b16 %v4314, %v4306
      %v5283 = vpack.c.b16 %v4315, %v4307
      %v5284 = vpack.c.b16 %v4316, %v4308
      %v5285 = vpack.c.b16 %v4317, %v4309
      %v5286 = vpack.c.b16 %v4318, %v4310
      %v5287 = vpack.c.b16 %v4319, %v4311
      %v5288 = vpack.c.b16 %v4320, %v4312
      %v5289 = vpack.c.b16 %v4329, %v4321
      %v5290 = vpack.c.b16 %v4330, %v4322
      %v5291 = vpack.c.b16 %v4331, %v4323
      %v5292 = vpack.c.b16 %v4332, %v4324
      %v5293 = vpack.c.b16 %v4333, %v4325
      %v5294 = vpack.c.b16 %v4334, %v4326
      %v5295 = vpack.c.b16 %v4335, %v4327
      %v5296 = vpack.c.b16 %v4336, %v4328
      %v5297 = vpack.c.b16 %v4345, %v4337
      %v5298 = vpack.c.b16 %v4346, %v4338
      %v5299 = vpack.c.b16 %v4347, %v4339
      %v5300 = vpack.c.b16 %v4348, %v4340
      %v5301 = vpack.c.b16 %v4349, %v4341
      %v5302 = vpack.c.b16 %v4350, %v4342
      %v5303 = vpack.c.b16 %v4351, %v4343
      %v5304 = vpack.c.b16 %v4352, %v4344
      %v5305 = vpack.c.b16 %v4361, %v4353
      %v5306 = vpack.c.b16 %v4362, %v4354
      %v5307 = vpack.c.b16 %v4363, %v4355
      %v5308 = vpack.c.b16 %v4364, %v4356
      %v5309 = vpack.c.b16 %v4365, %v4357
      %v5310 = vpack.c.b16 %v4366, %v4358
      %v5311 = vpack.c.b16 %v4367, %v4359
      %v5312 = vpack.c.b16 %v4368, %v4360
      %v5313 = vpack.c.b16 %v4377, %v4369
      %v5314 = vpack.c.b16 %v4378, %v4370
      %v5315 = vpack.c.b16 %v4379, %v4371
      %v5316 = vpack.c.b16 %v4380, %v4372
      %v5317 = vpack.c.b16 %v4381, %v4373
      %v5318 = vpack.c.b16 %v4382, %v4374
      %v5319 = vpack.c.b16 %v4383, %v4375
      %v5320 = vpack.c.b16 %v4384, %v4376
      %v5321 = vpack.c.b16 %v4393, %v4385
      %v5322 = vpack.c.b16 %v4394, %v4386
      %v5323 = vpack.c.b16 %v4395, %v4387
      %v5324 = vpack.c.b16 %v4396, %v4388
      %v5325 = vpack.c.b16 %v4397, %v4389
      %v5326 = vpack.c.b16 %v4398, %v4390
      %v5327 = vpack.c.b16 %v4399, %v4391
      %v5328 = vpack.c.b16 %v4400, %v4392
      %v5329 = vpack.c.b16 %v4409, %v4401
      %v5330 = vpack.c.b16 %v4410, %v4402
      %v5331 = vpack.c.b16 %v4411, %v4403
      %v5332 = vpack.c.b16 %v4412, %v4404
      %v5333 = vpack.c.b16 %v4413, %v4405
      %v5334 = vpack.c.b16 %v4414, %v4406
      %v5335 = vpack.c.b16 %v4415, %v4407
      %v5336 = vpack.c.b16 %v4416, %v4408
      %v5337 = vpack.c.b16 %v4425, %v4417
      %v5338 = vpack.c.b16 %v4426, %v4418
      %v5339 = vpack.c.b16 %v4427, %v4419
      %v5340 = vpack.c.b16 %v4428, %v4420
      %v5341 = vpack.c.b16 %v4429, %v4421
      %v5342 = vpack.c.b16 %v4430, %v4422
      %v5343 = vpack.c.b16 %v4431, %v4423
      %v5344 = vpack.c.b16 %v4432, %v4424
      %v5345 = vpack.c.b16 %v4441, %v4433
      %v5346 = vpack.c.b16 %v4442, %v4434
      %v5347 = vpack.c.b16 %v4443, %v4435
      %v5348 = vpack.c.b16 %v4444, %v4436
      %v5349 = vpack.c.b16 %v4445, %v4437
      %v5350 = vpack.c.b16 %v4446, %v4438
      %v5351 = vpack.c.b16 %v4447, %v4439
      %v5352 = vpack.c.b16 %v4448, %v4440
      %v5353 = vpack.c.b16 %v4457, %v4449
      %v5354 = vpack.c.b16 %v4458, %v4450
      %v5355 = vpack.c.b16 %v4459, %v4451
      %v5356 = vpack.c.b16 %v4460, %v4452
      %v5357 = vpack.c.b16 %v4461, %v4453
      %v5358 = vpack.c.b16 %v4462, %v4454
      %v5359 = vpack.c.b16 %v4463, %v4455
      %v5360 = vpack.c.b16 %v4464, %v4456
      %v5361 = vpack.c.b16 %v4473, %v4465
      %v5362 = vpack.c.b16 %v4474, %v4466
      %v5363 = vpack.c.b16 %v4475, %v4467
      %v5364 = vpack.c.b16 %v4476, %v4468
      %v5365 = vpack.c.b16 %v4477, %v4469
      %v5366 = vpack.c.b16 %v4478, %v4470
      %v5367 = vpack.c.b16 %v4479, %v4471
      %v5368 = vpack.c.b16 %v4480, %v4472
      %v5369 = vpack.c.b16 %v4489, %v4481
      %v5370 = vpack.c.b16 %v4490, %v4482
      %v5371 = vpack.c.b16 %v4491, %v4483
      %v5372 = vpack.c.b16 %v4492, %v4484
      %v5373 = vpack.c.b16 %v4493, %v4485
      %v5374 = vpack.c.b16 %v4494, %v4486
      %v5375 = vpack.c.b16 %v4495, %v4487
      %v5376 = vpack.c.b16 %v4496, %v4488
      %v5377 = vpack.c.b16 %v4505, %v4497
      %v5378 = vpack.c.b16 %v4506, %v4498
      %v5379 = vpack.c.b16 %v4507, %v4499
      %v5380 = vpack.c.b16 %v4508, %v4500
      %v5381 = vpack.c.b16 %v4509, %v4501
      %v5382 = vpack.c.b16 %v4510, %v4502
      %v5383 = vpack.c.b16 %v4511, %v4503
      %v5384 = vpack.c.b16 %v4512, %v4504
      %v5385 = vpack.c.b16 %v4521, %v4513
      %v5386 = vpack.c.b16 %v4522, %v4514
      %v5387 = vpack.c.b16 %v4523, %v4515
      %v5388 = vpack.c.b16 %v4524, %v4516
      %v5389 = vpack.c.b16 %v4525, %v4517
      %v5390 = vpack.c.b16 %v4526, %v4518
      %v5391 = vpack.c.b16 %v4527, %v4519
      %v5392 = vpack.c.b16 %v4528, %v4520
      %v5393 = vpack.c.b16 %v4537, %v4529
      %v5394 = vpack.c.b16 %v4538, %v4530
      %v5395 = vpack.c.b16 %v4539, %v4531
      %v5396 = vpack.c.b16 %v4540, %v4532
      %v5397 = vpack.c.b16 %v4541, %v4533
      %v5398 = vpack.c.b16 %v4542, %v4534
      %v5399 = vpack.c.b16 %v4543, %v4535
      %v5400 = vpack.c.b16 %v4544, %v4536
      %v5401 = vpack.c.b16 %v4553, %v4545
      %v5402 = vpack.c.b16 %v4554, %v4546
      %v5403 = vpack.c.b16 %v4555, %v4547
      %v5404 = vpack.c.b16 %v4556, %v4548
      %v5405 = vpack.c.b16 %v4557, %v4549
      %v5406 = vpack.c.b16 %v4558, %v4550
      %v5407 = vpack.c.b16 %v4559, %v4551
      %v5408 = vpack.c.b16 %v4560, %v4552
      %v5409 = vpack.c.b16 %v4569, %v4561
      %v5410 = vpack.c.b16 %v4570, %v4562
      %v5411 = vpack.c.b16 %v4571, %v4563
      %v5412 = vpack.c.b16 %v4572, %v4564
      %v5413 = vpack.c.b16 %v4573, %v4565
      %v5414 = vpack.c.b16 %v4574, %v4566
      %v5415 = vpack.c.b16 %v4575, %v4567
      %v5416 = vpack.c.b16 %v4576, %v4568
      %v5417 = vpack.c.b16 %v4585, %v4577
      %v5418 = vpack.c.b16 %v4586, %v4578
      %v5419 = vpack.c.b16 %v4587, %v4579
      %v5420 = vpack.c.b16 %v4588, %v4580
      %v5421 = vpack.c.b16 %v4589, %v4581
      %v5422 = vpack.c.b16 %v4590, %v4582
      %v5423 = vpack.c.b16 %v4591, %v4583
      %v5424 = vpack.c.b16 %v4592, %v4584
      %v5425 = vpack.c.b16 %v4601, %v4593
      %v5426 = vpack.c.b16 %v4602, %v4594
      %v5427 = vpack.c.b16 %v4603, %v4595
      %v5428 = vpack.c.b16 %v4604, %v4596
      %v5429 = vpack.c.b16 %v4605, %v4597
      %v5430 = vpack.c.b16 %v4606, %v4598
      %v5431 = vpack.c.b16 %v4607, %v4599
      %v5432 = vpack.c.b16 %v4608, %v4600
      %v5433 = vpack.c.b16 %v4617, %v4609
      %v5434 = vpack.c.b16 %v4618, %v4610
      %v5435 = vpack.c.b16 %v4619, %v4611
      %v5436 = vpack.c.b16 %v4620, %v4612
      %v5437 = vpack.c.b16 %v4621, %v4613
      %v5438 = vpack.c.b16 %v4622, %v4614
      %v5439 = vpack.c.b16 %v4623, %v4615
      %v5440 = vpack.c.b16 %v4624, %v4616
      %v5441 = vpack.c.b16 %v4633, %v4625
      %v5442 = vpack.c.b16 %v4634, %v4626
      %v5443 = vpack.c.b16 %v4635, %v4627
      %v5444 = vpack.c.b16 %v4636, %v4628
      %v5445 = vpack.c.b16 %v4637, %v4629
      %v5446 = vpack.c.b16 %v4638, %v4630
      %v5447 = vpack.c.b16 %v4639, %v4631
      %v5448 = vpack.c.b16 %v4640, %v4632
      %v5449 = vpack.c.b16 %v4649, %v4641
      %v5450 = vpack.c.b16 %v4650, %v4642
      %v5451 = vpack.c.b16 %v4651, %v4643
      %v5452 = vpack.c.b16 %v4652, %v4644
      %v5453 = vpack.c.b16 %v4653, %v4645
      %v5454 = vpack.c.b16 %v4654, %v4646
      %v5455 = vpack.c.b16 %v4655, %v4647
      %v5456 = vpack.c.b16 %v4656, %v4648
      %v5457 = vpack.c.b16 %v4665, %v4657
      %v5458 = vpack.c.b16 %v4666, %v4658
      %v5459 = vpack.c.b16 %v4667, %v4659
      %v5460 = vpack.c.b16 %v4668, %v4660
      %v5461 = vpack.c.b16 %v4669, %v4661
      %v5462 = vpack.c.b16 %v4670, %v4662
      %v5463 = vpack.c.b16 %v4671, %v4663
      %v5464 = vpack.c.b16 %v4672, %v4664
      %v5465 = vpack.c.b16 %v4681, %v4673
      %v5466 = vpack.c.b16 %v4682, %v4674
      %v5467 = vpack.c.b16 %v4683, %v4675
      %v5468 = vpack.c.b16 %v4684, %v4676
      %v5469 = vpack.c.b16 %v4685, %v4677
      %v5470 = vpack.c.b16 %v4686, %v4678
      %v5471 = vpack.c.b16 %v4687, %v4679
      %v5472 = vpack.c.b16 %v4688, %v4680
      %v5473 = vpack.c.b16 %v4697, %v4689
      %v5474 = vpack.c.b16 %v4698, %v4690
      %v5475 = vpack.c.b16 %v4699, %v4691
      %v5476 = vpack.c.b16 %v4700, %v4692
      %v5477 = vpack.c.b16 %v4701, %v4693
      %v5478 = vpack.c.b16 %v4702, %v4694
      %v5479 = vpack.c.b16 %v4703, %v4695
      %v5480 = vpack.c.b16 %v4704, %v4696
      %v5481 = vpack.c.b16 %v4713, %v4705
      %v5482 = vpack.c.b16 %v4714, %v4706
      %v5483 = vpack.c.b16 %v4715, %v4707
      %v5484 = vpack.c.b16 %v4716, %v4708
      %v5485 = vpack.c.b16 %v4717, %v4709
      %v5486 = vpack.c.b16 %v4718, %v4710
      %v5487 = vpack.c.b16 %v4719, %v4711
      %v5488 = vpack.c.b16 %v4720, %v4712
      %6257 = vmatpush.bf16.msra.mxu0 %v4777
      %6258 = vmatpush.bf16.msra.mxu0 %v4769
      %6259 = vmatpush.bf16.msra.mxu0 %v4761
      %6260 = vmatpush.bf16.msra.mxu0 %v4753
      %6261 = vmatpush.bf16.msra.mxu0 %v4745
      %6262 = vmatpush.bf16.msra.mxu0 %v4737
      %6263 = vmatpush.bf16.msra.mxu0 %v4729
      %6264 = vmatpush.bf16.msra.mxu0 %v4721
      %6265 = vmatmul.bf16.gmra.mxu0 %v1619
      %v6266 = vpop.f32.mrf.mxu0
      %v6267 = vadd.f32 %v2401, %v6266
      %v6268 = vpop.f32.mrf.mxu0
      %6269 = vdwg.mxu0
      %6270 = vmatpush.bf16.msra.mxu0 %v4841
      %6271 = vmatpush.bf16.msra.mxu0 %v4833
      %6272 = vmatpush.bf16.msra.mxu0 %v4825
      %6273 = vmatpush.bf16.msra.mxu0 %v4817
      %6274 = vmatpush.bf16.msra.mxu0 %v4809
      %6275 = vmatpush.bf16.msra.mxu0 %v4801
      %6276 = vmatpush.bf16.msra.mxu0 %v4793
      %6277 = vmatpush.bf16.msra.mxu0 %v4785
      %6278 = vmatmul.bf16.gmra.mxu0 %v1620
      %v6279 = vpop.f32.mrf.mxu0
      %v6280 = vadd.f32 %v6267, %v6279
      %v6281 = vpop.f32.mrf.mxu0
      %6282 = vdwg.mxu0
      %6283 = vmatpush.bf16.msra.mxu0 %v4905
      %6284 = vmatpush.bf16.msra.mxu0 %v4897
      %6285 = vmatpush.bf16.msra.mxu0 %v4889
      %6286 = vmatpush.bf16.msra.mxu0 %v4881
      %6287 = vmatpush.bf16.msra.mxu0 %v4873
      %6288 = vmatpush.bf16.msra.mxu0 %v4865
      %6289 = vmatpush.bf16.msra.mxu0 %v4857
      %6290 = vmatpush.bf16.msra.mxu0 %v4849
      %6291 = vmatmul.bf16.gmra.mxu0 %v1621
      %v6292 = vpop.f32.mrf.mxu0
      %v6293 = vadd.f32 %v6280, %v6292
      %v6294 = vpop.f32.mrf.mxu0
      %6295 = vdwg.mxu0
      %6296 = vmatpush.bf16.msra.mxu0 %v4969
      %6297 = vmatpush.bf16.msra.mxu0 %v4961
      %6298 = vmatpush.bf16.msra.mxu0 %v4953
      %6299 = vmatpush.bf16.msra.mxu0 %v4945
      %6300 = vmatpush.bf16.msra.mxu0 %v4937
      %6301 = vmatpush.bf16.msra.mxu0 %v4929
      %6302 = vmatpush.bf16.msra.mxu0 %v4921
      %6303 = vmatpush.bf16.msra.mxu0 %v4913
      %6304 = vmatmul.bf16.gmra.mxu0 %v1622
      %v6305 = vpop.f32.mrf.mxu0
      %v6306 = vadd.f32 %v6293, %v6305
      %v6307 = vpop.f32.mrf.mxu0
      %6308 = vdwg.mxu0
      %6309 = vmatpush.bf16.msra.mxu0 %v5033
      %6310 = vmatpush.bf16.msra.mxu0 %v5025
      %6311 = vmatpush.bf16.msra.mxu0 %v5017
      %6312 = vmatpush.bf16.msra.mxu0 %v5009
      %6313 = vmatpush.bf16.msra.mxu0 %v5001
      %6314 = vmatpush.bf16.msra.mxu0 %v4993
      %6315 = vmatpush.bf16.msra.mxu0 %v4985
      %6316 = vmatpush.bf16.msra.mxu0 %v4977
      %6317 = vmatmul.bf16.gmra.mxu0 %v1623
      %v6318 = vpop.f32.mrf.mxu0
      %v6319 = vadd.f32 %v6306, %v6318
      %v6320 = vpop.f32.mrf.mxu0
      %6321 = vdwg.mxu0
      %6322 = vmatpush.bf16.msra.mxu0 %v5097
      %6323 = vmatpush.bf16.msra.mxu0 %v5089
      %6324 = vmatpush.bf16.msra.mxu0 %v5081
      %6325 = vmatpush.bf16.msra.mxu0 %v5073
      %6326 = vmatpush.bf16.msra.mxu0 %v5065
      %6327 = vmatpush.bf16.msra.mxu0 %v5057
      %6328 = vmatpush.bf16.msra.mxu0 %v5049
      %6329 = vmatpush.bf16.msra.mxu0 %v5041
      %6330 = vmatmul.bf16.gmra.mxu0 %v1624
      %v6331 = vpop.f32.mrf.mxu0
      %v6332 = vadd.f32 %v6319, %v6331
      %v6333 = vpop.f32.mrf.mxu0
      %6334 = vdwg.mxu0
      %6335 = vmatpush.bf16.msra.mxu0 %v5161
      %6336 = vmatpush.bf16.msra.mxu0 %v5153
      %6337 = vmatpush.bf16.msra.mxu0 %v5145
      %6338 = vmatpush.bf16.msra.mxu0 %v5137
      %6339 = vmatpush.bf16.msra.mxu0 %v5129
      %6340 = vmatpush.bf16.msra.mxu0 %v5121
      %6341 = vmatpush.bf16.msra.mxu0 %v5113
      %6342 = vmatpush.bf16.msra.mxu0 %v5105
      %6343 = vmatmul.bf16.gmra.mxu0 %v1625
      %v6344 = vpop.f32.mrf.mxu0
      %v6345 = vadd.f32 %v6332, %v6344
      %v6346 = vpop.f32.mrf.mxu0
      %6347 = vdwg.mxu0
      %6348 = vmatpush.bf16.msra.mxu0 %v5225
      %6349 = vmatpush.bf16.msra.mxu0 %v5217
      %6350 = vmatpush.bf16.msra.mxu0 %v5209
      %6351 = vmatpush.bf16.msra.mxu0 %v5201
      %6352 = vmatpush.bf16.msra.mxu0 %v5193
      %6353 = vmatpush.bf16.msra.mxu0 %v5185
      %6354 = vmatpush.bf16.msra.mxu0 %v5177
      %6355 = vmatpush.bf16.msra.mxu0 %v5169
      %6356 = vmatmul.bf16.gmra.mxu0 %v1626
      %v6357 = vpop.f32.mrf.mxu0
      %v6358 = vadd.f32 %v6345, %v6357
      %v6359 = vpop.f32.mrf.mxu0
      %6360 = vdwg.mxu0
      %6361 = vmatpush.bf16.msra.mxu0 %v5289
      %6362 = vmatpush.bf16.msra.mxu0 %v5281
      %6363 = vmatpush.bf16.msra.mxu0 %v5273
      %6364 = vmatpush.bf16.msra.mxu0 %v5265
      %6365 = vmatpush.bf16.msra.mxu0 %v5257
      %6366 = vmatpush.bf16.msra.mxu0 %v5249
      %6367 = vmatpush.bf16.msra.mxu0 %v5241
      %6368 = vmatpush.bf16.msra.mxu0 %v5233
      %6369 = vmatmul.bf16.gmra.mxu0 %v1627
      %v6370 = vpop.f32.mrf.mxu0
      %v6371 = vadd.f32 %v6358, %v6370
      %v6372 = vpop.f32.mrf.mxu0
      %6373 = vdwg.mxu0
      %6374 = vmatpush.bf16.msra.mxu0 %v5353
      %6375 = vmatpush.bf16.msra.mxu0 %v5345
      %6376 = vmatpush.bf16.msra.mxu0 %v5337
      %6377 = vmatpush.bf16.msra.mxu0 %v5329
      %6378 = vmatpush.bf16.msra.mxu0 %v5321
      %6379 = vmatpush.bf16.msra.mxu0 %v5313
      %6380 = vmatpush.bf16.msra.mxu0 %v5305
      %6381 = vmatpush.bf16.msra.mxu0 %v5297
      %6382 = vmatmul.bf16.gmra.mxu0 %v1628
      %v6383 = vpop.f32.mrf.mxu0
      %v6384 = vadd.f32 %v6371, %v6383
      %v6385 = vpop.f32.mrf.mxu0
      %6386 = vdwg.mxu0
      %6387 = vmatpush.bf16.msra.mxu0 %v5417
      %6388 = vmatpush.bf16.msra.mxu0 %v5409
      %6389 = vmatpush.bf16.msra.mxu0 %v5401
      %6390 = vmatpush.bf16.msra.mxu0 %v5393
      %6391 = vmatpush.bf16.msra.mxu0 %v5385
      %6392 = vmatpush.bf16.msra.mxu0 %v5377
      %6393 = vmatpush.bf16.msra.mxu0 %v5369
      %6394 = vmatpush.bf16.msra.mxu0 %v5361
      %6395 = vmatmul.bf16.gmra.mxu0 %v1629
      %v6396 = vpop.f32.mrf.mxu0
      %v6397 = vadd.f32 %v6384, %v6396
      %v6398 = vpop.f32.mrf.mxu0
      %6399 = vdwg.mxu0
      %6400 = vmatpush.bf16.msra.mxu0 %v5481
      %6401 = vmatpush.bf16.msra.mxu0 %v5473
      %6402 = vmatpush.bf16.msra.mxu0 %v5465
      %6403 = vmatpush.bf16.msra.mxu0 %v5457
      %6404 = vmatpush.bf16.msra.mxu0 %v5449
      %6405 = vmatpush.bf16.msra.mxu0 %v5441
      %6406 = vmatpush.bf16.msra.mxu0 %v5433
      %6407 = vmatpush.bf16.msra.mxu0 %v5425
      %6408 = vmatmul.bf16.gmra.mxu0 %v1630
      %v6409 = vpop.f32.mrf.mxu0
      %v6410 = vadd.f32 %v6397, %v6409
      %v6411 = vpop.f32.mrf.mxu0
      %6412 = vdwg.mxu0
      %6413 = vmatpush.bf16.msra.mxu0 %v4778
      %6414 = vmatpush.bf16.msra.mxu0 %v4770
      %6415 = vmatpush.bf16.msra.mxu0 %v4762
      %6416 = vmatpush.bf16.msra.mxu0 %v4754
      %6417 = vmatpush.bf16.msra.mxu0 %v4746
      %6418 = vmatpush.bf16.msra.mxu0 %v4738
      %6419 = vmatpush.bf16.msra.mxu0 %v4730
      %6420 = vmatpush.bf16.msra.mxu0 %v4722
      %6421 = vmatmul.bf16.gmra.mxu0 %v1619
      %v6422 = vpop.f32.mrf.mxu0
      %v6423 = vadd.f32 %v2402, %v6422
      %v6424 = vpop.f32.mrf.mxu0
      %6425 = vdwg.mxu0
      %6426 = vmatpush.bf16.msra.mxu0 %v4842
      %6427 = vmatpush.bf16.msra.mxu0 %v4834
      %6428 = vmatpush.bf16.msra.mxu0 %v4826
      %6429 = vmatpush.bf16.msra.mxu0 %v4818
      %6430 = vmatpush.bf16.msra.mxu0 %v4810
      %6431 = vmatpush.bf16.msra.mxu0 %v4802
      %6432 = vmatpush.bf16.msra.mxu0 %v4794
      %6433 = vmatpush.bf16.msra.mxu0 %v4786
      %6434 = vmatmul.bf16.gmra.mxu0 %v1620
      %v6435 = vpop.f32.mrf.mxu0
      %v6436 = vadd.f32 %v6423, %v6435
      %v6437 = vpop.f32.mrf.mxu0
      %6438 = vdwg.mxu0
      %6439 = vmatpush.bf16.msra.mxu0 %v4906
      %6440 = vmatpush.bf16.msra.mxu0 %v4898
      %6441 = vmatpush.bf16.msra.mxu0 %v4890
      %6442 = vmatpush.bf16.msra.mxu0 %v4882
      %6443 = vmatpush.bf16.msra.mxu0 %v4874
      %6444 = vmatpush.bf16.msra.mxu0 %v4866
      %6445 = vmatpush.bf16.msra.mxu0 %v4858
      %6446 = vmatpush.bf16.msra.mxu0 %v4850
      %6447 = vmatmul.bf16.gmra.mxu0 %v1621
      %v6448 = vpop.f32.mrf.mxu0
      %v6449 = vadd.f32 %v6436, %v6448
      %v6450 = vpop.f32.mrf.mxu0
      %6451 = vdwg.mxu0
      %6452 = vmatpush.bf16.msra.mxu0 %v4970
      %6453 = vmatpush.bf16.msra.mxu0 %v4962
      %6454 = vmatpush.bf16.msra.mxu0 %v4954
      %6455 = vmatpush.bf16.msra.mxu0 %v4946
      %6456 = vmatpush.bf16.msra.mxu0 %v4938
      %6457 = vmatpush.bf16.msra.mxu0 %v4930
      %6458 = vmatpush.bf16.msra.mxu0 %v4922
      %6459 = vmatpush.bf16.msra.mxu0 %v4914
      %6460 = vmatmul.bf16.gmra.mxu0 %v1622
      %v6461 = vpop.f32.mrf.mxu0
      %v6462 = vadd.f32 %v6449, %v6461
      %v6463 = vpop.f32.mrf.mxu0
      %6464 = vdwg.mxu0
      %6465 = vmatpush.bf16.msra.mxu0 %v5034
      %6466 = vmatpush.bf16.msra.mxu0 %v5026
      %6467 = vmatpush.bf16.msra.mxu0 %v5018
      %6468 = vmatpush.bf16.msra.mxu0 %v5010
      %6469 = vmatpush.bf16.msra.mxu0 %v5002
      %6470 = vmatpush.bf16.msra.mxu0 %v4994
      %6471 = vmatpush.bf16.msra.mxu0 %v4986
      %6472 = vmatpush.bf16.msra.mxu0 %v4978
      %6473 = vmatmul.bf16.gmra.mxu0 %v1623
      %v6474 = vpop.f32.mrf.mxu0
      %v6475 = vadd.f32 %v6462, %v6474
      %v6476 = vpop.f32.mrf.mxu0
      %6477 = vdwg.mxu0
      %6478 = vmatpush.bf16.msra.mxu0 %v5098
      %6479 = vmatpush.bf16.msra.mxu0 %v5090
      %6480 = vmatpush.bf16.msra.mxu0 %v5082
      %6481 = vmatpush.bf16.msra.mxu0 %v5074
      %6482 = vmatpush.bf16.msra.mxu0 %v5066
      %6483 = vmatpush.bf16.msra.mxu0 %v5058
      %6484 = vmatpush.bf16.msra.mxu0 %v5050
      %6485 = vmatpush.bf16.msra.mxu0 %v5042
      %6486 = vmatmul.bf16.gmra.mxu0 %v1624
      %v6487 = vpop.f32.mrf.mxu0
      %v6488 = vadd.f32 %v6475, %v6487
      %v6489 = vpop.f32.mrf.mxu0
      %6490 = vdwg.mxu0
      %6491 = vmatpush.bf16.msra.mxu0 %v5162
      %6492 = vmatpush.bf16.msra.mxu0 %v5154
      %6493 = vmatpush.bf16.msra.mxu0 %v5146
      %6494 = vmatpush.bf16.msra.mxu0 %v5138
      %6495 = vmatpush.bf16.msra.mxu0 %v5130
      %6496 = vmatpush.bf16.msra.mxu0 %v5122
      %6497 = vmatpush.bf16.msra.mxu0 %v5114
      %6498 = vmatpush.bf16.msra.mxu0 %v5106
      %6499 = vmatmul.bf16.gmra.mxu0 %v1625
      %v6500 = vpop.f32.mrf.mxu0
      %v6501 = vadd.f32 %v6488, %v6500
      %v6502 = vpop.f32.mrf.mxu0
      %6503 = vdwg.mxu0
      %6504 = vmatpush.bf16.msra.mxu0 %v5226
      %6505 = vmatpush.bf16.msra.mxu0 %v5218
      %6506 = vmatpush.bf16.msra.mxu0 %v5210
      %6507 = vmatpush.bf16.msra.mxu0 %v5202
      %6508 = vmatpush.bf16.msra.mxu0 %v5194
      %6509 = vmatpush.bf16.msra.mxu0 %v5186
      %6510 = vmatpush.bf16.msra.mxu0 %v5178
      %6511 = vmatpush.bf16.msra.mxu0 %v5170
      %6512 = vmatmul.bf16.gmra.mxu0 %v1626
      %v6513 = vpop.f32.mrf.mxu0
      %v6514 = vadd.f32 %v6501, %v6513
      %v6515 = vpop.f32.mrf.mxu0
      %6516 = vdwg.mxu0
      %6517 = vmatpush.bf16.msra.mxu0 %v5290
      %6518 = vmatpush.bf16.msra.mxu0 %v5282
      %6519 = vmatpush.bf16.msra.mxu0 %v5274
      %6520 = vmatpush.bf16.msra.mxu0 %v5266
      %6521 = vmatpush.bf16.msra.mxu0 %v5258
      %6522 = vmatpush.bf16.msra.mxu0 %v5250
      %6523 = vmatpush.bf16.msra.mxu0 %v5242
      %6524 = vmatpush.bf16.msra.mxu0 %v5234
      %6525 = vmatmul.bf16.gmra.mxu0 %v1627
      %v6526 = vpop.f32.mrf.mxu0
      %v6527 = vadd.f32 %v6514, %v6526
      %v6528 = vpop.f32.mrf.mxu0
      %6529 = vdwg.mxu0
      %6530 = vmatpush.bf16.msra.mxu0 %v5354
      %6531 = vmatpush.bf16.msra.mxu0 %v5346
      %6532 = vmatpush.bf16.msra.mxu0 %v5338
      %6533 = vmatpush.bf16.msra.mxu0 %v5330
      %6534 = vmatpush.bf16.msra.mxu0 %v5322
      %6535 = vmatpush.bf16.msra.mxu0 %v5314
      %6536 = vmatpush.bf16.msra.mxu0 %v5306
      %6537 = vmatpush.bf16.msra.mxu0 %v5298
      %6538 = vmatmul.bf16.gmra.mxu0 %v1628
      %v6539 = vpop.f32.mrf.mxu0
      %v6540 = vadd.f32 %v6527, %v6539
      %v6541 = vpop.f32.mrf.mxu0
      %6542 = vdwg.mxu0
      %6543 = vmatpush.bf16.msra.mxu0 %v5418
      %6544 = vmatpush.bf16.msra.mxu0 %v5410
      %6545 = vmatpush.bf16.msra.mxu0 %v5402
      %6546 = vmatpush.bf16.msra.mxu0 %v5394
      %6547 = vmatpush.bf16.msra.mxu0 %v5386
      %6548 = vmatpush.bf16.msra.mxu0 %v5378
      %6549 = vmatpush.bf16.msra.mxu0 %v5370
      %6550 = vmatpush.bf16.msra.mxu0 %v5362
      %6551 = vmatmul.bf16.gmra.mxu0 %v1629
      %v6552 = vpop.f32.mrf.mxu0
      %v6553 = vadd.f32 %v6540, %v6552
      %v6554 = vpop.f32.mrf.mxu0
      %6555 = vdwg.mxu0
      %6556 = vmatpush.bf16.msra.mxu0 %v5482
      %6557 = vmatpush.bf16.msra.mxu0 %v5474
      %6558 = vmatpush.bf16.msra.mxu0 %v5466
      %6559 = vmatpush.bf16.msra.mxu0 %v5458
      %6560 = vmatpush.bf16.msra.mxu0 %v5450
      %6561 = vmatpush.bf16.msra.mxu0 %v5442
      %6562 = vmatpush.bf16.msra.mxu0 %v5434
      %6563 = vmatpush.bf16.msra.mxu0 %v5426
      %6564 = vmatmul.bf16.gmra.mxu0 %v1630
      %v6565 = vpop.f32.mrf.mxu0
      %v6566 = vadd.f32 %v6553, %v6565
      %v6567 = vpop.f32.mrf.mxu0
      %6568 = vdwg.mxu0
      %6569 = vmatpush.bf16.msra.mxu0 %v4779
      %6570 = vmatpush.bf16.msra.mxu0 %v4771
      %6571 = vmatpush.bf16.msra.mxu0 %v4763
      %6572 = vmatpush.bf16.msra.mxu0 %v4755
      %6573 = vmatpush.bf16.msra.mxu0 %v4747
      %6574 = vmatpush.bf16.msra.mxu0 %v4739
      %6575 = vmatpush.bf16.msra.mxu0 %v4731
      %6576 = vmatpush.bf16.msra.mxu0 %v4723
      %6577 = vmatmul.bf16.gmra.mxu0 %v1619
      %v6578 = vpop.f32.mrf.mxu0
      %v6579 = vadd.f32 %v2403, %v6578
      %v6580 = vpop.f32.mrf.mxu0
      %6581 = vdwg.mxu0
      %6582 = vmatpush.bf16.msra.mxu0 %v4843
      %6583 = vmatpush.bf16.msra.mxu0 %v4835
      %6584 = vmatpush.bf16.msra.mxu0 %v4827
      %6585 = vmatpush.bf16.msra.mxu0 %v4819
      %6586 = vmatpush.bf16.msra.mxu0 %v4811
      %6587 = vmatpush.bf16.msra.mxu0 %v4803
      %6588 = vmatpush.bf16.msra.mxu0 %v4795
      %6589 = vmatpush.bf16.msra.mxu0 %v4787
      %6590 = vmatmul.bf16.gmra.mxu0 %v1620
      %v6591 = vpop.f32.mrf.mxu0
      %v6592 = vadd.f32 %v6579, %v6591
      %v6593 = vpop.f32.mrf.mxu0
      %6594 = vdwg.mxu0
      %6595 = vmatpush.bf16.msra.mxu0 %v4907
      %6596 = vmatpush.bf16.msra.mxu0 %v4899
      %6597 = vmatpush.bf16.msra.mxu0 %v4891
      %6598 = vmatpush.bf16.msra.mxu0 %v4883
      %6599 = vmatpush.bf16.msra.mxu0 %v4875
      %6600 = vmatpush.bf16.msra.mxu0 %v4867
      %6601 = vmatpush.bf16.msra.mxu0 %v4859
      %6602 = vmatpush.bf16.msra.mxu0 %v4851
      %6603 = vmatmul.bf16.gmra.mxu0 %v1621
      %v6604 = vpop.f32.mrf.mxu0
      %v6605 = vadd.f32 %v6592, %v6604
      %v6606 = vpop.f32.mrf.mxu0
      %6607 = vdwg.mxu0
      %6608 = vmatpush.bf16.msra.mxu0 %v4971
      %6609 = vmatpush.bf16.msra.mxu0 %v4963
      %6610 = vmatpush.bf16.msra.mxu0 %v4955
      %6611 = vmatpush.bf16.msra.mxu0 %v4947
      %6612 = vmatpush.bf16.msra.mxu0 %v4939
      %6613 = vmatpush.bf16.msra.mxu0 %v4931
      %6614 = vmatpush.bf16.msra.mxu0 %v4923
      %6615 = vmatpush.bf16.msra.mxu0 %v4915
      %6616 = vmatmul.bf16.gmra.mxu0 %v1622
      %v6617 = vpop.f32.mrf.mxu0
      %v6618 = vadd.f32 %v6605, %v6617
      %v6619 = vpop.f32.mrf.mxu0
      %6620 = vdwg.mxu0
      %6621 = vmatpush.bf16.msra.mxu0 %v5035
      %6622 = vmatpush.bf16.msra.mxu0 %v5027
      %6623 = vmatpush.bf16.msra.mxu0 %v5019
      %6624 = vmatpush.bf16.msra.mxu0 %v5011
      %6625 = vmatpush.bf16.msra.mxu0 %v5003
      %6626 = vmatpush.bf16.msra.mxu0 %v4995
      %6627 = vmatpush.bf16.msra.mxu0 %v4987
      %6628 = vmatpush.bf16.msra.mxu0 %v4979
      %6629 = vmatmul.bf16.gmra.mxu0 %v1623
      %v6630 = vpop.f32.mrf.mxu0
      %v6631 = vadd.f32 %v6618, %v6630
      %v6632 = vpop.f32.mrf.mxu0
      %6633 = vdwg.mxu0
      %6634 = vmatpush.bf16.msra.mxu0 %v5099
      %6635 = vmatpush.bf16.msra.mxu0 %v5091
      %6636 = vmatpush.bf16.msra.mxu0 %v5083
      %6637 = vmatpush.bf16.msra.mxu0 %v5075
      %6638 = vmatpush.bf16.msra.mxu0 %v5067
      %6639 = vmatpush.bf16.msra.mxu0 %v5059
      %6640 = vmatpush.bf16.msra.mxu0 %v5051
      %6641 = vmatpush.bf16.msra.mxu0 %v5043
      %6642 = vmatmul.bf16.gmra.mxu0 %v1624
      %v6643 = vpop.f32.mrf.mxu0
      %v6644 = vadd.f32 %v6631, %v6643
      %v6645 = vpop.f32.mrf.mxu0
      %6646 = vdwg.mxu0
      %6647 = vmatpush.bf16.msra.mxu0 %v5163
      %6648 = vmatpush.bf16.msra.mxu0 %v5155
      %6649 = vmatpush.bf16.msra.mxu0 %v5147
      %6650 = vmatpush.bf16.msra.mxu0 %v5139
      %6651 = vmatpush.bf16.msra.mxu0 %v5131
      %6652 = vmatpush.bf16.msra.mxu0 %v5123
      %6653 = vmatpush.bf16.msra.mxu0 %v5115
      %6654 = vmatpush.bf16.msra.mxu0 %v5107
      %6655 = vmatmul.bf16.gmra.mxu0 %v1625
      %v6656 = vpop.f32.mrf.mxu0
      %v6657 = vadd.f32 %v6644, %v6656
      %v6658 = vpop.f32.mrf.mxu0
      %6659 = vdwg.mxu0
      %6660 = vmatpush.bf16.msra.mxu0 %v5227
      %6661 = vmatpush.bf16.msra.mxu0 %v5219
      %6662 = vmatpush.bf16.msra.mxu0 %v5211
      %6663 = vmatpush.bf16.msra.mxu0 %v5203
      %6664 = vmatpush.bf16.msra.mxu0 %v5195
      %6665 = vmatpush.bf16.msra.mxu0 %v5187
      %6666 = vmatpush.bf16.msra.mxu0 %v5179
      %6667 = vmatpush.bf16.msra.mxu0 %v5171
      %6668 = vmatmul.bf16.gmra.mxu0 %v1626
      %v6669 = vpop.f32.mrf.mxu0
      %v6670 = vadd.f32 %v6657, %v6669
      %v6671 = vpop.f32.mrf.mxu0
      %6672 = vdwg.mxu0
      %6673 = vmatpush.bf16.msra.mxu0 %v5291
      %6674 = vmatpush.bf16.msra.mxu0 %v5283
      %6675 = vmatpush.bf16.msra.mxu0 %v5275
      %6676 = vmatpush.bf16.msra.mxu0 %v5267
      %6677 = vmatpush.bf16.msra.mxu0 %v5259
      %6678 = vmatpush.bf16.msra.mxu0 %v5251
      %6679 = vmatpush.bf16.msra.mxu0 %v5243
      %6680 = vmatpush.bf16.msra.mxu0 %v5235
      %6681 = vmatmul.bf16.gmra.mxu0 %v1627
      %v6682 = vpop.f32.mrf.mxu0
      %v6683 = vadd.f32 %v6670, %v6682
      %v6684 = vpop.f32.mrf.mxu0
      %6685 = vdwg.mxu0
      %6686 = vmatpush.bf16.msra.mxu0 %v5355
      %6687 = vmatpush.bf16.msra.mxu0 %v5347
      %6688 = vmatpush.bf16.msra.mxu0 %v5339
      %6689 = vmatpush.bf16.msra.mxu0 %v5331
      %6690 = vmatpush.bf16.msra.mxu0 %v5323
      %6691 = vmatpush.bf16.msra.mxu0 %v5315
      %6692 = vmatpush.bf16.msra.mxu0 %v5307
      %6693 = vmatpush.bf16.msra.mxu0 %v5299
      %6694 = vmatmul.bf16.gmra.mxu0 %v1628
      %v6695 = vpop.f32.mrf.mxu0
      %v6696 = vadd.f32 %v6683, %v6695
      %v6697 = vpop.f32.mrf.mxu0
      %6698 = vdwg.mxu0
      %6699 = vmatpush.bf16.msra.mxu0 %v5419
      %6700 = vmatpush.bf16.msra.mxu0 %v5411
      %6701 = vmatpush.bf16.msra.mxu0 %v5403
      %6702 = vmatpush.bf16.msra.mxu0 %v5395
      %6703 = vmatpush.bf16.msra.mxu0 %v5387
      %6704 = vmatpush.bf16.msra.mxu0 %v5379
      %6705 = vmatpush.bf16.msra.mxu0 %v5371
      %6706 = vmatpush.bf16.msra.mxu0 %v5363
      %6707 = vmatmul.bf16.gmra.mxu0 %v1629
      %v6708 = vpop.f32.mrf.mxu0
      %v6709 = vadd.f32 %v6696, %v6708
      %v6710 = vpop.f32.mrf.mxu0
      %6711 = vdwg.mxu0
      %6712 = vmatpush.bf16.msra.mxu0 %v5483
      %6713 = vmatpush.bf16.msra.mxu0 %v5475
      %6714 = vmatpush.bf16.msra.mxu0 %v5467
      %6715 = vmatpush.bf16.msra.mxu0 %v5459
      %6716 = vmatpush.bf16.msra.mxu0 %v5451
      %6717 = vmatpush.bf16.msra.mxu0 %v5443
      %6718 = vmatpush.bf16.msra.mxu0 %v5435
      %6719 = vmatpush.bf16.msra.mxu0 %v5427
      %6720 = vmatmul.bf16.gmra.mxu0 %v1630
      %v6721 = vpop.f32.mrf.mxu0
      %v6722 = vadd.f32 %v6709, %v6721
      %v6723 = vpop.f32.mrf.mxu0
      %6724 = vdwg.mxu0
      %6725 = vmatpush.bf16.msra.mxu0 %v4780
      %6726 = vmatpush.bf16.msra.mxu0 %v4772
      %6727 = vmatpush.bf16.msra.mxu0 %v4764
      %6728 = vmatpush.bf16.msra.mxu0 %v4756
      %6729 = vmatpush.bf16.msra.mxu0 %v4748
      %6730 = vmatpush.bf16.msra.mxu0 %v4740
      %6731 = vmatpush.bf16.msra.mxu0 %v4732
      %6732 = vmatpush.bf16.msra.mxu0 %v4724
      %6733 = vmatmul.bf16.gmra.mxu0 %v1619
      %v6734 = vpop.f32.mrf.mxu0
      %v6735 = vadd.f32 %v2404, %v6734
      %v6736 = vpop.f32.mrf.mxu0
      %6737 = vdwg.mxu0
      %6738 = vmatpush.bf16.msra.mxu0 %v4844
      %6739 = vmatpush.bf16.msra.mxu0 %v4836
      %6740 = vmatpush.bf16.msra.mxu0 %v4828
      %6741 = vmatpush.bf16.msra.mxu0 %v4820
      %6742 = vmatpush.bf16.msra.mxu0 %v4812
      %6743 = vmatpush.bf16.msra.mxu0 %v4804
      %6744 = vmatpush.bf16.msra.mxu0 %v4796
      %6745 = vmatpush.bf16.msra.mxu0 %v4788
      %6746 = vmatmul.bf16.gmra.mxu0 %v1620
      %v6747 = vpop.f32.mrf.mxu0
      %v6748 = vadd.f32 %v6735, %v6747
      %v6749 = vpop.f32.mrf.mxu0
      %6750 = vdwg.mxu0
      %6751 = vmatpush.bf16.msra.mxu0 %v4908
      %6752 = vmatpush.bf16.msra.mxu0 %v4900
      %6753 = vmatpush.bf16.msra.mxu0 %v4892
      %6754 = vmatpush.bf16.msra.mxu0 %v4884
      %6755 = vmatpush.bf16.msra.mxu0 %v4876
      %6756 = vmatpush.bf16.msra.mxu0 %v4868
      %6757 = vmatpush.bf16.msra.mxu0 %v4860
      %6758 = vmatpush.bf16.msra.mxu0 %v4852
      %6759 = vmatmul.bf16.gmra.mxu0 %v1621
      %v6760 = vpop.f32.mrf.mxu0
      %v6761 = vadd.f32 %v6748, %v6760
      %v6762 = vpop.f32.mrf.mxu0
      %6763 = vdwg.mxu0
      %6764 = vmatpush.bf16.msra.mxu0 %v4972
      %6765 = vmatpush.bf16.msra.mxu0 %v4964
      %6766 = vmatpush.bf16.msra.mxu0 %v4956
      %6767 = vmatpush.bf16.msra.mxu0 %v4948
      %6768 = vmatpush.bf16.msra.mxu0 %v4940
      %6769 = vmatpush.bf16.msra.mxu0 %v4932
      %6770 = vmatpush.bf16.msra.mxu0 %v4924
      %6771 = vmatpush.bf16.msra.mxu0 %v4916
      %6772 = vmatmul.bf16.gmra.mxu0 %v1622
      %v6773 = vpop.f32.mrf.mxu0
      %v6774 = vadd.f32 %v6761, %v6773
      %v6775 = vpop.f32.mrf.mxu0
      %6776 = vdwg.mxu0
      %6777 = vmatpush.bf16.msra.mxu0 %v5036
      %6778 = vmatpush.bf16.msra.mxu0 %v5028
      %6779 = vmatpush.bf16.msra.mxu0 %v5020
      %6780 = vmatpush.bf16.msra.mxu0 %v5012
      %6781 = vmatpush.bf16.msra.mxu0 %v5004
      %6782 = vmatpush.bf16.msra.mxu0 %v4996
      %6783 = vmatpush.bf16.msra.mxu0 %v4988
      %6784 = vmatpush.bf16.msra.mxu0 %v4980
      %6785 = vmatmul.bf16.gmra.mxu0 %v1623
      %v6786 = vpop.f32.mrf.mxu0
      %v6787 = vadd.f32 %v6774, %v6786
      %v6788 = vpop.f32.mrf.mxu0
      %6789 = vdwg.mxu0
      %6790 = vmatpush.bf16.msra.mxu0 %v5100
      %6791 = vmatpush.bf16.msra.mxu0 %v5092
      %6792 = vmatpush.bf16.msra.mxu0 %v5084
      %6793 = vmatpush.bf16.msra.mxu0 %v5076
      %6794 = vmatpush.bf16.msra.mxu0 %v5068
      %6795 = vmatpush.bf16.msra.mxu0 %v5060
      %6796 = vmatpush.bf16.msra.mxu0 %v5052
      %6797 = vmatpush.bf16.msra.mxu0 %v5044
      %6798 = vmatmul.bf16.gmra.mxu0 %v1624
      %v6799 = vpop.f32.mrf.mxu0
      %v6800 = vadd.f32 %v6787, %v6799
      %v6801 = vpop.f32.mrf.mxu0
      %6802 = vdwg.mxu0
      %6803 = vmatpush.bf16.msra.mxu0 %v5164
      %6804 = vmatpush.bf16.msra.mxu0 %v5156
      %6805 = vmatpush.bf16.msra.mxu0 %v5148
      %6806 = vmatpush.bf16.msra.mxu0 %v5140
      %6807 = vmatpush.bf16.msra.mxu0 %v5132
      %6808 = vmatpush.bf16.msra.mxu0 %v5124
      %6809 = vmatpush.bf16.msra.mxu0 %v5116
      %6810 = vmatpush.bf16.msra.mxu0 %v5108
      %6811 = vmatmul.bf16.gmra.mxu0 %v1625
      %v6812 = vpop.f32.mrf.mxu0
      %v6813 = vadd.f32 %v6800, %v6812
      %v6814 = vpop.f32.mrf.mxu0
      %6815 = vdwg.mxu0
      %6816 = vmatpush.bf16.msra.mxu0 %v5228
      %6817 = vmatpush.bf16.msra.mxu0 %v5220
      %6818 = vmatpush.bf16.msra.mxu0 %v5212
      %6819 = vmatpush.bf16.msra.mxu0 %v5204
      %6820 = vmatpush.bf16.msra.mxu0 %v5196
      %6821 = vmatpush.bf16.msra.mxu0 %v5188
      %6822 = vmatpush.bf16.msra.mxu0 %v5180
      %6823 = vmatpush.bf16.msra.mxu0 %v5172
      %6824 = vmatmul.bf16.gmra.mxu0 %v1626
      %v6825 = vpop.f32.mrf.mxu0
      %v6826 = vadd.f32 %v6813, %v6825
      %v6827 = vpop.f32.mrf.mxu0
      %6828 = vdwg.mxu0
      %6829 = vmatpush.bf16.msra.mxu0 %v5292
      %6830 = vmatpush.bf16.msra.mxu0 %v5284
      %6831 = vmatpush.bf16.msra.mxu0 %v5276
      %6832 = vmatpush.bf16.msra.mxu0 %v5268
      %6833 = vmatpush.bf16.msra.mxu0 %v5260
      %6834 = vmatpush.bf16.msra.mxu0 %v5252
      %6835 = vmatpush.bf16.msra.mxu0 %v5244
      %6836 = vmatpush.bf16.msra.mxu0 %v5236
      %6837 = vmatmul.bf16.gmra.mxu0 %v1627
      %v6838 = vpop.f32.mrf.mxu0
      %v6839 = vadd.f32 %v6826, %v6838
      %v6840 = vpop.f32.mrf.mxu0
      %6841 = vdwg.mxu0
      %6842 = vmatpush.bf16.msra.mxu0 %v5356
      %6843 = vmatpush.bf16.msra.mxu0 %v5348
      %6844 = vmatpush.bf16.msra.mxu0 %v5340
      %6845 = vmatpush.bf16.msra.mxu0 %v5332
      %6846 = vmatpush.bf16.msra.mxu0 %v5324
      %6847 = vmatpush.bf16.msra.mxu0 %v5316
      %6848 = vmatpush.bf16.msra.mxu0 %v5308
      %6849 = vmatpush.bf16.msra.mxu0 %v5300
      %6850 = vmatmul.bf16.gmra.mxu0 %v1628
      %v6851 = vpop.f32.mrf.mxu0
      %v6852 = vadd.f32 %v6839, %v6851
      %v6853 = vpop.f32.mrf.mxu0
      %6854 = vdwg.mxu0
      %6855 = vmatpush.bf16.msra.mxu0 %v5420
      %6856 = vmatpush.bf16.msra.mxu0 %v5412
      %6857 = vmatpush.bf16.msra.mxu0 %v5404
      %6858 = vmatpush.bf16.msra.mxu0 %v5396
      %6859 = vmatpush.bf16.msra.mxu0 %v5388
      %6860 = vmatpush.bf16.msra.mxu0 %v5380
      %6861 = vmatpush.bf16.msra.mxu0 %v5372
      %6862 = vmatpush.bf16.msra.mxu0 %v5364
      %6863 = vmatmul.bf16.gmra.mxu0 %v1629
      %v6864 = vpop.f32.mrf.mxu0
      %v6865 = vadd.f32 %v6852, %v6864
      %v6866 = vpop.f32.mrf.mxu0
      %6867 = vdwg.mxu0
      %6868 = vmatpush.bf16.msra.mxu0 %v5484
      %6869 = vmatpush.bf16.msra.mxu0 %v5476
      %6870 = vmatpush.bf16.msra.mxu0 %v5468
      %6871 = vmatpush.bf16.msra.mxu0 %v5460
      %6872 = vmatpush.bf16.msra.mxu0 %v5452
      %6873 = vmatpush.bf16.msra.mxu0 %v5444
      %6874 = vmatpush.bf16.msra.mxu0 %v5436
      %6875 = vmatpush.bf16.msra.mxu0 %v5428
      %6876 = vmatmul.bf16.gmra.mxu0 %v1630
      %v6877 = vpop.f32.mrf.mxu0
      %v6878 = vadd.f32 %v6865, %v6877
      %v6879 = vpop.f32.mrf.mxu0
      %6880 = vdwg.mxu0
      %6881 = vmatpush.bf16.msra.mxu0 %v4781
      %6882 = vmatpush.bf16.msra.mxu0 %v4773
      %6883 = vmatpush.bf16.msra.mxu0 %v4765
      %6884 = vmatpush.bf16.msra.mxu0 %v4757
      %6885 = vmatpush.bf16.msra.mxu0 %v4749
      %6886 = vmatpush.bf16.msra.mxu0 %v4741
      %6887 = vmatpush.bf16.msra.mxu0 %v4733
      %6888 = vmatpush.bf16.msra.mxu0 %v4725
      %6889 = vmatmul.bf16.gmra.mxu0 %v1619
      %v6890 = vpop.f32.mrf.mxu0
      %v6891 = vadd.f32 %v2405, %v6890
      %v6892 = vpop.f32.mrf.mxu0
      %6893 = vdwg.mxu0
      %6894 = vmatpush.bf16.msra.mxu0 %v4845
      %6895 = vmatpush.bf16.msra.mxu0 %v4837
      %6896 = vmatpush.bf16.msra.mxu0 %v4829
      %6897 = vmatpush.bf16.msra.mxu0 %v4821
      %6898 = vmatpush.bf16.msra.mxu0 %v4813
      %6899 = vmatpush.bf16.msra.mxu0 %v4805
      %6900 = vmatpush.bf16.msra.mxu0 %v4797
      %6901 = vmatpush.bf16.msra.mxu0 %v4789
      %6902 = vmatmul.bf16.gmra.mxu0 %v1620
      %v6903 = vpop.f32.mrf.mxu0
      %v6904 = vadd.f32 %v6891, %v6903
      %v6905 = vpop.f32.mrf.mxu0
      %6906 = vdwg.mxu0
      %6907 = vmatpush.bf16.msra.mxu0 %v4909
      %6908 = vmatpush.bf16.msra.mxu0 %v4901
      %6909 = vmatpush.bf16.msra.mxu0 %v4893
      %6910 = vmatpush.bf16.msra.mxu0 %v4885
      %6911 = vmatpush.bf16.msra.mxu0 %v4877
      %6912 = vmatpush.bf16.msra.mxu0 %v4869
      %6913 = vmatpush.bf16.msra.mxu0 %v4861
      %6914 = vmatpush.bf16.msra.mxu0 %v4853
      %6915 = vmatmul.bf16.gmra.mxu0 %v1621
      %v6916 = vpop.f32.mrf.mxu0
      %v6917 = vadd.f32 %v6904, %v6916
      %v6918 = vpop.f32.mrf.mxu0
      %6919 = vdwg.mxu0
      %6920 = vmatpush.bf16.msra.mxu0 %v4973
      %6921 = vmatpush.bf16.msra.mxu0 %v4965
      %6922 = vmatpush.bf16.msra.mxu0 %v4957
      %6923 = vmatpush.bf16.msra.mxu0 %v4949
      %6924 = vmatpush.bf16.msra.mxu0 %v4941
      %6925 = vmatpush.bf16.msra.mxu0 %v4933
      %6926 = vmatpush.bf16.msra.mxu0 %v4925
      %6927 = vmatpush.bf16.msra.mxu0 %v4917
      %6928 = vmatmul.bf16.gmra.mxu0 %v1622
      %v6929 = vpop.f32.mrf.mxu0
      %v6930 = vadd.f32 %v6917, %v6929
      %v6931 = vpop.f32.mrf.mxu0
      %6932 = vdwg.mxu0
      %6933 = vmatpush.bf16.msra.mxu0 %v5037
      %6934 = vmatpush.bf16.msra.mxu0 %v5029
      %6935 = vmatpush.bf16.msra.mxu0 %v5021
      %6936 = vmatpush.bf16.msra.mxu0 %v5013
      %6937 = vmatpush.bf16.msra.mxu0 %v5005
      %6938 = vmatpush.bf16.msra.mxu0 %v4997
      %6939 = vmatpush.bf16.msra.mxu0 %v4989
      %6940 = vmatpush.bf16.msra.mxu0 %v4981
      %6941 = vmatmul.bf16.gmra.mxu0 %v1623
      %v6942 = vpop.f32.mrf.mxu0
      %v6943 = vadd.f32 %v6930, %v6942
      %v6944 = vpop.f32.mrf.mxu0
      %6945 = vdwg.mxu0
      %6946 = vmatpush.bf16.msra.mxu0 %v5101
      %6947 = vmatpush.bf16.msra.mxu0 %v5093
      %6948 = vmatpush.bf16.msra.mxu0 %v5085
      %6949 = vmatpush.bf16.msra.mxu0 %v5077
      %6950 = vmatpush.bf16.msra.mxu0 %v5069
      %6951 = vmatpush.bf16.msra.mxu0 %v5061
      %6952 = vmatpush.bf16.msra.mxu0 %v5053
      %6953 = vmatpush.bf16.msra.mxu0 %v5045
      %6954 = vmatmul.bf16.gmra.mxu0 %v1624
      %v6955 = vpop.f32.mrf.mxu0
      %v6956 = vadd.f32 %v6943, %v6955
      %v6957 = vpop.f32.mrf.mxu0
      %6958 = vdwg.mxu0
      %6959 = vmatpush.bf16.msra.mxu0 %v5165
      %6960 = vmatpush.bf16.msra.mxu0 %v5157
      %6961 = vmatpush.bf16.msra.mxu0 %v5149
      %6962 = vmatpush.bf16.msra.mxu0 %v5141
      %6963 = vmatpush.bf16.msra.mxu0 %v5133
      %6964 = vmatpush.bf16.msra.mxu0 %v5125
      %6965 = vmatpush.bf16.msra.mxu0 %v5117
      %6966 = vmatpush.bf16.msra.mxu0 %v5109
      %6967 = vmatmul.bf16.gmra.mxu0 %v1625
      %v6968 = vpop.f32.mrf.mxu0
      %v6969 = vadd.f32 %v6956, %v6968
      %v6970 = vpop.f32.mrf.mxu0
      %6971 = vdwg.mxu0
      %6972 = vmatpush.bf16.msra.mxu0 %v5229
      %6973 = vmatpush.bf16.msra.mxu0 %v5221
      %6974 = vmatpush.bf16.msra.mxu0 %v5213
      %6975 = vmatpush.bf16.msra.mxu0 %v5205
      %6976 = vmatpush.bf16.msra.mxu0 %v5197
      %6977 = vmatpush.bf16.msra.mxu0 %v5189
      %6978 = vmatpush.bf16.msra.mxu0 %v5181
      %6979 = vmatpush.bf16.msra.mxu0 %v5173
      %6980 = vmatmul.bf16.gmra.mxu0 %v1626
      %v6981 = vpop.f32.mrf.mxu0
      %v6982 = vadd.f32 %v6969, %v6981
      %v6983 = vpop.f32.mrf.mxu0
      %6984 = vdwg.mxu0
      %6985 = vmatpush.bf16.msra.mxu0 %v5293
      %6986 = vmatpush.bf16.msra.mxu0 %v5285
      %6987 = vmatpush.bf16.msra.mxu0 %v5277
      %6988 = vmatpush.bf16.msra.mxu0 %v5269
      %6989 = vmatpush.bf16.msra.mxu0 %v5261
      %6990 = vmatpush.bf16.msra.mxu0 %v5253
      %6991 = vmatpush.bf16.msra.mxu0 %v5245
      %6992 = vmatpush.bf16.msra.mxu0 %v5237
      %6993 = vmatmul.bf16.gmra.mxu0 %v1627
      %v6994 = vpop.f32.mrf.mxu0
      %v6995 = vadd.f32 %v6982, %v6994
      %v6996 = vpop.f32.mrf.mxu0
      %6997 = vdwg.mxu0
      %6998 = vmatpush.bf16.msra.mxu0 %v5357
      %6999 = vmatpush.bf16.msra.mxu0 %v5349
      %7000 = vmatpush.bf16.msra.mxu0 %v5341
      %7001 = vmatpush.bf16.msra.mxu0 %v5333
      %7002 = vmatpush.bf16.msra.mxu0 %v5325
      %7003 = vmatpush.bf16.msra.mxu0 %v5317
      %7004 = vmatpush.bf16.msra.mxu0 %v5309
      %7005 = vmatpush.bf16.msra.mxu0 %v5301
      %7006 = vmatmul.bf16.gmra.mxu0 %v1628
      %v7007 = vpop.f32.mrf.mxu0
      %v7008 = vadd.f32 %v6995, %v7007
      %v7009 = vpop.f32.mrf.mxu0
      %7010 = vdwg.mxu0
      %7011 = vmatpush.bf16.msra.mxu0 %v5421
      %7012 = vmatpush.bf16.msra.mxu0 %v5413
      %7013 = vmatpush.bf16.msra.mxu0 %v5405
      %7014 = vmatpush.bf16.msra.mxu0 %v5397
      %7015 = vmatpush.bf16.msra.mxu0 %v5389
      %7016 = vmatpush.bf16.msra.mxu0 %v5381
      %7017 = vmatpush.bf16.msra.mxu0 %v5373
      %7018 = vmatpush.bf16.msra.mxu0 %v5365
      %7019 = vmatmul.bf16.gmra.mxu0 %v1629
      %v7020 = vpop.f32.mrf.mxu0
      %v7021 = vadd.f32 %v7008, %v7020
      %v7022 = vpop.f32.mrf.mxu0
      %7023 = vdwg.mxu0
      %7024 = vmatpush.bf16.msra.mxu0 %v5485
      %7025 = vmatpush.bf16.msra.mxu0 %v5477
      %7026 = vmatpush.bf16.msra.mxu0 %v5469
      %7027 = vmatpush.bf16.msra.mxu0 %v5461
      %7028 = vmatpush.bf16.msra.mxu0 %v5453
      %7029 = vmatpush.bf16.msra.mxu0 %v5445
      %7030 = vmatpush.bf16.msra.mxu0 %v5437
      %7031 = vmatpush.bf16.msra.mxu0 %v5429
      %7032 = vmatmul.bf16.gmra.mxu0 %v1630
      %v7033 = vpop.f32.mrf.mxu0
      %v7034 = vadd.f32 %v7021, %v7033
      %v7035 = vpop.f32.mrf.mxu0
      %7036 = vdwg.mxu0
      %7037 = vmatpush.bf16.msra.mxu0 %v4782
      %7038 = vmatpush.bf16.msra.mxu0 %v4774
      %7039 = vmatpush.bf16.msra.mxu0 %v4766
      %7040 = vmatpush.bf16.msra.mxu0 %v4758
      %7041 = vmatpush.bf16.msra.mxu0 %v4750
      %7042 = vmatpush.bf16.msra.mxu0 %v4742
      %7043 = vmatpush.bf16.msra.mxu0 %v4734
      %7044 = vmatpush.bf16.msra.mxu0 %v4726
      %7045 = vmatmul.bf16.gmra.mxu0 %v1619
      %v7046 = vpop.f32.mrf.mxu0
      %v7047 = vadd.f32 %v2406, %v7046
      %v7048 = vpop.f32.mrf.mxu0
      %7049 = vdwg.mxu0
      %7050 = vmatpush.bf16.msra.mxu0 %v4846
      %7051 = vmatpush.bf16.msra.mxu0 %v4838
      %7052 = vmatpush.bf16.msra.mxu0 %v4830
      %7053 = vmatpush.bf16.msra.mxu0 %v4822
      %7054 = vmatpush.bf16.msra.mxu0 %v4814
      %7055 = vmatpush.bf16.msra.mxu0 %v4806
      %7056 = vmatpush.bf16.msra.mxu0 %v4798
      %7057 = vmatpush.bf16.msra.mxu0 %v4790
      %7058 = vmatmul.bf16.gmra.mxu0 %v1620
      %v7059 = vpop.f32.mrf.mxu0
      %v7060 = vadd.f32 %v7047, %v7059
      %v7061 = vpop.f32.mrf.mxu0
      %7062 = vdwg.mxu0
      %7063 = vmatpush.bf16.msra.mxu0 %v4910
      %7064 = vmatpush.bf16.msra.mxu0 %v4902
      %7065 = vmatpush.bf16.msra.mxu0 %v4894
      %7066 = vmatpush.bf16.msra.mxu0 %v4886
      %7067 = vmatpush.bf16.msra.mxu0 %v4878
      %7068 = vmatpush.bf16.msra.mxu0 %v4870
      %7069 = vmatpush.bf16.msra.mxu0 %v4862
      %7070 = vmatpush.bf16.msra.mxu0 %v4854
      %7071 = vmatmul.bf16.gmra.mxu0 %v1621
      %v7072 = vpop.f32.mrf.mxu0
      %v7073 = vadd.f32 %v7060, %v7072
      %v7074 = vpop.f32.mrf.mxu0
      %7075 = vdwg.mxu0
      %7076 = vmatpush.bf16.msra.mxu0 %v4974
      %7077 = vmatpush.bf16.msra.mxu0 %v4966
      %7078 = vmatpush.bf16.msra.mxu0 %v4958
      %7079 = vmatpush.bf16.msra.mxu0 %v4950
      %7080 = vmatpush.bf16.msra.mxu0 %v4942
      %7081 = vmatpush.bf16.msra.mxu0 %v4934
      %7082 = vmatpush.bf16.msra.mxu0 %v4926
      %7083 = vmatpush.bf16.msra.mxu0 %v4918
      %7084 = vmatmul.bf16.gmra.mxu0 %v1622
      %v7085 = vpop.f32.mrf.mxu0
      %v7086 = vadd.f32 %v7073, %v7085
      %v7087 = vpop.f32.mrf.mxu0
      %7088 = vdwg.mxu0
      %7089 = vmatpush.bf16.msra.mxu0 %v5038
      %7090 = vmatpush.bf16.msra.mxu0 %v5030
      %7091 = vmatpush.bf16.msra.mxu0 %v5022
      %7092 = vmatpush.bf16.msra.mxu0 %v5014
      %7093 = vmatpush.bf16.msra.mxu0 %v5006
      %7094 = vmatpush.bf16.msra.mxu0 %v4998
      %7095 = vmatpush.bf16.msra.mxu0 %v4990
      %7096 = vmatpush.bf16.msra.mxu0 %v4982
      %7097 = vmatmul.bf16.gmra.mxu0 %v1623
      %v7098 = vpop.f32.mrf.mxu0
      %v7099 = vadd.f32 %v7086, %v7098
      %v7100 = vpop.f32.mrf.mxu0
      %7101 = vdwg.mxu0
      %7102 = vmatpush.bf16.msra.mxu0 %v5102
      %7103 = vmatpush.bf16.msra.mxu0 %v5094
      %7104 = vmatpush.bf16.msra.mxu0 %v5086
      %7105 = vmatpush.bf16.msra.mxu0 %v5078
      %7106 = vmatpush.bf16.msra.mxu0 %v5070
      %7107 = vmatpush.bf16.msra.mxu0 %v5062
      %7108 = vmatpush.bf16.msra.mxu0 %v5054
      %7109 = vmatpush.bf16.msra.mxu0 %v5046
      %7110 = vmatmul.bf16.gmra.mxu0 %v1624
      %v7111 = vpop.f32.mrf.mxu0
      %v7112 = vadd.f32 %v7099, %v7111
      %v7113 = vpop.f32.mrf.mxu0
      %7114 = vdwg.mxu0
      %7115 = vmatpush.bf16.msra.mxu0 %v5166
      %7116 = vmatpush.bf16.msra.mxu0 %v5158
      %7117 = vmatpush.bf16.msra.mxu0 %v5150
      %7118 = vmatpush.bf16.msra.mxu0 %v5142
      %7119 = vmatpush.bf16.msra.mxu0 %v5134
      %7120 = vmatpush.bf16.msra.mxu0 %v5126
      %7121 = vmatpush.bf16.msra.mxu0 %v5118
      %7122 = vmatpush.bf16.msra.mxu0 %v5110
      %7123 = vmatmul.bf16.gmra.mxu0 %v1625
      %v7124 = vpop.f32.mrf.mxu0
      %v7125 = vadd.f32 %v7112, %v7124
      %v7126 = vpop.f32.mrf.mxu0
      %7127 = vdwg.mxu0
      %7128 = vmatpush.bf16.msra.mxu0 %v5230
      %7129 = vmatpush.bf16.msra.mxu0 %v5222
      %7130 = vmatpush.bf16.msra.mxu0 %v5214
      %7131 = vmatpush.bf16.msra.mxu0 %v5206
      %7132 = vmatpush.bf16.msra.mxu0 %v5198
      %7133 = vmatpush.bf16.msra.mxu0 %v5190
      %7134 = vmatpush.bf16.msra.mxu0 %v5182
      %7135 = vmatpush.bf16.msra.mxu0 %v5174
      %7136 = vmatmul.bf16.gmra.mxu0 %v1626
      %v7137 = vpop.f32.mrf.mxu0
      %v7138 = vadd.f32 %v7125, %v7137
      %v7139 = vpop.f32.mrf.mxu0
      %7140 = vdwg.mxu0
      %7141 = vmatpush.bf16.msra.mxu0 %v5294
      %7142 = vmatpush.bf16.msra.mxu0 %v5286
      %7143 = vmatpush.bf16.msra.mxu0 %v5278
      %7144 = vmatpush.bf16.msra.mxu0 %v5270
      %7145 = vmatpush.bf16.msra.mxu0 %v5262
      %7146 = vmatpush.bf16.msra.mxu0 %v5254
      %7147 = vmatpush.bf16.msra.mxu0 %v5246
      %7148 = vmatpush.bf16.msra.mxu0 %v5238
      %7149 = vmatmul.bf16.gmra.mxu0 %v1627
      %v7150 = vpop.f32.mrf.mxu0
      %v7151 = vadd.f32 %v7138, %v7150
      %v7152 = vpop.f32.mrf.mxu0
      %7153 = vdwg.mxu0
      %7154 = vmatpush.bf16.msra.mxu0 %v5358
      %7155 = vmatpush.bf16.msra.mxu0 %v5350
      %7156 = vmatpush.bf16.msra.mxu0 %v5342
      %7157 = vmatpush.bf16.msra.mxu0 %v5334
      %7158 = vmatpush.bf16.msra.mxu0 %v5326
      %7159 = vmatpush.bf16.msra.mxu0 %v5318
      %7160 = vmatpush.bf16.msra.mxu0 %v5310
      %7161 = vmatpush.bf16.msra.mxu0 %v5302
      %7162 = vmatmul.bf16.gmra.mxu0 %v1628
      %v7163 = vpop.f32.mrf.mxu0
      %v7164 = vadd.f32 %v7151, %v7163
      %v7165 = vpop.f32.mrf.mxu0
      %7166 = vdwg.mxu0
      %7167 = vmatpush.bf16.msra.mxu0 %v5422
      %7168 = vmatpush.bf16.msra.mxu0 %v5414
      %7169 = vmatpush.bf16.msra.mxu0 %v5406
      %7170 = vmatpush.bf16.msra.mxu0 %v5398
      %7171 = vmatpush.bf16.msra.mxu0 %v5390
      %7172 = vmatpush.bf16.msra.mxu0 %v5382
      %7173 = vmatpush.bf16.msra.mxu0 %v5374
      %7174 = vmatpush.bf16.msra.mxu0 %v5366
      %7175 = vmatmul.bf16.gmra.mxu0 %v1629
      %v7176 = vpop.f32.mrf.mxu0
      %v7177 = vadd.f32 %v7164, %v7176
      %v7178 = vpop.f32.mrf.mxu0
      %7179 = vdwg.mxu0
      %7180 = vmatpush.bf16.msra.mxu0 %v5486
      %7181 = vmatpush.bf16.msra.mxu0 %v5478
      %7182 = vmatpush.bf16.msra.mxu0 %v5470
      %7183 = vmatpush.bf16.msra.mxu0 %v5462
      %7184 = vmatpush.bf16.msra.mxu0 %v5454
      %7185 = vmatpush.bf16.msra.mxu0 %v5446
      %7186 = vmatpush.bf16.msra.mxu0 %v5438
      %7187 = vmatpush.bf16.msra.mxu0 %v5430
      %7188 = vmatmul.bf16.gmra.mxu0 %v1630
      %v7189 = vpop.f32.mrf.mxu0
      %v7190 = vadd.f32 %v7177, %v7189
      %v7191 = vpop.f32.mrf.mxu0
      %7192 = vdwg.mxu0
      %7193 = vmatpush.bf16.msra.mxu0 %v4783
      %7194 = vmatpush.bf16.msra.mxu0 %v4775
      %7195 = vmatpush.bf16.msra.mxu0 %v4767
      %7196 = vmatpush.bf16.msra.mxu0 %v4759
      %7197 = vmatpush.bf16.msra.mxu0 %v4751
      %7198 = vmatpush.bf16.msra.mxu0 %v4743
      %7199 = vmatpush.bf16.msra.mxu0 %v4735
      %7200 = vmatpush.bf16.msra.mxu0 %v4727
      %7201 = vmatmul.bf16.gmra.mxu0 %v1619
      %v7202 = vpop.f32.mrf.mxu0
      %v7203 = vadd.f32 %v2407, %v7202
      %v7204 = vpop.f32.mrf.mxu0
      %7205 = vdwg.mxu0
      %7206 = vmatpush.bf16.msra.mxu0 %v4847
      %7207 = vmatpush.bf16.msra.mxu0 %v4839
      %7208 = vmatpush.bf16.msra.mxu0 %v4831
      %7209 = vmatpush.bf16.msra.mxu0 %v4823
      %7210 = vmatpush.bf16.msra.mxu0 %v4815
      %7211 = vmatpush.bf16.msra.mxu0 %v4807
      %7212 = vmatpush.bf16.msra.mxu0 %v4799
      %7213 = vmatpush.bf16.msra.mxu0 %v4791
      %7214 = vmatmul.bf16.gmra.mxu0 %v1620
      %v7215 = vpop.f32.mrf.mxu0
      %v7216 = vadd.f32 %v7203, %v7215
      %v7217 = vpop.f32.mrf.mxu0
      %7218 = vdwg.mxu0
      %7219 = vmatpush.bf16.msra.mxu0 %v4911
      %7220 = vmatpush.bf16.msra.mxu0 %v4903
      %7221 = vmatpush.bf16.msra.mxu0 %v4895
      %7222 = vmatpush.bf16.msra.mxu0 %v4887
      %7223 = vmatpush.bf16.msra.mxu0 %v4879
      %7224 = vmatpush.bf16.msra.mxu0 %v4871
      %7225 = vmatpush.bf16.msra.mxu0 %v4863
      %7226 = vmatpush.bf16.msra.mxu0 %v4855
      %7227 = vmatmul.bf16.gmra.mxu0 %v1621
      %v7228 = vpop.f32.mrf.mxu0
      %v7229 = vadd.f32 %v7216, %v7228
      %v7230 = vpop.f32.mrf.mxu0
      %7231 = vdwg.mxu0
      %7232 = vmatpush.bf16.msra.mxu0 %v4975
      %7233 = vmatpush.bf16.msra.mxu0 %v4967
      %7234 = vmatpush.bf16.msra.mxu0 %v4959
      %7235 = vmatpush.bf16.msra.mxu0 %v4951
      %7236 = vmatpush.bf16.msra.mxu0 %v4943
      %7237 = vmatpush.bf16.msra.mxu0 %v4935
      %7238 = vmatpush.bf16.msra.mxu0 %v4927
      %7239 = vmatpush.bf16.msra.mxu0 %v4919
      %7240 = vmatmul.bf16.gmra.mxu0 %v1622
      %v7241 = vpop.f32.mrf.mxu0
      %v7242 = vadd.f32 %v7229, %v7241
      %v7243 = vpop.f32.mrf.mxu0
      %7244 = vdwg.mxu0
      %7245 = vmatpush.bf16.msra.mxu0 %v5039
      %7246 = vmatpush.bf16.msra.mxu0 %v5031
      %7247 = vmatpush.bf16.msra.mxu0 %v5023
      %7248 = vmatpush.bf16.msra.mxu0 %v5015
      %7249 = vmatpush.bf16.msra.mxu0 %v5007
      %7250 = vmatpush.bf16.msra.mxu0 %v4999
      %7251 = vmatpush.bf16.msra.mxu0 %v4991
      %7252 = vmatpush.bf16.msra.mxu0 %v4983
      %7253 = vmatmul.bf16.gmra.mxu0 %v1623
      %v7254 = vpop.f32.mrf.mxu0
      %v7255 = vadd.f32 %v7242, %v7254
      %v7256 = vpop.f32.mrf.mxu0
      %7257 = vdwg.mxu0
      %7258 = vmatpush.bf16.msra.mxu0 %v5103
      %7259 = vmatpush.bf16.msra.mxu0 %v5095
      %7260 = vmatpush.bf16.msra.mxu0 %v5087
      %7261 = vmatpush.bf16.msra.mxu0 %v5079
      %7262 = vmatpush.bf16.msra.mxu0 %v5071
      %7263 = vmatpush.bf16.msra.mxu0 %v5063
      %7264 = vmatpush.bf16.msra.mxu0 %v5055
      %7265 = vmatpush.bf16.msra.mxu0 %v5047
      %7266 = vmatmul.bf16.gmra.mxu0 %v1624
      %v7267 = vpop.f32.mrf.mxu0
      %v7268 = vadd.f32 %v7255, %v7267
      %v7269 = vpop.f32.mrf.mxu0
      %7270 = vdwg.mxu0
      %7271 = vmatpush.bf16.msra.mxu0 %v5167
      %7272 = vmatpush.bf16.msra.mxu0 %v5159
      %7273 = vmatpush.bf16.msra.mxu0 %v5151
      %7274 = vmatpush.bf16.msra.mxu0 %v5143
      %7275 = vmatpush.bf16.msra.mxu0 %v5135
      %7276 = vmatpush.bf16.msra.mxu0 %v5127
      %7277 = vmatpush.bf16.msra.mxu0 %v5119
      %7278 = vmatpush.bf16.msra.mxu0 %v5111
      %7279 = vmatmul.bf16.gmra.mxu0 %v1625
      %v7280 = vpop.f32.mrf.mxu0
      %v7281 = vadd.f32 %v7268, %v7280
      %v7282 = vpop.f32.mrf.mxu0
      %7283 = vdwg.mxu0
      %7284 = vmatpush.bf16.msra.mxu0 %v5231
      %7285 = vmatpush.bf16.msra.mxu0 %v5223
      %7286 = vmatpush.bf16.msra.mxu0 %v5215
      %7287 = vmatpush.bf16.msra.mxu0 %v5207
      %7288 = vmatpush.bf16.msra.mxu0 %v5199
      %7289 = vmatpush.bf16.msra.mxu0 %v5191
      %7290 = vmatpush.bf16.msra.mxu0 %v5183
      %7291 = vmatpush.bf16.msra.mxu0 %v5175
      %7292 = vmatmul.bf16.gmra.mxu0 %v1626
      %v7293 = vpop.f32.mrf.mxu0
      %v7294 = vadd.f32 %v7281, %v7293
      %v7295 = vpop.f32.mrf.mxu0
      %7296 = vdwg.mxu0
      %7297 = vmatpush.bf16.msra.mxu0 %v5295
      %7298 = vmatpush.bf16.msra.mxu0 %v5287
      %7299 = vmatpush.bf16.msra.mxu0 %v5279
      %7300 = vmatpush.bf16.msra.mxu0 %v5271
      %7301 = vmatpush.bf16.msra.mxu0 %v5263
      %7302 = vmatpush.bf16.msra.mxu0 %v5255
      %7303 = vmatpush.bf16.msra.mxu0 %v5247
      %7304 = vmatpush.bf16.msra.mxu0 %v5239
      %7305 = vmatmul.bf16.gmra.mxu0 %v1627
      %v7306 = vpop.f32.mrf.mxu0
      %v7307 = vadd.f32 %v7294, %v7306
      %v7308 = vpop.f32.mrf.mxu0
      %7309 = vdwg.mxu0
      %7310 = vmatpush.bf16.msra.mxu0 %v5359
      %7311 = vmatpush.bf16.msra.mxu0 %v5351
      %7312 = vmatpush.bf16.msra.mxu0 %v5343
      %7313 = vmatpush.bf16.msra.mxu0 %v5335
      %7314 = vmatpush.bf16.msra.mxu0 %v5327
      %7315 = vmatpush.bf16.msra.mxu0 %v5319
      %7316 = vmatpush.bf16.msra.mxu0 %v5311
      %7317 = vmatpush.bf16.msra.mxu0 %v5303
      %7318 = vmatmul.bf16.gmra.mxu0 %v1628
      %v7319 = vpop.f32.mrf.mxu0
      %v7320 = vadd.f32 %v7307, %v7319
      %v7321 = vpop.f32.mrf.mxu0
      %7322 = vdwg.mxu0
      %7323 = vmatpush.bf16.msra.mxu0 %v5423
      %7324 = vmatpush.bf16.msra.mxu0 %v5415
      %7325 = vmatpush.bf16.msra.mxu0 %v5407
      %7326 = vmatpush.bf16.msra.mxu0 %v5399
      %7327 = vmatpush.bf16.msra.mxu0 %v5391
      %7328 = vmatpush.bf16.msra.mxu0 %v5383
      %7329 = vmatpush.bf16.msra.mxu0 %v5375
      %7330 = vmatpush.bf16.msra.mxu0 %v5367
      %7331 = vmatmul.bf16.gmra.mxu0 %v1629
      %v7332 = vpop.f32.mrf.mxu0
      %v7333 = vadd.f32 %v7320, %v7332
      %v7334 = vpop.f32.mrf.mxu0
      %7335 = vdwg.mxu0
      %7336 = vmatpush.bf16.msra.mxu0 %v5487
      %7337 = vmatpush.bf16.msra.mxu0 %v5479
      %7338 = vmatpush.bf16.msra.mxu0 %v5471
      %7339 = vmatpush.bf16.msra.mxu0 %v5463
      %7340 = vmatpush.bf16.msra.mxu0 %v5455
      %7341 = vmatpush.bf16.msra.mxu0 %v5447
      %7342 = vmatpush.bf16.msra.mxu0 %v5439
      %7343 = vmatpush.bf16.msra.mxu0 %v5431
      %7344 = vmatmul.bf16.gmra.mxu0 %v1630
      %v7345 = vpop.f32.mrf.mxu0
      %v7346 = vadd.f32 %v7333, %v7345
      %v7347 = vpop.f32.mrf.mxu0
      %7348 = vdwg.mxu0
      %7349 = vmatpush.bf16.msra.mxu0 %v4784
      %7350 = vmatpush.bf16.msra.mxu0 %v4776
      %7351 = vmatpush.bf16.msra.mxu0 %v4768
      %7352 = vmatpush.bf16.msra.mxu0 %v4760
      %7353 = vmatpush.bf16.msra.mxu0 %v4752
      %7354 = vmatpush.bf16.msra.mxu0 %v4744
      %7355 = vmatpush.bf16.msra.mxu0 %v4736
      %7356 = vmatpush.bf16.msra.mxu0 %v4728
      %7357 = vmatmul.bf16.gmra.mxu0 %v1619
      %v7358 = vpop.f32.mrf.mxu0
      %v7359 = vadd.f32 %v2408, %v7358
      %v7360 = vpop.f32.mrf.mxu0
      %7361 = vdwg.mxu0
      %7362 = vmatpush.bf16.msra.mxu0 %v4848
      %7363 = vmatpush.bf16.msra.mxu0 %v4840
      %7364 = vmatpush.bf16.msra.mxu0 %v4832
      %7365 = vmatpush.bf16.msra.mxu0 %v4824
      %7366 = vmatpush.bf16.msra.mxu0 %v4816
      %7367 = vmatpush.bf16.msra.mxu0 %v4808
      %7368 = vmatpush.bf16.msra.mxu0 %v4800
      %7369 = vmatpush.bf16.msra.mxu0 %v4792
      %7370 = vmatmul.bf16.gmra.mxu0 %v1620
      %v7371 = vpop.f32.mrf.mxu0
      %v7372 = vadd.f32 %v7359, %v7371
      %v7373 = vpop.f32.mrf.mxu0
      %7374 = vdwg.mxu0
      %7375 = vmatpush.bf16.msra.mxu0 %v4912
      %7376 = vmatpush.bf16.msra.mxu0 %v4904
      %7377 = vmatpush.bf16.msra.mxu0 %v4896
      %7378 = vmatpush.bf16.msra.mxu0 %v4888
      %7379 = vmatpush.bf16.msra.mxu0 %v4880
      %7380 = vmatpush.bf16.msra.mxu0 %v4872
      %7381 = vmatpush.bf16.msra.mxu0 %v4864
      %7382 = vmatpush.bf16.msra.mxu0 %v4856
      %7383 = vmatmul.bf16.gmra.mxu0 %v1621
      %v7384 = vpop.f32.mrf.mxu0
      %v7385 = vadd.f32 %v7372, %v7384
      %v7386 = vpop.f32.mrf.mxu0
      %7387 = vdwg.mxu0
      %7388 = vmatpush.bf16.msra.mxu0 %v4976
      %7389 = vmatpush.bf16.msra.mxu0 %v4968
      %7390 = vmatpush.bf16.msra.mxu0 %v4960
      %7391 = vmatpush.bf16.msra.mxu0 %v4952
      %7392 = vmatpush.bf16.msra.mxu0 %v4944
      %7393 = vmatpush.bf16.msra.mxu0 %v4936
      %7394 = vmatpush.bf16.msra.mxu0 %v4928
      %7395 = vmatpush.bf16.msra.mxu0 %v4920
      %7396 = vmatmul.bf16.gmra.mxu0 %v1622
      %v7397 = vpop.f32.mrf.mxu0
      %v7398 = vadd.f32 %v7385, %v7397
      %v7399 = vpop.f32.mrf.mxu0
      %7400 = vdwg.mxu0
      %7401 = vmatpush.bf16.msra.mxu0 %v5040
      %7402 = vmatpush.bf16.msra.mxu0 %v5032
      %7403 = vmatpush.bf16.msra.mxu0 %v5024
      %7404 = vmatpush.bf16.msra.mxu0 %v5016
      %7405 = vmatpush.bf16.msra.mxu0 %v5008
      %7406 = vmatpush.bf16.msra.mxu0 %v5000
      %7407 = vmatpush.bf16.msra.mxu0 %v4992
      %7408 = vmatpush.bf16.msra.mxu0 %v4984
      %7409 = vmatmul.bf16.gmra.mxu0 %v1623
      %v7410 = vpop.f32.mrf.mxu0
      %v7411 = vadd.f32 %v7398, %v7410
      %v7412 = vpop.f32.mrf.mxu0
      %7413 = vdwg.mxu0
      %7414 = vmatpush.bf16.msra.mxu0 %v5104
      %7415 = vmatpush.bf16.msra.mxu0 %v5096
      %7416 = vmatpush.bf16.msra.mxu0 %v5088
      %7417 = vmatpush.bf16.msra.mxu0 %v5080
      %7418 = vmatpush.bf16.msra.mxu0 %v5072
      %7419 = vmatpush.bf16.msra.mxu0 %v5064
      %7420 = vmatpush.bf16.msra.mxu0 %v5056
      %7421 = vmatpush.bf16.msra.mxu0 %v5048
      %7422 = vmatmul.bf16.gmra.mxu0 %v1624
      %v7423 = vpop.f32.mrf.mxu0
      %v7424 = vadd.f32 %v7411, %v7423
      %v7425 = vpop.f32.mrf.mxu0
      %7426 = vdwg.mxu0
      %7427 = vmatpush.bf16.msra.mxu0 %v5168
      %7428 = vmatpush.bf16.msra.mxu0 %v5160
      %7429 = vmatpush.bf16.msra.mxu0 %v5152
      %7430 = vmatpush.bf16.msra.mxu0 %v5144
      %7431 = vmatpush.bf16.msra.mxu0 %v5136
      %7432 = vmatpush.bf16.msra.mxu0 %v5128
      %7433 = vmatpush.bf16.msra.mxu0 %v5120
      %7434 = vmatpush.bf16.msra.mxu0 %v5112
      %7435 = vmatmul.bf16.gmra.mxu0 %v1625
      %v7436 = vpop.f32.mrf.mxu0
      %v7437 = vadd.f32 %v7424, %v7436
      %v7438 = vpop.f32.mrf.mxu0
      %7439 = vdwg.mxu0
      %7440 = vmatpush.bf16.msra.mxu0 %v5232
      %7441 = vmatpush.bf16.msra.mxu0 %v5224
      %7442 = vmatpush.bf16.msra.mxu0 %v5216
      %7443 = vmatpush.bf16.msra.mxu0 %v5208
      %7444 = vmatpush.bf16.msra.mxu0 %v5200
      %7445 = vmatpush.bf16.msra.mxu0 %v5192
      %7446 = vmatpush.bf16.msra.mxu0 %v5184
      %7447 = vmatpush.bf16.msra.mxu0 %v5176
      %7448 = vmatmul.bf16.gmra.mxu0 %v1626
      %v7449 = vpop.f32.mrf.mxu0
      %v7450 = vadd.f32 %v7437, %v7449
      %v7451 = vpop.f32.mrf.mxu0
      %7452 = vdwg.mxu0
      %7453 = vmatpush.bf16.msra.mxu0 %v5296
      %7454 = vmatpush.bf16.msra.mxu0 %v5288
      %7455 = vmatpush.bf16.msra.mxu0 %v5280
      %7456 = vmatpush.bf16.msra.mxu0 %v5272
      %7457 = vmatpush.bf16.msra.mxu0 %v5264
      %7458 = vmatpush.bf16.msra.mxu0 %v5256
      %7459 = vmatpush.bf16.msra.mxu0 %v5248
      %7460 = vmatpush.bf16.msra.mxu0 %v5240
      %7461 = vmatmul.bf16.gmra.mxu0 %v1627
      %v7462 = vpop.f32.mrf.mxu0
      %v7463 = vadd.f32 %v7450, %v7462
      %v7464 = vpop.f32.mrf.mxu0
      %7465 = vdwg.mxu0
      %7466 = vmatpush.bf16.msra.mxu0 %v5360
      %7467 = vmatpush.bf16.msra.mxu0 %v5352
      %7468 = vmatpush.bf16.msra.mxu0 %v5344
      %7469 = vmatpush.bf16.msra.mxu0 %v5336
      %7470 = vmatpush.bf16.msra.mxu0 %v5328
      %7471 = vmatpush.bf16.msra.mxu0 %v5320
      %7472 = vmatpush.bf16.msra.mxu0 %v5312
      %7473 = vmatpush.bf16.msra.mxu0 %v5304
      %7474 = vmatmul.bf16.gmra.mxu0 %v1628
      %v7475 = vpop.f32.mrf.mxu0
      %v7476 = vadd.f32 %v7463, %v7475
      %v7477 = vpop.f32.mrf.mxu0
      %7478 = vdwg.mxu0
      %7479 = vmatpush.bf16.msra.mxu0 %v5424
      %7480 = vmatpush.bf16.msra.mxu0 %v5416
      %7481 = vmatpush.bf16.msra.mxu0 %v5408
      %7482 = vmatpush.bf16.msra.mxu0 %v5400
      %7483 = vmatpush.bf16.msra.mxu0 %v5392
      %7484 = vmatpush.bf16.msra.mxu0 %v5384
      %7485 = vmatpush.bf16.msra.mxu0 %v5376
      %7486 = vmatpush.bf16.msra.mxu0 %v5368
      %7487 = vmatmul.bf16.gmra.mxu0 %v1629
      %v7488 = vpop.f32.mrf.mxu0
      %v7489 = vadd.f32 %v7476, %v7488
      %v7490 = vpop.f32.mrf.mxu0
      %7491 = vdwg.mxu0
      %7492 = vmatpush.bf16.msra.mxu0 %v5488
      %7493 = vmatpush.bf16.msra.mxu0 %v5480
      %7494 = vmatpush.bf16.msra.mxu0 %v5472
      %7495 = vmatpush.bf16.msra.mxu0 %v5464
      %7496 = vmatpush.bf16.msra.mxu0 %v5456
      %7497 = vmatpush.bf16.msra.mxu0 %v5448
      %7498 = vmatpush.bf16.msra.mxu0 %v5440
      %7499 = vmatpush.bf16.msra.mxu0 %v5432
      %7500 = vmatmul.bf16.gmra.mxu0 %v1630
      %v7501 = vpop.f32.mrf.mxu0
      %v7502 = vadd.f32 %v7489, %v7501
      %v7503 = vpop.f32.mrf.mxu0
      %7504 = vdwg.mxu0
      %v7505 = vmul.f32 %v6410, 0.5
      %v7506 = vmul.f32 %v6566, 0.5
      %v7507 = vmul.f32 %v6722, 0.5
      %v7508 = vmul.f32 %v6878, 0.5
      %v7509 = vmul.f32 %v7034, 0.5
      %v7510 = vmul.f32 %v7190, 0.5
      %v7511 = vmul.f32 %v7346, 0.5
      %v7512 = vmul.f32 %v7502, 0.5
      %v7513 = vmul.f32 %v6410, 0.70710677
      %v7514 = vmul.f32 %v6566, 0.70710677
      %v7515 = vmul.f32 %v6722, 0.70710677
      %v7516 = vmul.f32 %v6878, 0.70710677
      %v7517 = vmul.f32 %v7034, 0.70710677
      %v7518 = vmul.f32 %v7190, 0.70710677
      %v7519 = vmul.f32 %v7346, 0.70710677
      %v7520 = vmul.f32 %v7502, 0.70710677
      %v7521 = vmul.f32 %v7513, %v7513
      %v7522 = vmin.f32 16.0, %v7521
      %v7523 = vmul.f32 %v7522, 2.1237322e-06
      %v7524 = vadd.f32 %v7523, 0.00028619796
      %v7525 = vmul.f32 %v7522, %v7524
      %v7526 = vadd.f32 %v7525, 0.0036580483
      %v7527 = vmul.f32 %v7522, %v7526
      %v7528 = vadd.f32 %v7527, 0.05243302
      %v7529 = vmul.f32 %v7522, %v7528
      %v7530 = vadd.f32 %v7529, 0.18741608
      %v7531 = vmul.f32 %v7522, %v7530
      %v7532 = vadd.f32 %v7531, 1.1283791
      %v7533 = vmul.f32 %v7513, %v7532
      %v7534 = vmul.f32 %v7522, 3.8918573e-05
      %v7535 = vadd.f32 %v7534, 0.001143296
      %v7536 = vmul.f32 %v7522, %v7535
      %v7537 = vadd.f32 %v7536, 0.014752088
      %v7538 = vmul.f32 %v7522, %v7537
      %v7539 = vadd.f32 %v7538, 0.112945676
      %v7540 = vmul.f32 %v7522, %v7539
      %v7541 = vadd.f32 %v7540, 0.4994258
      %v7542 = vmul.f32 %v7522, %v7541
      %v7543 = vadd.f32 %v7542, 1.0
      %v7544 = vrcp.pop %v7543
      %v7545 = vmul.f32 %v7543, %v7544
      %v7546 = vsub.f32 1.0, %v7545
      %v7547 = vmul.f32 %v7544, %v7546
      %v7548 = vadd.f32 %v7544, %v7547
      %vm7549 = vweird.f32 %v7543
      %vm7550 = vweird.f32 %v7544
      %vm7551 = vmor %vm7549, %vm7550
      %v7552 = vsel %vm7551, %v7544, %v7548
      %v7553 = vand.u32 2147483647, %v7543
      %vm7554 = vcmp.eq.f32.partialorder %v7553, 8.507059e+37
      %v7555 = vand.u32 %v7543, 2147483648
      %v7556 = vor.u32 1.1754944e-38, %v7555
      %v7557 = vsel %vm7554, %v7556, %v7552
      %v7558 = vmul.f32 %v7533, %v7557
      %v7559 = vmin.f32 %v7558, 1.0
      %v7560 = vmax.f32 %v7559, -1.0
      %v7561 = vmul.f32 %v7514, %v7514
      %v7562 = vmin.f32 16.0, %v7561
      %v7563 = vmul.f32 %v7562, 2.1237322e-06
      %v7564 = vadd.f32 %v7563, 0.00028619796
      %v7565 = vmul.f32 %v7562, %v7564
      %v7566 = vadd.f32 %v7565, 0.0036580483
      %v7567 = vmul.f32 %v7562, %v7566
      %v7568 = vadd.f32 %v7567, 0.05243302
      %v7569 = vmul.f32 %v7562, %v7568
      %v7570 = vadd.f32 %v7569, 0.18741608
      %v7571 = vmul.f32 %v7562, %v7570
      %v7572 = vadd.f32 %v7571, 1.1283791
      %v7573 = vmul.f32 %v7514, %v7572
      %v7574 = vmul.f32 %v7562, 3.8918573e-05
      %v7575 = vadd.f32 %v7574, 0.001143296
      %v7576 = vmul.f32 %v7562, %v7575
      %v7577 = vadd.f32 %v7576, 0.014752088
      %v7578 = vmul.f32 %v7562, %v7577
      %v7579 = vadd.f32 %v7578, 0.112945676
      %v7580 = vmul.f32 %v7562, %v7579
      %v7581 = vadd.f32 %v7580, 0.4994258
      %v7582 = vmul.f32 %v7562, %v7581
      %v7583 = vadd.f32 %v7582, 1.0
      %v7584 = vrcp.pop %v7583
      %v7585 = vmul.f32 %v7583, %v7584
      %v7586 = vsub.f32 1.0, %v7585
      %v7587 = vmul.f32 %v7584, %v7586
      %v7588 = vadd.f32 %v7584, %v7587
      %vm7589 = vweird.f32 %v7583
      %vm7590 = vweird.f32 %v7584
      %vm7591 = vmor %vm7589, %vm7590
      %v7592 = vsel %vm7591, %v7584, %v7588
      %v7593 = vand.u32 2147483647, %v7583
      %vm7594 = vcmp.eq.f32.partialorder %v7593, 8.507059e+37
      %v7595 = vand.u32 %v7583, 2147483648
      %v7596 = vor.u32 1.1754944e-38, %v7595
      %v7597 = vsel %vm7594, %v7596, %v7592
      %v7598 = vmul.f32 %v7573, %v7597
      %v7599 = vmin.f32 %v7598, 1.0
      %v7600 = vmax.f32 %v7599, -1.0
      %v7601 = vmul.f32 %v7515, %v7515
      %v7602 = vmin.f32 16.0, %v7601
      %v7603 = vmul.f32 %v7602, 2.1237322e-06
      %v7604 = vadd.f32 %v7603, 0.00028619796
      %v7605 = vmul.f32 %v7602, %v7604
      %v7606 = vadd.f32 %v7605, 0.0036580483
      %v7607 = vmul.f32 %v7602, %v7606
      %v7608 = vadd.f32 %v7607, 0.05243302
      %v7609 = vmul.f32 %v7602, %v7608
      %v7610 = vadd.f32 %v7609, 0.18741608
      %v7611 = vmul.f32 %v7602, %v7610
      %v7612 = vadd.f32 %v7611, 1.1283791
      %v7613 = vmul.f32 %v7515, %v7612
      %v7614 = vmul.f32 %v7602, 3.8918573e-05
      %v7615 = vadd.f32 %v7614, 0.001143296
      %v7616 = vmul.f32 %v7602, %v7615
      %v7617 = vadd.f32 %v7616, 0.014752088
      %v7618 = vmul.f32 %v7602, %v7617
      %v7619 = vadd.f32 %v7618, 0.112945676
      %v7620 = vmul.f32 %v7602, %v7619
      %v7621 = vadd.f32 %v7620, 0.4994258
      %v7622 = vmul.f32 %v7602, %v7621
      %v7623 = vadd.f32 %v7622, 1.0
      %v7624 = vrcp.pop %v7623
      %v7625 = vmul.f32 %v7623, %v7624
      %v7626 = vsub.f32 1.0, %v7625
      %v7627 = vmul.f32 %v7624, %v7626
      %v7628 = vadd.f32 %v7624, %v7627
      %vm7629 = vweird.f32 %v7623
      %vm7630 = vweird.f32 %v7624
      %vm7631 = vmor %vm7629, %vm7630
      %v7632 = vsel %vm7631, %v7624, %v7628
      %v7633 = vand.u32 2147483647, %v7623
      %vm7634 = vcmp.eq.f32.partialorder %v7633, 8.507059e+37
      %v7635 = vand.u32 %v7623, 2147483648
      %v7636 = vor.u32 1.1754944e-38, %v7635
      %v7637 = vsel %vm7634, %v7636, %v7632
      %v7638 = vmul.f32 %v7613, %v7637
      %v7639 = vmin.f32 %v7638, 1.0
      %v7640 = vmax.f32 %v7639, -1.0
      %v7641 = vmul.f32 %v7516, %v7516
      %v7642 = vmin.f32 16.0, %v7641
      %v7643 = vmul.f32 %v7642, 2.1237322e-06
      %v7644 = vadd.f32 %v7643, 0.00028619796
      %v7645 = vmul.f32 %v7642, %v7644
      %v7646 = vadd.f32 %v7645, 0.0036580483
      %v7647 = vmul.f32 %v7642, %v7646
      %v7648 = vadd.f32 %v7647, 0.05243302
      %v7649 = vmul.f32 %v7642, %v7648
      %v7650 = vadd.f32 %v7649, 0.18741608
      %v7651 = vmul.f32 %v7642, %v7650
      %v7652 = vadd.f32 %v7651, 1.1283791
      %v7653 = vmul.f32 %v7516, %v7652
      %v7654 = vmul.f32 %v7642, 3.8918573e-05
      %v7655 = vadd.f32 %v7654, 0.001143296
      %v7656 = vmul.f32 %v7642, %v7655
      %v7657 = vadd.f32 %v7656, 0.014752088
      %v7658 = vmul.f32 %v7642, %v7657
      %v7659 = vadd.f32 %v7658, 0.112945676
      %v7660 = vmul.f32 %v7642, %v7659
      %v7661 = vadd.f32 %v7660, 0.4994258
      %v7662 = vmul.f32 %v7642, %v7661
      %v7663 = vadd.f32 %v7662, 1.0
      %v7664 = vrcp.pop %v7663
      %v7665 = vmul.f32 %v7663, %v7664
      %v7666 = vsub.f32 1.0, %v7665
      %v7667 = vmul.f32 %v7664, %v7666
      %v7668 = vadd.f32 %v7664, %v7667
      %vm7669 = vweird.f32 %v7663
      %vm7670 = vweird.f32 %v7664
      %vm7671 = vmor %vm7669, %vm7670
      %v7672 = vsel %vm7671, %v7664, %v7668
      %v7673 = vand.u32 2147483647, %v7663
      %vm7674 = vcmp.eq.f32.partialorder %v7673, 8.507059e+37
      %v7675 = vand.u32 %v7663, 2147483648
      %v7676 = vor.u32 1.1754944e-38, %v7675
      %v7677 = vsel %vm7674, %v7676, %v7672
      %v7678 = vmul.f32 %v7653, %v7677
      %v7679 = vmin.f32 %v7678, 1.0
      %v7680 = vmax.f32 %v7679, -1.0
      %v7681 = vmul.f32 %v7517, %v7517
      %v7682 = vmin.f32 16.0, %v7681
      %v7683 = vmul.f32 %v7682, 2.1237322e-06
      %v7684 = vadd.f32 %v7683, 0.00028619796
      %v7685 = vmul.f32 %v7682, %v7684
      %v7686 = vadd.f32 %v7685, 0.0036580483
      %v7687 = vmul.f32 %v7682, %v7686
      %v7688 = vadd.f32 %v7687, 0.05243302
      %v7689 = vmul.f32 %v7682, %v7688
      %v7690 = vadd.f32 %v7689, 0.18741608
      %v7691 = vmul.f32 %v7682, %v7690
      %v7692 = vadd.f32 %v7691, 1.1283791
      %v7693 = vmul.f32 %v7517, %v7692
      %v7694 = vmul.f32 %v7682, 3.8918573e-05
      %v7695 = vadd.f32 %v7694, 0.001143296
      %v7696 = vmul.f32 %v7682, %v7695
      %v7697 = vadd.f32 %v7696, 0.014752088
      %v7698 = vmul.f32 %v7682, %v7697
      %v7699 = vadd.f32 %v7698, 0.112945676
      %v7700 = vmul.f32 %v7682, %v7699
      %v7701 = vadd.f32 %v7700, 0.4994258
      %v7702 = vmul.f32 %v7682, %v7701
      %v7703 = vadd.f32 %v7702, 1.0
      %v7704 = vrcp.pop %v7703
      %v7705 = vmul.f32 %v7703, %v7704
      %v7706 = vsub.f32 1.0, %v7705
      %v7707 = vmul.f32 %v7704, %v7706
      %v7708 = vadd.f32 %v7704, %v7707
      %vm7709 = vweird.f32 %v7703
      %vm7710 = vweird.f32 %v7704
      %vm7711 = vmor %vm7709, %vm7710
      %v7712 = vsel %vm7711, %v7704, %v7708
      %v7713 = vand.u32 2147483647, %v7703
      %vm7714 = vcmp.eq.f32.partialorder %v7713, 8.507059e+37
      %v7715 = vand.u32 %v7703, 2147483648
      %v7716 = vor.u32 1.1754944e-38, %v7715
      %v7717 = vsel %vm7714, %v7716, %v7712
      %v7718 = vmul.f32 %v7693, %v7717
      %v7719 = vmin.f32 %v7718, 1.0
      %v7720 = vmax.f32 %v7719, -1.0
      %v7721 = vmul.f32 %v7518, %v7518
      %v7722 = vmin.f32 16.0, %v7721
      %v7723 = vmul.f32 %v7722, 2.1237322e-06
      %v7724 = vadd.f32 %v7723, 0.00028619796
      %v7725 = vmul.f32 %v7722, %v7724
      %v7726 = vadd.f32 %v7725, 0.0036580483
      %v7727 = vmul.f32 %v7722, %v7726
      %v7728 = vadd.f32 %v7727, 0.05243302
      %v7729 = vmul.f32 %v7722, %v7728
      %v7730 = vadd.f32 %v7729, 0.18741608
      %v7731 = vmul.f32 %v7722, %v7730
      %v7732 = vadd.f32 %v7731, 1.1283791
      %v7733 = vmul.f32 %v7518, %v7732
      %v7734 = vmul.f32 %v7722, 3.8918573e-05
      %v7735 = vadd.f32 %v7734, 0.001143296
      %v7736 = vmul.f32 %v7722, %v7735
      %v7737 = vadd.f32 %v7736, 0.014752088
      %v7738 = vmul.f32 %v7722, %v7737
      %v7739 = vadd.f32 %v7738, 0.112945676
      %v7740 = vmul.f32 %v7722, %v7739
      %v7741 = vadd.f32 %v7740, 0.4994258
      %v7742 = vmul.f32 %v7722, %v7741
      %v7743 = vadd.f32 %v7742, 1.0
      %v7744 = vrcp.pop %v7743
      %v7745 = vmul.f32 %v7743, %v7744
      %v7746 = vsub.f32 1.0, %v7745
      %v7747 = vmul.f32 %v7744, %v7746
      %v7748 = vadd.f32 %v7744, %v7747
      %vm7749 = vweird.f32 %v7743
      %vm7750 = vweird.f32 %v7744
      %vm7751 = vmor %vm7749, %vm7750
      %v7752 = vsel %vm7751, %v7744, %v7748
      %v7753 = vand.u32 2147483647, %v7743
      %vm7754 = vcmp.eq.f32.partialorder %v7753, 8.507059e+37
      %v7755 = vand.u32 %v7743, 2147483648
      %v7756 = vor.u32 1.1754944e-38, %v7755
      %v7757 = vsel %vm7754, %v7756, %v7752
      %v7758 = vmul.f32 %v7733, %v7757
      %v7759 = vmin.f32 %v7758, 1.0
      %v7760 = vmax.f32 %v7759, -1.0
      %v7761 = vmul.f32 %v7519, %v7519
      %v7762 = vmin.f32 16.0, %v7761
      %v7763 = vmul.f32 %v7762, 2.1237322e-06
      %v7764 = vadd.f32 %v7763, 0.00028619796
      %v7765 = vmul.f32 %v7762, %v7764
      %v7766 = vadd.f32 %v7765, 0.0036580483
      %v7767 = vmul.f32 %v7762, %v7766
      %v7768 = vadd.f32 %v7767, 0.05243302
      %v7769 = vmul.f32 %v7762, %v7768
      %v7770 = vadd.f32 %v7769, 0.18741608
      %v7771 = vmul.f32 %v7762, %v7770
      %v7772 = vadd.f32 %v7771, 1.1283791
      %v7773 = vmul.f32 %v7519, %v7772
      %v7774 = vmul.f32 %v7762, 3.8918573e-05
      %v7775 = vadd.f32 %v7774, 0.001143296
      %v7776 = vmul.f32 %v7762, %v7775
      %v7777 = vadd.f32 %v7776, 0.014752088
      %v7778 = vmul.f32 %v7762, %v7777
      %v7779 = vadd.f32 %v7778, 0.112945676
      %v7780 = vmul.f32 %v7762, %v7779
      %v7781 = vadd.f32 %v7780, 0.4994258
      %v7782 = vmul.f32 %v7762, %v7781
      %v7783 = vadd.f32 %v7782, 1.0
      %v7784 = vrcp.pop %v7783
      %v7785 = vmul.f32 %v7783, %v7784
      %v7786 = vsub.f32 1.0, %v7785
      %v7787 = vmul.f32 %v7784, %v7786
      %v7788 = vadd.f32 %v7784, %v7787
      %vm7789 = vweird.f32 %v7783
      %vm7790 = vweird.f32 %v7784
      %vm7791 = vmor %vm7789, %vm7790
      %v7792 = vsel %vm7791, %v7784, %v7788
      %v7793 = vand.u32 2147483647, %v7783
      %vm7794 = vcmp.eq.f32.partialorder %v7793, 8.507059e+37
      %v7795 = vand.u32 %v7783, 2147483648
      %v7796 = vor.u32 1.1754944e-38, %v7795
      %v7797 = vsel %vm7794, %v7796, %v7792
      %v7798 = vmul.f32 %v7773, %v7797
      %v7799 = vmin.f32 %v7798, 1.0
      %v7800 = vmax.f32 %v7799, -1.0
      %v7801 = vmul.f32 %v7520, %v7520
      %v7802 = vmin.f32 16.0, %v7801
      %v7803 = vmul.f32 %v7802, 2.1237322e-06
      %v7804 = vadd.f32 %v7803, 0.00028619796
      %v7805 = vmul.f32 %v7802, %v7804
      %v7806 = vadd.f32 %v7805, 0.0036580483
      %v7807 = vmul.f32 %v7802, %v7806
      %v7808 = vadd.f32 %v7807, 0.05243302
      %v7809 = vmul.f32 %v7802, %v7808
      %v7810 = vadd.f32 %v7809, 0.18741608
      %v7811 = vmul.f32 %v7802, %v7810
      %v7812 = vadd.f32 %v7811, 1.1283791
      %v7813 = vmul.f32 %v7520, %v7812
      %v7814 = vmul.f32 %v7802, 3.8918573e-05
      %v7815 = vadd.f32 %v7814, 0.001143296
      %v7816 = vmul.f32 %v7802, %v7815
      %v7817 = vadd.f32 %v7816, 0.014752088
      %v7818 = vmul.f32 %v7802, %v7817
      %v7819 = vadd.f32 %v7818, 0.112945676
      %v7820 = vmul.f32 %v7802, %v7819
      %v7821 = vadd.f32 %v7820, 0.4994258
      %v7822 = vmul.f32 %v7802, %v7821
      %v7823 = vadd.f32 %v7822, 1.0
      %v7824 = vrcp.pop %v7823
      %v7825 = vmul.f32 %v7823, %v7824
      %v7826 = vsub.f32 1.0, %v7825
      %v7827 = vmul.f32 %v7824, %v7826
      %v7828 = vadd.f32 %v7824, %v7827
      %vm7829 = vweird.f32 %v7823
      %vm7830 = vweird.f32 %v7824
      %vm7831 = vmor %vm7829, %vm7830
      %v7832 = vsel %vm7831, %v7824, %v7828
      %v7833 = vand.u32 2147483647, %v7823
      %vm7834 = vcmp.eq.f32.partialorder %v7833, 8.507059e+37
      %v7835 = vand.u32 %v7823, 2147483648
      %v7836 = vor.u32 1.1754944e-38, %v7835
      %v7837 = vsel %vm7834, %v7836, %v7832
      %v7838 = vmul.f32 %v7813, %v7837
      %v7839 = vmin.f32 %v7838, 1.0
      %v7840 = vmax.f32 %v7839, -1.0
      %v7841 = vadd.f32 %v7560, 1.0
      %v7842 = vadd.f32 %v7600, 1.0
      %v7843 = vadd.f32 %v7640, 1.0
      %v7844 = vadd.f32 %v7680, 1.0
      %v7845 = vadd.f32 %v7720, 1.0
      %v7846 = vadd.f32 %v7760, 1.0
      %v7847 = vadd.f32 %v7800, 1.0
      %v7848 = vadd.f32 %v7840, 1.0
      %v7849 = vmul.f32 %v7505, %v7841
      %v7850 = vmul.f32 %v7506, %v7842
      %v7851 = vmul.f32 %v7507, %v7843
      %v7852 = vmul.f32 %v7508, %v7844
      %v7853 = vmul.f32 %v7509, %v7845
      %v7854 = vmul.f32 %v7510, %v7846
      %v7855 = vmul.f32 %v7511, %v7847
      %v7856 = vmul.f32 %v7512, %v7848
      %v7857 = vpack.c.bf16 %v7849, %v7849
      %v7858 = vpack.c.bf16 %v7850, %v7850
      %v7859 = vpack.c.bf16 %v7851, %v7851
      %v7860 = vpack.c.bf16 %v7852, %v7852
      %v7861 = vpack.c.bf16 %v7853, %v7853
      %v7862 = vpack.c.bf16 %v7854, %v7854
      %v7863 = vpack.c.bf16 %v7855, %v7855
      %v7864 = vpack.c.bf16 %v7856, %v7856
      %v7865 = vld [vmem:[#allocation18] sm:$0xf]
      %v7866 = vld [vmem:[#allocation18 + $0x4] sm:$0xf]
      %v7867 = vld [vmem:[#allocation18 + $0x8] sm:$0xf]
      %v7868 = vld [vmem:[#allocation18 + $0xc] sm:$0xf]
      %v7869 = vld [vmem:[#allocation18 + $0x10] sm:$0xf]
      %v7870 = vld [vmem:[#allocation18 + $0x14] sm:$0xf]
      %v7871 = vld [vmem:[#allocation18 + $0x18] sm:$0xf]
      %v7872 = vld [vmem:[#allocation18 + $0x1c] sm:$0xf]
      %v7873 = vld [vmem:[#allocation18 + $0x20] sm:$0xf]
      %v7874 = vld [vmem:[#allocation18 + $0x24] sm:$0xf]
      %v7875 = vld [vmem:[#allocation18 + $0x28] sm:$0xf]
      %v7876 = vld [vmem:[#allocation18 + $0x2c] sm:$0xf]
      %v7877 = vld [vmem:[#allocation18 + $0x30] sm:$0xf]
      %v7878 = vld [vmem:[#allocation18 + $0x34] sm:$0xf]
      %v7879 = vld [vmem:[#allocation18 + $0x38] sm:$0xf]
      %v7880 = vld [vmem:[#allocation18 + $0x3c] sm:$0xf]
      %v7881 = vld [vmem:[#allocation18 + $0x40] sm:$0xf]
      %v7882 = vld [vmem:[#allocation18 + $0x44] sm:$0xf]
      %v7883 = vld [vmem:[#allocation18 + $0x48] sm:$0xf]
      %v7884 = vld [vmem:[#allocation18 + $0x4c] sm:$0xf]
      %v7885 = vld [vmem:[#allocation18 + $0x50] sm:$0xf]
      %v7886 = vld [vmem:[#allocation18 + $0x54] sm:$0xf]
      %v7887 = vld [vmem:[#allocation18 + $0x58] sm:$0xf]
      %v7888 = vld [vmem:[#allocation18 + $0x5c] sm:$0xf]
      %v7889 = vld [vmem:[#allocation18 + $0x60] sm:$0xf]
      %v7890 = vld [vmem:[#allocation18 + $0x64] sm:$0xf]
      %v7891 = vld [vmem:[#allocation18 + $0x68] sm:$0xf]
      %v7892 = vld [vmem:[#allocation18 + $0x6c] sm:$0xf]
      %v7893 = vld [vmem:[#allocation18 + $0x70] sm:$0xf]
      %v7894 = vld [vmem:[#allocation18 + $0x74] sm:$0xf]
      %v7895 = vld [vmem:[#allocation18 + $0x78] sm:$0xf]
      %v7896 = vld [vmem:[#allocation18 + $0x7c] sm:$0xf]
      %v7897 = vld [vmem:[#allocation18 + $0x80] sm:$0xf]
      %v7898 = vld [vmem:[#allocation18 + $0x84] sm:$0xf]
      %v7899 = vld [vmem:[#allocation18 + $0x88] sm:$0xf]
      %v7900 = vld [vmem:[#allocation18 + $0x8c] sm:$0xf]
      %v7901 = vld [vmem:[#allocation18 + $0x90] sm:$0xf]
      %v7902 = vld [vmem:[#allocation18 + $0x94] sm:$0xf]
      %v7903 = vld [vmem:[#allocation18 + $0x98] sm:$0xf]
      %v7904 = vld [vmem:[#allocation18 + $0x9c] sm:$0xf]
      %v7905 = vld [vmem:[#allocation18 + $0xa0] sm:$0xf]
      %v7906 = vld [vmem:[#allocation18 + $0xa4] sm:$0xf]
      %v7907 = vld [vmem:[#allocation18 + $0xa8] sm:$0xf]
      %v7908 = vld [vmem:[#allocation18 + $0xac] sm:$0xf]
      %v7909 = vld [vmem:[#allocation18 + $0xb0] sm:$0xf]
      %v7910 = vld [vmem:[#allocation18 + $0xb4] sm:$0xf]
      %v7911 = vld [vmem:[#allocation18 + $0xb8] sm:$0xf]
      %v7912 = vld [vmem:[#allocation18 + $0xbc] sm:$0xf]
      %v7913 = vld [vmem:[#allocation18 + $0xc0] sm:$0xf]
      %v7914 = vld [vmem:[#allocation18 + $0xc4] sm:$0xf]
      %v7915 = vld [vmem:[#allocation18 + $0xc8] sm:$0xf]
      %v7916 = vld [vmem:[#allocation18 + $0xcc] sm:$0xf]
      %v7917 = vld [vmem:[#allocation18 + $0xd0] sm:$0xf]
      %v7918 = vld [vmem:[#allocation18 + $0xd4] sm:$0xf]
      %v7919 = vld [vmem:[#allocation18 + $0xd8] sm:$0xf]
      %v7920 = vld [vmem:[#allocation18 + $0xdc] sm:$0xf]
      %v7921 = vld [vmem:[#allocation18 + $0xe0] sm:$0xf]
      %v7922 = vld [vmem:[#allocation18 + $0xe4] sm:$0xf]
      %v7923 = vld [vmem:[#allocation18 + $0xe8] sm:$0xf]
      %v7924 = vld [vmem:[#allocation18 + $0xec] sm:$0xf]
      %v7925 = vld [vmem:[#allocation18 + $0xf0] sm:$0xf]
      %v7926 = vld [vmem:[#allocation18 + $0xf4] sm:$0xf]
      %v7927 = vld [vmem:[#allocation18 + $0xf8] sm:$0xf]
      %v7928 = vld [vmem:[#allocation18 + $0xfc] sm:$0xf]
      %v7929 = vld [vmem:[#allocation18 + $0x100] sm:$0xf]
      %v7930 = vld [vmem:[#allocation18 + $0x104] sm:$0xf]
      %v7931 = vld [vmem:[#allocation18 + $0x108] sm:$0xf]
      %v7932 = vld [vmem:[#allocation18 + $0x10c] sm:$0xf]
      %v7933 = vld [vmem:[#allocation18 + $0x110] sm:$0xf]
      %v7934 = vld [vmem:[#allocation18 + $0x114] sm:$0xf]
      %v7935 = vld [vmem:[#allocation18 + $0x118] sm:$0xf]
      %v7936 = vld [vmem:[#allocation18 + $0x11c] sm:$0xf]
      %v7937 = vld [vmem:[#allocation18 + $0x120] sm:$0xf]
      %v7938 = vld [vmem:[#allocation18 + $0x124] sm:$0xf]
      %v7939 = vld [vmem:[#allocation18 + $0x128] sm:$0xf]
      %v7940 = vld [vmem:[#allocation18 + $0x12c] sm:$0xf]
      %v7941 = vld [vmem:[#allocation18 + $0x130] sm:$0xf]
      %v7942 = vld [vmem:[#allocation18 + $0x134] sm:$0xf]
      %v7943 = vld [vmem:[#allocation18 + $0x138] sm:$0xf]
      %v7944 = vld [vmem:[#allocation18 + $0x13c] sm:$0xf]
      %v7945 = vld [vmem:[#allocation18 + $0x140] sm:$0xf]
      %v7946 = vld [vmem:[#allocation18 + $0x144] sm:$0xf]
      %v7947 = vld [vmem:[#allocation18 + $0x148] sm:$0xf]
      %v7948 = vld [vmem:[#allocation18 + $0x14c] sm:$0xf]
      %v7949 = vld [vmem:[#allocation18 + $0x150] sm:$0xf]
      %v7950 = vld [vmem:[#allocation18 + $0x154] sm:$0xf]
      %v7951 = vld [vmem:[#allocation18 + $0x158] sm:$0xf]
      %v7952 = vld [vmem:[#allocation18 + $0x15c] sm:$0xf]
      %v7953 = vld [vmem:[#allocation18 + $0x160] sm:$0xf]
      %v7954 = vld [vmem:[#allocation18 + $0x164] sm:$0xf]
      %v7955 = vld [vmem:[#allocation18 + $0x168] sm:$0xf]
      %v7956 = vld [vmem:[#allocation18 + $0x16c] sm:$0xf]
      %v7957 = vld [vmem:[#allocation18 + $0x170] sm:$0xf]
      %v7958 = vld [vmem:[#allocation18 + $0x174] sm:$0xf]
      %v7959 = vld [vmem:[#allocation18 + $0x178] sm:$0xf]
      %v7960 = vld [vmem:[#allocation18 + $0x17c] sm:$0xf]
      %v7961 = vld [vmem:[#allocation18 + $0x180] sm:$0xf]
      %v7962 = vld [vmem:[#allocation18 + $0x184] sm:$0xf]
      %v7963 = vld [vmem:[#allocation18 + $0x188] sm:$0xf]
      %v7964 = vld [vmem:[#allocation18 + $0x18c] sm:$0xf]
      %v7965 = vld [vmem:[#allocation18 + $0x190] sm:$0xf]
      %v7966 = vld [vmem:[#allocation18 + $0x194] sm:$0xf]
      %v7967 = vld [vmem:[#allocation18 + $0x198] sm:$0xf]
      %v7968 = vld [vmem:[#allocation18 + $0x19c] sm:$0xf]
      %v7969 = vld [vmem:[#allocation18 + $0x1a0] sm:$0xf]
      %v7970 = vld [vmem:[#allocation18 + $0x1a4] sm:$0xf]
      %v7971 = vld [vmem:[#allocation18 + $0x1a8] sm:$0xf]
      %v7972 = vld [vmem:[#allocation18 + $0x1ac] sm:$0xf]
      %v7973 = vld [vmem:[#allocation18 + $0x1b0] sm:$0xf]
      %v7974 = vld [vmem:[#allocation18 + $0x1b4] sm:$0xf]
      %v7975 = vld [vmem:[#allocation18 + $0x1b8] sm:$0xf]
      %v7976 = vld [vmem:[#allocation18 + $0x1bc] sm:$0xf]
      %v7977 = vld [vmem:[#allocation18 + $0x1c0] sm:$0xf]
      %v7978 = vld [vmem:[#allocation18 + $0x1c4] sm:$0xf]
      %v7979 = vld [vmem:[#allocation18 + $0x1c8] sm:$0xf]
      %v7980 = vld [vmem:[#allocation18 + $0x1cc] sm:$0xf]
      %v7981 = vld [vmem:[#allocation18 + $0x1d0] sm:$0xf]
      %v7982 = vld [vmem:[#allocation18 + $0x1d4] sm:$0xf]
      %v7983 = vld [vmem:[#allocation18 + $0x1d8] sm:$0xf]
      %v7984 = vld [vmem:[#allocation18 + $0x1dc] sm:$0xf]
      %v7985 = vld [vmem:[#allocation18 + $0x1e0] sm:$0xf]
      %v7986 = vld [vmem:[#allocation18 + $0x1e4] sm:$0xf]
      %v7987 = vld [vmem:[#allocation18 + $0x1e8] sm:$0xf]
      %v7988 = vld [vmem:[#allocation18 + $0x1ec] sm:$0xf]
      %v7989 = vld [vmem:[#allocation18 + $0x1f0] sm:$0xf]
      %v7990 = vld [vmem:[#allocation18 + $0x1f4] sm:$0xf]
      %v7991 = vld [vmem:[#allocation18 + $0x1f8] sm:$0xf]
      %v7992 = vld [vmem:[#allocation18 + $0x1fc] sm:$0xf]
      %v7993 = vld [vmem:[#allocation20] sm:$0x1]
      %v7995 = vperm.slane %v7993, 0
      %v8125 = vunpack.c.l.b16 %v7865
      %v8126 = vunpack.c.l.b16 %v7866
      %v8127 = vunpack.c.l.b16 %v7867
      %v8128 = vunpack.c.l.b16 %v7868
      %v8129 = vunpack.c.l.b16 %v7869
      %v8130 = vunpack.c.l.b16 %v7870
      %v8131 = vunpack.c.l.b16 %v7871
      %v8132 = vunpack.c.l.b16 %v7872
      %v8133 = vunpack.c.l.b16 %v7873
      %v8134 = vunpack.c.l.b16 %v7874
      %v8135 = vunpack.c.l.b16 %v7875
      %v8136 = vunpack.c.l.b16 %v7876
      %v8137 = vunpack.c.l.b16 %v7877
      %v8138 = vunpack.c.l.b16 %v7878
      %v8139 = vunpack.c.l.b16 %v7879
      %v8140 = vunpack.c.l.b16 %v7880
      %v8141 = vunpack.c.l.b16 %v7881
      %v8142 = vunpack.c.l.b16 %v7882
      %v8143 = vunpack.c.l.b16 %v7883
      %v8144 = vunpack.c.l.b16 %v7884
      %v8145 = vunpack.c.l.b16 %v7885
      %v8146 = vunpack.c.l.b16 %v7886
      %v8147 = vunpack.c.l.b16 %v7887
      %v8148 = vunpack.c.l.b16 %v7888
      %v8149 = vunpack.c.l.b16 %v7889
      %v8150 = vunpack.c.l.b16 %v7890
      %v8151 = vunpack.c.l.b16 %v7891
      %v8152 = vunpack.c.l.b16 %v7892
      %v8153 = vunpack.c.l.b16 %v7893
      %v8154 = vunpack.c.l.b16 %v7894
      %v8155 = vunpack.c.l.b16 %v7895
      %v8156 = vunpack.c.l.b16 %v7896
      %v8157 = vunpack.c.l.b16 %v7897
      %v8158 = vunpack.c.l.b16 %v7898
      %v8159 = vunpack.c.l.b16 %v7899
      %v8160 = vunpack.c.l.b16 %v7900
      %v8161 = vunpack.c.l.b16 %v7901
      %v8162 = vunpack.c.l.b16 %v7902
      %v8163 = vunpack.c.l.b16 %v7903
      %v8164 = vunpack.c.l.b16 %v7904
      %v8165 = vunpack.c.l.b16 %v7905
      %v8166 = vunpack.c.l.b16 %v7906
      %v8167 = vunpack.c.l.b16 %v7907
      %v8168 = vunpack.c.l.b16 %v7908
      %v8169 = vunpack.c.l.b16 %v7909
      %v8170 = vunpack.c.l.b16 %v7910
      %v8171 = vunpack.c.l.b16 %v7911
      %v8172 = vunpack.c.l.b16 %v7912
      %v8173 = vunpack.c.l.b16 %v7913
      %v8174 = vunpack.c.l.b16 %v7914
      %v8175 = vunpack.c.l.b16 %v7915
      %v8176 = vunpack.c.l.b16 %v7916
      %v8177 = vunpack.c.l.b16 %v7917
      %v8178 = vunpack.c.l.b16 %v7918
      %v8179 = vunpack.c.l.b16 %v7919
      %v8180 = vunpack.c.l.b16 %v7920
      %v8181 = vunpack.c.l.b16 %v7921
      %v8182 = vunpack.c.l.b16 %v7922
      %v8183 = vunpack.c.l.b16 %v7923
      %v8184 = vunpack.c.l.b16 %v7924
      %v8185 = vunpack.c.l.b16 %v7925
      %v8186 = vunpack.c.l.b16 %v7926
      %v8187 = vunpack.c.l.b16 %v7927
      %v8188 = vunpack.c.l.b16 %v7928
      %v8189 = vunpack.c.l.b16 %v7929
      %v8190 = vunpack.c.l.b16 %v7930
      %v8191 = vunpack.c.l.b16 %v7931
      %v8192 = vunpack.c.l.b16 %v7932
      %v8193 = vunpack.c.l.b16 %v7933
      %v8194 = vunpack.c.l.b16 %v7934
      %v8195 = vunpack.c.l.b16 %v7935
      %v8196 = vunpack.c.l.b16 %v7936
      %v8197 = vunpack.c.l.b16 %v7937
      %v8198 = vunpack.c.l.b16 %v7938
      %v8199 = vunpack.c.l.b16 %v7939
      %v8200 = vunpack.c.l.b16 %v7940
      %v8201 = vunpack.c.l.b16 %v7941
      %v8202 = vunpack.c.l.b16 %v7942
      %v8203 = vunpack.c.l.b16 %v7943
      %v8204 = vunpack.c.l.b16 %v7944
      %v8205 = vunpack.c.l.b16 %v7945
      %v8206 = vunpack.c.l.b16 %v7946
      %v8207 = vunpack.c.l.b16 %v7947
      %v8208 = vunpack.c.l.b16 %v7948
      %v8209 = vunpack.c.l.b16 %v7949
      %v8210 = vunpack.c.l.b16 %v7950
      %v8211 = vunpack.c.l.b16 %v7951
      %v8212 = vunpack.c.l.b16 %v7952
      %v8213 = vunpack.c.l.b16 %v7953
      %v8214 = vunpack.c.l.b16 %v7954
      %v8215 = vunpack.c.l.b16 %v7955
      %v8216 = vunpack.c.l.b16 %v7956
      %v8217 = vunpack.c.l.b16 %v7957
      %v8218 = vunpack.c.l.b16 %v7958
      %v8219 = vunpack.c.l.b16 %v7959
      %v8220 = vunpack.c.l.b16 %v7960
      %v8221 = vunpack.c.l.b16 %v7961
      %v8222 = vunpack.c.l.b16 %v7962
      %v8223 = vunpack.c.l.b16 %v7963
      %v8224 = vunpack.c.l.b16 %v7964
      %v8225 = vunpack.c.l.b16 %v7965
      %v8226 = vunpack.c.l.b16 %v7966
      %v8227 = vunpack.c.l.b16 %v7967
      %v8228 = vunpack.c.l.b16 %v7968
      %v8229 = vunpack.c.l.b16 %v7969
      %v8230 = vunpack.c.l.b16 %v7970
      %v8231 = vunpack.c.l.b16 %v7971
      %v8232 = vunpack.c.l.b16 %v7972
      %v8233 = vunpack.c.l.b16 %v7973
      %v8234 = vunpack.c.l.b16 %v7974
      %v8235 = vunpack.c.l.b16 %v7975
      %v8236 = vunpack.c.l.b16 %v7976
      %v8237 = vunpack.c.l.b16 %v7977
      %v8238 = vunpack.c.l.b16 %v7978
      %v8239 = vunpack.c.l.b16 %v7979
      %v8240 = vunpack.c.l.b16 %v7980
      %v8241 = vunpack.c.l.b16 %v7981
      %v8242 = vunpack.c.l.b16 %v7982
      %v8243 = vunpack.c.l.b16 %v7983
      %v8244 = vunpack.c.l.b16 %v7984
      %v8245 = vunpack.c.l.b16 %v7985
      %v8246 = vunpack.c.l.b16 %v7986
      %v8247 = vunpack.c.l.b16 %v7987
      %v8248 = vunpack.c.l.b16 %v7988
      %v8249 = vunpack.c.l.b16 %v7989
      %v8250 = vunpack.c.l.b16 %v7990
      %v8251 = vunpack.c.l.b16 %v7991
      %v8252 = vunpack.c.l.b16 %v7992
      %v8253 = vpack.c.b16 %v8126, %v8125
      %v8254 = vpack.c.b16 %v8128, %v8127
      %v8255 = vpack.c.b16 %v8130, %v8129
      %v8256 = vpack.c.b16 %v8132, %v8131
      %v8257 = vpack.c.b16 %v8134, %v8133
      %v8258 = vpack.c.b16 %v8136, %v8135
      %v8259 = vpack.c.b16 %v8138, %v8137
      %v8260 = vpack.c.b16 %v8140, %v8139
      %v8261 = vpack.c.b16 %v8142, %v8141
      %v8262 = vpack.c.b16 %v8144, %v8143
      %v8263 = vpack.c.b16 %v8146, %v8145
      %v8264 = vpack.c.b16 %v8148, %v8147
      %v8265 = vpack.c.b16 %v8150, %v8149
      %v8266 = vpack.c.b16 %v8152, %v8151
      %v8267 = vpack.c.b16 %v8154, %v8153
      %v8268 = vpack.c.b16 %v8156, %v8155
      %v8269 = vpack.c.b16 %v8158, %v8157
      %v8270 = vpack.c.b16 %v8160, %v8159
      %v8271 = vpack.c.b16 %v8162, %v8161
      %v8272 = vpack.c.b16 %v8164, %v8163
      %v8273 = vpack.c.b16 %v8166, %v8165
      %v8274 = vpack.c.b16 %v8168, %v8167
      %v8275 = vpack.c.b16 %v8170, %v8169
      %v8276 = vpack.c.b16 %v8172, %v8171
      %v8277 = vpack.c.b16 %v8174, %v8173
      %v8278 = vpack.c.b16 %v8176, %v8175
      %v8279 = vpack.c.b16 %v8178, %v8177
      %v8280 = vpack.c.b16 %v8180, %v8179
      %v8281 = vpack.c.b16 %v8182, %v8181
      %v8282 = vpack.c.b16 %v8184, %v8183
      %v8283 = vpack.c.b16 %v8186, %v8185
      %v8284 = vpack.c.b16 %v8188, %v8187
      %v8285 = vpack.c.b16 %v8190, %v8189
      %v8286 = vpack.c.b16 %v8192, %v8191
      %v8287 = vpack.c.b16 %v8194, %v8193
      %v8288 = vpack.c.b16 %v8196, %v8195
      %v8289 = vpack.c.b16 %v8198, %v8197
      %v8290 = vpack.c.b16 %v8200, %v8199
      %v8291 = vpack.c.b16 %v8202, %v8201
      %v8292 = vpack.c.b16 %v8204, %v8203
      %v8293 = vpack.c.b16 %v8206, %v8205
      %v8294 = vpack.c.b16 %v8208, %v8207
      %v8295 = vpack.c.b16 %v8210, %v8209
      %v8296 = vpack.c.b16 %v8212, %v8211
      %v8297 = vpack.c.b16 %v8214, %v8213
      %v8298 = vpack.c.b16 %v8216, %v8215
      %v8299 = vpack.c.b16 %v8218, %v8217
      %v8300 = vpack.c.b16 %v8220, %v8219
      %v8301 = vpack.c.b16 %v8222, %v8221
      %v8302 = vpack.c.b16 %v8224, %v8223
      %v8303 = vpack.c.b16 %v8226, %v8225
      %v8304 = vpack.c.b16 %v8228, %v8227
      %v8305 = vpack.c.b16 %v8230, %v8229
      %v8306 = vpack.c.b16 %v8232, %v8231
      %v8307 = vpack.c.b16 %v8234, %v8233
      %v8308 = vpack.c.b16 %v8236, %v8235
      %v8309 = vpack.c.b16 %v8238, %v8237
      %v8310 = vpack.c.b16 %v8240, %v8239
      %v8311 = vpack.c.b16 %v8242, %v8241
      %v8312 = vpack.c.b16 %v8244, %v8243
      %v8313 = vpack.c.b16 %v8246, %v8245
      %v8314 = vpack.c.b16 %v8248, %v8247
      %v8315 = vpack.c.b16 %v8250, %v8249
      %v8316 = vpack.c.b16 %v8252, %v8251
      %8381 = vmatpush.bf16.msra.mxu0 %v8260
      %8382 = vmatpush.bf16.msra.mxu0 %v8259
      %8383 = vmatpush.bf16.msra.mxu0 %v8258
      %8384 = vmatpush.bf16.msra.mxu0 %v8257
      %8385 = vmatpush.bf16.msra.mxu0 %v8256
      %8386 = vmatpush.bf16.msra.mxu0 %v8255
      %8387 = vmatpush.bf16.msra.mxu0 %v8254
      %8388 = vmatpush.bf16.msra.mxu0 %v8253
      %8389 = vmatmul.bf16.gmra.mxu0 %v7857
      %v8390 = vpop.f32.mrf.mxu0
      %v8391 = vadd.f32 %v7995, %v8390
      %v8392 = vpop.f32.mrf.mxu0
      %8393 = vdwg.mxu0
      %8394 = vmatpush.bf16.msra.mxu0 %v8268
      %8395 = vmatpush.bf16.msra.mxu0 %v8267
      %8396 = vmatpush.bf16.msra.mxu0 %v8266
      %8397 = vmatpush.bf16.msra.mxu0 %v8265
      %8398 = vmatpush.bf16.msra.mxu0 %v8264
      %8399 = vmatpush.bf16.msra.mxu0 %v8263
      %8400 = vmatpush.bf16.msra.mxu0 %v8262
      %8401 = vmatpush.bf16.msra.mxu0 %v8261
      %8402 = vmatmul.bf16.gmra.mxu0 %v7858
      %v8403 = vpop.f32.mrf.mxu0
      %v8404 = vadd.f32 %v8391, %v8403
      %v8405 = vpop.f32.mrf.mxu0
      %8406 = vdwg.mxu0
      %8407 = vmatpush.bf16.msra.mxu0 %v8276
      %8408 = vmatpush.bf16.msra.mxu0 %v8275
      %8409 = vmatpush.bf16.msra.mxu0 %v8274
      %8410 = vmatpush.bf16.msra.mxu0 %v8273
      %8411 = vmatpush.bf16.msra.mxu0 %v8272
      %8412 = vmatpush.bf16.msra.mxu0 %v8271
      %8413 = vmatpush.bf16.msra.mxu0 %v8270
      %8414 = vmatpush.bf16.msra.mxu0 %v8269
      %8415 = vmatmul.bf16.gmra.mxu0 %v7859
      %v8416 = vpop.f32.mrf.mxu0
      %v8417 = vadd.f32 %v8404, %v8416
      %v8418 = vpop.f32.mrf.mxu0
      %8419 = vdwg.mxu0
      %8420 = vmatpush.bf16.msra.mxu0 %v8284
      %8421 = vmatpush.bf16.msra.mxu0 %v8283
      %8422 = vmatpush.bf16.msra.mxu0 %v8282
      %8423 = vmatpush.bf16.msra.mxu0 %v8281
      %8424 = vmatpush.bf16.msra.mxu0 %v8280
      %8425 = vmatpush.bf16.msra.mxu0 %v8279
      %8426 = vmatpush.bf16.msra.mxu0 %v8278
      %8427 = vmatpush.bf16.msra.mxu0 %v8277
      %8428 = vmatmul.bf16.gmra.mxu0 %v7860
      %v8429 = vpop.f32.mrf.mxu0
      %v8430 = vadd.f32 %v8417, %v8429
      %v8431 = vpop.f32.mrf.mxu0
      %8432 = vdwg.mxu0
      %8433 = vmatpush.bf16.msra.mxu0 %v8292
      %8434 = vmatpush.bf16.msra.mxu0 %v8291
      %8435 = vmatpush.bf16.msra.mxu0 %v8290
      %8436 = vmatpush.bf16.msra.mxu0 %v8289
      %8437 = vmatpush.bf16.msra.mxu0 %v8288
      %8438 = vmatpush.bf16.msra.mxu0 %v8287
      %8439 = vmatpush.bf16.msra.mxu0 %v8286
      %8440 = vmatpush.bf16.msra.mxu0 %v8285
      %8441 = vmatmul.bf16.gmra.mxu0 %v7861
      %v8442 = vpop.f32.mrf.mxu0
      %v8443 = vadd.f32 %v8430, %v8442
      %v8444 = vpop.f32.mrf.mxu0
      %8445 = vdwg.mxu0
      %8446 = vmatpush.bf16.msra.mxu0 %v8300
      %8447 = vmatpush.bf16.msra.mxu0 %v8299
      %8448 = vmatpush.bf16.msra.mxu0 %v8298
      %8449 = vmatpush.bf16.msra.mxu0 %v8297
      %8450 = vmatpush.bf16.msra.mxu0 %v8296
      %8451 = vmatpush.bf16.msra.mxu0 %v8295
      %8452 = vmatpush.bf16.msra.mxu0 %v8294
      %8453 = vmatpush.bf16.msra.mxu0 %v8293
      %8454 = vmatmul.bf16.gmra.mxu0 %v7862
      %v8455 = vpop.f32.mrf.mxu0
      %v8456 = vadd.f32 %v8443, %v8455
      %v8457 = vpop.f32.mrf.mxu0
      %8458 = vdwg.mxu0
      %8459 = vmatpush.bf16.msra.mxu0 %v8308
      %8460 = vmatpush.bf16.msra.mxu0 %v8307
      %8461 = vmatpush.bf16.msra.mxu0 %v8306
      %8462 = vmatpush.bf16.msra.mxu0 %v8305
      %8463 = vmatpush.bf16.msra.mxu0 %v8304
      %8464 = vmatpush.bf16.msra.mxu0 %v8303
      %8465 = vmatpush.bf16.msra.mxu0 %v8302
      %8466 = vmatpush.bf16.msra.mxu0 %v8301
      %8467 = vmatmul.bf16.gmra.mxu0 %v7863
      %v8468 = vpop.f32.mrf.mxu0
      %v8469 = vadd.f32 %v8456, %v8468
      %v8470 = vpop.f32.mrf.mxu0
      %8471 = vdwg.mxu0
      %8472 = vmatpush.bf16.msra.mxu0 %v8316
      %8473 = vmatpush.bf16.msra.mxu0 %v8315
      %8474 = vmatpush.bf16.msra.mxu0 %v8314
      %8475 = vmatpush.bf16.msra.mxu0 %v8313
      %8476 = vmatpush.bf16.msra.mxu0 %v8312
      %8477 = vmatpush.bf16.msra.mxu0 %v8311
      %8478 = vmatpush.bf16.msra.mxu0 %v8310
      %8479 = vmatpush.bf16.msra.mxu0 %v8309
      %8480 = vmatmul.bf16.gmra.mxu0 %v7864
      %v8481 = vpop.f32.mrf.mxu0
      %v8482 = vadd.f32 %v8469, %v8481
      %v8483 = vpop.f32.mrf.mxu0
      %8484 = vdwg.mxu0
      %v8486 = vrot.slane %v8482, 1
      %8488 = vst [vmem:[#allocation21] sm:$0x1] %v8482
      %8489 = vst [vmem:[#allocation21 + $0x1] sm:$0x1] %v8486
    $region97: #{tpu_custom_call.1} parent=1 // pred_fallthru
      _
    // Predicated region
    $region98: #{tpu_custom_call.1} parent=1 // pred_check
      _
    $region99: #{tpu_custom_call.1} parent=1 // pred_check_branch
      %8491 = sbr.rel (0) target = $region101
    $region100: #{tpu_custom_call.1} parent=1 // pred_region
      %8493 = vsyncadd [#allocation5], 0
      %s8494 = sshll.u32 [#allocation21], 4
      %s8495 = int_to_ptr.vmem [resolvable:$true] %s8494
      %s8496 = sshll.u32 %s11, 4
      %s8497 = int_to_ptr.hbm [resolvable:$true] %s8496
      %8502 = dma.vmem_to_hbm [thread:$0]  %s8495, 32, %s8497, [#allocation5], 16, 16, 1
    $region101: #{tpu_custom_call.1} parent=1 // pred_fallthru
      _
    // Predicated region
    $region102: #{tpu_custom_call.1} parent=1 // pred_check
      _
    $region103: #{tpu_custom_call.1} parent=1 // pred_check_branch
      %8504 = sbr.rel (0) target = $region105
    $region104: #{tpu_custom_call.1} parent=1 // pred_region
      %8506 = dma.done [#allocation5], 32
    $region105: #{tpu_custom_call.1} parent=1 // pred_fallthru
      _
    %8507 = vsyncpa [#allocation4], 1
    %8508 = vsyncpa [#allocation7], 1
    %8509 = vsyncpa [#allocation10], 1
    %8510 = vsyncpa [#allocation13], 1
    %8511 = vsyncpa [#allocation16], 1
    %8512 = vsyncpa [#allocation19], 1
    %8513 = vsyncpa [#allocation5], 1

</llo_original>
